<compile_context>
chip_gen: v6e
topology: v6e:2x2x1
jax: 0.10.0
libtpu: 0.0.40
codegen_flags: <defaults>
</compile_context>

<pallas_src>
import functools
import math

import jax
import jax.numpy as jnp
import numpy as np
from jax.experimental import pallas as pl
from jax.experimental.pallas import tpu as pltpu


# ----------------------------------------------------------------------------
# In-kernel helpers (traced inside the fused kernels)
# ----------------------------------------------------------------------------

def _mm(a, b):
    """(M,K) @ (K,N) with bf16 MXU inputs, f32 accumulation."""
    return jax.lax.dot_general(
        a.astype(jnp.bfloat16), b.astype(jnp.bfloat16),
        (((1,), (0,)), ((), ())), preferred_element_type=jnp.float32)


def _mm_t(a, b):
    """(M,K) @ (N,K)^T -> (M,N) with bf16 MXU inputs, f32 accumulation."""
    return jax.lax.dot_general(
        a.astype(jnp.bfloat16), b.astype(jnp.bfloat16),
        (((1,), (1,)), ((), ())), preferred_element_type=jnp.float32)


def _ln(x, a_ref, b_ref, eps=1e-6):
    """Annotated-Transformer LayerNorm: unbiased std, eps added to std (matches torch .std())."""
    d = x.shape[-1]
    mean = jnp.mean(x, axis=-1, keepdims=True)
    xc = x - mean
    var = jnp.sum(xc * xc, axis=-1, keepdims=True) * (1.0 / float(d - 1))
    std = jnp.sqrt(var)
    return a_ref[...] * xc / (std + eps) + b_ref[...]


def _ffn(x, w1, b1, w2, b2):
    h = jnp.maximum(_mm(x, w1[...]) + b1[...], 0.0)
    return _mm(h, w2[...]) + b2[...]


def _attend(q_all, kv_all, k_off, v_off, wo_ref, bo_ref, heads, dk, bias):
    """Multi-head attention over packed projections.

    q_all:  (Tq, >=heads*dk)  -- per-head queries at columns [h*dk : (h+1)*dk]
    kv_all: (Tk, ...)         -- keys at k_off + h*dk, values at v_off + h*dk
    Output projection is accumulated per head (sum_h o_h @ wo[h*dk:(h+1)*dk, :]),
    which avoids an in-kernel concat/transpose.
    """
    Tq = q_all.shape[0]
    D = heads * dk
    scale = 1.0 / math.sqrt(dk)
    out = jnp.zeros((Tq, D), jnp.float32)
    for hh in range(heads):
        qh = q_all[:, hh * dk:(hh + 1) * dk]
        kh = kv_all[:, k_off + hh * dk:k_off + (hh + 1) * dk]
        vh = kv_all[:, v_off + hh * dk:v_off + (hh + 1) * dk]
        s = _mm_t(qh, kh) * scale                      # (Tq, Tk) f32
        if bias is not None:
            s = s + bias
        s = s - jnp.max(s, axis=-1, keepdims=True)
        p = jnp.exp(s)
        p = p / jnp.sum(p, axis=-1, keepdims=True)
        oh = _mm(p, vh)                                # (Tq, dk)
        out = out + _mm(oh, wo_ref[hh * dk:(hh + 1) * dk, :])
    return out + bo_ref[...]


# ----------------------------------------------------------------------------
# Fused encoder / decoder kernels (one pallas_call each, grid over batch)
# ----------------------------------------------------------------------------

_ENC_LAYER_REFS = 12   # ln1(a,b), wqkv, bqkv, wo, bo, ln2(a,b), w1, b1, w2, b2
_DEC_LAYER_REFS = 20   # + src-attn: wq, bq, wkv, bkv, wo, bo, ln3(a,b)


def _encoder_kernel(*refs, n_layers, heads):
    x_ref, emb_w, emb_b, pe = refs[:4]
    idx = 4
    layers = [refs[idx + i * _ENC_LAYER_REFS: idx + (i + 1) * _ENC_LAYER_REFS]
              for i in range(n_layers)]
    idx += _ENC_LAYER_REFS * n_layers
    lnf_a, lnf_b, o_ref = refs[idx], refs[idx + 1], refs[idx + 2]

    D = emb_w.shape[1]
    dk = D // heads

    x = x_ref[0]                                        # (T, F) raw input (norm folded into emb)
    h = _mm(x, emb_w[...]) + emb_b[...] + pe[...]       # embedding (sqrt(d) folded) + PE
    for (l1a, l1b, wqkv, bqkv, wo, bo, l2a, l2b, w1, b1, w2, b2) in layers:
        xn = _ln(h, l1a, l1b)
        qkv = _mm(xn, wqkv[...]) + bqkv[...]            # (T, 3D) fused QKV projection
        h = h + _attend(qkv, qkv, D, 2 * D, wo, bo, heads, dk, None)   # src mask = all ones
        xn = _ln(h, l2a, l2b)
        h = h + _ffn(xn, w1, b1, w2, b2)
    o_ref[0] = _ln(h, lnf_a, lnf_b)


def _decoder_kernel(*refs, n_layers, heads):
    tgt_ref, mem_ref, emb_w, emb_b, pe = refs[:5]
    idx = 5
    layers = [refs[idx + i * _DEC_LAYER_REFS: idx + (i + 1) * _DEC_LAYER_REFS]
              for i in range(n_layers)]
    idx += _DEC_LAYER_REFS * n_layers
    lnf_a, lnf_b, gen_w, gen_b = refs[idx:idx + 4]
    o_ref = refs[idx + 4]

    D = emb_w.shape[1]
    dk = D // heads

    x = tgt_ref[0]                                      # (Td, 3)
    mem = mem_ref[0]                                    # (Ts, D)
    Td = x.shape[0]

    # Causal additive bias generated in-kernel (no HBM mask traffic).
    row = jax.lax.broadcasted_iota(jnp.int32, (Td, Td), 0)
    col = jax.lax.broadcasted_iota(jnp.int32, (Td, Td), 1)
    causal_bias = jnp.where(row >= col, 0.0, -1e9).astype(jnp.float32)

    h = _mm(x, emb_w[...]) + emb_b[...] + pe[...]
    for (l1a, l1b, wqkv, bqkv, wos, bos,
         l2a, l2b, wq, bq, wkv, bkv, woc, boc,
         l3a, l3b, w1, b1, w2, b2) in layers:
        xn = _ln(h, l1a, l1b)
        qkv = _mm(xn, wqkv[...]) + bqkv[...]            # (Td, 3D)
        h = h + _attend(qkv, qkv, D, 2 * D, wos, bos, heads, dk, causal_bias)
        xn = _ln(h, l2a, l2b)
        q = _mm(xn, wq[...]) + bq[...]                  # (Td, D)
        kv = _mm(mem, wkv[...]) + bkv[...]              # (Ts, 2D) fused K|V projection
        h = h + _attend(q, kv, 0, D, woc, boc, heads, dk, None)        # src mask = all ones
        xn = _ln(h, l3a, l3b)
        h = h + _ffn(xn, w1, b1, w2, b2)
    h = _ln(h, lnf_a, lnf_b)
    o_ref[0] = _mm(h, gen_w[...]) + gen_b[...]          # generator (Td, dec_out)


# ----------------------------------------------------------------------------
# pallas_call wrappers
# ----------------------------------------------------------------------------

def _const_spec(a):
    nd = a.ndim
    return pl.BlockSpec(tuple(a.shape), lambda b, _nd=nd: (0,) * _nd)


def _encoder_apply(prep, x, cfg):
    B, T, F = x.shape
    D = cfg["d_model"]
    inputs = [x, prep["enc_emb_w"], prep["enc_emb_b"], prep["pe"][:T]]
    for lp in prep["enc_layers"]:
        inputs.extend(lp)
    inputs.extend(prep["enc_lnf"])
    in_specs = [pl.BlockSpec((1, T, F), lambda b: (b, 0, 0))]
    in_specs += [_const_spec(a) for a in inputs[1:]]
    kern = functools.partial(_encoder_kernel, n_layers=cfg["n_layers"], heads=cfg["heads"])
    return pl.pallas_call(
        kern,
        out_shape=jax.ShapeDtypeStruct((B, T, D), jnp.float32),
        grid=(B,),
        in_specs=in_specs,
        out_specs=pl.BlockSpec((1, T, D), lambda b: (b, 0, 0)),
        compiler_params=pltpu.CompilerParams(dimension_semantics=("parallel",)),
    )(*inputs)


def _decoder_apply(prep, dec_inp, mem, cfg):
    B, T, F = dec_inp.shape
    D = cfg["d_model"]
    Ts = mem.shape[1]
    gw, gb = prep["gen"]
    out_size = gw.shape[1]
    inputs = [dec_inp, mem, prep["dec_emb_w"], prep["dec_emb_b"], prep["pe"][:T]]
    for lp in prep["dec_layers"]:
        inputs.extend(lp)
    inputs.extend(prep["dec_lnf"])
    inputs += [gw, gb]
    in_specs = [pl.BlockSpec((1, T, F), lambda b: (b, 0, 0)),
                pl.BlockSpec((1, Ts, D), lambda b: (b, 0, 0))]
    in_specs += [_const_spec(a) for a in inputs[2:]]
    kern = functools.partial(_decoder_kernel, n_layers=cfg["n_layers"], heads=cfg["heads"])
    return pl.pallas_call(
        kern,
        out_shape=jax.ShapeDtypeStruct((B, T, out_size), jnp.float32),
        grid=(B,),
        in_specs=in_specs,
        out_specs=pl.BlockSpec((1, T, out_size), lambda b: (b, 0, 0)),
        compiler_params=pltpu.CompilerParams(dimension_semantics=("parallel",)),
    )(*inputs)


# ----------------------------------------------------------------------------
# Parameter init (deterministic nn.Linear-style uniform fan-in init) + packing
# ----------------------------------------------------------------------------

def _init_linear(key, din, dout):
    kw, kb = jax.random.split(key)
    bound = 1.0 / math.sqrt(din)
    w = jax.random.uniform(kw, (din, dout), jnp.float32, -bound, bound)
    b = jax.random.uniform(kb, (1, dout), jnp.float32, -bound, bound)
    return w, b


def _init_ln(d):
    return jnp.ones((1, d), jnp.float32), jnp.zeros((1, d), jnp.float32)


def _init_mha(key, d):
    p = {}
    for name, kk in zip("qkvo", jax.random.split(key, 4)):
        w, b = _init_linear(kk, d, d)
        p["w" + name], p["b" + name] = w, b
    return p


def _init_ffn(key, d, dff):
    k1, k2 = jax.random.split(key)
    w1, b1 = _init_linear(k1, d, dff)
    w2, b2 = _init_linear(k2, dff, d)
    return {"w1": w1, "b1": b1, "w2": w2, "b2": b2}


def positional_encoding(max_len, d):
    pos = np.arange(max_len, dtype=np.float32)[:, None]
    div = np.exp(np.arange(0, d, 2, dtype=np.float32) * (-math.log(10000.0) / d))
    pe = np.zeros((max_len, d), np.float32)
    pe[:, 0::2] = np.sin(pos * div)
    pe[:, 1::2] = np.cos(pos * div)
    return jnp.asarray(pe)


def init_params(key, cfg):
    d, dff, n = cfg["d_model"], cfg["d_ff"], cfg["n_layers"]
    keys = jax.random.split(key, 6)

    enc = {"emb": _init_linear(keys[0], cfg["enc_inp_size"], d),
           "layers": [], "ln_f": _init_ln(d)}
    for lk in jax.random.split(keys[1], n):
        k1, k2 = jax.random.split(lk)
        enc["layers"].append({"ln1": _init_ln(d), "self_attn": _init_mha(k1, d),
                              "ln2": _init_ln(d), "ffn": _init_ffn(k2, d, dff)})

    dec = {"emb": _init_linear(keys[2], cfg["dec_inp_size"], d),
           "layers": [], "ln_f": _init_ln(d),
           "gen": _init_linear(keys[3], d, cfg["dec_out_size"])}
    for lk in jax.random.split(keys[4], n):
        k1, k2, k3 = jax.random.split(lk, 3)
        dec["layers"].append({"ln1": _init_ln(d), "self_attn": _init_mha(k1, d),
                              "ln2": _init_ln(d), "src_attn": _init_mha(k2, d),
                              "ln3": _init_ln(d), "ffn": _init_ffn(k3, d, dff)})

    return {"encoder": enc, "decoder": dec, "pe": positional_encoding(cfg["max_len"], d)}


def _prepare(params, mean, std, cfg):
    """Pack QKV weights, fold mean/std + sqrt(d_model) into the encoder embedding."""
    d = cfg["d_model"]
    sq = math.sqrt(d)
    enc, dec = params["encoder"], params["decoder"]
    inv_std = 1.0 / std

    ew, eb = enc["emb"]
    enc_emb_w = (ew * inv_std[:, None]) * sq
    enc_emb_b = (eb - jnp.matmul((mean * inv_std)[None, :], ew)) * sq

    dw, db = dec["emb"]
    dec_emb_w = dw * sq
    dec_emb_b = db * sq

    def pack_self(p):
        return (jnp.concatenate([p["wq"], p["wk"], p["wv"]], axis=1),
                jnp.concatenate([p["bq"], p["bk"], p["bv"]], axis=1),
                p["wo"], p["bo"])

    def pack_cross(p):
        return (p["wq"], p["bq"],
                jnp.concatenate([p["wk"], p["wv"]], axis=1),
                jnp.concatenate([p["bk"], p["bv"]], axis=1),
                p["wo"], p["bo"])

    enc_layers = []
    for lp in enc["layers"]:
        wqkv, bqkv, wo, bo = pack_self(lp["self_attn"])
        f = lp["ffn"]
        enc_layers.append((lp["ln1"][0], lp["ln1"][1], wqkv, bqkv, wo, bo,
                           lp["ln2"][0], lp["ln2"][1],
                           f["w1"], f["b1"], f["w2"], f["b2"]))

    dec_layers = []
    for lp in dec["layers"]:
        wqkv, bqkv, wos, bos = pack_self(lp["self_attn"])
        wq, bq, wkv, bkv, woc, boc = pack_cross(lp["src_attn"])
        f = lp["ffn"]
        dec_layers.append((lp["ln1"][0], lp["ln1"][1], wqkv, bqkv, wos, bos,
                           lp["ln2"][0], lp["ln2"][1], wq, bq, wkv, bkv, woc, boc,
                           lp["ln3"][0], lp["ln3"][1],
                           f["w1"], f["b1"], f["w2"], f["b2"]))

    return {"pe": params["pe"],
            "enc_emb_w": enc_emb_w, "enc_emb_b": enc_emb_b,
            "enc_layers": enc_layers, "enc_lnf": enc["ln_f"],
            "dec_emb_w": dec_emb_w, "dec_emb_b": dec_emb_b,
            "dec_layers": dec_layers, "dec_lnf": dec["ln_f"],
            "gen": dec["gen"]}


# ----------------------------------------------------------------------------
# TrajectoryGenerator forward
# ----------------------------------------------------------------------------

def trajectory_generator_forward(params, obs_traj, obs_traj_rel, pred_traj_gt_rel,
                                 seq_start_end, mean, std, *, predict, cfg):
    del obs_traj, seq_start_end  # only used by pooling / global noise, disabled in default config
    # TODO(synk): PoolHiddenNet + mlp_decoder_context + add_noise are identity under the
    # default config (pooling_type=None, noise_dim=(0,)) and therefore not implemented.

    prep = _prepare(params, mean, std, cfg)

    # Encoder input: raw (obs_len-1, B, 2) slice; (x - mean)/std is folded into the
    # embedding weights inside the fused encoder kernel.
    inp = jnp.transpose(obs_traj_rel, (1, 0, 2))[:, 1:, :]          # (B, obs_len-1, 2)
    B = inp.shape[0]
    mem = _encoder_apply(prep, inp, cfg)                            # (B, Ts, D)

    start = jnp.tile(jnp.array([0.0, 0.0, 1.0], jnp.float32)[None, None, :], (B, 1, 1))

    if predict:
        # Fixed-length autoregressive decode: causal mask makes positions > step inert,
        # so we fill a (pred_len+1)-long buffer inside lax.fori_loop (no retraces).
        L = cfg["pred_len"] + 1
        dec_buf = jnp.zeros((B, L, 3), jnp.float32)
        dec_buf = dec_buf.at[:, 0, :].set(start[:, 0, :])

        def body(i, buf):
            out = _decoder_apply(prep, buf, mem, cfg)               # (B, L, 3)
            nxt = jax.lax.dynamic_slice_in_dim(out, i, 1, axis=1)   # prediction at pos i
            return jax.lax.dynamic_update_slice_in_dim(buf, nxt, i + 1, axis=1)

        dec_buf = jax.lax.fori_loop(0, cfg["pred_len"], body, dec_buf)
        pred = dec_buf[:, 1:, :]                                    # (B, pred_len, 3)
    else:
        target = (jnp.transpose(pred_traj_gt_rel, (1, 0, 2))[:, :-1, :] - mean) / std
        target = jnp.concatenate(
            [target, jnp.zeros((B, target.shape[1], 1), jnp.float32)], axis=-1)
        dec_inp = jnp.concatenate([start, target], axis=1)          # (B, pred_len, 3)
        pred = _decoder_apply(prep, dec_inp, mem, cfg)              # (B, pred_len, 3)

    return jnp.transpose(pred, (1, 0, 2))[:, :, 0:2] * std + mean   # (pred_len, B, 2)


# ----------------------------------------------------------------------------
# Main
# ----------------------------------------------------------------------------

if __name__ == "__main__":
    OBS_LEN, PRED_LEN, BATCH = 8, 12, 2  # "batch" = number of pedestrians
    cfg = {
        "enc_inp_size": 2,
        "dec_inp_size": 3,
        "dec_out_size": 3,
        "d_model": 64,       # tf_emb_dim
        "d_ff": 128,         # tf_ff_size (small for the demo)
        "heads": 8,
        "n_layers": 1,       # layer_count
        "pred_len": PRED_LEN,
        "max_len": 64,
    }

    key = jax.random.PRNGKey(0)
    k1, k2, k3, k4, k5 = jax.random.split(key, 5)
    obs_traj = jax.random.normal(k1, (OBS_LEN, BATCH, 2), jnp.float32)
    obs_traj_rel = jax.random.normal(k2, (OBS_LEN, BATCH, 2), jnp.float32)
    pred_traj_gt_rel = jax.random.normal(k3, (PRED_LEN, BATCH, 2), jnp.float32)
    seq_start_end = jnp.array([[0, BATCH]], jnp.int32)
    mean = 0.1 * jax.random.normal(k4, (2,), jnp.float32)
    std = jnp.ones((2,), jnp.float32)

    params = init_params(k5, cfg)

    fwd_teacher = jax.jit(functools.partial(trajectory_generator_forward,
                                            predict=False, cfg=cfg))
    fwd_autoreg = jax.jit(functools.partial(trajectory_generator_forward,
                                            predict=True, cfg=cfg))

    out = fwd_teacher(params, obs_traj, obs_traj_rel, pred_traj_gt_rel,
                      seq_start_end, mean, std)
    out = jax.block_until_ready(out)
    assert out.shape == (PRED_LEN, BATCH, 2), out.shape
    assert bool(jnp.all(jnp.isfinite(out)))

    out_ar = fwd_autoreg(params, obs_traj, obs_traj_rel, pred_traj_gt_rel,
                         seq_start_end, mean, std)
    out_ar = jax.block_until_ready(out_ar)
    assert out_ar.shape == (PRED_LEN, BATCH, 2), out_ar.shape
    assert bool(jnp.all(jnp.isfinite(out_ar)))

    print("KERNEL_OK")
</pallas_src>

<mosaic_0001>
module attributes {stable_mosaic.version = 11 : i64} {
  func.func @_encoder_kernel(%arg0: i32, %arg1: memref<1x7x2xf32, #tpu.memory_space<vmem>>, %arg2: memref<2x64xf32, #tpu.memory_space<vmem>>, %arg3: memref<1x64xf32, #tpu.memory_space<vmem>>, %arg4: memref<7x64xf32, #tpu.memory_space<vmem>>, %arg5: memref<1x64xf32, #tpu.memory_space<vmem>>, %arg6: memref<1x64xf32, #tpu.memory_space<vmem>>, %arg7: memref<64x192xf32, #tpu.memory_space<vmem>>, %arg8: memref<1x192xf32, #tpu.memory_space<vmem>>, %arg9: memref<64x64xf32, #tpu.memory_space<vmem>>, %arg10: memref<1x64xf32, #tpu.memory_space<vmem>>, %arg11: memref<1x64xf32, #tpu.memory_space<vmem>>, %arg12: memref<1x64xf32, #tpu.memory_space<vmem>>, %arg13: memref<64x128xf32, #tpu.memory_space<vmem>>, %arg14: memref<1x128xf32, #tpu.memory_space<vmem>>, %arg15: memref<128x64xf32, #tpu.memory_space<vmem>>, %arg16: memref<1x64xf32, #tpu.memory_space<vmem>>, %arg17: memref<1x64xf32, #tpu.memory_space<vmem>>, %arg18: memref<1x64xf32, #tpu.memory_space<vmem>>, %arg19: memref<1x7x64xf32, #tpu.memory_space<vmem>>) attributes {dimension_semantics = [#tpu.dimension_semantics<parallel>], iteration_bounds = array<i64: 2>, scalar_prefetch = 0 : i64, scratch_operands = 0 : i64, tpu.core_type = #tpu.core_type<tc>, window_params = [{transform_indices = @transform_0, window_bounds = array<i64: 1, 7, 2>}, {pipeline_mode = #tpu.pipeline_mode<synchronous>, transform_indices = @transform_1, window_bounds = array<i64: 2, 64>}, {pipeline_mode = #tpu.pipeline_mode<synchronous>, transform_indices = @transform_2, window_bounds = array<i64: 1, 64>}, {pipeline_mode = #tpu.pipeline_mode<synchronous>, transform_indices = @transform_3, window_bounds = array<i64: 7, 64>}, {pipeline_mode = #tpu.pipeline_mode<synchronous>, transform_indices = @transform_4, window_bounds = array<i64: 1, 64>}, {pipeline_mode = #tpu.pipeline_mode<synchronous>, transform_indices = @transform_5, window_bounds = array<i64: 1, 64>}, {pipeline_mode = #tpu.pipeline_mode<synchronous>, transform_indices = @transform_6, window_bounds = array<i64: 64, 192>}, {pipeline_mode = #tpu.pipeline_mode<synchronous>, transform_indices = @transform_7, window_bounds = array<i64: 1, 192>}, {pipeline_mode = #tpu.pipeline_mode<synchronous>, transform_indices = @transform_8, window_bounds = array<i64: 64, 64>}, {pipeline_mode = #tpu.pipeline_mode<synchronous>, transform_indices = @transform_9, window_bounds = array<i64: 1, 64>}, {pipeline_mode = #tpu.pipeline_mode<synchronous>, transform_indices = @transform_10, window_bounds = array<i64: 1, 64>}, {pipeline_mode = #tpu.pipeline_mode<synchronous>, transform_indices = @transform_11, window_bounds = array<i64: 1, 64>}, {pipeline_mode = #tpu.pipeline_mode<synchronous>, transform_indices = @transform_12, window_bounds = array<i64: 64, 128>}, {pipeline_mode = #tpu.pipeline_mode<synchronous>, transform_indices = @transform_13, window_bounds = array<i64: 1, 128>}, {pipeline_mode = #tpu.pipeline_mode<synchronous>, transform_indices = @transform_14, window_bounds = array<i64: 128, 64>}, {pipeline_mode = #tpu.pipeline_mode<synchronous>, transform_indices = @transform_15, window_bounds = array<i64: 1, 64>}, {pipeline_mode = #tpu.pipeline_mode<synchronous>, transform_indices = @transform_16, window_bounds = array<i64: 1, 64>}, {pipeline_mode = #tpu.pipeline_mode<synchronous>, transform_indices = @transform_17, window_bounds = array<i64: 1, 64>}, {transform_indices = @transform_18, window_bounds = array<i64: 1, 7, 64>}]} {
    %c0 = arith.constant 0 : index
    %c0_0 = arith.constant 0 : index
    %c0_1 = arith.constant 0 : index
    %0 = vector.load %arg1[%c0, %c0_0, %c0_1] : memref<1x7x2xf32, #tpu.memory_space<vmem>>, vector<1x7x2xf32>
    %1 = vector.shape_cast %0 : vector<1x7x2xf32> to vector<7x2xf32>
    %c0_2 = arith.constant 0 : index
    %c0_3 = arith.constant 0 : index
    %2 = vector.load %arg2[%c0_2, %c0_3] : memref<2x64xf32, #tpu.memory_space<vmem>>, vector<2x64xf32>
    %3 = arith.truncf %1 : vector<7x2xf32> to vector<7x2xbf16>
    %4 = arith.truncf %2 : vector<2x64xf32> to vector<2x64xbf16>
    %cst = arith.constant dense<0.000000e+00> : vector<7x64xf32>
    %5 = tpu.matmul %3, %4, %cst {dimension_numbers = #tpu.dot_dimension_numbers<[1], [0], [0], [1], [0, 0, 1, 1], [], []>} : vector<7x2xbf16>, vector<2x64xbf16>, vector<7x64xf32> -> vector<7x64xf32>
    %c0_4 = arith.constant 0 : index
    %c0_5 = arith.constant 0 : index
    %6 = vector.load %arg3[%c0_4, %c0_5] : memref<1x64xf32, #tpu.memory_space<vmem>>, vector<1x64xf32>
    %7 = vector.broadcast %6 : vector<1x64xf32> to vector<7x64xf32>
    %8 = arith.addf %5, %7 : vector<7x64xf32>
    %c0_6 = arith.constant 0 : index
    %c0_7 = arith.constant 0 : index
    %9 = vector.load %arg4[%c0_6, %c0_7] : memref<7x64xf32, #tpu.memory_space<vmem>>, vector<7x64xf32>
    %10 = arith.addf %8, %9 : vector<7x64xf32>
    %cst_8 = arith.constant dense<0.000000e+00> : vector<7xf32>
    %11 = vector.multi_reduction <add>, %10, %cst_8 [1] : vector<7x64xf32> to vector<7xf32>
    %12 = vector.shape_cast %11 : vector<7xf32> to vector<7x1xf32>
    %cst_9 = arith.constant 6.400000e+01 : f32
    %13 = vector.broadcast %cst_9 : f32 to vector<7x1xf32>
    %14 = arith.divf %12, %13 : vector<7x1xf32>
    %15 = vector.broadcast %14 : vector<7x1xf32> to vector<7x64xf32>
    %16 = arith.subf %10, %15 : vector<7x64xf32>
    %17 = arith.mulf %16, %16 : vector<7x64xf32>
    %cst_10 = arith.constant dense<0.000000e+00> : vector<7xf32>
    %18 = vector.multi_reduction <add>, %17, %cst_10 [1] : vector<7x64xf32> to vector<7xf32>
    %19 = vector.shape_cast %18 : vector<7xf32> to vector<7x1xf32>
    %cst_11 = arith.constant 0.0158730168 : f32
    %20 = vector.broadcast %cst_11 : f32 to vector<7x1xf32>
    %21 = arith.mulf %19, %20 : vector<7x1xf32>
    %22 = math.sqrt %21 : vector<7x1xf32>
    %c0_12 = arith.constant 0 : index
    %c0_13 = arith.constant 0 : index
    %23 = vector.load %arg5[%c0_12, %c0_13] : memref<1x64xf32, #tpu.memory_space<vmem>>, vector<1x64xf32>
    %24 = vector.broadcast %23 : vector<1x64xf32> to vector<7x64xf32>
    %25 = arith.mulf %24, %16 : vector<7x64xf32>
    %cst_14 = arith.constant 9.99999997E-7 : f32
    %26 = vector.broadcast %cst_14 : f32 to vector<7x1xf32>
    %27 = arith.addf %22, %26 : vector<7x1xf32>
    %28 = vector.broadcast %27 : vector<7x1xf32> to vector<7x64xf32>
    %29 = arith.divf %25, %28 : vector<7x64xf32>
    %c0_15 = arith.constant 0 : index
    %c0_16 = arith.constant 0 : index
    %30 = vector.load %arg6[%c0_15, %c0_16] : memref<1x64xf32, #tpu.memory_space<vmem>>, vector<1x64xf32>
    %31 = vector.broadcast %30 : vector<1x64xf32> to vector<7x64xf32>
    %32 = arith.addf %29, %31 : vector<7x64xf32>
    %c0_17 = arith.constant 0 : index
    %c0_18 = arith.constant 0 : index
    %33 = vector.load %arg7[%c0_17, %c0_18] : memref<64x192xf32, #tpu.memory_space<vmem>>, vector<64x192xf32>
    %34 = arith.truncf %32 : vector<7x64xf32> to vector<7x64xbf16>
    %35 = arith.truncf %33 : vector<64x192xf32> to vector<64x192xbf16>
    %cst_19 = arith.constant dense<0.000000e+00> : vector<7x192xf32>
    %36 = tpu.matmul %34, %35, %cst_19 {dimension_numbers = #tpu.dot_dimension_numbers<[1], [0], [0], [1], [0, 0, 1, 1], [], []>} : vector<7x64xbf16>, vector<64x192xbf16>, vector<7x192xf32> -> vector<7x192xf32>
    %c0_20 = arith.constant 0 : index
    %c0_21 = arith.constant 0 : index
    %37 = vector.load %arg8[%c0_20, %c0_21] : memref<1x192xf32, #tpu.memory_space<vmem>>, vector<1x192xf32>
    %38 = vector.broadcast %37 : vector<1x192xf32> to vector<7x192xf32>
    %39 = arith.addf %36, %38 : vector<7x192xf32>
    %cst_22 = arith.constant 0.000000e+00 : f32
    %40 = vector.broadcast %cst_22 : f32 to vector<7x64xf32>
    %41 = vector.extract_strided_slice %39 {offsets = [0, 0], sizes = [7, 8], strides = [1, 1]} : vector<7x192xf32> to vector<7x8xf32>
    %42 = vector.extract_strided_slice %39 {offsets = [0, 64], sizes = [7, 8], strides = [1, 1]} : vector<7x192xf32> to vector<7x8xf32>
    %43 = vector.extract_strided_slice %39 {offsets = [0, 128], sizes = [7, 8], strides = [1, 1]} : vector<7x192xf32> to vector<7x8xf32>
    %44 = arith.truncf %41 : vector<7x8xf32> to vector<7x8xbf16>
    %45 = arith.truncf %42 : vector<7x8xf32> to vector<7x8xbf16>
    %cst_23 = arith.constant dense<0.000000e+00> : vector<7x7xf32>
    %46 = tpu.matmul %44, %45, %cst_23 {dimension_numbers = #tpu.dot_dimension_numbers<[1], [1], [0], [0], [0, 0, 1, 0], [], []>} : vector<7x8xbf16>, vector<7x8xbf16>, vector<7x7xf32> -> vector<7x7xf32>
    %cst_24 = arith.constant 0.353553385 : f32
    %47 = vector.broadcast %cst_24 : f32 to vector<7x7xf32>
    %48 = arith.mulf %46, %47 : vector<7x7xf32>
    %cst_25 = arith.constant dense<0xFF800000> : vector<7xf32>
    %49 = vector.multi_reduction <maximumf>, %48, %cst_25 [1] : vector<7x7xf32> to vector<7xf32>
    %50 = vector.shape_cast %49 : vector<7xf32> to vector<7x1xf32>
    %51 = vector.broadcast %50 : vector<7x1xf32> to vector<7x7xf32>
    %52 = arith.subf %48, %51 : vector<7x7xf32>
    %53 = math.exp %52 : vector<7x7xf32>
    %cst_26 = arith.constant dense<0.000000e+00> : vector<7xf32>
    %54 = vector.multi_reduction <add>, %53, %cst_26 [1] : vector<7x7xf32> to vector<7xf32>
    %55 = vector.shape_cast %54 : vector<7xf32> to vector<7x1xf32>
    %56 = vector.broadcast %55 : vector<7x1xf32> to vector<7x7xf32>
    %57 = arith.divf %53, %56 : vector<7x7xf32>
    %58 = arith.truncf %57 : vector<7x7xf32> to vector<7x7xbf16>
    %59 = arith.truncf %43 : vector<7x8xf32> to vector<7x8xbf16>
    %cst_27 = arith.constant dense<0.000000e+00> : vector<7x8xf32>
    %60 = tpu.matmul %58, %59, %cst_27 {dimension_numbers = #tpu.dot_dimension_numbers<[1], [0], [0], [1], [0, 0, 1, 1], [], []>} : vector<7x7xbf16>, vector<7x8xbf16>, vector<7x8xf32> -> vector<7x8xf32>
    %c0_28 = arith.constant 0 : index
    %c0_29 = arith.constant 0 : index
    %61 = vector.load %arg9[%c0_28, %c0_29] : memref<64x64xf32, #tpu.memory_space<vmem>>, vector<8x64xf32>
    %62 = arith.truncf %60 : vector<7x8xf32> to vector<7x8xbf16>
    %63 = arith.truncf %61 : vector<8x64xf32> to vector<8x64xbf16>
    %cst_30 = arith.constant dense<0.000000e+00> : vector<7x64xf32>
    %64 = tpu.matmul %62, %63, %cst_30 {dimension_numbers = #tpu.dot_dimension_numbers<[1], [0], [0], [1], [0, 0, 1, 1], [], []>} : vector<7x8xbf16>, vector<8x64xbf16>, vector<7x64xf32> -> vector<7x64xf32>
    %65 = arith.addf %40, %64 : vector<7x64xf32>
    %66 = vector.extract_strided_slice %39 {offsets = [0, 8], sizes = [7, 8], strides = [1, 1]} : vector<7x192xf32> to vector<7x8xf32>
    %67 = vector.extract_strided_slice %39 {offsets = [0, 72], sizes = [7, 8], strides = [1, 1]} : vector<7x192xf32> to vector<7x8xf32>
    %68 = vector.extract_strided_slice %39 {offsets = [0, 136], sizes = [7, 8], strides = [1, 1]} : vector<7x192xf32> to vector<7x8xf32>
    %69 = arith.truncf %66 : vector<7x8xf32> to vector<7x8xbf16>
    %70 = arith.truncf %67 : vector<7x8xf32> to vector<7x8xbf16>
    %cst_31 = arith.constant dense<0.000000e+00> : vector<7x7xf32>
    %71 = tpu.matmul %69, %70, %cst_31 {dimension_numbers = #tpu.dot_dimension_numbers<[1], [1], [0], [0], [0, 0, 1, 0], [], []>} : vector<7x8xbf16>, vector<7x8xbf16>, vector<7x7xf32> -> vector<7x7xf32>
    %cst_32 = arith.constant 0.353553385 : f32
    %72 = vector.broadcast %cst_32 : f32 to vector<7x7xf32>
    %73 = arith.mulf %71, %72 : vector<7x7xf32>
    %cst_33 = arith.constant dense<0xFF800000> : vector<7xf32>
    %74 = vector.multi_reduction <maximumf>, %73, %cst_33 [1] : vector<7x7xf32> to vector<7xf32>
    %75 = vector.shape_cast %74 : vector<7xf32> to vector<7x1xf32>
    %76 = vector.broadcast %75 : vector<7x1xf32> to vector<7x7xf32>
    %77 = arith.subf %73, %76 : vector<7x7xf32>
    %78 = math.exp %77 : vector<7x7xf32>
    %cst_34 = arith.constant dense<0.000000e+00> : vector<7xf32>
    %79 = vector.multi_reduction <add>, %78, %cst_34 [1] : vector<7x7xf32> to vector<7xf32>
    %80 = vector.shape_cast %79 : vector<7xf32> to vector<7x1xf32>
    %81 = vector.broadcast %80 : vector<7x1xf32> to vector<7x7xf32>
    %82 = arith.divf %78, %81 : vector<7x7xf32>
    %83 = arith.truncf %82 : vector<7x7xf32> to vector<7x7xbf16>
    %84 = arith.truncf %68 : vector<7x8xf32> to vector<7x8xbf16>
    %cst_35 = arith.constant dense<0.000000e+00> : vector<7x8xf32>
    %85 = tpu.matmul %83, %84, %cst_35 {dimension_numbers = #tpu.dot_dimension_numbers<[1], [0], [0], [1], [0, 0, 1, 1], [], []>} : vector<7x7xbf16>, vector<7x8xbf16>, vector<7x8xf32> -> vector<7x8xf32>
    %c8 = arith.constant 8 : index
    %c0_36 = arith.constant 0 : index
    %86 = vector.load %arg9[%c8, %c0_36] : memref<64x64xf32, #tpu.memory_space<vmem>>, vector<8x64xf32>
    %87 = arith.truncf %85 : vector<7x8xf32> to vector<7x8xbf16>
    %88 = arith.truncf %86 : vector<8x64xf32> to vector<8x64xbf16>
    %cst_37 = arith.constant dense<0.000000e+00> : vector<7x64xf32>
    %89 = tpu.matmul %87, %88, %cst_37 {dimension_numbers = #tpu.dot_dimension_numbers<[1], [0], [0], [1], [0, 0, 1, 1], [], []>} : vector<7x8xbf16>, vector<8x64xbf16>, vector<7x64xf32> -> vector<7x64xf32>
    %90 = arith.addf %65, %89 : vector<7x64xf32>
    %91 = vector.extract_strided_slice %39 {offsets = [0, 16], sizes = [7, 8], strides = [1, 1]} : vector<7x192xf32> to vector<7x8xf32>
    %92 = vector.extract_strided_slice %39 {offsets = [0, 80], sizes = [7, 8], strides = [1, 1]} : vector<7x192xf32> to vector<7x8xf32>
    %93 = vector.extract_strided_slice %39 {offsets = [0, 144], sizes = [7, 8], strides = [1, 1]} : vector<7x192xf32> to vector<7x8xf32>
    %94 = arith.truncf %91 : vector<7x8xf32> to vector<7x8xbf16>
    %95 = arith.truncf %92 : vector<7x8xf32> to vector<7x8xbf16>
    %cst_38 = arith.constant dense<0.000000e+00> : vector<7x7xf32>
    %96 = tpu.matmul %94, %95, %cst_38 {dimension_numbers = #tpu.dot_dimension_numbers<[1], [1], [0], [0], [0, 0, 1, 0], [], []>} : vector<7x8xbf16>, vector<7x8xbf16>, vector<7x7xf32> -> vector<7x7xf32>
    %cst_39 = arith.constant 0.353553385 : f32
    %97 = vector.broadcast %cst_39 : f32 to vector<7x7xf32>
    %98 = arith.mulf %96, %97 : vector<7x7xf32>
    %cst_40 = arith.constant dense<0xFF800000> : vector<7xf32>
    %99 = vector.multi_reduction <maximumf>, %98, %cst_40 [1] : vector<7x7xf32> to vector<7xf32>
    %100 = vector.shape_cast %99 : vector<7xf32> to vector<7x1xf32>
    %101 = vector.broadcast %100 : vector<7x1xf32> to vector<7x7xf32>
    %102 = arith.subf %98, %101 : vector<7x7xf32>
    %103 = math.exp %102 : vector<7x7xf32>
    %cst_41 = arith.constant dense<0.000000e+00> : vector<7xf32>
    %104 = vector.multi_reduction <add>, %103, %cst_41 [1] : vector<7x7xf32> to vector<7xf32>
    %105 = vector.shape_cast %104 : vector<7xf32> to vector<7x1xf32>
    %106 = vector.broadcast %105 : vector<7x1xf32> to vector<7x7xf32>
    %107 = arith.divf %103, %106 : vector<7x7xf32>
    %108 = arith.truncf %107 : vector<7x7xf32> to vector<7x7xbf16>
    %109 = arith.truncf %93 : vector<7x8xf32> to vector<7x8xbf16>
    %cst_42 = arith.constant dense<0.000000e+00> : vector<7x8xf32>
    %110 = tpu.matmul %108, %109, %cst_42 {dimension_numbers = #tpu.dot_dimension_numbers<[1], [0], [0], [1], [0, 0, 1, 1], [], []>} : vector<7x7xbf16>, vector<7x8xbf16>, vector<7x8xf32> -> vector<7x8xf32>
    %c16 = arith.constant 16 : index
    %c0_43 = arith.constant 0 : index
    %111 = vector.load %arg9[%c16, %c0_43] : memref<64x64xf32, #tpu.memory_space<vmem>>, vector<8x64xf32>
    %112 = arith.truncf %110 : vector<7x8xf32> to vector<7x8xbf16>
    %113 = arith.truncf %111 : vector<8x64xf32> to vector<8x64xbf16>
    %cst_44 = arith.constant dense<0.000000e+00> : vector<7x64xf32>
    %114 = tpu.matmul %112, %113, %cst_44 {dimension_numbers = #tpu.dot_dimension_numbers<[1], [0], [0], [1], [0, 0, 1, 1], [], []>} : vector<7x8xbf16>, vector<8x64xbf16>, vector<7x64xf32> -> vector<7x64xf32>
    %115 = arith.addf %90, %114 : vector<7x64xf32>
    %116 = vector.extract_strided_slice %39 {offsets = [0, 24], sizes = [7, 8], strides = [1, 1]} : vector<7x192xf32> to vector<7x8xf32>
    %117 = vector.extract_strided_slice %39 {offsets = [0, 88], sizes = [7, 8], strides = [1, 1]} : vector<7x192xf32> to vector<7x8xf32>
    %118 = vector.extract_strided_slice %39 {offsets = [0, 152], sizes = [7, 8], strides = [1, 1]} : vector<7x192xf32> to vector<7x8xf32>
    %119 = arith.truncf %116 : vector<7x8xf32> to vector<7x8xbf16>
    %120 = arith.truncf %117 : vector<7x8xf32> to vector<7x8xbf16>
    %cst_45 = arith.constant dense<0.000000e+00> : vector<7x7xf32>
    %121 = tpu.matmul %119, %120, %cst_45 {dimension_numbers = #tpu.dot_dimension_numbers<[1], [1], [0], [0], [0, 0, 1, 0], [], []>} : vector<7x8xbf16>, vector<7x8xbf16>, vector<7x7xf32> -> vector<7x7xf32>
    %cst_46 = arith.constant 0.353553385 : f32
    %122 = vector.broadcast %cst_46 : f32 to vector<7x7xf32>
    %123 = arith.mulf %121, %122 : vector<7x7xf32>
    %cst_47 = arith.constant dense<0xFF800000> : vector<7xf32>
    %124 = vector.multi_reduction <maximumf>, %123, %cst_47 [1] : vector<7x7xf32> to vector<7xf32>
    %125 = vector.shape_cast %124 : vector<7xf32> to vector<7x1xf32>
    %126 = vector.broadcast %125 : vector<7x1xf32> to vector<7x7xf32>
    %127 = arith.subf %123, %126 : vector<7x7xf32>
    %128 = math.exp %127 : vector<7x7xf32>
    %cst_48 = arith.constant dense<0.000000e+00> : vector<7xf32>
    %129 = vector.multi_reduction <add>, %128, %cst_48 [1] : vector<7x7xf32> to vector<7xf32>
    %130 = vector.shape_cast %129 : vector<7xf32> to vector<7x1xf32>
    %131 = vector.broadcast %130 : vector<7x1xf32> to vector<7x7xf32>
    %132 = arith.divf %128, %131 : vector<7x7xf32>
    %133 = arith.truncf %132 : vector<7x7xf32> to vector<7x7xbf16>
    %134 = arith.truncf %118 : vector<7x8xf32> to vector<7x8xbf16>
    %cst_49 = arith.constant dense<0.000000e+00> : vector<7x8xf32>
    %135 = tpu.matmul %133, %134, %cst_49 {dimension_numbers = #tpu.dot_dimension_numbers<[1], [0], [0], [1], [0, 0, 1, 1], [], []>} : vector<7x7xbf16>, vector<7x8xbf16>, vector<7x8xf32> -> vector<7x8xf32>
    %c24 = arith.constant 24 : index
    %c0_50 = arith.constant 0 : index
    %136 = vector.load %arg9[%c24, %c0_50] : memref<64x64xf32, #tpu.memory_space<vmem>>, vector<8x64xf32>
    %137 = arith.truncf %135 : vector<7x8xf32> to vector<7x8xbf16>
    %138 = arith.truncf %136 : vector<8x64xf32> to vector<8x64xbf16>
    %cst_51 = arith.constant dense<0.000000e+00> : vector<7x64xf32>
    %139 = tpu.matmul %137, %138, %cst_51 {dimension_numbers = #tpu.dot_dimension_numbers<[1], [0], [0], [1], [0, 0, 1, 1], [], []>} : vector<7x8xbf16>, vector<8x64xbf16>, vector<7x64xf32> -> vector<7x64xf32>
    %140 = arith.addf %115, %139 : vector<7x64xf32>
    %141 = vector.extract_strided_slice %39 {offsets = [0, 32], sizes = [7, 8], strides = [1, 1]} : vector<7x192xf32> to vector<7x8xf32>
    %142 = vector.extract_strided_slice %39 {offsets = [0, 96], sizes = [7, 8], strides = [1, 1]} : vector<7x192xf32> to vector<7x8xf32>
    %143 = vector.extract_strided_slice %39 {offsets = [0, 160], sizes = [7, 8], strides = [1, 1]} : vector<7x192xf32> to vector<7x8xf32>
    %144 = arith.truncf %141 : vector<7x8xf32> to vector<7x8xbf16>
    %145 = arith.truncf %142 : vector<7x8xf32> to vector<7x8xbf16>
    %cst_52 = arith.constant dense<0.000000e+00> : vector<7x7xf32>
    %146 = tpu.matmul %144, %145, %cst_52 {dimension_numbers = #tpu.dot_dimension_numbers<[1], [1], [0], [0], [0, 0, 1, 0], [], []>} : vector<7x8xbf16>, vector<7x8xbf16>, vector<7x7xf32> -> vector<7x7xf32>
    %cst_53 = arith.constant 0.353553385 : f32
    %147 = vector.broadcast %cst_53 : f32 to vector<7x7xf32>
    %148 = arith.mulf %146, %147 : vector<7x7xf32>
    %cst_54 = arith.constant dense<0xFF800000> : vector<7xf32>
    %149 = vector.multi_reduction <maximumf>, %148, %cst_54 [1] : vector<7x7xf32> to vector<7xf32>
    %150 = vector.shape_cast %149 : vector<7xf32> to vector<7x1xf32>
    %151 = vector.broadcast %150 : vector<7x1xf32> to vector<7x7xf32>
    %152 = arith.subf %148, %151 : vector<7x7xf32>
    %153 = math.exp %152 : vector<7x7xf32>
    %cst_55 = arith.constant dense<0.000000e+00> : vector<7xf32>
    %154 = vector.multi_reduction <add>, %153, %cst_55 [1] : vector<7x7xf32> to vector<7xf32>
    %155 = vector.shape_cast %154 : vector<7xf32> to vector<7x1xf32>
    %156 = vector.broadcast %155 : vector<7x1xf32> to vector<7x7xf32>
    %157 = arith.divf %153, %156 : vector<7x7xf32>
    %158 = arith.truncf %157 : vector<7x7xf32> to vector<7x7xbf16>
    %159 = arith.truncf %143 : vector<7x8xf32> to vector<7x8xbf16>
    %cst_56 = arith.constant dense<0.000000e+00> : vector<7x8xf32>
    %160 = tpu.matmul %158, %159, %cst_56 {dimension_numbers = #tpu.dot_dimension_numbers<[1], [0], [0], [1], [0, 0, 1, 1], [], []>} : vector<7x7xbf16>, vector<7x8xbf16>, vector<7x8xf32> -> vector<7x8xf32>
    %c32 = arith.constant 32 : index
    %c0_57 = arith.constant 0 : index
    %161 = vector.load %arg9[%c32, %c0_57] : memref<64x64xf32, #tpu.memory_space<vmem>>, vector<8x64xf32>
    %162 = arith.truncf %160 : vector<7x8xf32> to vector<7x8xbf16>
    %163 = arith.truncf %161 : vector<8x64xf32> to vector<8x64xbf16>
    %cst_58 = arith.constant dense<0.000000e+00> : vector<7x64xf32>
    %164 = tpu.matmul %162, %163, %cst_58 {dimension_numbers = #tpu.dot_dimension_numbers<[1], [0], [0], [1], [0, 0, 1, 1], [], []>} : vector<7x8xbf16>, vector<8x64xbf16>, vector<7x64xf32> -> vector<7x64xf32>
    %165 = arith.addf %140, %164 : vector<7x64xf32>
    %166 = vector.extract_strided_slice %39 {offsets = [0, 40], sizes = [7, 8], strides = [1, 1]} : vector<7x192xf32> to vector<7x8xf32>
    %167 = vector.extract_strided_slice %39 {offsets = [0, 104], sizes = [7, 8], strides = [1, 1]} : vector<7x192xf32> to vector<7x8xf32>
    %168 = vector.extract_strided_slice %39 {offsets = [0, 168], sizes = [7, 8], strides = [1, 1]} : vector<7x192xf32> to vector<7x8xf32>
    %169 = arith.truncf %166 : vector<7x8xf32> to vector<7x8xbf16>
    %170 = arith.truncf %167 : vector<7x8xf32> to vector<7x8xbf16>
    %cst_59 = arith.constant dense<0.000000e+00> : vector<7x7xf32>
    %171 = tpu.matmul %169, %170, %cst_59 {dimension_numbers = #tpu.dot_dimension_numbers<[1], [1], [0], [0], [0, 0, 1, 0], [], []>} : vector<7x8xbf16>, vector<7x8xbf16>, vector<7x7xf32> -> vector<7x7xf32>
    %cst_60 = arith.constant 0.353553385 : f32
    %172 = vector.broadcast %cst_60 : f32 to vector<7x7xf32>
    %173 = arith.mulf %171, %172 : vector<7x7xf32>
    %cst_61 = arith.constant dense<0xFF800000> : vector<7xf32>
    %174 = vector.multi_reduction <maximumf>, %173, %cst_61 [1] : vector<7x7xf32> to vector<7xf32>
    %175 = vector.shape_cast %174 : vector<7xf32> to vector<7x1xf32>
    %176 = vector.broadcast %175 : vector<7x1xf32> to vector<7x7xf32>
    %177 = arith.subf %173, %176 : vector<7x7xf32>
    %178 = math.exp %177 : vector<7x7xf32>
    %cst_62 = arith.constant dense<0.000000e+00> : vector<7xf32>
    %179 = vector.multi_reduction <add>, %178, %cst_62 [1] : vector<7x7xf32> to vector<7xf32>
    %180 = vector.shape_cast %179 : vector<7xf32> to vector<7x1xf32>
    %181 = vector.broadcast %180 : vector<7x1xf32> to vector<7x7xf32>
    %182 = arith.divf %178, %181 : vector<7x7xf32>
    %183 = arith.truncf %182 : vector<7x7xf32> to vector<7x7xbf16>
    %184 = arith.truncf %168 : vector<7x8xf32> to vector<7x8xbf16>
    %cst_63 = arith.constant dense<0.000000e+00> : vector<7x8xf32>
    %185 = tpu.matmul %183, %184, %cst_63 {dimension_numbers = #tpu.dot_dimension_numbers<[1], [0], [0], [1], [0, 0, 1, 1], [], []>} : vector<7x7xbf16>, vector<7x8xbf16>, vector<7x8xf32> -> vector<7x8xf32>
    %c40 = arith.constant 40 : index
    %c0_64 = arith.constant 0 : index
    %186 = vector.load %arg9[%c40, %c0_64] : memref<64x64xf32, #tpu.memory_space<vmem>>, vector<8x64xf32>
    %187 = arith.truncf %185 : vector<7x8xf32> to vector<7x8xbf16>
    %188 = arith.truncf %186 : vector<8x64xf32> to vector<8x64xbf16>
    %cst_65 = arith.constant dense<0.000000e+00> : vector<7x64xf32>
    %189 = tpu.matmul %187, %188, %cst_65 {dimension_numbers = #tpu.dot_dimension_numbers<[1], [0], [0], [1], [0, 0, 1, 1], [], []>} : vector<7x8xbf16>, vector<8x64xbf16>, vector<7x64xf32> -> vector<7x64xf32>
    %190 = arith.addf %165, %189 : vector<7x64xf32>
    %191 = vector.extract_strided_slice %39 {offsets = [0, 48], sizes = [7, 8], strides = [1, 1]} : vector<7x192xf32> to vector<7x8xf32>
    %192 = vector.extract_strided_slice %39 {offsets = [0, 112], sizes = [7, 8], strides = [1, 1]} : vector<7x192xf32> to vector<7x8xf32>
    %193 = vector.extract_strided_slice %39 {offsets = [0, 176], sizes = [7, 8], strides = [1, 1]} : vector<7x192xf32> to vector<7x8xf32>
    %194 = arith.truncf %191 : vector<7x8xf32> to vector<7x8xbf16>
    %195 = arith.truncf %192 : vector<7x8xf32> to vector<7x8xbf16>
    %cst_66 = arith.constant dense<0.000000e+00> : vector<7x7xf32>
    %196 = tpu.matmul %194, %195, %cst_66 {dimension_numbers = #tpu.dot_dimension_numbers<[1], [1], [0], [0], [0, 0, 1, 0], [], []>} : vector<7x8xbf16>, vector<7x8xbf16>, vector<7x7xf32> -> vector<7x7xf32>
    %cst_67 = arith.constant 0.353553385 : f32
    %197 = vector.broadcast %cst_67 : f32 to vector<7x7xf32>
    %198 = arith.mulf %196, %197 : vector<7x7xf32>
    %cst_68 = arith.constant dense<0xFF800000> : vector<7xf32>
    %199 = vector.multi_reduction <maximumf>, %198, %cst_68 [1] : vector<7x7xf32> to vector<7xf32>
    %200 = vector.shape_cast %199 : vector<7xf32> to vector<7x1xf32>
    %201 = vector.broadcast %200 : vector<7x1xf32> to vector<7x7xf32>
    %202 = arith.subf %198, %201 : vector<7x7xf32>
    %203 = math.exp %202 : vector<7x7xf32>
    %cst_69 = arith.constant dense<0.000000e+00> : vector<7xf32>
    %204 = vector.multi_reduction <add>, %203, %cst_69 [1] : vector<7x7xf32> to vector<7xf32>
    %205 = vector.shape_cast %204 : vector<7xf32> to vector<7x1xf32>
    %206 = vector.broadcast %205 : vector<7x1xf32> to vector<7x7xf32>
    %207 = arith.divf %203, %206 : vector<7x7xf32>
    %208 = arith.truncf %207 : vector<7x7xf32> to vector<7x7xbf16>
    %209 = arith.truncf %193 : vector<7x8xf32> to vector<7x8xbf16>
    %cst_70 = arith.constant dense<0.000000e+00> : vector<7x8xf32>
    %210 = tpu.matmul %208, %209, %cst_70 {dimension_numbers = #tpu.dot_dimension_numbers<[1], [0], [0], [1], [0, 0, 1, 1], [], []>} : vector<7x7xbf16>, vector<7x8xbf16>, vector<7x8xf32> -> vector<7x8xf32>
    %c48 = arith.constant 48 : index
    %c0_71 = arith.constant 0 : index
    %211 = vector.load %arg9[%c48, %c0_71] : memref<64x64xf32, #tpu.memory_space<vmem>>, vector<8x64xf32>
    %212 = arith.truncf %210 : vector<7x8xf32> to vector<7x8xbf16>
    %213 = arith.truncf %211 : vector<8x64xf32> to vector<8x64xbf16>
    %cst_72 = arith.constant dense<0.000000e+00> : vector<7x64xf32>
    %214 = tpu.matmul %212, %213, %cst_72 {dimension_numbers = #tpu.dot_dimension_numbers<[1], [0], [0], [1], [0, 0, 1, 1], [], []>} : vector<7x8xbf16>, vector<8x64xbf16>, vector<7x64xf32> -> vector<7x64xf32>
    %215 = arith.addf %190, %214 : vector<7x64xf32>
    %216 = vector.extract_strided_slice %39 {offsets = [0, 56], sizes = [7, 8], strides = [1, 1]} : vector<7x192xf32> to vector<7x8xf32>
    %217 = vector.extract_strided_slice %39 {offsets = [0, 120], sizes = [7, 8], strides = [1, 1]} : vector<7x192xf32> to vector<7x8xf32>
    %218 = vector.extract_strided_slice %39 {offsets = [0, 184], sizes = [7, 8], strides = [1, 1]} : vector<7x192xf32> to vector<7x8xf32>
    %219 = arith.truncf %216 : vector<7x8xf32> to vector<7x8xbf16>
    %220 = arith.truncf %217 : vector<7x8xf32> to vector<7x8xbf16>
    %cst_73 = arith.constant dense<0.000000e+00> : vector<7x7xf32>
    %221 = tpu.matmul %219, %220, %cst_73 {dimension_numbers = #tpu.dot_dimension_numbers<[1], [1], [0], [0], [0, 0, 1, 0], [], []>} : vector<7x8xbf16>, vector<7x8xbf16>, vector<7x7xf32> -> vector<7x7xf32>
    %cst_74 = arith.constant 0.353553385 : f32
    %222 = vector.broadcast %cst_74 : f32 to vector<7x7xf32>
    %223 = arith.mulf %221, %222 : vector<7x7xf32>
    %cst_75 = arith.constant dense<0xFF800000> : vector<7xf32>
    %224 = vector.multi_reduction <maximumf>, %223, %cst_75 [1] : vector<7x7xf32> to vector<7xf32>
    %225 = vector.shape_cast %224 : vector<7xf32> to vector<7x1xf32>
    %226 = vector.broadcast %225 : vector<7x1xf32> to vector<7x7xf32>
    %227 = arith.subf %223, %226 : vector<7x7xf32>
    %228 = math.exp %227 : vector<7x7xf32>
    %cst_76 = arith.constant dense<0.000000e+00> : vector<7xf32>
    %229 = vector.multi_reduction <add>, %228, %cst_76 [1] : vector<7x7xf32> to vector<7xf32>
    %230 = vector.shape_cast %229 : vector<7xf32> to vector<7x1xf32>
    %231 = vector.broadcast %230 : vector<7x1xf32> to vector<7x7xf32>
    %232 = arith.divf %228, %231 : vector<7x7xf32>
    %233 = arith.truncf %232 : vector<7x7xf32> to vector<7x7xbf16>
    %234 = arith.truncf %218 : vector<7x8xf32> to vector<7x8xbf16>
    %cst_77 = arith.constant dense<0.000000e+00> : vector<7x8xf32>
    %235 = tpu.matmul %233, %234, %cst_77 {dimension_numbers = #tpu.dot_dimension_numbers<[1], [0], [0], [1], [0, 0, 1, 1], [], []>} : vector<7x7xbf16>, vector<7x8xbf16>, vector<7x8xf32> -> vector<7x8xf32>
    %c56 = arith.constant 56 : index
    %c0_78 = arith.constant 0 : index
    %236 = vector.load %arg9[%c56, %c0_78] : memref<64x64xf32, #tpu.memory_space<vmem>>, vector<8x64xf32>
    %237 = arith.truncf %235 : vector<7x8xf32> to vector<7x8xbf16>
    %238 = arith.truncf %236 : vector<8x64xf32> to vector<8x64xbf16>
    %cst_79 = arith.constant dense<0.000000e+00> : vector<7x64xf32>
    %239 = tpu.matmul %237, %238, %cst_79 {dimension_numbers = #tpu.dot_dimension_numbers<[1], [0], [0], [1], [0, 0, 1, 1], [], []>} : vector<7x8xbf16>, vector<8x64xbf16>, vector<7x64xf32> -> vector<7x64xf32>
    %240 = arith.addf %215, %239 : vector<7x64xf32>
    %c0_80 = arith.constant 0 : index
    %c0_81 = arith.constant 0 : index
    %241 = vector.load %arg10[%c0_80, %c0_81] : memref<1x64xf32, #tpu.memory_space<vmem>>, vector<1x64xf32>
    %242 = vector.broadcast %241 : vector<1x64xf32> to vector<7x64xf32>
    %243 = arith.addf %240, %242 : vector<7x64xf32>
    %244 = arith.addf %10, %243 : vector<7x64xf32>
    %cst_82 = arith.constant dense<0.000000e+00> : vector<7xf32>
    %245 = vector.multi_reduction <add>, %244, %cst_82 [1] : vector<7x64xf32> to vector<7xf32>
    %246 = vector.shape_cast %245 : vector<7xf32> to vector<7x1xf32>
    %cst_83 = arith.constant 6.400000e+01 : f32
    %247 = vector.broadcast %cst_83 : f32 to vector<7x1xf32>
    %248 = arith.divf %246, %247 : vector<7x1xf32>
    %249 = vector.broadcast %248 : vector<7x1xf32> to vector<7x64xf32>
    %250 = arith.subf %244, %249 : vector<7x64xf32>
    %251 = arith.mulf %250, %250 : vector<7x64xf32>
    %cst_84 = arith.constant dense<0.000000e+00> : vector<7xf32>
    %252 = vector.multi_reduction <add>, %251, %cst_84 [1] : vector<7x64xf32> to vector<7xf32>
    %253 = vector.shape_cast %252 : vector<7xf32> to vector<7x1xf32>
    %cst_85 = arith.constant 0.0158730168 : f32
    %254 = vector.broadcast %cst_85 : f32 to vector<7x1xf32>
    %255 = arith.mulf %253, %254 : vector<7x1xf32>
    %256 = math.sqrt %255 : vector<7x1xf32>
    %c0_86 = arith.constant 0 : index
    %c0_87 = arith.constant 0 : index
    %257 = vector.load %arg11[%c0_86, %c0_87] : memref<1x64xf32, #tpu.memory_space<vmem>>, vector<1x64xf32>
    %258 = vector.broadcast %257 : vector<1x64xf32> to vector<7x64xf32>
    %259 = arith.mulf %258, %250 : vector<7x64xf32>
    %cst_88 = arith.constant 9.99999997E-7 : f32
    %260 = vector.broadcast %cst_88 : f32 to vector<7x1xf32>
    %261 = arith.addf %256, %260 : vector<7x1xf32>
    %262 = vector.broadcast %261 : vector<7x1xf32> to vector<7x64xf32>
    %263 = arith.divf %259, %262 : vector<7x64xf32>
    %c0_89 = arith.constant 0 : index
    %c0_90 = arith.constant 0 : index
    %264 = vector.load %arg12[%c0_89, %c0_90] : memref<1x64xf32, #tpu.memory_space<vmem>>, vector<1x64xf32>
    %265 = vector.broadcast %264 : vector<1x64xf32> to vector<7x64xf32>
    %266 = arith.addf %263, %265 : vector<7x64xf32>
    %c0_91 = arith.constant 0 : index
    %c0_92 = arith.constant 0 : index
    %267 = vector.load %arg13[%c0_91, %c0_92] : memref<64x128xf32, #tpu.memory_space<vmem>>, vector<64x128xf32>
    %268 = arith.truncf %266 : vector<7x64xf32> to vector<7x64xbf16>
    %269 = arith.truncf %267 : vector<64x128xf32> to vector<64x128xbf16>
    %cst_93 = arith.constant dense<0.000000e+00> : vector<7x128xf32>
    %270 = tpu.matmul %268, %269, %cst_93 {dimension_numbers = #tpu.dot_dimension_numbers<[1], [0], [0], [1], [0, 0, 1, 1], [], []>} : vector<7x64xbf16>, vector<64x128xbf16>, vector<7x128xf32> -> vector<7x128xf32>
    %c0_94 = arith.constant 0 : index
    %c0_95 = arith.constant 0 : index
    %271 = vector.load %arg14[%c0_94, %c0_95] : memref<1x128xf32, #tpu.memory_space<vmem>>, vector<1x128xf32>
    %272 = vector.broadcast %271 : vector<1x128xf32> to vector<7x128xf32>
    %273 = arith.addf %270, %272 : vector<7x128xf32>
    %cst_96 = arith.constant 0.000000e+00 : f32
    %274 = vector.broadcast %cst_96 : f32 to vector<7x128xf32>
    %275 = arith.maximumf %273, %274 : vector<7x128xf32>
    %c0_97 = arith.constant 0 : index
    %c0_98 = arith.constant 0 : index
    %276 = vector.load %arg15[%c0_97, %c0_98] : memref<128x64xf32, #tpu.memory_space<vmem>>, vector<128x64xf32>
    %277 = arith.truncf %275 : vector<7x128xf32> to vector<7x128xbf16>
    %278 = arith.truncf %276 : vector<128x64xf32> to vector<128x64xbf16>
    %cst_99 = arith.constant dense<0.000000e+00> : vector<7x64xf32>
    %279 = tpu.matmul %277, %278, %cst_99 {dimension_numbers = #tpu.dot_dimension_numbers<[1], [0], [0], [1], [0, 0, 1, 1], [], []>} : vector<7x128xbf16>, vector<128x64xbf16>, vector<7x64xf32> -> vector<7x64xf32>
    %c0_100 = arith.constant 0 : index
    %c0_101 = arith.constant 0 : index
    %280 = vector.load %arg16[%c0_100, %c0_101] : memref<1x64xf32, #tpu.memory_space<vmem>>, vector<1x64xf32>
    %281 = vector.broadcast %280 : vector<1x64xf32> to vector<7x64xf32>
    %282 = arith.addf %279, %281 : vector<7x64xf32>
    %283 = arith.addf %244, %282 : vector<7x64xf32>
    %cst_102 = arith.constant dense<0.000000e+00> : vector<7xf32>
    %284 = vector.multi_reduction <add>, %283, %cst_102 [1] : vector<7x64xf32> to vector<7xf32>
    %285 = vector.shape_cast %284 : vector<7xf32> to vector<7x1xf32>
    %cst_103 = arith.constant 6.400000e+01 : f32
    %286 = vector.broadcast %cst_103 : f32 to vector<7x1xf32>
    %287 = arith.divf %285, %286 : vector<7x1xf32>
    %288 = vector.broadcast %287 : vector<7x1xf32> to vector<7x64xf32>
    %289 = arith.subf %283, %288 : vector<7x64xf32>
    %290 = arith.mulf %289, %289 : vector<7x64xf32>
    %cst_104 = arith.constant dense<0.000000e+00> : vector<7xf32>
    %291 = vector.multi_reduction <add>, %290, %cst_104 [1] : vector<7x64xf32> to vector<7xf32>
    %292 = vector.shape_cast %291 : vector<7xf32> to vector<7x1xf32>
    %cst_105 = arith.constant 0.0158730168 : f32
    %293 = vector.broadcast %cst_105 : f32 to vector<7x1xf32>
    %294 = arith.mulf %292, %293 : vector<7x1xf32>
    %295 = math.sqrt %294 : vector<7x1xf32>
    %c0_106 = arith.constant 0 : index
    %c0_107 = arith.constant 0 : index
    %296 = vector.load %arg17[%c0_106, %c0_107] : memref<1x64xf32, #tpu.memory_space<vmem>>, vector<1x64xf32>
    %297 = vector.broadcast %296 : vector<1x64xf32> to vector<7x64xf32>
    %298 = arith.mulf %297, %289 : vector<7x64xf32>
    %cst_108 = arith.constant 9.99999997E-7 : f32
    %299 = vector.broadcast %cst_108 : f32 to vector<7x1xf32>
    %300 = arith.addf %295, %299 : vector<7x1xf32>
    %301 = vector.broadcast %300 : vector<7x1xf32> to vector<7x64xf32>
    %302 = arith.divf %298, %301 : vector<7x64xf32>
    %c0_109 = arith.constant 0 : index
    %c0_110 = arith.constant 0 : index
    %303 = vector.load %arg18[%c0_109, %c0_110] : memref<1x64xf32, #tpu.memory_space<vmem>>, vector<1x64xf32>
    %304 = vector.broadcast %303 : vector<1x64xf32> to vector<7x64xf32>
    %305 = arith.addf %302, %304 : vector<7x64xf32>
    %c0_111 = arith.constant 0 : index
    %c0_112 = arith.constant 0 : index
    %c0_113 = arith.constant 0 : index
    %306 = vector.load %arg19[%c0_111, %c0_112, %c0_113] : memref<1x7x64xf32, #tpu.memory_space<vmem>>, vector<1x7x64xf32>
    %307 = vector.shape_cast %306 : vector<1x7x64xf32> to vector<7x64xf32>
    %308 = vector.shape_cast %305 : vector<7x64xf32> to vector<1x7x64xf32>
    tpu.vector_store %arg19[%c0_111, %c0_112, %c0_113], %308 {strides = array<i32>} : memref<1x7x64xf32, #tpu.memory_space<vmem>>, vector<1x7x64xf32>,
    return
  }
  func.func @transform_0(%arg0: i32) -> (i32, i32, i32) {
    %c0_i32 = arith.constant 0 : i32
    %c0_i32_0 = arith.constant 0 : i32
    %c0_i32_1 = arith.constant 0 : i32
    return %arg0, %c0_i32, %c0_i32_0 : i32, i32, i32
  }
  func.func @transform_1(%arg0: i32) -> (i32, i32) {
    %c0_i32 = arith.constant 0 : i32
    %c0_i32_0 = arith.constant 0 : i32
    %c0_i32_1 = arith.constant 0 : i32
    return %c0_i32, %c0_i32_0 : i32, i32
  }
  func.func @transform_2(%arg0: i32) -> (i32, i32) {
    %c0_i32 = arith.constant 0 : i32
    %c0_i32_0 = arith.constant 0 : i32
    %c0_i32_1 = arith.constant 0 : i32
    return %c0_i32, %c0_i32_0 : i32, i32
  }
  func.func @transform_3(%arg0: i32) -> (i32, i32) {
    %c0_i32 = arith.constant 0 : i32
    %c0_i32_0 = arith.constant 0 : i32
    %c0_i32_1 = arith.constant 0 : i32
    return %c0_i32, %c0_i32_0 : i32, i32
  }
  func.func @transform_4(%arg0: i32) -> (i32, i32) {
    %c0_i32 = arith.constant 0 : i32
    %c0_i32_0 = arith.constant 0 : i32
    %c0_i32_1 = arith.constant 0 : i32
    return %c0_i32, %c0_i32_0 : i32, i32
  }
  func.func @transform_5(%arg0: i32) -> (i32, i32) {
    %c0_i32 = arith.constant 0 : i32
    %c0_i32_0 = arith.constant 0 : i32
    %c0_i32_1 = arith.constant 0 : i32
    return %c0_i32, %c0_i32_0 : i32, i32
  }
  func.func @transform_6(%arg0: i32) -> (i32, i32) {
    %c0_i32 = arith.constant 0 : i32
    %c0_i32_0 = arith.constant 0 : i32
    %c0_i32_1 = arith.constant 0 : i32
    return %c0_i32, %c0_i32_0 : i32, i32
  }
  func.func @transform_7(%arg0: i32) -> (i32, i32) {
    %c0_i32 = arith.constant 0 : i32
    %c0_i32_0 = arith.constant 0 : i32
    %c0_i32_1 = arith.constant 0 : i32
    return %c0_i32, %c0_i32_0 : i32, i32
  }
  func.func @transform_8(%arg0: i32) -> (i32, i32) {
    %c0_i32 = arith.constant 0 : i32
    %c0_i32_0 = arith.constant 0 : i32
    %c0_i32_1 = arith.constant 0 : i32
    return %c0_i32, %c0_i32_0 : i32, i32
  }
  func.func @transform_9(%arg0: i32) -> (i32, i32) {
    %c0_i32 = arith.constant 0 : i32
    %c0_i32_0 = arith.constant 0 : i32
    %c0_i32_1 = arith.constant 0 : i32
    return %c0_i32, %c0_i32_0 : i32, i32
  }
  func.func @transform_10(%arg0: i32) -> (i32, i32) {
    %c0_i32 = arith.constant 0 : i32
    %c0_i32_0 = arith.constant 0 : i32
    %c0_i32_1 = arith.constant 0 : i32
    return %c0_i32, %c0_i32_0 : i32, i32
  }
  func.func @transform_11(%arg0: i32) -> (i32, i32) {
    %c0_i32 = arith.constant 0 : i32
    %c0_i32_0 = arith.constant 0 : i32
    %c0_i32_1 = arith.constant 0 : i32
    return %c0_i32, %c0_i32_0 : i32, i32
  }
  func.func @transform_12(%arg0: i32) -> (i32, i32) {
    %c0_i32 = arith.constant 0 : i32
    %c0_i32_0 = arith.constant 0 : i32
    %c0_i32_1 = arith.constant 0 : i32
    return %c0_i32, %c0_i32_0 : i32, i32
  }
  func.func @transform_13(%arg0: i32) -> (i32, i32) {
    %c0_i32 = arith.constant 0 : i32
    %c0_i32_0 = arith.constant 0 : i32
    %c0_i32_1 = arith.constant 0 : i32
    return %c0_i32, %c0_i32_0 : i32, i32
  }
  func.func @transform_14(%arg0: i32) -> (i32, i32) {
    %c0_i32 = arith.constant 0 : i32
    %c0_i32_0 = arith.constant 0 : i32
    %c0_i32_1 = arith.constant 0 : i32
    return %c0_i32, %c0_i32_0 : i32, i32
  }
  func.func @transform_15(%arg0: i32) -> (i32, i32) {
    %c0_i32 = arith.constant 0 : i32
    %c0_i32_0 = arith.constant 0 : i32
    %c0_i32_1 = arith.constant 0 : i32
    return %c0_i32, %c0_i32_0 : i32, i32
  }
  func.func @transform_16(%arg0: i32) -> (i32, i32) {
    %c0_i32 = arith.constant 0 : i32
    %c0_i32_0 = arith.constant 0 : i32
    %c0_i32_1 = arith.constant 0 : i32
    return %c0_i32, %c0_i32_0 : i32, i32
  }
  func.func @transform_17(%arg0: i32) -> (i32, i32) {
    %c0_i32 = arith.constant 0 : i32
    %c0_i32_0 = arith.constant 0 : i32
    %c0_i32_1 = arith.constant 0 : i32
    return %c0_i32, %c0_i32_0 : i32, i32
  }
  func.func @transform_18(%arg0: i32) -> (i32, i32, i32) {
    %c0_i32 = arith.constant 0 : i32
    %c0_i32_0 = arith.constant 0 : i32
    %c0_i32_1 = arith.constant 0 : i32
    return %arg0, %c0_i32, %c0_i32_0 : i32, i32, i32
  }
}

module attributes {stable_mosaic.version = 11 : i64} {
  func.func @_decoder_kernel(%arg0: i32, %arg1: memref<1x12x3xf32, #tpu.memory_space<vmem>>, %arg2: memref<1x7x64xf32, #tpu.memory_space<vmem>>, %arg3: memref<3x64xf32, #tpu.memory_space<vmem>>, %arg4: memref<1x64xf32, #tpu.memory_space<vmem>>, %arg5: memref<12x64xf32, #tpu.memory_space<vmem>>, %arg6: memref<1x64xf32, #tpu.memory_space<vmem>>, %arg7: memref<1x64xf32, #tpu.memory_space<vmem>>, %arg8: memref<64x192xf32, #tpu.memory_space<vmem>>, %arg9: memref<1x192xf32, #tpu.memory_space<vmem>>, %arg10: memref<64x64xf32, #tpu.memory_space<vmem>>, %arg11: memref<1x64xf32, #tpu.memory_space<vmem>>, %arg12: memref<1x64xf32, #tpu.memory_space<vmem>>, %arg13: memref<1x64xf32, #tpu.memory_space<vmem>>, %arg14: memref<64x64xf32, #tpu.memory_space<vmem>>, %arg15: memref<1x64xf32, #tpu.memory_space<vmem>>, %arg16: memref<64x128xf32, #tpu.memory_space<vmem>>, %arg17: memref<1x128xf32, #tpu.memory_space<vmem>>, %arg18: memref<64x64xf32, #tpu.memory_space<vmem>>, %arg19: memref<1x64xf32, #tpu.memory_space<vmem>>, %arg20: memref<1x64xf32, #tpu.memory_space<vmem>>, %arg21: memref<1x64xf32, #tpu.memory_space<vmem>>, %arg22: memref<64x128xf32, #tpu.memory_space<vmem>>, %arg23: memref<1x128xf32, #tpu.memory_space<vmem>>, %arg24: memref<128x64xf32, #tpu.memory_space<vmem>>, %arg25: memref<1x64xf32, #tpu.memory_space<vmem>>, %arg26: memref<1x64xf32, #tpu.memory_space<vmem>>, %arg27: memref<1x64xf32, #tpu.memory_space<vmem>>, %arg28: memref<64x3xf32, #tpu.memory_space<vmem>>, %arg29: memref<1x3xf32, #tpu.memory_space<vmem>>, %arg30: memref<1x12x3xf32, #tpu.memory_space<vmem>>) attributes {dimension_semantics = [#tpu.dimension_semantics<parallel>], iteration_bounds = array<i64: 2>, scalar_prefetch = 0 : i64, scratch_operands = 0 : i64, tpu.core_type = #tpu.core_type<tc>, window_params = [{transform_indices = @transform_0, window_bounds = array<i64: 1, 12, 3>}, {transform_indices = @transform_1, window_bounds = array<i64: 1, 7, 64>}, {pipeline_mode = #tpu.pipeline_mode<synchronous>, transform_indices = @transform_2, window_bounds = array<i64: 3, 64>}, {pipeline_mode = #tpu.pipeline_mode<synchronous>, transform_indices = @transform_3, window_bounds = array<i64: 1, 64>}, {pipeline_mode = #tpu.pipeline_mode<synchronous>, transform_indices = @transform_4, window_bounds = array<i64: 12, 64>}, {pipeline_mode = #tpu.pipeline_mode<synchronous>, transform_indices = @transform_5, window_bounds = array<i64: 1, 64>}, {pipeline_mode = #tpu.pipeline_mode<synchronous>, transform_indices = @transform_6, window_bounds = array<i64: 1, 64>}, {pipeline_mode = #tpu.pipeline_mode<synchronous>, transform_indices = @transform_7, window_bounds = array<i64: 64, 192>}, {pipeline_mode = #tpu.pipeline_mode<synchronous>, transform_indices = @transform_8, window_bounds = array<i64: 1, 192>}, {pipeline_mode = #tpu.pipeline_mode<synchronous>, transform_indices = @transform_9, window_bounds = array<i64: 64, 64>}, {pipeline_mode = #tpu.pipeline_mode<synchronous>, transform_indices = @transform_10, window_bounds = array<i64: 1, 64>}, {pipeline_mode = #tpu.pipeline_mode<synchronous>, transform_indices = @transform_11, window_bounds = array<i64: 1, 64>}, {pipeline_mode = #tpu.pipeline_mode<synchronous>, transform_indices = @transform_12, window_bounds = array<i64: 1, 64>}, {pipeline_mode = #tpu.pipeline_mode<synchronous>, transform_indices = @transform_13, window_bounds = array<i64: 64, 64>}, {pipeline_mode = #tpu.pipeline_mode<synchronous>, transform_indices = @transform_14, window_bounds = array<i64: 1, 64>}, {pipeline_mode = #tpu.pipeline_mode<synchronous>, transform_indices = @transform_15, window_bounds = array<i64: 64, 128>}, {pipeline_mode = #tpu.pipeline_mode<synchronous>, transform_indices = @transform_16, window_bounds = array<i64: 1, 128>}, {pipeline_mode = #tpu.pipeline_mode<synchronous>, transform_indices = @transform_17, window_bounds = array<i64: 64, 64>}, {pipeline_mode = #tpu.pipeline_mode<synchronous>, transform_indices = @transform_18, window_bounds = array<i64: 1, 64>}, {pipeline_mode = #tpu.pipeline_mode<synchronous>, transform_indices = @transform_19, window_bounds = array<i64: 1, 64>}, {pipeline_mode = #tpu.pipeline_mode<synchronous>, transform_indices = @transform_20, window_bounds = array<i64: 1, 64>}, {pipeline_mode = #tpu.pipeline_mode<synchronous>, transform_indices = @transform_21, window_bounds = array<i64: 64, 128>}, {pipeline_mode = #tpu.pipeline_mode<synchronous>, transform_indices = @transform_22, window_bounds = array<i64: 1, 128>}, {pipeline_mode = #tpu.pipeline_mode<synchronous>, transform_indices = @transform_23, window_bounds = array<i64: 128, 64>}, {pipeline_mode = #tpu.pipeline_mode<synchronous>, transform_indices = @transform_24, window_bounds = array<i64: 1, 64>}, {pipeline_mode = #tpu.pipeline_mode<synchronous>, transform_indices = @transform_25, window_bounds = array<i64: 1, 64>}, {pipeline_mode = #tpu.pipeline_mode<synchronous>, transform_indices = @transform_26, window_bounds = array<i64: 1, 64>}, {pipeline_mode = #tpu.pipeline_mode<synchronous>, transform_indices = @transform_27, window_bounds = array<i64: 64, 3>}, {pipeline_mode = #tpu.pipeline_mode<synchronous>, transform_indices = @transform_28, window_bounds = array<i64: 1, 3>}, {transform_indices = @transform_29, window_bounds = array<i64: 1, 12, 3>}]} {
    %c0 = arith.constant 0 : index
    %c0_0 = arith.constant 0 : index
    %c0_1 = arith.constant 0 : index
    %0 = vector.load %arg1[%c0, %c0_0, %c0_1] : memref<1x12x3xf32, #tpu.memory_space<vmem>>, vector<1x12x3xf32>
    %1 = vector.shape_cast %0 : vector<1x12x3xf32> to vector<12x3xf32>
    %c0_2 = arith.constant 0 : index
    %c0_3 = arith.constant 0 : index
    %c0_4 = arith.constant 0 : index
    %2 = vector.load %arg2[%c0_2, %c0_3, %c0_4] : memref<1x7x64xf32, #tpu.memory_space<vmem>>, vector<1x7x64xf32>
    %3 = vector.shape_cast %2 : vector<1x7x64xf32> to vector<7x64xf32>
    %4 = tpu.iota {dimensions = array<i32: 0>} : vector<12x12xi32>
    %5 = tpu.iota {dimensions = array<i32: 1>} : vector<12x12xi32>
    %6 = arith.cmpi sge, %4, %5 : vector<12x12xi32>
    %cst = arith.constant 0.000000e+00 : f32
    %cst_5 = arith.constant -1.000000e+09 : f32
    %7 = vector.broadcast %cst : f32 to vector<12x12xf32>
    %8 = vector.broadcast %cst_5 : f32 to vector<12x12xf32>
    %9 = arith.select %6, %7, %8 : vector<12x12xi1>, vector<12x12xf32>
    %c0_6 = arith.constant 0 : index
    %c0_7 = arith.constant 0 : index
    %10 = vector.load %arg3[%c0_6, %c0_7] : memref<3x64xf32, #tpu.memory_space<vmem>>, vector<3x64xf32>
    %11 = arith.truncf %1 : vector<12x3xf32> to vector<12x3xbf16>
    %12 = arith.truncf %10 : vector<3x64xf32> to vector<3x64xbf16>
    %cst_8 = arith.constant dense<0.000000e+00> : vector<12x64xf32>
    %13 = tpu.matmul %11, %12, %cst_8 {dimension_numbers = #tpu.dot_dimension_numbers<[1], [0], [0], [1], [0, 0, 1, 1], [], []>} : vector<12x3xbf16>, vector<3x64xbf16>, vector<12x64xf32> -> vector<12x64xf32>
    %c0_9 = arith.constant 0 : index
    %c0_10 = arith.constant 0 : index
    %14 = vector.load %arg4[%c0_9, %c0_10] : memref<1x64xf32, #tpu.memory_space<vmem>>, vector<1x64xf32>
    %15 = vector.broadcast %14 : vector<1x64xf32> to vector<12x64xf32>
    %16 = arith.addf %13, %15 : vector<12x64xf32>
    %c0_11 = arith.constant 0 : index
    %c0_12 = arith.constant 0 : index
    %17 = vector.load %arg5[%c0_11, %c0_12] : memref<12x64xf32, #tpu.memory_space<vmem>>, vector<12x64xf32>
    %18 = arith.addf %16, %17 : vector<12x64xf32>
    %cst_13 = arith.constant dense<0.000000e+00> : vector<12xf32>
    %19 = vector.multi_reduction <add>, %18, %cst_13 [1] : vector<12x64xf32> to vector<12xf32>
    %20 = vector.shape_cast %19 : vector<12xf32> to vector<12x1xf32>
    %cst_14 = arith.constant 6.400000e+01 : f32
    %21 = vector.broadcast %cst_14 : f32 to vector<12x1xf32>
    %22 = arith.divf %20, %21 : vector<12x1xf32>
    %23 = vector.broadcast %22 : vector<12x1xf32> to vector<12x64xf32>
    %24 = arith.subf %18, %23 : vector<12x64xf32>
    %25 = arith.mulf %24, %24 : vector<12x64xf32>
    %cst_15 = arith.constant dense<0.000000e+00> : vector<12xf32>
    %26 = vector.multi_reduction <add>, %25, %cst_15 [1] : vector<12x64xf32> to vector<12xf32>
    %27 = vector.shape_cast %26 : vector<12xf32> to vector<12x1xf32>
    %cst_16 = arith.constant 0.0158730168 : f32
    %28 = vector.broadcast %cst_16 : f32 to vector<12x1xf32>
    %29 = arith.mulf %27, %28 : vector<12x1xf32>
    %30 = math.sqrt %29 : vector<12x1xf32>
    %c0_17 = arith.constant 0 : index
    %c0_18 = arith.constant 0 : index
    %31 = vector.load %arg6[%c0_17, %c0_18] : memref<1x64xf32, #tpu.memory_space<vmem>>, vector<1x64xf32>
    %32 = vector.broadcast %31 : vector<1x64xf32> to vector<12x64xf32>
    %33 = arith.mulf %32, %24 : vector<12x64xf32>
    %cst_19 = arith.constant 9.99999997E-7 : f32
    %34 = vector.broadcast %cst_19 : f32 to vector<12x1xf32>
    %35 = arith.addf %30, %34 : vector<12x1xf32>
    %36 = vector.broadcast %35 : vector<12x1xf32> to vector<12x64xf32>
    %37 = arith.divf %33, %36 : vector<12x64xf32>
    %c0_20 = arith.constant 0 : index
    %c0_21 = arith.constant 0 : index
    %38 = vector.load %arg7[%c0_20, %c0_21] : memref<1x64xf32, #tpu.memory_space<vmem>>, vector<1x64xf32>
    %39 = vector.broadcast %38 : vector<1x64xf32> to vector<12x64xf32>
    %40 = arith.addf %37, %39 : vector<12x64xf32>
    %c0_22 = arith.constant 0 : index
    %c0_23 = arith.constant 0 : index
    %41 = vector.load %arg8[%c0_22, %c0_23] : memref<64x192xf32, #tpu.memory_space<vmem>>, vector<64x192xf32>
    %42 = arith.truncf %40 : vector<12x64xf32> to vector<12x64xbf16>
    %43 = arith.truncf %41 : vector<64x192xf32> to vector<64x192xbf16>
    %cst_24 = arith.constant dense<0.000000e+00> : vector<12x192xf32>
    %44 = tpu.matmul %42, %43, %cst_24 {dimension_numbers = #tpu.dot_dimension_numbers<[1], [0], [0], [1], [0, 0, 1, 1], [], []>} : vector<12x64xbf16>, vector<64x192xbf16>, vector<12x192xf32> -> vector<12x192xf32>
    %c0_25 = arith.constant 0 : index
    %c0_26 = arith.constant 0 : index
    %45 = vector.load %arg9[%c0_25, %c0_26] : memref<1x192xf32, #tpu.memory_space<vmem>>, vector<1x192xf32>
    %46 = vector.broadcast %45 : vector<1x192xf32> to vector<12x192xf32>
    %47 = arith.addf %44, %46 : vector<12x192xf32>
    %cst_27 = arith.constant 0.000000e+00 : f32
    %48 = vector.broadcast %cst_27 : f32 to vector<12x64xf32>
    %49 = vector.extract_strided_slice %47 {offsets = [0, 0], sizes = [12, 8], strides = [1, 1]} : vector<12x192xf32> to vector<12x8xf32>
    %50 = vector.extract_strided_slice %47 {offsets = [0, 64], sizes = [12, 8], strides = [1, 1]} : vector<12x192xf32> to vector<12x8xf32>
    %51 = vector.extract_strided_slice %47 {offsets = [0, 128], sizes = [12, 8], strides = [1, 1]} : vector<12x192xf32> to vector<12x8xf32>
    %52 = arith.truncf %49 : vector<12x8xf32> to vector<12x8xbf16>
    %53 = arith.truncf %50 : vector<12x8xf32> to vector<12x8xbf16>
    %cst_28 = arith.constant dense<0.000000e+00> : vector<12x12xf32>
    %54 = tpu.matmul %52, %53, %cst_28 {dimension_numbers = #tpu.dot_dimension_numbers<[1], [1], [0], [0], [0, 0, 1, 0], [], []>} : vector<12x8xbf16>, vector<12x8xbf16>, vector<12x12xf32> -> vector<12x12xf32>
    %cst_29 = arith.constant 0.353553385 : f32
    %55 = vector.broadcast %cst_29 : f32 to vector<12x12xf32>
    %56 = arith.mulf %54, %55 : vector<12x12xf32>
    %57 = arith.addf %56, %9 : vector<12x12xf32>
    %cst_30 = arith.constant dense<0xFF800000> : vector<12xf32>
    %58 = vector.multi_reduction <maximumf>, %57, %cst_30 [1] : vector<12x12xf32> to vector<12xf32>
    %59 = vector.shape_cast %58 : vector<12xf32> to vector<12x1xf32>
    %60 = vector.broadcast %59 : vector<12x1xf32> to vector<12x12xf32>
    %61 = arith.subf %57, %60 : vector<12x12xf32>
    %62 = math.exp %61 : vector<12x12xf32>
    %cst_31 = arith.constant dense<0.000000e+00> : vector<12xf32>
    %63 = vector.multi_reduction <add>, %62, %cst_31 [1] : vector<12x12xf32> to vector<12xf32>
    %64 = vector.shape_cast %63 : vector<12xf32> to vector<12x1xf32>
    %65 = vector.broadcast %64 : vector<12x1xf32> to vector<12x12xf32>
    %66 = arith.divf %62, %65 : vector<12x12xf32>
    %67 = arith.truncf %66 : vector<12x12xf32> to vector<12x12xbf16>
    %68 = arith.truncf %51 : vector<12x8xf32> to vector<12x8xbf16>
    %cst_32 = arith.constant dense<0.000000e+00> : vector<12x8xf32>
    %69 = tpu.matmul %67, %68, %cst_32 {dimension_numbers = #tpu.dot_dimension_numbers<[1], [0], [0], [1], [0, 0, 1, 1], [], []>} : vector<12x12xbf16>, vector<12x8xbf16>, vector<12x8xf32> -> vector<12x8xf32>
    %c0_33 = arith.constant 0 : index
    %c0_34 = arith.constant 0 : index
    %70 = vector.load %arg10[%c0_33, %c0_34] : memref<64x64xf32, #tpu.memory_space<vmem>>, vector<8x64xf32>
    %71 = arith.truncf %69 : vector<12x8xf32> to vector<12x8xbf16>
    %72 = arith.truncf %70 : vector<8x64xf32> to vector<8x64xbf16>
    %cst_35 = arith.constant dense<0.000000e+00> : vector<12x64xf32>
    %73 = tpu.matmul %71, %72, %cst_35 {dimension_numbers = #tpu.dot_dimension_numbers<[1], [0], [0], [1], [0, 0, 1, 1], [], []>} : vector<12x8xbf16>, vector<8x64xbf16>, vector<12x64xf32> -> vector<12x64xf32>
    %74 = arith.addf %48, %73 : vector<12x64xf32>
    %75 = vector.extract_strided_slice %47 {offsets = [0, 8], sizes = [12, 8], strides = [1, 1]} : vector<12x192xf32> to vector<12x8xf32>
    %76 = vector.extract_strided_slice %47 {offsets = [0, 72], sizes = [12, 8], strides = [1, 1]} : vector<12x192xf32> to vector<12x8xf32>
    %77 = vector.extract_strided_slice %47 {offsets = [0, 136], sizes = [12, 8], strides = [1, 1]} : vector<12x192xf32> to vector<12x8xf32>
    %78 = arith.truncf %75 : vector<12x8xf32> to vector<12x8xbf16>
    %79 = arith.truncf %76 : vector<12x8xf32> to vector<12x8xbf16>
    %cst_36 = arith.constant dense<0.000000e+00> : vector<12x12xf32>
    %80 = tpu.matmul %78, %79, %cst_36 {dimension_numbers = #tpu.dot_dimension_numbers<[1], [1], [0], [0], [0, 0, 1, 0], [], []>} : vector<12x8xbf16>, vector<12x8xbf16>, vector<12x12xf32> -> vector<12x12xf32>
    %cst_37 = arith.constant 0.353553385 : f32
    %81 = vector.broadcast %cst_37 : f32 to vector<12x12xf32>
    %82 = arith.mulf %80, %81 : vector<12x12xf32>
    %83 = arith.addf %82, %9 : vector<12x12xf32>
    %cst_38 = arith.constant dense<0xFF800000> : vector<12xf32>
    %84 = vector.multi_reduction <maximumf>, %83, %cst_38 [1] : vector<12x12xf32> to vector<12xf32>
    %85 = vector.shape_cast %84 : vector<12xf32> to vector<12x1xf32>
    %86 = vector.broadcast %85 : vector<12x1xf32> to vector<12x12xf32>
    %87 = arith.subf %83, %86 : vector<12x12xf32>
    %88 = math.exp %87 : vector<12x12xf32>
    %cst_39 = arith.constant dense<0.000000e+00> : vector<12xf32>
    %89 = vector.multi_reduction <add>, %88, %cst_39 [1] : vector<12x12xf32> to vector<12xf32>
    %90 = vector.shape_cast %89 : vector<12xf32> to vector<12x1xf32>
    %91 = vector.broadcast %90 : vector<12x1xf32> to vector<12x12xf32>
    %92 = arith.divf %88, %91 : vector<12x12xf32>
    %93 = arith.truncf %92 : vector<12x12xf32> to vector<12x12xbf16>
    %94 = arith.truncf %77 : vector<12x8xf32> to vector<12x8xbf16>
    %cst_40 = arith.constant dense<0.000000e+00> : vector<12x8xf32>
    %95 = tpu.matmul %93, %94, %cst_40 {dimension_numbers = #tpu.dot_dimension_numbers<[1], [0], [0], [1], [0, 0, 1, 1], [], []>} : vector<12x12xbf16>, vector<12x8xbf16>, vector<12x8xf32> -> vector<12x8xf32>
    %c8 = arith.constant 8 : index
    %c0_41 = arith.constant 0 : index
    %96 = vector.load %arg10[%c8, %c0_41] : memref<64x64xf32, #tpu.memory_space<vmem>>, vector<8x64xf32>
    %97 = arith.truncf %95 : vector<12x8xf32> to vector<12x8xbf16>
    %98 = arith.truncf %96 : vector<8x64xf32> to vector<8x64xbf16>
    %cst_42 = arith.constant dense<0.000000e+00> : vector<12x64xf32>
    %99 = tpu.matmul %97, %98, %cst_42 {dimension_numbers = #tpu.dot_dimension_numbers<[1], [0], [0], [1], [0, 0, 1, 1], [], []>} : vector<12x8xbf16>, vector<8x64xbf16>, vector<12x64xf32> -> vector<12x64xf32>
    %100 = arith.addf %74, %99 : vector<12x64xf32>
    %101 = vector.extract_strided_slice %47 {offsets = [0, 16], sizes = [12, 8], strides = [1, 1]} : vector<12x192xf32> to vector<12x8xf32>
    %102 = vector.extract_strided_slice %47 {offsets = [0, 80], sizes = [12, 8], strides = [1, 1]} : vector<12x192xf32> to vector<12x8xf32>
    %103 = vector.extract_strided_slice %47 {offsets = [0, 144], sizes = [12, 8], strides = [1, 1]} : vector<12x192xf32> to vector<12x8xf32>
    %104 = arith.truncf %101 : vector<12x8xf32> to vector<12x8xbf16>
    %105 = arith.truncf %102 : vector<12x8xf32> to vector<12x8xbf16>
    %cst_43 = arith.constant dense<0.000000e+00> : vector<12x12xf32>
    %106 = tpu.matmul %104, %105, %cst_43 {dimension_numbers = #tpu.dot_dimension_numbers<[1], [1], [0], [0], [0, 0, 1, 0], [], []>} : vector<12x8xbf16>, vector<12x8xbf16>, vector<12x12xf32> -> vector<12x12xf32>
    %cst_44 = arith.constant 0.353553385 : f32
    %107 = vector.broadcast %cst_44 : f32 to vector<12x12xf32>
    %108 = arith.mulf %106, %107 : vector<12x12xf32>
    %109 = arith.addf %108, %9 : vector<12x12xf32>
    %cst_45 = arith.constant dense<0xFF800000> : vector<12xf32>
    %110 = vector.multi_reduction <maximumf>, %109, %cst_45 [1] : vector<12x12xf32> to vector<12xf32>
    %111 = vector.shape_cast %110 : vector<12xf32> to vector<12x1xf32>
    %112 = vector.broadcast %111 : vector<12x1xf32> to vector<12x12xf32>
    %113 = arith.subf %109, %112 : vector<12x12xf32>
    %114 = math.exp %113 : vector<12x12xf32>
    %cst_46 = arith.constant dense<0.000000e+00> : vector<12xf32>
    %115 = vector.multi_reduction <add>, %114, %cst_46 [1] : vector<12x12xf32> to vector<12xf32>
    %116 = vector.shape_cast %115 : vector<12xf32> to vector<12x1xf32>
    %117 = vector.broadcast %116 : vector<12x1xf32> to vector<12x12xf32>
    %118 = arith.divf %114, %117 : vector<12x12xf32>
    %119 = arith.truncf %118 : vector<12x12xf32> to vector<12x12xbf16>
    %120 = arith.truncf %103 : vector<12x8xf32> to vector<12x8xbf16>
    %cst_47 = arith.constant dense<0.000000e+00> : vector<12x8xf32>
    %121 = tpu.matmul %119, %120, %cst_47 {dimension_numbers = #tpu.dot_dimension_numbers<[1], [0], [0], [1], [0, 0, 1, 1], [], []>} : vector<12x12xbf16>, vector<12x8xbf16>, vector<12x8xf32> -> vector<12x8xf32>
    %c16 = arith.constant 16 : index
    %c0_48 = arith.constant 0 : index
    %122 = vector.load %arg10[%c16, %c0_48] : memref<64x64xf32, #tpu.memory_space<vmem>>, vector<8x64xf32>
    %123 = arith.truncf %121 : vector<12x8xf32> to vector<12x8xbf16>
    %124 = arith.truncf %122 : vector<8x64xf32> to vector<8x64xbf16>
    %cst_49 = arith.constant dense<0.000000e+00> : vector<12x64xf32>
    %125 = tpu.matmul %123, %124, %cst_49 {dimension_numbers = #tpu.dot_dimension_numbers<[1], [0], [0], [1], [0, 0, 1, 1], [], []>} : vector<12x8xbf16>, vector<8x64xbf16>, vector<12x64xf32> -> vector<12x64xf32>
    %126 = arith.addf %100, %125 : vector<12x64xf32>
    %127 = vector.extract_strided_slice %47 {offsets = [0, 24], sizes = [12, 8], strides = [1, 1]} : vector<12x192xf32> to vector<12x8xf32>
    %128 = vector.extract_strided_slice %47 {offsets = [0, 88], sizes = [12, 8], strides = [1, 1]} : vector<12x192xf32> to vector<12x8xf32>
    %129 = vector.extract_strided_slice %47 {offsets = [0, 152], sizes = [12, 8], strides = [1, 1]} : vector<12x192xf32> to vector<12x8xf32>
    %130 = arith.truncf %127 : vector<12x8xf32> to vector<12x8xbf16>
    %131 = arith.truncf %128 : vector<12x8xf32> to vector<12x8xbf16>
    %cst_50 = arith.constant dense<0.000000e+00> : vector<12x12xf32>
    %132 = tpu.matmul %130, %131, %cst_50 {dimension_numbers = #tpu.dot_dimension_numbers<[1], [1], [0], [0], [0, 0, 1, 0], [], []>} : vector<12x8xbf16>, vector<12x8xbf16>, vector<12x12xf32> -> vector<12x12xf32>
    %cst_51 = arith.constant 0.353553385 : f32
    %133 = vector.broadcast %cst_51 : f32 to vector<12x12xf32>
    %134 = arith.mulf %132, %133 : vector<12x12xf32>
    %135 = arith.addf %134, %9 : vector<12x12xf32>
    %cst_52 = arith.constant dense<0xFF800000> : vector<12xf32>
    %136 = vector.multi_reduction <maximumf>, %135, %cst_52 [1] : vector<12x12xf32> to vector<12xf32>
    %137 = vector.shape_cast %136 : vector<12xf32> to vector<12x1xf32>
    %138 = vector.broadcast %137 : vector<12x1xf32> to vector<12x12xf32>
    %139 = arith.subf %135, %138 : vector<12x12xf32>
    %140 = math.exp %139 : vector<12x12xf32>
    %cst_53 = arith.constant dense<0.000000e+00> : vector<12xf32>
    %141 = vector.multi_reduction <add>, %140, %cst_53 [1] : vector<12x12xf32> to vector<12xf32>
    %142 = vector.shape_cast %141 : vector<12xf32> to vector<12x1xf32>
    %143 = vector.broadcast %142 : vector<12x1xf32> to vector<12x12xf32>
    %144 = arith.divf %140, %143 : vector<12x12xf32>
    %145 = arith.truncf %144 : vector<12x12xf32> to vector<12x12xbf16>
    %146 = arith.truncf %129 : vector<12x8xf32> to vector<12x8xbf16>
    %cst_54 = arith.constant dense<0.000000e+00> : vector<12x8xf32>
    %147 = tpu.matmul %145, %146, %cst_54 {dimension_numbers = #tpu.dot_dimension_numbers<[1], [0], [0], [1], [0, 0, 1, 1], [], []>} : vector<12x12xbf16>, vector<12x8xbf16>, vector<12x8xf32> -> vector<12x8xf32>
    %c24 = arith.constant 24 : index
    %c0_55 = arith.constant 0 : index
    %148 = vector.load %arg10[%c24, %c0_55] : memref<64x64xf32, #tpu.memory_space<vmem>>, vector<8x64xf32>
    %149 = arith.truncf %147 : vector<12x8xf32> to vector<12x8xbf16>
    %150 = arith.truncf %148 : vector<8x64xf32> to vector<8x64xbf16>
    %cst_56 = arith.constant dense<0.000000e+00> : vector<12x64xf32>
    %151 = tpu.matmul %149, %150, %cst_56 {dimension_numbers = #tpu.dot_dimension_numbers<[1], [0], [0], [1], [0, 0, 1, 1], [], []>} : vector<12x8xbf16>, vector<8x64xbf16>, vector<12x64xf32> -> vector<12x64xf32>
    %152 = arith.addf %126, %151 : vector<12x64xf32>
    %153 = vector.extract_strided_slice %47 {offsets = [0, 32], sizes = [12, 8], strides = [1, 1]} : vector<12x192xf32> to vector<12x8xf32>
    %154 = vector.extract_strided_slice %47 {offsets = [0, 96], sizes = [12, 8], strides = [1, 1]} : vector<12x192xf32> to vector<12x8xf32>
    %155 = vector.extract_strided_slice %47 {offsets = [0, 160], sizes = [12, 8], strides = [1, 1]} : vector<12x192xf32> to vector<12x8xf32>
    %156 = arith.truncf %153 : vector<12x8xf32> to vector<12x8xbf16>
    %157 = arith.truncf %154 : vector<12x8xf32> to vector<12x8xbf16>
    %cst_57 = arith.constant dense<0.000000e+00> : vector<12x12xf32>
    %158 = tpu.matmul %156, %157, %cst_57 {dimension_numbers = #tpu.dot_dimension_numbers<[1], [1], [0], [0], [0, 0, 1, 0], [], []>} : vector<12x8xbf16>, vector<12x8xbf16>, vector<12x12xf32> -> vector<12x12xf32>
    %cst_58 = arith.constant 0.353553385 : f32
    %159 = vector.broadcast %cst_58 : f32 to vector<12x12xf32>
    %160 = arith.mulf %158, %159 : vector<12x12xf32>
    %161 = arith.addf %160, %9 : vector<12x12xf32>
    %cst_59 = arith.constant dense<0xFF800000> : vector<12xf32>
    %162 = vector.multi_reduction <maximumf>, %161, %cst_59 [1] : vector<12x12xf32> to vector<12xf32>
    %163 = vector.shape_cast %162 : vector<12xf32> to vector<12x1xf32>
    %164 = vector.broadcast %163 : vector<12x1xf32> to vector<12x12xf32>
    %165 = arith.subf %161, %164 : vector<12x12xf32>
    %166 = math.exp %165 : vector<12x12xf32>
    %cst_60 = arith.constant dense<0.000000e+00> : vector<12xf32>
    %167 = vector.multi_reduction <add>, %166, %cst_60 [1] : vector<12x12xf32> to vector<12xf32>
    %168 = vector.shape_cast %167 : vector<12xf32> to vector<12x1xf32>
    %169 = vector.broadcast %168 : vector<12x1xf32> to vector<12x12xf32>
    %170 = arith.divf %166, %169 : vector<12x12xf32>
    %171 = arith.truncf %170 : vector<12x12xf32> to vector<12x12xbf16>
    %172 = arith.truncf %155 : vector<12x8xf32> to vector<12x8xbf16>
    %cst_61 = arith.constant dense<0.000000e+00> : vector<12x8xf32>
    %173 = tpu.matmul %171, %172, %cst_61 {dimension_numbers = #tpu.dot_dimension_numbers<[1], [0], [0], [1], [0, 0, 1, 1], [], []>} : vector<12x12xbf16>, vector<12x8xbf16>, vector<12x8xf32> -> vector<12x8xf32>
    %c32 = arith.constant 32 : index
    %c0_62 = arith.constant 0 : index
    %174 = vector.load %arg10[%c32, %c0_62] : memref<64x64xf32, #tpu.memory_space<vmem>>, vector<8x64xf32>
    %175 = arith.truncf %173 : vector<12x8xf32> to vector<12x8xbf16>
    %176 = arith.truncf %174 : vector<8x64xf32> to vector<8x64xbf16>
    %cst_63 = arith.constant dense<0.000000e+00> : vector<12x64xf32>
    %177 = tpu.matmul %175, %176, %cst_63 {dimension_numbers = #tpu.dot_dimension_numbers<[1], [0], [0], [1], [0, 0, 1, 1], [], []>} : vector<12x8xbf16>, vector<8x64xbf16>, vector<12x64xf32> -> vector<12x64xf32>
    %178 = arith.addf %152, %177 : vector<12x64xf32>
    %179 = vector.extract_strided_slice %47 {offsets = [0, 40], sizes = [12, 8], strides = [1, 1]} : vector<12x192xf32> to vector<12x8xf32>
    %180 = vector.extract_strided_slice %47 {offsets = [0, 104], sizes = [12, 8], strides = [1, 1]} : vector<12x192xf32> to vector<12x8xf32>
    %181 = vector.extract_strided_slice %47 {offsets = [0, 168], sizes = [12, 8], strides = [1, 1]} : vector<12x192xf32> to vector<12x8xf32>
    %182 = arith.truncf %179 : vector<12x8xf32> to vector<12x8xbf16>
    %183 = arith.truncf %180 : vector<12x8xf32> to vector<12x8xbf16>
    %cst_64 = arith.constant dense<0.000000e+00> : vector<12x12xf32>
    %184 = tpu.matmul %182, %183, %cst_64 {dimension_numbers = #tpu.dot_dimension_numbers<[1], [1], [0], [0], [0, 0, 1, 0], [], []>} : vector<12x8xbf16>, vector<12x8xbf16>, vector<12x12xf32> -> vector<12x12xf32>
    %cst_65 = arith.constant 0.353553385 : f32
    %185 = vector.broadcast %cst_65 : f32 to vector<12x12xf32>
    %186 = arith.mulf %184, %185 : vector<12x12xf32>
    %187 = arith.addf %186, %9 : vector<12x12xf32>
    %cst_66 = arith.constant dense<0xFF800000> : vector<12xf32>
    %188 = vector.multi_reduction <maximumf>, %187, %cst_66 [1] : vector<12x12xf32> to vector<12xf32>
    %189 = vector.shape_cast %188 : vector<12xf32> to vector<12x1xf32>
    %190 = vector.broadcast %189 : vector<12x1xf32> to vector<12x12xf32>
    %191 = arith.subf %187, %190 : vector<12x12xf32>
    %192 = math.exp %191 : vector<12x12xf32>
    %cst_67 = arith.constant dense<0.000000e+00> : vector<12xf32>
    %193 = vector.multi_reduction <add>, %192, %cst_67 [1] : vector<12x12xf32> to vector<12xf32>
    %194 = vector.shape_cast %193 : vector<12xf32> to vector<12x1xf32>
    %195 = vector.broadcast %194 : vector<12x1xf32> to vector<12x12xf32>
    %196 = arith.divf %192, %195 : vector<12x12xf32>
    %197 = arith.truncf %196 : vector<12x12xf32> to vector<12x12xbf16>
    %198 = arith.truncf %181 : vector<12x8xf32> to vector<12x8xbf16>
    %cst_68 = arith.constant dense<0.000000e+00> : vector<12x8xf32>
    %199 = tpu.matmul %197, %198, %cst_68 {dimension_numbers = #tpu.dot_dimension_numbers<[1], [0], [0], [1], [0, 0, 1, 1], [], []>} : vector<12x12xbf16>, vector<12x8xbf16>, vector<12x8xf32> -> vector<12x8xf32>
    %c40 = arith.constant 40 : index
    %c0_69 = arith.constant 0 : index
    %200 = vector.load %arg10[%c40, %c0_69] : memref<64x64xf32, #tpu.memory_space<vmem>>, vector<8x64xf32>
    %201 = arith.truncf %199 : vector<12x8xf32> to vector<12x8xbf16>
    %202 = arith.truncf %200 : vector<8x64xf32> to vector<8x64xbf16>
    %cst_70 = arith.constant dense<0.000000e+00> : vector<12x64xf32>
    %203 = tpu.matmul %201, %202, %cst_70 {dimension_numbers = #tpu.dot_dimension_numbers<[1], [0], [0], [1], [0, 0, 1, 1], [], []>} : vector<12x8xbf16>, vector<8x64xbf16>, vector<12x64xf32> -> vector<12x64xf32>
    %204 = arith.addf %178, %203 : vector<12x64xf32>
    %205 = vector.extract_strided_slice %47 {offsets = [0, 48], sizes = [12, 8], strides = [1, 1]} : vector<12x192xf32> to vector<12x8xf32>
    %206 = vector.extract_strided_slice %47 {offsets = [0, 112], sizes = [12, 8], strides = [1, 1]} : vector<12x192xf32> to vector<12x8xf32>
    %207 = vector.extract_strided_slice %47 {offsets = [0, 176], sizes = [12, 8], strides = [1, 1]} : vector<12x192xf32> to vector<12x8xf32>
    %208 = arith.truncf %205 : vector<12x8xf32> to vector<12x8xbf16>
    %209 = arith.truncf %206 : vector<12x8xf32> to vector<12x8xbf16>
    %cst_71 = arith.constant dense<0.000000e+00> : vector<12x12xf32>
    %210 = tpu.matmul %208, %209, %cst_71 {dimension_numbers = #tpu.dot_dimension_numbers<[1], [1], [0], [0], [0, 0, 1, 0], [], []>} : vector<12x8xbf16>, vector<12x8xbf16>, vector<12x12xf32> -> vector<12x12xf32>
    %cst_72 = arith.constant 0.353553385 : f32
    %211 = vector.broadcast %cst_72 : f32 to vector<12x12xf32>
    %212 = arith.mulf %210, %211 : vector<12x12xf32>
    %213 = arith.addf %212, %9 : vector<12x12xf32>
    %cst_73 = arith.constant dense<0xFF800000> : vector<12xf32>
    %214 = vector.multi_reduction <maximumf>, %213, %cst_73 [1] : vector<12x12xf32> to vector<12xf32>
    %215 = vector.shape_cast %214 : vector<12xf32> to vector<12x1xf32>
    %216 = vector.broadcast %215 : vector<12x1xf32> to vector<12x12xf32>
    %217 = arith.subf %213, %216 : vector<12x12xf32>
    %218 = math.exp %217 : vector<12x12xf32>
    %cst_74 = arith.constant dense<0.000000e+00> : vector<12xf32>
    %219 = vector.multi_reduction <add>, %218, %cst_74 [1] : vector<12x12xf32> to vector<12xf32>
    %220 = vector.shape_cast %219 : vector<12xf32> to vector<12x1xf32>
    %221 = vector.broadcast %220 : vector<12x1xf32> to vector<12x12xf32>
    %222 = arith.divf %218, %221 : vector<12x12xf32>
    %223 = arith.truncf %222 : vector<12x12xf32> to vector<12x12xbf16>
    %224 = arith.truncf %207 : vector<12x8xf32> to vector<12x8xbf16>
    %cst_75 = arith.constant dense<0.000000e+00> : vector<12x8xf32>
    %225 = tpu.matmul %223, %224, %cst_75 {dimension_numbers = #tpu.dot_dimension_numbers<[1], [0], [0], [1], [0, 0, 1, 1], [], []>} : vector<12x12xbf16>, vector<12x8xbf16>, vector<12x8xf32> -> vector<12x8xf32>
    %c48 = arith.constant 48 : index
    %c0_76 = arith.constant 0 : index
    %226 = vector.load %arg10[%c48, %c0_76] : memref<64x64xf32, #tpu.memory_space<vmem>>, vector<8x64xf32>
    %227 = arith.truncf %225 : vector<12x8xf32> to vector<12x8xbf16>
    %228 = arith.truncf %226 : vector<8x64xf32> to vector<8x64xbf16>
    %cst_77 = arith.constant dense<0.000000e+00> : vector<12x64xf32>
    %229 = tpu.matmul %227, %228, %cst_77 {dimension_numbers = #tpu.dot_dimension_numbers<[1], [0], [0], [1], [0, 0, 1, 1], [], []>} : vector<12x8xbf16>, vector<8x64xbf16>, vector<12x64xf32> -> vector<12x64xf32>
    %230 = arith.addf %204, %229 : vector<12x64xf32>
    %231 = vector.extract_strided_slice %47 {offsets = [0, 56], sizes = [12, 8], strides = [1, 1]} : vector<12x192xf32> to vector<12x8xf32>
    %232 = vector.extract_strided_slice %47 {offsets = [0, 120], sizes = [12, 8], strides = [1, 1]} : vector<12x192xf32> to vector<12x8xf32>
    %233 = vector.extract_strided_slice %47 {offsets = [0, 184], sizes = [12, 8], strides = [1, 1]} : vector<12x192xf32> to vector<12x8xf32>
    %234 = arith.truncf %231 : vector<12x8xf32> to vector<12x8xbf16>
    %235 = arith.truncf %232 : vector<12x8xf32> to vector<12x8xbf16>
    %cst_78 = arith.constant dense<0.000000e+00> : vector<12x12xf32>
    %236 = tpu.matmul %234, %235, %cst_78 {dimension_numbers = #tpu.dot_dimension_numbers<[1], [1], [0], [0], [0, 0, 1, 0], [], []>} : vector<12x8xbf16>, vector<12x8xbf16>, vector<12x12xf32> -> vector<12x12xf32>
    %cst_79 = arith.constant 0.353553385 : f32
    %237 = vector.broadcast %cst_79 : f32 to vector<12x12xf32>
    %238 = arith.mulf %236, %237 : vector<12x12xf32>
    %239 = arith.addf %238, %9 : vector<12x12xf32>
    %cst_80 = arith.constant dense<0xFF800000> : vector<12xf32>
    %240 = vector.multi_reduction <maximumf>, %239, %cst_80 [1] : vector<12x12xf32> to vector<12xf32>
    %241 = vector.shape_cast %240 : vector<12xf32> to vector<12x1xf32>
    %242 = vector.broadcast %241 : vector<12x1xf32> to vector<12x12xf32>
    %243 = arith.subf %239, %242 : vector<12x12xf32>
    %244 = math.exp %243 : vector<12x12xf32>
    %cst_81 = arith.constant dense<0.000000e+00> : vector<12xf32>
    %245 = vector.multi_reduction <add>, %244, %cst_81 [1] : vector<12x12xf32> to vector<12xf32>
    %246 = vector.shape_cast %245 : vector<12xf32> to vector<12x1xf32>
    %247 = vector.broadcast %246 : vector<12x1xf32> to vector<12x12xf32>
    %248 = arith.divf %244, %247 : vector<12x12xf32>
    %249 = arith.truncf %248 : vector<12x12xf32> to vector<12x12xbf16>
    %250 = arith.truncf %233 : vector<12x8xf32> to vector<12x8xbf16>
    %cst_82 = arith.constant dense<0.000000e+00> : vector<12x8xf32>
    %251 = tpu.matmul %249, %250, %cst_82 {dimension_numbers = #tpu.dot_dimension_numbers<[1], [0], [0], [1], [0, 0, 1, 1], [], []>} : vector<12x12xbf16>, vector<12x8xbf16>, vector<12x8xf32> -> vector<12x8xf32>
    %c56 = arith.constant 56 : index
    %c0_83 = arith.constant 0 : index
    %252 = vector.load %arg10[%c56, %c0_83] : memref<64x64xf32, #tpu.memory_space<vmem>>, vector<8x64xf32>
    %253 = arith.truncf %251 : vector<12x8xf32> to vector<12x8xbf16>
    %254 = arith.truncf %252 : vector<8x64xf32> to vector<8x64xbf16>
    %cst_84 = arith.constant dense<0.000000e+00> : vector<12x64xf32>
    %255 = tpu.matmul %253, %254, %cst_84 {dimension_numbers = #tpu.dot_dimension_numbers<[1], [0], [0], [1], [0, 0, 1, 1], [], []>} : vector<12x8xbf16>, vector<8x64xbf16>, vector<12x64xf32> -> vector<12x64xf32>
    %256 = arith.addf %230, %255 : vector<12x64xf32>
    %c0_85 = arith.constant 0 : index
    %c0_86 = arith.constant 0 : index
    %257 = vector.load %arg11[%c0_85, %c0_86] : memref<1x64xf32, #tpu.memory_space<vmem>>, vector<1x64xf32>
    %258 = vector.broadcast %257 : vector<1x64xf32> to vector<12x64xf32>
    %259 = arith.addf %256, %258 : vector<12x64xf32>
    %260 = arith.addf %18, %259 : vector<12x64xf32>
    %cst_87 = arith.constant dense<0.000000e+00> : vector<12xf32>
    %261 = vector.multi_reduction <add>, %260, %cst_87 [1] : vector<12x64xf32> to vector<12xf32>
    %262 = vector.shape_cast %261 : vector<12xf32> to vector<12x1xf32>
    %cst_88 = arith.constant 6.400000e+01 : f32
    %263 = vector.broadcast %cst_88 : f32 to vector<12x1xf32>
    %264 = arith.divf %262, %263 : vector<12x1xf32>
    %265 = vector.broadcast %264 : vector<12x1xf32> to vector<12x64xf32>
    %266 = arith.subf %260, %265 : vector<12x64xf32>
    %267 = arith.mulf %266, %266 : vector<12x64xf32>
    %cst_89 = arith.constant dense<0.000000e+00> : vector<12xf32>
    %268 = vector.multi_reduction <add>, %267, %cst_89 [1] : vector<12x64xf32> to vector<12xf32>
    %269 = vector.shape_cast %268 : vector<12xf32> to vector<12x1xf32>
    %cst_90 = arith.constant 0.0158730168 : f32
    %270 = vector.broadcast %cst_90 : f32 to vector<12x1xf32>
    %271 = arith.mulf %269, %270 : vector<12x1xf32>
    %272 = math.sqrt %271 : vector<12x1xf32>
    %c0_91 = arith.constant 0 : index
    %c0_92 = arith.constant 0 : index
    %273 = vector.load %arg12[%c0_91, %c0_92] : memref<1x64xf32, #tpu.memory_space<vmem>>, vector<1x64xf32>
    %274 = vector.broadcast %273 : vector<1x64xf32> to vector<12x64xf32>
    %275 = arith.mulf %274, %266 : vector<12x64xf32>
    %cst_93 = arith.constant 9.99999997E-7 : f32
    %276 = vector.broadcast %cst_93 : f32 to vector<12x1xf32>
    %277 = arith.addf %272, %276 : vector<12x1xf32>
    %278 = vector.broadcast %277 : vector<12x1xf32> to vector<12x64xf32>
    %279 = arith.divf %275, %278 : vector<12x64xf32>
    %c0_94 = arith.constant 0 : index
    %c0_95 = arith.constant 0 : index
    %280 = vector.load %arg13[%c0_94, %c0_95] : memref<1x64xf32, #tpu.memory_space<vmem>>, vector<1x64xf32>
    %281 = vector.broadcast %280 : vector<1x64xf32> to vector<12x64xf32>
    %282 = arith.addf %279, %281 : vector<12x64xf32>
    %c0_96 = arith.constant 0 : index
    %c0_97 = arith.constant 0 : index
    %283 = vector.load %arg14[%c0_96, %c0_97] : memref<64x64xf32, #tpu.memory_space<vmem>>, vector<64x64xf32>
    %284 = arith.truncf %282 : vector<12x64xf32> to vector<12x64xbf16>
    %285 = arith.truncf %283 : vector<64x64xf32> to vector<64x64xbf16>
    %cst_98 = arith.constant dense<0.000000e+00> : vector<12x64xf32>
    %286 = tpu.matmul %284, %285, %cst_98 {dimension_numbers = #tpu.dot_dimension_numbers<[1], [0], [0], [1], [0, 0, 1, 1], [], []>} : vector<12x64xbf16>, vector<64x64xbf16>, vector<12x64xf32> -> vector<12x64xf32>
    %c0_99 = arith.constant 0 : index
    %c0_100 = arith.constant 0 : index
    %287 = vector.load %arg15[%c0_99, %c0_100] : memref<1x64xf32, #tpu.memory_space<vmem>>, vector<1x64xf32>
    %288 = vector.broadcast %287 : vector<1x64xf32> to vector<12x64xf32>
    %289 = arith.addf %286, %288 : vector<12x64xf32>
    %c0_101 = arith.constant 0 : index
    %c0_102 = arith.constant 0 : index
    %290 = vector.load %arg16[%c0_101, %c0_102] : memref<64x128xf32, #tpu.memory_space<vmem>>, vector<64x128xf32>
    %291 = arith.truncf %3 : vector<7x64xf32> to vector<7x64xbf16>
    %292 = arith.truncf %290 : vector<64x128xf32> to vector<64x128xbf16>
    %cst_103 = arith.constant dense<0.000000e+00> : vector<7x128xf32>
    %293 = tpu.matmul %291, %292, %cst_103 {dimension_numbers = #tpu.dot_dimension_numbers<[1], [0], [0], [1], [0, 0, 1, 1], [], []>} : vector<7x64xbf16>, vector<64x128xbf16>, vector<7x128xf32> -> vector<7x128xf32>
    %c0_104 = arith.constant 0 : index
    %c0_105 = arith.constant 0 : index
    %294 = vector.load %arg17[%c0_104, %c0_105] : memref<1x128xf32, #tpu.memory_space<vmem>>, vector<1x128xf32>
    %295 = vector.broadcast %294 : vector<1x128xf32> to vector<7x128xf32>
    %296 = arith.addf %293, %295 : vector<7x128xf32>
    %cst_106 = arith.constant 0.000000e+00 : f32
    %297 = vector.broadcast %cst_106 : f32 to vector<12x64xf32>
    %298 = vector.extract_strided_slice %289 {offsets = [0, 0], sizes = [12, 8], strides = [1, 1]} : vector<12x64xf32> to vector<12x8xf32>
    %299 = vector.extract_strided_slice %296 {offsets = [0, 0], sizes = [7, 8], strides = [1, 1]} : vector<7x128xf32> to vector<7x8xf32>
    %300 = vector.extract_strided_slice %296 {offsets = [0, 64], sizes = [7, 8], strides = [1, 1]} : vector<7x128xf32> to vector<7x8xf32>
    %301 = arith.truncf %298 : vector<12x8xf32> to vector<12x8xbf16>
    %302 = arith.truncf %299 : vector<7x8xf32> to vector<7x8xbf16>
    %cst_107 = arith.constant dense<0.000000e+00> : vector<12x7xf32>
    %303 = tpu.matmul %301, %302, %cst_107 {dimension_numbers = #tpu.dot_dimension_numbers<[1], [1], [0], [0], [0, 0, 1, 0], [], []>} : vector<12x8xbf16>, vector<7x8xbf16>, vector<12x7xf32> -> vector<12x7xf32>
    %cst_108 = arith.constant 0.353553385 : f32
    %304 = vector.broadcast %cst_108 : f32 to vector<12x7xf32>
    %305 = arith.mulf %303, %304 : vector<12x7xf32>
    %cst_109 = arith.constant dense<0xFF800000> : vector<12xf32>
    %306 = vector.multi_reduction <maximumf>, %305, %cst_109 [1] : vector<12x7xf32> to vector<12xf32>
    %307 = vector.shape_cast %306 : vector<12xf32> to vector<12x1xf32>
    %308 = vector.broadcast %307 : vector<12x1xf32> to vector<12x7xf32>
    %309 = arith.subf %305, %308 : vector<12x7xf32>
    %310 = math.exp %309 : vector<12x7xf32>
    %cst_110 = arith.constant dense<0.000000e+00> : vector<12xf32>
    %311 = vector.multi_reduction <add>, %310, %cst_110 [1] : vector<12x7xf32> to vector<12xf32>
    %312 = vector.shape_cast %311 : vector<12xf32> to vector<12x1xf32>
    %313 = vector.broadcast %312 : vector<12x1xf32> to vector<12x7xf32>
    %314 = arith.divf %310, %313 : vector<12x7xf32>
    %315 = arith.truncf %314 : vector<12x7xf32> to vector<12x7xbf16>
    %316 = arith.truncf %300 : vector<7x8xf32> to vector<7x8xbf16>
    %cst_111 = arith.constant dense<0.000000e+00> : vector<12x8xf32>
    %317 = tpu.matmul %315, %316, %cst_111 {dimension_numbers = #tpu.dot_dimension_numbers<[1], [0], [0], [1], [0, 0, 1, 1], [], []>} : vector<12x7xbf16>, vector<7x8xbf16>, vector<12x8xf32> -> vector<12x8xf32>
    %c0_112 = arith.constant 0 : index
    %c0_113 = arith.constant 0 : index
    %318 = vector.load %arg18[%c0_112, %c0_113] : memref<64x64xf32, #tpu.memory_space<vmem>>, vector<8x64xf32>
    %319 = arith.truncf %317 : vector<12x8xf32> to vector<12x8xbf16>
    %320 = arith.truncf %318 : vector<8x64xf32> to vector<8x64xbf16>
    %cst_114 = arith.constant dense<0.000000e+00> : vector<12x64xf32>
    %321 = tpu.matmul %319, %320, %cst_114 {dimension_numbers = #tpu.dot_dimension_numbers<[1], [0], [0], [1], [0, 0, 1, 1], [], []>} : vector<12x8xbf16>, vector<8x64xbf16>, vector<12x64xf32> -> vector<12x64xf32>
    %322 = arith.addf %297, %321 : vector<12x64xf32>
    %323 = vector.extract_strided_slice %289 {offsets = [0, 8], sizes = [12, 8], strides = [1, 1]} : vector<12x64xf32> to vector<12x8xf32>
    %324 = vector.extract_strided_slice %296 {offsets = [0, 8], sizes = [7, 8], strides = [1, 1]} : vector<7x128xf32> to vector<7x8xf32>
    %325 = vector.extract_strided_slice %296 {offsets = [0, 72], sizes = [7, 8], strides = [1, 1]} : vector<7x128xf32> to vector<7x8xf32>
    %326 = arith.truncf %323 : vector<12x8xf32> to vector<12x8xbf16>
    %327 = arith.truncf %324 : vector<7x8xf32> to vector<7x8xbf16>
    %cst_115 = arith.constant dense<0.000000e+00> : vector<12x7xf32>
    %328 = tpu.matmul %326, %327, %cst_115 {dimension_numbers = #tpu.dot_dimension_numbers<[1], [1], [0], [0], [0, 0, 1, 0], [], []>} : vector<12x8xbf16>, vector<7x8xbf16>, vector<12x7xf32> -> vector<12x7xf32>
    %cst_116 = arith.constant 0.353553385 : f32
    %329 = vector.broadcast %cst_116 : f32 to vector<12x7xf32>
    %330 = arith.mulf %328, %329 : vector<12x7xf32>
    %cst_117 = arith.constant dense<0xFF800000> : vector<12xf32>
    %331 = vector.multi_reduction <maximumf>, %330, %cst_117 [1] : vector<12x7xf32> to vector<12xf32>
    %332 = vector.shape_cast %331 : vector<12xf32> to vector<12x1xf32>
    %333 = vector.broadcast %332 : vector<12x1xf32> to vector<12x7xf32>
    %334 = arith.subf %330, %333 : vector<12x7xf32>
    %335 = math.exp %334 : vector<12x7xf32>
    %cst_118 = arith.constant dense<0.000000e+00> : vector<12xf32>
    %336 = vector.multi_reduction <add>, %335, %cst_118 [1] : vector<12x7xf32> to vector<12xf32>
    %337 = vector.shape_cast %336 : vector<12xf32> to vector<12x1xf32>
    %338 = vector.broadcast %337 : vector<12x1xf32> to vector<12x7xf32>
    %339 = arith.divf %335, %338 : vector<12x7xf32>
    %340 = arith.truncf %339 : vector<12x7xf32> to vector<12x7xbf16>
    %341 = arith.truncf %325 : vector<7x8xf32> to vector<7x8xbf16>
    %cst_119 = arith.constant dense<0.000000e+00> : vector<12x8xf32>
    %342 = tpu.matmul %340, %341, %cst_119 {dimension_numbers = #tpu.dot_dimension_numbers<[1], [0], [0], [1], [0, 0, 1, 1], [], []>} : vector<12x7xbf16>, vector<7x8xbf16>, vector<12x8xf32> -> vector<12x8xf32>
    %c8_120 = arith.constant 8 : index
    %c0_121 = arith.constant 0 : index
    %343 = vector.load %arg18[%c8_120, %c0_121] : memref<64x64xf32, #tpu.memory_space<vmem>>, vector<8x64xf32>
    %344 = arith.truncf %342 : vector<12x8xf32> to vector<12x8xbf16>
    %345 = arith.truncf %343 : vector<8x64xf32> to vector<8x64xbf16>
    %cst_122 = arith.constant dense<0.000000e+00> : vector<12x64xf32>
    %346 = tpu.matmul %344, %345, %cst_122 {dimension_numbers = #tpu.dot_dimension_numbers<[1], [0], [0], [1], [0, 0, 1, 1], [], []>} : vector<12x8xbf16>, vector<8x64xbf16>, vector<12x64xf32> -> vector<12x64xf32>
    %347 = arith.addf %322, %346 : vector<12x64xf32>
    %348 = vector.extract_strided_slice %289 {offsets = [0, 16], sizes = [12, 8], strides = [1, 1]} : vector<12x64xf32> to vector<12x8xf32>
    %349 = vector.extract_strided_slice %296 {offsets = [0, 16], sizes = [7, 8], strides = [1, 1]} : vector<7x128xf32> to vector<7x8xf32>
    %350 = vector.extract_strided_slice %296 {offsets = [0, 80], sizes = [7, 8], strides = [1, 1]} : vector<7x128xf32> to vector<7x8xf32>
    %351 = arith.truncf %348 : vector<12x8xf32> to vector<12x8xbf16>
    %352 = arith.truncf %349 : vector<7x8xf32> to vector<7x8xbf16>
    %cst_123 = arith.constant dense<0.000000e+00> : vector<12x7xf32>
    %353 = tpu.matmul %351, %352, %cst_123 {dimension_numbers = #tpu.dot_dimension_numbers<[1], [1], [0], [0], [0, 0, 1, 0], [], []>} : vector<12x8xbf16>, vector<7x8xbf16>, vector<12x7xf32> -> vector<12x7xf32>
    %cst_124 = arith.constant 0.353553385 : f32
    %354 = vector.broadcast %cst_124 : f32 to vector<12x7xf32>
    %355 = arith.mulf %353, %354 : vector<12x7xf32>
    %cst_125 = arith.constant dense<0xFF800000> : vector<12xf32>
    %356 = vector.multi_reduction <maximumf>, %355, %cst_125 [1] : vector<12x7xf32> to vector<12xf32>
    %357 = vector.shape_cast %356 : vector<12xf32> to vector<12x1xf32>
    %358 = vector.broadcast %357 : vector<12x1xf32> to vector<12x7xf32>
    %359 = arith.subf %355, %358 : vector<12x7xf32>
    %360 = math.exp %359 : vector<12x7xf32>
    %cst_126 = arith.constant dense<0.000000e+00> : vector<12xf32>
    %361 = vector.multi_reduction <add>, %360, %cst_126 [1] : vector<12x7xf32> to vector<12xf32>
    %362 = vector.shape_cast %361 : vector<12xf32> to vector<12x1xf32>
    %363 = vector.broadcast %362 : vector<12x1xf32> to vector<12x7xf32>
    %364 = arith.divf %360, %363 : vector<12x7xf32>
    %365 = arith.truncf %364 : vector<12x7xf32> to vector<12x7xbf16>
    %366 = arith.truncf %350 : vector<7x8xf32> to vector<7x8xbf16>
    %cst_127 = arith.constant dense<0.000000e+00> : vector<12x8xf32>
    %367 = tpu.matmul %365, %366, %cst_127 {dimension_numbers = #tpu.dot_dimension_numbers<[1], [0], [0], [1], [0, 0, 1, 1], [], []>} : vector<12x7xbf16>, vector<7x8xbf16>, vector<12x8xf32> -> vector<12x8xf32>
    %c16_128 = arith.constant 16 : index
    %c0_129 = arith.constant 0 : index
    %368 = vector.load %arg18[%c16_128, %c0_129] : memref<64x64xf32, #tpu.memory_space<vmem>>, vector<8x64xf32>
    %369 = arith.truncf %367 : vector<12x8xf32> to vector<12x8xbf16>
    %370 = arith.truncf %368 : vector<8x64xf32> to vector<8x64xbf16>
    %cst_130 = arith.constant dense<0.000000e+00> : vector<12x64xf32>
    %371 = tpu.matmul %369, %370, %cst_130 {dimension_numbers = #tpu.dot_dimension_numbers<[1], [0], [0], [1], [0, 0, 1, 1], [], []>} : vector<12x8xbf16>, vector<8x64xbf16>, vector<12x64xf32> -> vector<12x64xf32>
    %372 = arith.addf %347, %371 : vector<12x64xf32>
    %373 = vector.extract_strided_slice %289 {offsets = [0, 24], sizes = [12, 8], strides = [1, 1]} : vector<12x64xf32> to vector<12x8xf32>
    %374 = vector.extract_strided_slice %296 {offsets = [0, 24], sizes = [7, 8], strides = [1, 1]} : vector<7x128xf32> to vector<7x8xf32>
    %375 = vector.extract_strided_slice %296 {offsets = [0, 88], sizes = [7, 8], strides = [1, 1]} : vector<7x128xf32> to vector<7x8xf32>
    %376 = arith.truncf %373 : vector<12x8xf32> to vector<12x8xbf16>
    %377 = arith.truncf %374 : vector<7x8xf32> to vector<7x8xbf16>
    %cst_131 = arith.constant dense<0.000000e+00> : vector<12x7xf32>
    %378 = tpu.matmul %376, %377, %cst_131 {dimension_numbers = #tpu.dot_dimension_numbers<[1], [1], [0], [0], [0, 0, 1, 0], [], []>} : vector<12x8xbf16>, vector<7x8xbf16>, vector<12x7xf32> -> vector<12x7xf32>
    %cst_132 = arith.constant 0.353553385 : f32
    %379 = vector.broadcast %cst_132 : f32 to vector<12x7xf32>
    %380 = arith.mulf %378, %379 : vector<12x7xf32>
    %cst_133 = arith.constant dense<0xFF800000> : vector<12xf32>
    %381 = vector.multi_reduction <maximumf>, %380, %cst_133 [1] : vector<12x7xf32> to vector<12xf32>
    %382 = vector.shape_cast %381 : vector<12xf32> to vector<12x1xf32>
    %383 = vector.broadcast %382 : vector<12x1xf32> to vector<12x7xf32>
    %384 = arith.subf %380, %383 : vector<12x7xf32>
    %385 = math.exp %384 : vector<12x7xf32>
    %cst_134 = arith.constant dense<0.000000e+00> : vector<12xf32>
    %386 = vector.multi_reduction <add>, %385, %cst_134 [1] : vector<12x7xf32> to vector<12xf32>
    %387 = vector.shape_cast %386 : vector<12xf32> to vector<12x1xf32>
    %388 = vector.broadcast %387 : vector<12x1xf32> to vector<12x7xf32>
    %389 = arith.divf %385, %388 : vector<12x7xf32>
    %390 = arith.truncf %389 : vector<12x7xf32> to vector<12x7xbf16>
    %391 = arith.truncf %375 : vector<7x8xf32> to vector<7x8xbf16>
    %cst_135 = arith.constant dense<0.000000e+00> : vector<12x8xf32>
    %392 = tpu.matmul %390, %391, %cst_135 {dimension_numbers = #tpu.dot_dimension_numbers<[1], [0], [0], [1], [0, 0, 1, 1], [], []>} : vector<12x7xbf16>, vector<7x8xbf16>, vector<12x8xf32> -> vector<12x8xf32>
    %c24_136 = arith.constant 24 : index
    %c0_137 = arith.constant 0 : index
    %393 = vector.load %arg18[%c24_136, %c0_137] : memref<64x64xf32, #tpu.memory_space<vmem>>, vector<8x64xf32>
    %394 = arith.truncf %392 : vector<12x8xf32> to vector<12x8xbf16>
    %395 = arith.truncf %393 : vector<8x64xf32> to vector<8x64xbf16>
    %cst_138 = arith.constant dense<0.000000e+00> : vector<12x64xf32>
    %396 = tpu.matmul %394, %395, %cst_138 {dimension_numbers = #tpu.dot_dimension_numbers<[1], [0], [0], [1], [0, 0, 1, 1], [], []>} : vector<12x8xbf16>, vector<8x64xbf16>, vector<12x64xf32> -> vector<12x64xf32>
    %397 = arith.addf %372, %396 : vector<12x64xf32>
    %398 = vector.extract_strided_slice %289 {offsets = [0, 32], sizes = [12, 8], strides = [1, 1]} : vector<12x64xf32> to vector<12x8xf32>
    %399 = vector.extract_strided_slice %296 {offsets = [0, 32], sizes = [7, 8], strides = [1, 1]} : vector<7x128xf32> to vector<7x8xf32>
    %400 = vector.extract_strided_slice %296 {offsets = [0, 96], sizes = [7, 8], strides = [1, 1]} : vector<7x128xf32> to vector<7x8xf32>
    %401 = arith.truncf %398 : vector<12x8xf32> to vector<12x8xbf16>
    %402 = arith.truncf %399 : vector<7x8xf32> to vector<7x8xbf16>
    %cst_139 = arith.constant dense<0.000000e+00> : vector<12x7xf32>
    %403 = tpu.matmul %401, %402, %cst_139 {dimension_numbers = #tpu.dot_dimension_numbers<[1], [1], [0], [0], [0, 0, 1, 0], [], []>} : vector<12x8xbf16>, vector<7x8xbf16>, vector<12x7xf32> -> vector<12x7xf32>
    %cst_140 = arith.constant 0.353553385 : f32
    %404 = vector.broadcast %cst_140 : f32 to vector<12x7xf32>
    %405 = arith.mulf %403, %404 : vector<12x7xf32>
    %cst_141 = arith.constant dense<0xFF800000> : vector<12xf32>
    %406 = vector.multi_reduction <maximumf>, %405, %cst_141 [1] : vector<12x7xf32> to vector<12xf32>
    %407 = vector.shape_cast %406 : vector<12xf32> to vector<12x1xf32>
    %408 = vector.broadcast %407 : vector<12x1xf32> to vector<12x7xf32>
    %409 = arith.subf %405, %408 : vector<12x7xf32>
    %410 = math.exp %409 : vector<12x7xf32>
    %cst_142 = arith.constant dense<0.000000e+00> : vector<12xf32>
    %411 = vector.multi_reduction <add>, %410, %cst_142 [1] : vector<12x7xf32> to vector<12xf32>
    %412 = vector.shape_cast %411 : vector<12xf32> to vector<12x1xf32>
    %413 = vector.broadcast %412 : vector<12x1xf32> to vector<12x7xf32>
    %414 = arith.divf %410, %413 : vector<12x7xf32>
    %415 = arith.truncf %414 : vector<12x7xf32> to vector<12x7xbf16>
    %416 = arith.truncf %400 : vector<7x8xf32> to vector<7x8xbf16>
    %cst_143 = arith.constant dense<0.000000e+00> : vector<12x8xf32>
    %417 = tpu.matmul %415, %416, %cst_143 {dimension_numbers = #tpu.dot_dimension_numbers<[1], [0], [0], [1], [0, 0, 1, 1], [], []>} : vector<12x7xbf16>, vector<7x8xbf16>, vector<12x8xf32> -> vector<12x8xf32>
    %c32_144 = arith.constant 32 : index
    %c0_145 = arith.constant 0 : index
    %418 = vector.load %arg18[%c32_144, %c0_145] : memref<64x64xf32, #tpu.memory_space<vmem>>, vector<8x64xf32>
    %419 = arith.truncf %417 : vector<12x8xf32> to vector<12x8xbf16>
    %420 = arith.truncf %418 : vector<8x64xf32> to vector<8x64xbf16>
    %cst_146 = arith.constant dense<0.000000e+00> : vector<12x64xf32>
    %421 = tpu.matmul %419, %420, %cst_146 {dimension_numbers = #tpu.dot_dimension_numbers<[1], [0], [0], [1], [0, 0, 1, 1], [], []>} : vector<12x8xbf16>, vector<8x64xbf16>, vector<12x64xf32> -> vector<12x64xf32>
    %422 = arith.addf %397, %421 : vector<12x64xf32>
    %423 = vector.extract_strided_slice %289 {offsets = [0, 40], sizes = [12, 8], strides = [1, 1]} : vector<12x64xf32> to vector<12x8xf32>
    %424 = vector.extract_strided_slice %296 {offsets = [0, 40], sizes = [7, 8], strides = [1, 1]} : vector<7x128xf32> to vector<7x8xf32>
    %425 = vector.extract_strided_slice %296 {offsets = [0, 104], sizes = [7, 8], strides = [1, 1]} : vector<7x128xf32> to vector<7x8xf32>
    %426 = arith.truncf %423 : vector<12x8xf32> to vector<12x8xbf16>
    %427 = arith.truncf %424 : vector<7x8xf32> to vector<7x8xbf16>
    %cst_147 = arith.constant dense<0.000000e+00> : vector<12x7xf32>
    %428 = tpu.matmul %426, %427, %cst_147 {dimension_numbers = #tpu.dot_dimension_numbers<[1], [1], [0], [0], [0, 0, 1, 0], [], []>} : vector<12x8xbf16>, vector<7x8xbf16>, vector<12x7xf32> -> vector<12x7xf32>
    %cst_148 = arith.constant 0.353553385 : f32
    %429 = vector.broadcast %cst_148 : f32 to vector<12x7xf32>
    %430 = arith.mulf %428, %429 : vector<12x7xf32>
    %cst_149 = arith.constant dense<0xFF800000> : vector<12xf32>
    %431 = vector.multi_reduction <maximumf>, %430, %cst_149 [1] : vector<12x7xf32> to vector<12xf32>
    %432 = vector.shape_cast %431 : vector<12xf32> to vector<12x1xf32>
    %433 = vector.broadcast %432 : vector<12x1xf32> to vector<12x7xf32>
    %434 = arith.subf %430, %433 : vector<12x7xf32>
    %435 = math.exp %434 : vector<12x7xf32>
    %cst_150 = arith.constant dense<0.000000e+00> : vector<12xf32>
    %436 = vector.multi_reduction <add>, %435, %cst_150 [1] : vector<12x7xf32> to vector<12xf32>
    %437 = vector.shape_cast %436 : vector<12xf32> to vector<12x1xf32>
    %438 = vector.broadcast %437 : vector<12x1xf32> to vector<12x7xf32>
    %439 = arith.divf %435, %438 : vector<12x7xf32>
    %440 = arith.truncf %439 : vector<12x7xf32> to vector<12x7xbf16>
    %441 = arith.truncf %425 : vector<7x8xf32> to vector<7x8xbf16>
    %cst_151 = arith.constant dense<0.000000e+00> : vector<12x8xf32>
    %442 = tpu.matmul %440, %441, %cst_151 {dimension_numbers = #tpu.dot_dimension_numbers<[1], [0], [0], [1], [0, 0, 1, 1], [], []>} : vector<12x7xbf16>, vector<7x8xbf16>, vector<12x8xf32> -> vector<12x8xf32>
    %c40_152 = arith.constant 40 : index
    %c0_153 = arith.constant 0 : index
    %443 = vector.load %arg18[%c40_152, %c0_153] : memref<64x64xf32, #tpu.memory_space<vmem>>, vector<8x64xf32>
    %444 = arith.truncf %442 : vector<12x8xf32> to vector<12x8xbf16>
    %445 = arith.truncf %443 : vector<8x64xf32> to vector<8x64xbf16>
    %cst_154 = arith.constant dense<0.000000e+00> : vector<12x64xf32>
    %446 = tpu.matmul %444, %445, %cst_154 {dimension_numbers = #tpu.dot_dimension_numbers<[1], [0], [0], [1], [0, 0, 1, 1], [], []>} : vector<12x8xbf16>, vector<8x64xbf16>, vector<12x64xf32> -> vector<12x64xf32>
    %447 = arith.addf %422, %446 : vector<12x64xf32>
    %448 = vector.extract_strided_slice %289 {offsets = [0, 48], sizes = [12, 8], strides = [1, 1]} : vector<12x64xf32> to vector<12x8xf32>
    %449 = vector.extract_strided_slice %296 {offsets = [0, 48], sizes = [7, 8], strides = [1, 1]} : vector<7x128xf32> to vector<7x8xf32>
    %450 = vector.extract_strided_slice %296 {offsets = [0, 112], sizes = [7, 8], strides = [1, 1]} : vector<7x128xf32> to vector<7x8xf32>
    %451 = arith.truncf %448 : vector<12x8xf32> to vector<12x8xbf16>
    %452 = arith.truncf %449 : vector<7x8xf32> to vector<7x8xbf16>
    %cst_155 = arith.constant dense<0.000000e+00> : vector<12x7xf32>
    %453 = tpu.matmul %451, %452, %cst_155 {dimension_numbers = #tpu.dot_dimension_numbers<[1], [1], [0], [0], [0, 0, 1, 0], [], []>} : vector<12x8xbf16>, vector<7x8xbf16>, vector<12x7xf32> -> vector<12x7xf32>
    %cst_156 = arith.constant 0.353553385 : f32
    %454 = vector.broadcast %cst_156 : f32 to vector<12x7xf32>
    %455 = arith.mulf %453, %454 : vector<12x7xf32>
    %cst_157 = arith.constant dense<0xFF800000> : vector<12xf32>
    %456 = vector.multi_reduction <maximumf>, %455, %cst_157 [1] : vector<12x7xf32> to vector<12xf32>
    %457 = vector.shape_cast %456 : vector<12xf32> to vector<12x1xf32>
    %458 = vector.broadcast %457 : vector<12x1xf32> to vector<12x7xf32>
    %459 = arith.subf %455, %458 : vector<12x7xf32>
    %460 = math.exp %459 : vector<12x7xf32>
    %cst_158 = arith.constant dense<0.000000e+00> : vector<12xf32>
    %461 = vector.multi_reduction <add>, %460, %cst_158 [1] : vector<12x7xf32> to vector<12xf32>
    %462 = vector.shape_cast %461 : vector<12xf32> to vector<12x1xf32>
    %463 = vector.broadcast %462 : vector<12x1xf32> to vector<12x7xf32>
    %464 = arith.divf %460, %463 : vector<12x7xf32>
    %465 = arith.truncf %464 : vector<12x7xf32> to vector<12x7xbf16>
    %466 = arith.truncf %450 : vector<7x8xf32> to vector<7x8xbf16>
    %cst_159 = arith.constant dense<0.000000e+00> : vector<12x8xf32>
    %467 = tpu.matmul %465, %466, %cst_159 {dimension_numbers = #tpu.dot_dimension_numbers<[1], [0], [0], [1], [0, 0, 1, 1], [], []>} : vector<12x7xbf16>, vector<7x8xbf16>, vector<12x8xf32> -> vector<12x8xf32>
    %c48_160 = arith.constant 48 : index
    %c0_161 = arith.constant 0 : index
    %468 = vector.load %arg18[%c48_160, %c0_161] : memref<64x64xf32, #tpu.memory_space<vmem>>, vector<8x64xf32>
    %469 = arith.truncf %467 : vector<12x8xf32> to vector<12x8xbf16>
    %470 = arith.truncf %468 : vector<8x64xf32> to vector<8x64xbf16>
    %cst_162 = arith.constant dense<0.000000e+00> : vector<12x64xf32>
    %471 = tpu.matmul %469, %470, %cst_162 {dimension_numbers = #tpu.dot_dimension_numbers<[1], [0], [0], [1], [0, 0, 1, 1], [], []>} : vector<12x8xbf16>, vector<8x64xbf16>, vector<12x64xf32> -> vector<12x64xf32>
    %472 = arith.addf %447, %471 : vector<12x64xf32>
    %473 = vector.extract_strided_slice %289 {offsets = [0, 56], sizes = [12, 8], strides = [1, 1]} : vector<12x64xf32> to vector<12x8xf32>
    %474 = vector.extract_strided_slice %296 {offsets = [0, 56], sizes = [7, 8], strides = [1, 1]} : vector<7x128xf32> to vector<7x8xf32>
    %475 = vector.extract_strided_slice %296 {offsets = [0, 120], sizes = [7, 8], strides = [1, 1]} : vector<7x128xf32> to vector<7x8xf32>
    %476 = arith.truncf %473 : vector<12x8xf32> to vector<12x8xbf16>
    %477 = arith.truncf %474 : vector<7x8xf32> to vector<7x8xbf16>
    %cst_163 = arith.constant dense<0.000000e+00> : vector<12x7xf32>
    %478 = tpu.matmul %476, %477, %cst_163 {dimension_numbers = #tpu.dot_dimension_numbers<[1], [1], [0], [0], [0, 0, 1, 0], [], []>} : vector<12x8xbf16>, vector<7x8xbf16>, vector<12x7xf32> -> vector<12x7xf32>
    %cst_164 = arith.constant 0.353553385 : f32
    %479 = vector.broadcast %cst_164 : f32 to vector<12x7xf32>
    %480 = arith.mulf %478, %479 : vector<12x7xf32>
    %cst_165 = arith.constant dense<0xFF800000> : vector<12xf32>
    %481 = vector.multi_reduction <maximumf>, %480, %cst_165 [1] : vector<12x7xf32> to vector<12xf32>
    %482 = vector.shape_cast %481 : vector<12xf32> to vector<12x1xf32>
    %483 = vector.broadcast %482 : vector<12x1xf32> to vector<12x7xf32>
    %484 = arith.subf %480, %483 : vector<12x7xf32>
    %485 = math.exp %484 : vector<12x7xf32>
    %cst_166 = arith.constant dense<0.000000e+00> : vector<12xf32>
    %486 = vector.multi_reduction <add>, %485, %cst_166 [1] : vector<12x7xf32> to vector<12xf32>
    %487 = vector.shape_cast %486 : vector<12xf32> to vector<12x1xf32>
    %488 = vector.broadcast %487 : vector<12x1xf32> to vector<12x7xf32>
    %489 = arith.divf %485, %488 : vector<12x7xf32>
    %490 = arith.truncf %489 : vector<12x7xf32> to vector<12x7xbf16>
    %491 = arith.truncf %475 : vector<7x8xf32> to vector<7x8xbf16>
    %cst_167 = arith.constant dense<0.000000e+00> : vector<12x8xf32>
    %492 = tpu.matmul %490, %491, %cst_167 {dimension_numbers = #tpu.dot_dimension_numbers<[1], [0], [0], [1], [0, 0, 1, 1], [], []>} : vector<12x7xbf16>, vector<7x8xbf16>, vector<12x8xf32> -> vector<12x8xf32>
    %c56_168 = arith.constant 56 : index
    %c0_169 = arith.constant 0 : index
    %493 = vector.load %arg18[%c56_168, %c0_169] : memref<64x64xf32, #tpu.memory_space<vmem>>, vector<8x64xf32>
    %494 = arith.truncf %492 : vector<12x8xf32> to vector<12x8xbf16>
    %495 = arith.truncf %493 : vector<8x64xf32> to vector<8x64xbf16>
    %cst_170 = arith.constant dense<0.000000e+00> : vector<12x64xf32>
    %496 = tpu.matmul %494, %495, %cst_170 {dimension_numbers = #tpu.dot_dimension_numbers<[1], [0], [0], [1], [0, 0, 1, 1], [], []>} : vector<12x8xbf16>, vector<8x64xbf16>, vector<12x64xf32> -> vector<12x64xf32>
    %497 = arith.addf %472, %496 : vector<12x64xf32>
    %c0_171 = arith.constant 0 : index
    %c0_172 = arith.constant 0 : index
    %498 = vector.load %arg19[%c0_171, %c0_172] : memref<1x64xf32, #tpu.memory_space<vmem>>, vector<1x64xf32>
    %499 = vector.broadcast %498 : vector<1x64xf32> to vector<12x64xf32>
    %500 = arith.addf %497, %499 : vector<12x64xf32>
    %501 = arith.addf %260, %500 : vector<12x64xf32>
    %cst_173 = arith.constant dense<0.000000e+00> : vector<12xf32>
    %502 = vector.multi_reduction <add>, %501, %cst_173 [1] : vector<12x64xf32> to vector<12xf32>
    %503 = vector.shape_cast %502 : vector<12xf32> to vector<12x1xf32>
    %cst_174 = arith.constant 6.400000e+01 : f32
    %504 = vector.broadcast %cst_174 : f32 to vector<12x1xf32>
    %505 = arith.divf %503, %504 : vector<12x1xf32>
    %506 = vector.broadcast %505 : vector<12x1xf32> to vector<12x64xf32>
    %507 = arith.subf %501, %506 : vector<12x64xf32>
    %508 = arith.mulf %507, %507 : vector<12x64xf32>
    %cst_175 = arith.constant dense<0.000000e+00> : vector<12xf32>
    %509 = vector.multi_reduction <add>, %508, %cst_175 [1] : vector<12x64xf32> to vector<12xf32>
    %510 = vector.shape_cast %509 : vector<12xf32> to vector<12x1xf32>
    %cst_176 = arith.constant 0.0158730168 : f32
    %511 = vector.broadcast %cst_176 : f32 to vector<12x1xf32>
    %512 = arith.mulf %510, %511 : vector<12x1xf32>
    %513 = math.sqrt %512 : vector<12x1xf32>
    %c0_177 = arith.constant 0 : index
    %c0_178 = arith.constant 0 : index
    %514 = vector.load %arg20[%c0_177, %c0_178] : memref<1x64xf32, #tpu.memory_space<vmem>>, vector<1x64xf32>
    %515 = vector.broadcast %514 : vector<1x64xf32> to vector<12x64xf32>
    %516 = arith.mulf %515, %507 : vector<12x64xf32>
    %cst_179 = arith.constant 9.99999997E-7 : f32
    %517 = vector.broadcast %cst_179 : f32 to vector<12x1xf32>
    %518 = arith.addf %513, %517 : vector<12x1xf32>
    %519 = vector.broadcast %518 : vector<12x1xf32> to vector<12x64xf32>
    %520 = arith.divf %516, %519 : vector<12x64xf32>
    %c0_180 = arith.constant 0 : index
    %c0_181 = arith.constant 0 : index
    %521 = vector.load %arg21[%c0_180, %c0_181] : memref<1x64xf32, #tpu.memory_space<vmem>>, vector<1x64xf32>
    %522 = vector.broadcast %521 : vector<1x64xf32> to vector<12x64xf32>
    %523 = arith.addf %520, %522 : vector<12x64xf32>
    %c0_182 = arith.constant 0 : index
    %c0_183 = arith.constant 0 : index
    %524 = vector.load %arg22[%c0_182, %c0_183] : memref<64x128xf32, #tpu.memory_space<vmem>>, vector<64x128xf32>
    %525 = arith.truncf %523 : vector<12x64xf32> to vector<12x64xbf16>
    %526 = arith.truncf %524 : vector<64x128xf32> to vector<64x128xbf16>
    %cst_184 = arith.constant dense<0.000000e+00> : vector<12x128xf32>
    %527 = tpu.matmul %525, %526, %cst_184 {dimension_numbers = #tpu.dot_dimension_numbers<[1], [0], [0], [1], [0, 0, 1, 1], [], []>} : vector<12x64xbf16>, vector<64x128xbf16>, vector<12x128xf32> -> vector<12x128xf32>
    %c0_185 = arith.constant 0 : index
    %c0_186 = arith.constant 0 : index
    %528 = vector.load %arg23[%c0_185, %c0_186] : memref<1x128xf32, #tpu.memory_space<vmem>>, vector<1x128xf32>
    %529 = vector.broadcast %528 : vector<1x128xf32> to vector<12x128xf32>
    %530 = arith.addf %527, %529 : vector<12x128xf32>
    %cst_187 = arith.constant 0.000000e+00 : f32
    %531 = vector.broadcast %cst_187 : f32 to vector<12x128xf32>
    %532 = arith.maximumf %530, %531 : vector<12x128xf32>
    %c0_188 = arith.constant 0 : index
    %c0_189 = arith.constant 0 : index
    %533 = vector.load %arg24[%c0_188, %c0_189] : memref<128x64xf32, #tpu.memory_space<vmem>>, vector<128x64xf32>
    %534 = arith.truncf %532 : vector<12x128xf32> to vector<12x128xbf16>
    %535 = arith.truncf %533 : vector<128x64xf32> to vector<128x64xbf16>
    %cst_190 = arith.constant dense<0.000000e+00> : vector<12x64xf32>
    %536 = tpu.matmul %534, %535, %cst_190 {dimension_numbers = #tpu.dot_dimension_numbers<[1], [0], [0], [1], [0, 0, 1, 1], [], []>} : vector<12x128xbf16>, vector<128x64xbf16>, vector<12x64xf32> -> vector<12x64xf32>
    %c0_191 = arith.constant 0 : index
    %c0_192 = arith.constant 0 : index
    %537 = vector.load %arg25[%c0_191, %c0_192] : memref<1x64xf32, #tpu.memory_space<vmem>>, vector<1x64xf32>
    %538 = vector.broadcast %537 : vector<1x64xf32> to vector<12x64xf32>
    %539 = arith.addf %536, %538 : vector<12x64xf32>
    %540 = arith.addf %501, %539 : vector<12x64xf32>
    %cst_193 = arith.constant dense<0.000000e+00> : vector<12xf32>
    %541 = vector.multi_reduction <add>, %540, %cst_193 [1] : vector<12x64xf32> to vector<12xf32>
    %542 = vector.shape_cast %541 : vector<12xf32> to vector<12x1xf32>
    %cst_194 = arith.constant 6.400000e+01 : f32
    %543 = vector.broadcast %cst_194 : f32 to vector<12x1xf32>
    %544 = arith.divf %542, %543 : vector<12x1xf32>
    %545 = vector.broadcast %544 : vector<12x1xf32> to vector<12x64xf32>
    %546 = arith.subf %540, %545 : vector<12x64xf32>
    %547 = arith.mulf %546, %546 : vector<12x64xf32>
    %cst_195 = arith.constant dense<0.000000e+00> : vector<12xf32>
    %548 = vector.multi_reduction <add>, %547, %cst_195 [1] : vector<12x64xf32> to vector<12xf32>
    %549 = vector.shape_cast %548 : vector<12xf32> to vector<12x1xf32>
    %cst_196 = arith.constant 0.0158730168 : f32
    %550 = vector.broadcast %cst_196 : f32 to vector<12x1xf32>
    %551 = arith.mulf %549, %550 : vector<12x1xf32>
    %552 = math.sqrt %551 : vector<12x1xf32>
    %c0_197 = arith.constant 0 : index
    %c0_198 = arith.constant 0 : index
    %553 = vector.load %arg26[%c0_197, %c0_198] : memref<1x64xf32, #tpu.memory_space<vmem>>, vector<1x64xf32>
    %554 = vector.broadcast %553 : vector<1x64xf32> to vector<12x64xf32>
    %555 = arith.mulf %554, %546 : vector<12x64xf32>
    %cst_199 = arith.constant 9.99999997E-7 : f32
    %556 = vector.broadcast %cst_199 : f32 to vector<12x1xf32>
    %557 = arith.addf %552, %556 : vector<12x1xf32>
    %558 = vector.broadcast %557 : vector<12x1xf32> to vector<12x64xf32>
    %559 = arith.divf %555, %558 : vector<12x64xf32>
    %c0_200 = arith.constant 0 : index
    %c0_201 = arith.constant 0 : index
    %560 = vector.load %arg27[%c0_200, %c0_201] : memref<1x64xf32, #tpu.memory_space<vmem>>, vector<1x64xf32>
    %561 = vector.broadcast %560 : vector<1x64xf32> to vector<12x64xf32>
    %562 = arith.addf %559, %561 : vector<12x64xf32>
    %c0_202 = arith.constant 0 : index
    %c0_203 = arith.constant 0 : index
    %563 = vector.load %arg28[%c0_202, %c0_203] : memref<64x3xf32, #tpu.memory_space<vmem>>, vector<64x3xf32>
    %564 = arith.truncf %562 : vector<12x64xf32> to vector<12x64xbf16>
    %565 = arith.truncf %563 : vector<64x3xf32> to vector<64x3xbf16>
    %cst_204 = arith.constant dense<0.000000e+00> : vector<12x3xf32>
    %566 = tpu.matmul %564, %565, %cst_204 {dimension_numbers = #tpu.dot_dimension_numbers<[1], [0], [0], [1], [0, 0, 1, 1], [], []>} : vector<12x64xbf16>, vector<64x3xbf16>, vector<12x3xf32> -> vector<12x3xf32>
    %c0_205 = arith.constant 0 : index
    %c0_206 = arith.constant 0 : index
    %567 = vector.load %arg29[%c0_205, %c0_206] : memref<1x3xf32, #tpu.memory_space<vmem>>, vector<1x3xf32>
    %568 = vector.broadcast %567 : vector<1x3xf32> to vector<12x3xf32>
    %569 = arith.addf %566, %568 : vector<12x3xf32>
    %c0_207 = arith.constant 0 : index
    %c0_208 = arith.constant 0 : index
    %c0_209 = arith.constant 0 : index
    %570 = vector.load %arg30[%c0_207, %c0_208, %c0_209] : memref<1x12x3xf32, #tpu.memory_space<vmem>>, vector<1x12x3xf32>
    %571 = vector.shape_cast %570 : vector<1x12x3xf32> to vector<12x3xf32>
    %572 = vector.shape_cast %569 : vector<12x3xf32> to vector<1x12x3xf32>
    tpu.vector_store %arg30[%c0_207, %c0_208, %c0_209], %572 {strides = array<i32>} : memref<1x12x3xf32, #tpu.memory_space<vmem>>, vector<1x12x3xf32>,
    return
  }
  func.func @transform_0(%arg0: i32) -> (i32, i32, i32) {
    %c0_i32 = arith.constant 0 : i32
    %c0_i32_0 = arith.constant 0 : i32
    %c0_i32_1 = arith.constant 0 : i32
    return %arg0, %c0_i32, %c0_i32_0 : i32, i32, i32
  }
  func.func @transform_1(%arg0: i32) -> (i32, i32, i32) {
    %c0_i32 = arith.constant 0 : i32
    %c0_i32_0 = arith.constant 0 : i32
    %c0_i32_1 = arith.constant 0 : i32
    return %arg0, %c0_i32, %c0_i32_0 : i32, i32, i32
  }
  func.func @transform_2(%arg0: i32) -> (i32, i32) {
    %c0_i32 = arith.constant 0 : i32
    %c0_i32_0 = arith.constant 0 : i32
    %c0_i32_1 = arith.constant 0 : i32
    return %c0_i32, %c0_i32_0 : i32, i32
  }
  func.func @transform_3(%arg0: i32) -> (i32, i32) {
    %c0_i32 = arith.constant 0 : i32
    %c0_i32_0 = arith.constant 0 : i32
    %c0_i32_1 = arith.constant 0 : i32
    return %c0_i32, %c0_i32_0 : i32, i32
  }
  func.func @transform_4(%arg0: i32) -> (i32, i32) {
    %c0_i32 = arith.constant 0 : i32
    %c0_i32_0 = arith.constant 0 : i32
    %c0_i32_1 = arith.constant 0 : i32
    return %c0_i32, %c0_i32_0 : i32, i32
  }
  func.func @transform_5(%arg0: i32) -> (i32, i32) {
    %c0_i32 = arith.constant 0 : i32
    %c0_i32_0 = arith.constant 0 : i32
    %c0_i32_1 = arith.constant 0 : i32
    return %c0_i32, %c0_i32_0 : i32, i32
  }
  func.func @transform_6(%arg0: i32) -> (i32, i32) {
    %c0_i32 = arith.constant 0 : i32
    %c0_i32_0 = arith.constant 0 : i32
    %c0_i32_1 = arith.constant 0 : i32
    return %c0_i32, %c0_i32_0 : i32, i32
  }
  func.func @transform_7(%arg0: i32) -> (i32, i32) {
    %c0_i32 = arith.constant 0 : i32
    %c0_i32_0 = arith.constant 0 : i32
    %c0_i32_1 = arith.constant 0 : i32
    return %c0_i32, %c0_i32_0 : i32, i32
  }
  func.func @transform_8(%arg0: i32) -> (i32, i32) {
    %c0_i32 = arith.constant 0 : i32
    %c0_i32_0 = arith.constant 0 : i32
    %c0_i32_1 = arith.constant 0 : i32
    return %c0_i32, %c0_i32_0 : i32, i32
  }
  func.func @transform_9(%arg0: i32) -> (i32, i32) {
    %c0_i32 = arith.constant 0 : i32
    %c0_i32_0 = arith.constant 0 : i32
    %c0_i32_1 = arith.constant 0 : i32
    return %c0_i32, %c0_i32_0 : i32, i32
  }
  func.func @transform_10(%arg0: i32) -> (i32, i32) {
    %c0_i32 = arith.constant 0 : i32
    %c0_i32_0 = arith.constant 0 : i32
    %c0_i32_1 = arith.constant 0 : i32
    return %c0_i32, %c0_i32_0 : i32, i32
  }
  func.func @transform_11(%arg0: i32) -> (i32, i32) {
    %c0_i32 = arith.constant 0 : i32
    %c0_i32_0 = arith.constant 0 : i32
    %c0_i32_1 = arith.constant 0 : i32
    return %c0_i32, %c0_i32_0 : i32, i32
  }
  func.func @transform_12(%arg0: i32) -> (i32, i32) {
    %c0_i32 = arith.constant 0 : i32
    %c0_i32_0 = arith.constant 0 : i32
    %c0_i32_1 = arith.constant 0 : i32
    return %c0_i32, %c0_i32_0 : i32, i32
  }
  func.func @transform_13(%arg0: i32) -> (i32, i32) {
    %c0_i32 = arith.constant 0 : i32
    %c0_i32_0 = arith.constant 0 : i32
    %c0_i32_1 = arith.constant 0 : i32
    return %c0_i32, %c0_i32_0 : i32, i32
  }
  func.func @transform_14(%arg0: i32) -> (i32, i32) {
    %c0_i32 = arith.constant 0 : i32
    %c0_i32_0 = arith.constant 0 : i32
    %c0_i32_1 = arith.constant 0 : i32
    return %c0_i32, %c0_i32_0 : i32, i32
  }
  func.func @transform_15(%arg0: i32) -> (i32, i32) {
    %c0_i32 = arith.constant 0 : i32
    %c0_i32_0 = arith.constant 0 : i32
    %c0_i32_1 = arith.constant 0 : i32
    return %c0_i32, %c0_i32_0 : i32, i32
  }
  func.func @transform_16(%arg0: i32) -> (i32, i32) {
    %c0_i32 = arith.constant 0 : i32
    %c0_i32_0 = arith.constant 0 : i32
    %c0_i32_1 = arith.constant 0 : i32
    return %c0_i32, %c0_i32_0 : i32, i32
  }
  func.func @transform_17(%arg0: i32) -> (i32, i32) {
    %c0_i32 = arith.constant 0 : i32
    %c0_i32_0 = arith.constant 0 : i32
    %c0_i32_1 = arith.constant 0 : i32
    return %c0_i32, %c0_i32_0 : i32, i32
  }
  func.func @transform_18(%arg0: i32) -> (i32, i32) {
    %c0_i32 = arith.constant 0 : i32
    %c0_i32_0 = arith.constant 0 : i32
    %c0_i32_1 = arith.constant 0 : i32
    return %c0_i32, %c0_i32_0 : i32, i32
  }
  func.func @transform_19(%arg0: i32) -> (i32, i32) {
    %c0_i32 = arith.constant 0 : i32
    %c0_i32_0 = arith.constant 0 : i32
    %c0_i32_1 = arith.constant 0 : i32
    return %c0_i32, %c0_i32_0 : i32, i32
  }
  func.func @transform_20(%arg0: i32) -> (i32, i32) {
    %c0_i32 = arith.constant 0 : i32
    %c0_i32_0 = arith.constant 0 : i32
    %c0_i32_1 = arith.constant 0 : i32
    return %c0_i32, %c0_i32_0 : i32, i32
  }
  func.func @transform_21(%arg0: i32) -> (i32, i32) {
    %c0_i32 = arith.constant 0 : i32
    %c0_i32_0 = arith.constant 0 : i32
    %c0_i32_1 = arith.constant 0 : i32
    return %c0_i32, %c0_i32_0 : i32, i32
  }
  func.func @transform_22(%arg0: i32) -> (i32, i32) {
    %c0_i32 = arith.constant 0 : i32
    %c0_i32_0 = arith.constant 0 : i32
    %c0_i32_1 = arith.constant 0 : i32
    return %c0_i32, %c0_i32_0 : i32, i32
  }
  func.func @transform_23(%arg0: i32) -> (i32, i32) {
    %c0_i32 = arith.constant 0 : i32
    %c0_i32_0 = arith.constant 0 : i32
    %c0_i32_1 = arith.constant 0 : i32
    return %c0_i32, %c0_i32_0 : i32, i32
  }
  func.func @transform_24(%arg0: i32) -> (i32, i32) {
    %c0_i32 = arith.constant 0 : i32
    %c0_i32_0 = arith.constant 0 : i32
    %c0_i32_1 = arith.constant 0 : i32
    return %c0_i32, %c0_i32_0 : i32, i32
  }
  func.func @transform_25(%arg0: i32) -> (i32, i32) {
    %c0_i32 = arith.constant 0 : i32
    %c0_i32_0 = arith.constant 0 : i32
    %c0_i32_1 = arith.constant 0 : i32
    return %c0_i32, %c0_i32_0 : i32, i32
  }
  func.func @transform_26(%arg0: i32) -> (i32, i32) {
    %c0_i32 = arith.constant 0 : i32
    %c0_i32_0 = arith.constant 0 : i32
    %c0_i32_1 = arith.constant 0 : i32
    return %c0_i32, %c0_i32_0 : i32, i32
  }
  func.func @transform_27(%arg0: i32) -> (i32, i32) {
    %c0_i32 = arith.constant 0 : i32
    %c0_i32_0 = arith.constant 0 : i32
    %c0_i32_1 = arith.constant 0 : i32
    return %c0_i32, %c0_i32_0 : i32, i32
  }
  func.func @transform_28(%arg0: i32) -> (i32, i32) {
    %c0_i32 = arith.constant 0 : i32
    %c0_i32_0 = arith.constant 0 : i32
    %c0_i32_1 = arith.constant 0 : i32
    return %c0_i32, %c0_i32_0 : i32, i32
  }
  func.func @transform_29(%arg0: i32) -> (i32, i32, i32) {
    %c0_i32 = arith.constant 0 : i32
    %c0_i32_0 = arith.constant 0 : i32
    %c0_i32_1 = arith.constant 0 : i32
    return %arg0, %c0_i32, %c0_i32_0 : i32, i32, i32
  }
}

</mosaic_0001>

<llo_original>
// kernel: trajectory_generator_forward.2
$region0: #{trajectory_generator_forward.2}
  #allocation0 [shape = 'u32[]', space=smem, size = 0x4, offset = 0x4, fixed_abs, tag = 'smem constant byte address 0x4 - core index']
  #allocation1 [shape = 'u32[144,128]{1,0:T(1,128)}', space=vmem, size = 0x12000, scoped, tag = 'internal scratch']
  %s0 = inlined_call_operand.vmem [shape: f32[2,7,2], index: 0, kind: input, shape index: {}]
  %s1 = inlined_call_operand.vmem [shape: f32[2,64], index: 1, kind: input, shape index: {}]
  %s2 = inlined_call_operand.vmem [shape: f32[1,64], index: 2, kind: input, shape index: {}]
  %s3 = inlined_call_operand.vmem [shape: f32[7,64], index: 3, kind: input, shape index: {}]
  %s4 = inlined_call_operand.vmem [shape: f32[1,64], index: 4, kind: input, shape index: {}]
  %s5 = inlined_call_operand.vmem [shape: f32[1,64], index: 5, kind: input, shape index: {}]
  %s6 = inlined_call_operand.vmem [shape: f32[64,192], index: 6, kind: input, shape index: {}]
  %s7 = inlined_call_operand.vmem [shape: f32[1,192], index: 7, kind: input, shape index: {}]
  %s8 = inlined_call_operand.vmem [shape: f32[64,64], index: 8, kind: input, shape index: {}]
  %s9 = inlined_call_operand.vmem [shape: f32[1,64], index: 9, kind: input, shape index: {}]
  %s10 = inlined_call_operand.vmem [shape: f32[1,64], index: 10, kind: input, shape index: {}]
  %s11 = inlined_call_operand.vmem [shape: f32[1,64], index: 11, kind: input, shape index: {}]
  %s12 = inlined_call_operand.vmem [shape: f32[64,128], index: 12, kind: input, shape index: {}]
  %s13 = inlined_call_operand.vmem [shape: f32[1,128], index: 13, kind: input, shape index: {}]
  %s14 = inlined_call_operand.vmem [shape: f32[128,64], index: 14, kind: input, shape index: {}]
  %s15 = inlined_call_operand.vmem [shape: f32[1,64], index: 15, kind: input, shape index: {}]
  %s16 = inlined_call_operand.vmem [shape: f32[1,64], index: 16, kind: input, shape index: {}]
  %s17 = inlined_call_operand.vmem [shape: f32[1,64], index: 17, kind: input, shape index: {}]
  %s18 = inlined_call_operand.vmem [shape: f32[2,7,64], index: 18, kind: output, shape index: {}]
  %s19 = sld [smem:[#allocation0]]
  $region105: #{trajectory_generator_forward.2} parent=0
    _
  %s21 = ssub.s32 1, %s19
  %s22 = scalar_select 0, %s21, %s19
  loop: start=0, step=1, limit=4
  $region2: #{trajectory_generator_forward.2} parent=0 // loop_pre_header
    _
  $region3: #{trajectory_generator_forward.2} parent=0 // loop_header
    %s24 = sphi 0, %s28
    %p25 = scmp.ge.s32.totalorder %s24, 4
    %s34 = sphi 0, %s36
    %s37 = sphi 0, %s34
    %s38 = sphi 0, %s37
    %s54 = sphi 0, %s38
    %s58 = sphi 0, %s58
    %s60 = sphi 0, %s58
    %s61 = sphi 0, %s60
    %s75 = sphi 0, %s61
    %s79 = sphi 0, %s79
    %s81 = sphi 0, %s79
    %s82 = sphi 0, %s81
    %s96 = sphi 0, %s82
    %s100 = sphi 0, %s100
    %s102 = sphi 0, %s100
    %s103 = sphi 0, %s102
    %s117 = sphi 0, %s103
    %s121 = sphi 0, %s121
    %s123 = sphi 0, %s121
    %s124 = sphi 0, %s123
    %s138 = sphi 0, %s124
    %s142 = sphi 0, %s142
    %s144 = sphi 0, %s142
    %s145 = sphi 0, %s144
    %s159 = sphi 0, %s145
    %s163 = sphi 0, %s163
    %s165 = sphi 0, %s163
    %s166 = sphi 0, %s165
    %s180 = sphi 0, %s166
    %s184 = sphi 0, %s184
    %s186 = sphi 0, %s184
    %s187 = sphi 0, %s186
    %s201 = sphi 0, %s187
    %s205 = sphi 0, %s205
    %s207 = sphi 0, %s205
    %s208 = sphi 0, %s207
    %s222 = sphi 0, %s208
    %s226 = sphi 0, %s226
    %s228 = sphi 0, %s226
    %s229 = sphi 0, %s228
    %s243 = sphi 0, %s229
    %s247 = sphi 0, %s247
    %s249 = sphi 0, %s247
    %s250 = sphi 0, %s249
    %s264 = sphi 0, %s250
    %s268 = sphi 0, %s268
    %s270 = sphi 0, %s268
    %s271 = sphi 0, %s270
    %s285 = sphi 0, %s271
    %s289 = sphi 0, %s289
    %s291 = sphi 0, %s289
    %s292 = sphi 0, %s291
    %s306 = sphi 0, %s292
    %s310 = sphi 0, %s310
    %s312 = sphi 0, %s310
    %s313 = sphi 0, %s312
    %s327 = sphi 0, %s313
    %s331 = sphi 0, %s331
    %s333 = sphi 0, %s331
    %s334 = sphi 0, %s333
    %s348 = sphi 0, %s334
    %s352 = sphi 0, %s352
    %s354 = sphi 0, %s352
    %s355 = sphi 0, %s354
    %s369 = sphi 0, %s355
    %s373 = sphi 0, %s373
    %s375 = sphi 0, %s373
    %s376 = sphi 0, %s375
    %s390 = sphi 0, %s376
    %s394 = sphi 0, %s394
    %s396 = sphi 0, %s394
    %s397 = sphi 0, %s396
    %s411 = sphi 0, %s397
    %s417 = sphi 0, %s419
    %s420 = sphi 0, %s417
    %s421 = sphi 0, %s420
    %s437 = sphi 0, %s421
  $region4: #{trajectory_generator_forward.2} parent=0 // loop_header_branch
    %27 = sbr.rel (%p25) target = $region8
  $region5: #{trajectory_generator_forward.2} parent=0 // loop_body
    %s29 = ssub.s32 %s24, 1
    %s30 = ssub.s32 %s24, 2
    %s31 = sadd.s32 %s24, 1
    %s32 = ssub.s32 %s24, %s31
    %p33 = scmp.eq.s32.totalorder %s32, 0
    %s35 = sadd.s32 %s34, 1
    %s36 = scalar_select %p33, %s34, %s35
    %p39 = pneg %p33
    %p40 = scmp.eq.s32.totalorder %s24, 1
    %p41 = por %p39, %p40
    %p42 = scmp.ne.s32.totalorder %s34, %s37
    %p43 = scmp.eq.s32.totalorder %s24, 0
    %p44 = por %p42, %p43
    %p45 = scmp.ne.s32.totalorder %s34, %s37
    %p46 = scmp.eq.s32.totalorder %s29, 1
    %p47 = por %p45, %p46
    %p48 = scmp.ne.s32.totalorder %s37, %s38
    %p49 = scmp.eq.s32.totalorder %s29, 0
    %p50 = por %p48, %p49
    %p51 = scmp.ne.s32.totalorder %s37, %s38
    %p52 = scmp.eq.s32.totalorder %s30, 1
    %p53 = por %p51, %p52
    %p55 = scmp.ne.s32.totalorder %s38, %s54
    %p56 = scmp.eq.s32.totalorder %s30, 0
    %p57 = por %p55, %p56
    %s59 = sadd.s32 %s58, 1
    %p62 = scmp.eq.s32.totalorder %s24, 1
    %p63 = scmp.ne.s32.totalorder %s58, %s60
    %p64 = scmp.eq.s32.totalorder %s24, 0
    %p65 = por %p63, %p64
    %p66 = scmp.ne.s32.totalorder %s58, %s60
    %p67 = scmp.eq.s32.totalorder %s29, 1
    %p68 = por %p66, %p67
    %p69 = scmp.ne.s32.totalorder %s60, %s61
    %p70 = scmp.eq.s32.totalorder %s29, 0
    %p71 = por %p69, %p70
    %p72 = scmp.ne.s32.totalorder %s60, %s61
    %p73 = scmp.eq.s32.totalorder %s30, 1
    %p74 = por %p72, %p73
    %p76 = scmp.ne.s32.totalorder %s61, %s75
    %p77 = scmp.eq.s32.totalorder %s30, 0
    %p78 = por %p76, %p77
    %s80 = sadd.s32 %s79, 1
    %p83 = scmp.eq.s32.totalorder %s24, 1
    %p84 = scmp.ne.s32.totalorder %s79, %s81
    %p85 = scmp.eq.s32.totalorder %s24, 0
    %p86 = por %p84, %p85
    %p87 = scmp.ne.s32.totalorder %s79, %s81
    %p88 = scmp.eq.s32.totalorder %s29, 1
    %p89 = por %p87, %p88
    %p90 = scmp.ne.s32.totalorder %s81, %s82
    %p91 = scmp.eq.s32.totalorder %s29, 0
    %p92 = por %p90, %p91
    %p93 = scmp.ne.s32.totalorder %s81, %s82
    %p94 = scmp.eq.s32.totalorder %s30, 1
    %p95 = por %p93, %p94
    %p97 = scmp.ne.s32.totalorder %s82, %s96
    %p98 = scmp.eq.s32.totalorder %s30, 0
    %p99 = por %p97, %p98
    %s101 = sadd.s32 %s100, 1
    %p104 = scmp.eq.s32.totalorder %s24, 1
    %p105 = scmp.ne.s32.totalorder %s100, %s102
    %p106 = scmp.eq.s32.totalorder %s24, 0
    %p107 = por %p105, %p106
    %p108 = scmp.ne.s32.totalorder %s100, %s102
    %p109 = scmp.eq.s32.totalorder %s29, 1
    %p110 = por %p108, %p109
    %p111 = scmp.ne.s32.totalorder %s102, %s103
    %p112 = scmp.eq.s32.totalorder %s29, 0
    %p113 = por %p111, %p112
    %p114 = scmp.ne.s32.totalorder %s102, %s103
    %p115 = scmp.eq.s32.totalorder %s30, 1
    %p116 = por %p114, %p115
    %p118 = scmp.ne.s32.totalorder %s103, %s117
    %p119 = scmp.eq.s32.totalorder %s30, 0
    %p120 = por %p118, %p119
    %s122 = sadd.s32 %s121, 1
    %p125 = scmp.eq.s32.totalorder %s24, 1
    %p126 = scmp.ne.s32.totalorder %s121, %s123
    %p127 = scmp.eq.s32.totalorder %s24, 0
    %p128 = por %p126, %p127
    %p129 = scmp.ne.s32.totalorder %s121, %s123
    %p130 = scmp.eq.s32.totalorder %s29, 1
    %p131 = por %p129, %p130
    %p132 = scmp.ne.s32.totalorder %s123, %s124
    %p133 = scmp.eq.s32.totalorder %s29, 0
    %p134 = por %p132, %p133
    %p135 = scmp.ne.s32.totalorder %s123, %s124
    %p136 = scmp.eq.s32.totalorder %s30, 1
    %p137 = por %p135, %p136
    %p139 = scmp.ne.s32.totalorder %s124, %s138
    %p140 = scmp.eq.s32.totalorder %s30, 0
    %p141 = por %p139, %p140
    %s143 = sadd.s32 %s142, 1
    %p146 = scmp.eq.s32.totalorder %s24, 1
    %p147 = scmp.ne.s32.totalorder %s142, %s144
    %p148 = scmp.eq.s32.totalorder %s24, 0
    %p149 = por %p147, %p148
    %p150 = scmp.ne.s32.totalorder %s142, %s144
    %p151 = scmp.eq.s32.totalorder %s29, 1
    %p152 = por %p150, %p151
    %p153 = scmp.ne.s32.totalorder %s144, %s145
    %p154 = scmp.eq.s32.totalorder %s29, 0
    %p155 = por %p153, %p154
    %p156 = scmp.ne.s32.totalorder %s144, %s145
    %p157 = scmp.eq.s32.totalorder %s30, 1
    %p158 = por %p156, %p157
    %p160 = scmp.ne.s32.totalorder %s145, %s159
    %p161 = scmp.eq.s32.totalorder %s30, 0
    %p162 = por %p160, %p161
    %s164 = sadd.s32 %s163, 1
    %p167 = scmp.eq.s32.totalorder %s24, 1
    %p168 = scmp.ne.s32.totalorder %s163, %s165
    %p169 = scmp.eq.s32.totalorder %s24, 0
    %p170 = por %p168, %p169
    %p171 = scmp.ne.s32.totalorder %s163, %s165
    %p172 = scmp.eq.s32.totalorder %s29, 1
    %p173 = por %p171, %p172
    %p174 = scmp.ne.s32.totalorder %s165, %s166
    %p175 = scmp.eq.s32.totalorder %s29, 0
    %p176 = por %p174, %p175
    %p177 = scmp.ne.s32.totalorder %s165, %s166
    %p178 = scmp.eq.s32.totalorder %s30, 1
    %p179 = por %p177, %p178
    %p181 = scmp.ne.s32.totalorder %s166, %s180
    %p182 = scmp.eq.s32.totalorder %s30, 0
    %p183 = por %p181, %p182
    %s185 = sadd.s32 %s184, 1
    %p188 = scmp.eq.s32.totalorder %s24, 1
    %p189 = scmp.ne.s32.totalorder %s184, %s186
    %p190 = scmp.eq.s32.totalorder %s24, 0
    %p191 = por %p189, %p190
    %p192 = scmp.ne.s32.totalorder %s184, %s186
    %p193 = scmp.eq.s32.totalorder %s29, 1
    %p194 = por %p192, %p193
    %p195 = scmp.ne.s32.totalorder %s186, %s187
    %p196 = scmp.eq.s32.totalorder %s29, 0
    %p197 = por %p195, %p196
    %p198 = scmp.ne.s32.totalorder %s186, %s187
    %p199 = scmp.eq.s32.totalorder %s30, 1
    %p200 = por %p198, %p199
    %p202 = scmp.ne.s32.totalorder %s187, %s201
    %p203 = scmp.eq.s32.totalorder %s30, 0
    %p204 = por %p202, %p203
    %s206 = sadd.s32 %s205, 1
    %p209 = scmp.eq.s32.totalorder %s24, 1
    %p210 = scmp.ne.s32.totalorder %s205, %s207
    %p211 = scmp.eq.s32.totalorder %s24, 0
    %p212 = por %p210, %p211
    %p213 = scmp.ne.s32.totalorder %s205, %s207
    %p214 = scmp.eq.s32.totalorder %s29, 1
    %p215 = por %p213, %p214
    %p216 = scmp.ne.s32.totalorder %s207, %s208
    %p217 = scmp.eq.s32.totalorder %s29, 0
    %p218 = por %p216, %p217
    %p219 = scmp.ne.s32.totalorder %s207, %s208
    %p220 = scmp.eq.s32.totalorder %s30, 1
    %p221 = por %p219, %p220
    %p223 = scmp.ne.s32.totalorder %s208, %s222
    %p224 = scmp.eq.s32.totalorder %s30, 0
    %p225 = por %p223, %p224
    %s227 = sadd.s32 %s226, 1
    %p230 = scmp.eq.s32.totalorder %s24, 1
    %p231 = scmp.ne.s32.totalorder %s226, %s228
    %p232 = scmp.eq.s32.totalorder %s24, 0
    %p233 = por %p231, %p232
    %p234 = scmp.ne.s32.totalorder %s226, %s228
    %p235 = scmp.eq.s32.totalorder %s29, 1
    %p236 = por %p234, %p235
    %p237 = scmp.ne.s32.totalorder %s228, %s229
    %p238 = scmp.eq.s32.totalorder %s29, 0
    %p239 = por %p237, %p238
    %p240 = scmp.ne.s32.totalorder %s228, %s229
    %p241 = scmp.eq.s32.totalorder %s30, 1
    %p242 = por %p240, %p241
    %p244 = scmp.ne.s32.totalorder %s229, %s243
    %p245 = scmp.eq.s32.totalorder %s30, 0
    %p246 = por %p244, %p245
    %s248 = sadd.s32 %s247, 1
    %p251 = scmp.eq.s32.totalorder %s24, 1
    %p252 = scmp.ne.s32.totalorder %s247, %s249
    %p253 = scmp.eq.s32.totalorder %s24, 0
    %p254 = por %p252, %p253
    %p255 = scmp.ne.s32.totalorder %s247, %s249
    %p256 = scmp.eq.s32.totalorder %s29, 1
    %p257 = por %p255, %p256
    %p258 = scmp.ne.s32.totalorder %s249, %s250
    %p259 = scmp.eq.s32.totalorder %s29, 0
    %p260 = por %p258, %p259
    %p261 = scmp.ne.s32.totalorder %s249, %s250
    %p262 = scmp.eq.s32.totalorder %s30, 1
    %p263 = por %p261, %p262
    %p265 = scmp.ne.s32.totalorder %s250, %s264
    %p266 = scmp.eq.s32.totalorder %s30, 0
    %p267 = por %p265, %p266
    %s269 = sadd.s32 %s268, 1
    %p272 = scmp.eq.s32.totalorder %s24, 1
    %p273 = scmp.ne.s32.totalorder %s268, %s270
    %p274 = scmp.eq.s32.totalorder %s24, 0
    %p275 = por %p273, %p274
    %p276 = scmp.ne.s32.totalorder %s268, %s270
    %p277 = scmp.eq.s32.totalorder %s29, 1
    %p278 = por %p276, %p277
    %p279 = scmp.ne.s32.totalorder %s270, %s271
    %p280 = scmp.eq.s32.totalorder %s29, 0
    %p281 = por %p279, %p280
    %p282 = scmp.ne.s32.totalorder %s270, %s271
    %p283 = scmp.eq.s32.totalorder %s30, 1
    %p284 = por %p282, %p283
    %p286 = scmp.ne.s32.totalorder %s271, %s285
    %p287 = scmp.eq.s32.totalorder %s30, 0
    %p288 = por %p286, %p287
    %s290 = sadd.s32 %s289, 1
    %p293 = scmp.eq.s32.totalorder %s24, 1
    %p294 = scmp.ne.s32.totalorder %s289, %s291
    %p295 = scmp.eq.s32.totalorder %s24, 0
    %p296 = por %p294, %p295
    %p297 = scmp.ne.s32.totalorder %s289, %s291
    %p298 = scmp.eq.s32.totalorder %s29, 1
    %p299 = por %p297, %p298
    %p300 = scmp.ne.s32.totalorder %s291, %s292
    %p301 = scmp.eq.s32.totalorder %s29, 0
    %p302 = por %p300, %p301
    %p303 = scmp.ne.s32.totalorder %s291, %s292
    %p304 = scmp.eq.s32.totalorder %s30, 1
    %p305 = por %p303, %p304
    %p307 = scmp.ne.s32.totalorder %s292, %s306
    %p308 = scmp.eq.s32.totalorder %s30, 0
    %p309 = por %p307, %p308
    %s311 = sadd.s32 %s310, 1
    %p314 = scmp.eq.s32.totalorder %s24, 1
    %p315 = scmp.ne.s32.totalorder %s310, %s312
    %p316 = scmp.eq.s32.totalorder %s24, 0
    %p317 = por %p315, %p316
    %p318 = scmp.ne.s32.totalorder %s310, %s312
    %p319 = scmp.eq.s32.totalorder %s29, 1
    %p320 = por %p318, %p319
    %p321 = scmp.ne.s32.totalorder %s312, %s313
    %p322 = scmp.eq.s32.totalorder %s29, 0
    %p323 = por %p321, %p322
    %p324 = scmp.ne.s32.totalorder %s312, %s313
    %p325 = scmp.eq.s32.totalorder %s30, 1
    %p326 = por %p324, %p325
    %p328 = scmp.ne.s32.totalorder %s313, %s327
    %p329 = scmp.eq.s32.totalorder %s30, 0
    %p330 = por %p328, %p329
    %s332 = sadd.s32 %s331, 1
    %p335 = scmp.eq.s32.totalorder %s24, 1
    %p336 = scmp.ne.s32.totalorder %s331, %s333
    %p337 = scmp.eq.s32.totalorder %s24, 0
    %p338 = por %p336, %p337
    %p339 = scmp.ne.s32.totalorder %s331, %s333
    %p340 = scmp.eq.s32.totalorder %s29, 1
    %p341 = por %p339, %p340
    %p342 = scmp.ne.s32.totalorder %s333, %s334
    %p343 = scmp.eq.s32.totalorder %s29, 0
    %p344 = por %p342, %p343
    %p345 = scmp.ne.s32.totalorder %s333, %s334
    %p346 = scmp.eq.s32.totalorder %s30, 1
    %p347 = por %p345, %p346
    %p349 = scmp.ne.s32.totalorder %s334, %s348
    %p350 = scmp.eq.s32.totalorder %s30, 0
    %p351 = por %p349, %p350
    %s353 = sadd.s32 %s352, 1
    %p356 = scmp.eq.s32.totalorder %s24, 1
    %p357 = scmp.ne.s32.totalorder %s352, %s354
    %p358 = scmp.eq.s32.totalorder %s24, 0
    %p359 = por %p357, %p358
    %p360 = scmp.ne.s32.totalorder %s352, %s354
    %p361 = scmp.eq.s32.totalorder %s29, 1
    %p362 = por %p360, %p361
    %p363 = scmp.ne.s32.totalorder %s354, %s355
    %p364 = scmp.eq.s32.totalorder %s29, 0
    %p365 = por %p363, %p364
    %p366 = scmp.ne.s32.totalorder %s354, %s355
    %p367 = scmp.eq.s32.totalorder %s30, 1
    %p368 = por %p366, %p367
    %p370 = scmp.ne.s32.totalorder %s355, %s369
    %p371 = scmp.eq.s32.totalorder %s30, 0
    %p372 = por %p370, %p371
    %s374 = sadd.s32 %s373, 1
    %p377 = scmp.eq.s32.totalorder %s24, 1
    %p378 = scmp.ne.s32.totalorder %s373, %s375
    %p379 = scmp.eq.s32.totalorder %s24, 0
    %p380 = por %p378, %p379
    %p381 = scmp.ne.s32.totalorder %s373, %s375
    %p382 = scmp.eq.s32.totalorder %s29, 1
    %p383 = por %p381, %p382
    %p384 = scmp.ne.s32.totalorder %s375, %s376
    %p385 = scmp.eq.s32.totalorder %s29, 0
    %p386 = por %p384, %p385
    %p387 = scmp.ne.s32.totalorder %s375, %s376
    %p388 = scmp.eq.s32.totalorder %s30, 1
    %p389 = por %p387, %p388
    %p391 = scmp.ne.s32.totalorder %s376, %s390
    %p392 = scmp.eq.s32.totalorder %s30, 0
    %p393 = por %p391, %p392
    %s395 = sadd.s32 %s394, 1
    %p398 = scmp.eq.s32.totalorder %s24, 1
    %p399 = scmp.ne.s32.totalorder %s394, %s396
    %p400 = scmp.eq.s32.totalorder %s24, 0
    %p401 = por %p399, %p400
    %p402 = scmp.ne.s32.totalorder %s394, %s396
    %p403 = scmp.eq.s32.totalorder %s29, 1
    %p404 = por %p402, %p403
    %p405 = scmp.ne.s32.totalorder %s396, %s397
    %p406 = scmp.eq.s32.totalorder %s29, 0
    %p407 = por %p405, %p406
    %p408 = scmp.ne.s32.totalorder %s396, %s397
    %p409 = scmp.eq.s32.totalorder %s30, 1
    %p410 = por %p408, %p409
    %p412 = scmp.ne.s32.totalorder %s397, %s411
    %p413 = scmp.eq.s32.totalorder %s30, 0
    %p414 = por %p412, %p413
    %s415 = ssub.s32 %s24, %s31
    %p416 = scmp.eq.s32.totalorder %s415, 0
    %s418 = sadd.s32 %s417, 1
    %s419 = scalar_select %p416, %s417, %s418
    %p422 = pneg %p416
    %p423 = scmp.eq.s32.totalorder %s24, 1
    %p424 = por %p422, %p423
    %p425 = scmp.ne.s32.totalorder %s417, %s420
    %p426 = scmp.eq.s32.totalorder %s24, 0
    %p427 = por %p425, %p426
    %p428 = scmp.ne.s32.totalorder %s417, %s420
    %p429 = scmp.eq.s32.totalorder %s29, 1
    %p430 = por %p428, %p429
    %p431 = scmp.ne.s32.totalorder %s420, %s421
    %p432 = scmp.eq.s32.totalorder %s29, 0
    %p433 = por %p431, %p432
    %p434 = scmp.ne.s32.totalorder %s420, %s421
    %p435 = scmp.eq.s32.totalorder %s30, 1
    %p436 = por %p434, %p435
    %p438 = scmp.ne.s32.totalorder %s421, %s437
    %p439 = scmp.eq.s32.totalorder %s30, 0
    %p440 = por %p438, %p439
    %p441 = scmp.le.s32.totalorder 1, %s24
    %p442 = scmp.lt.s32.totalorder %s24, 3
    %p443 = pnand %p441, %p442
    %p444 = pneg %p443
    // Predicated region
    $region9: #{trajectory_generator_forward.2} parent=5 // pred_check
      _
    $region10: #{trajectory_generator_forward.2} parent=5 // pred_check_branch
      %446 = sbr.rel (%p443) target = $region12
    $region11: #{trajectory_generator_forward.2} parent=5 // pred_region
      %s447 = ssub.s32 %s24, 1
      // Predicated region
      $region13: #{trajectory_generator_forward.2} parent=11 // pred_check
        %p448 = pneg %p71
      $region14: #{trajectory_generator_forward.2} parent=11 // pred_check_branch
        %450 = sbr.rel (%p448) target = $region16
      $region15: #{trajectory_generator_forward.2} parent=11 // pred_region
        _
      $region16: #{trajectory_generator_forward.2} parent=11 // pred_fallthru
        _
      // Predicated region
      $region17: #{trajectory_generator_forward.2} parent=11 // pred_check
        %p451 = pneg %p92
      $region18: #{trajectory_generator_forward.2} parent=11 // pred_check_branch
        %453 = sbr.rel (%p451) target = $region20
      $region19: #{trajectory_generator_forward.2} parent=11 // pred_region
        _
      $region20: #{trajectory_generator_forward.2} parent=11 // pred_fallthru
        _
      // Predicated region
      $region21: #{trajectory_generator_forward.2} parent=11 // pred_check
        %p454 = pneg %p113
      $region22: #{trajectory_generator_forward.2} parent=11 // pred_check_branch
        %456 = sbr.rel (%p454) target = $region24
      $region23: #{trajectory_generator_forward.2} parent=11 // pred_region
        _
      $region24: #{trajectory_generator_forward.2} parent=11 // pred_fallthru
        _
      // Predicated region
      $region25: #{trajectory_generator_forward.2} parent=11 // pred_check
        %p457 = pneg %p134
      $region26: #{trajectory_generator_forward.2} parent=11 // pred_check_branch
        %459 = sbr.rel (%p457) target = $region28
      $region27: #{trajectory_generator_forward.2} parent=11 // pred_region
        _
      $region28: #{trajectory_generator_forward.2} parent=11 // pred_fallthru
        _
      // Predicated region
      $region29: #{trajectory_generator_forward.2} parent=11 // pred_check
        %p460 = pneg %p155
      $region30: #{trajectory_generator_forward.2} parent=11 // pred_check_branch
        %462 = sbr.rel (%p460) target = $region32
      $region31: #{trajectory_generator_forward.2} parent=11 // pred_region
        _
      $region32: #{trajectory_generator_forward.2} parent=11 // pred_fallthru
        _
      // Predicated region
      $region33: #{trajectory_generator_forward.2} parent=11 // pred_check
        %p463 = pneg %p176
      $region34: #{trajectory_generator_forward.2} parent=11 // pred_check_branch
        %465 = sbr.rel (%p463) target = $region36
      $region35: #{trajectory_generator_forward.2} parent=11 // pred_region
        _
      $region36: #{trajectory_generator_forward.2} parent=11 // pred_fallthru
        _
      // Predicated region
      $region37: #{trajectory_generator_forward.2} parent=11 // pred_check
        %p466 = pneg %p197
      $region38: #{trajectory_generator_forward.2} parent=11 // pred_check_branch
        %468 = sbr.rel (%p466) target = $region40
      $region39: #{trajectory_generator_forward.2} parent=11 // pred_region
        _
      $region40: #{trajectory_generator_forward.2} parent=11 // pred_fallthru
        _
      // Predicated region
      $region41: #{trajectory_generator_forward.2} parent=11 // pred_check
        %p469 = pneg %p218
      $region42: #{trajectory_generator_forward.2} parent=11 // pred_check_branch
        %471 = sbr.rel (%p469) target = $region44
      $region43: #{trajectory_generator_forward.2} parent=11 // pred_region
        _
      $region44: #{trajectory_generator_forward.2} parent=11 // pred_fallthru
        _
      // Predicated region
      $region45: #{trajectory_generator_forward.2} parent=11 // pred_check
        %p472 = pneg %p239
      $region46: #{trajectory_generator_forward.2} parent=11 // pred_check_branch
        %474 = sbr.rel (%p472) target = $region48
      $region47: #{trajectory_generator_forward.2} parent=11 // pred_region
        _
      $region48: #{trajectory_generator_forward.2} parent=11 // pred_fallthru
        _
      // Predicated region
      $region49: #{trajectory_generator_forward.2} parent=11 // pred_check
        %p475 = pneg %p260
      $region50: #{trajectory_generator_forward.2} parent=11 // pred_check_branch
        %477 = sbr.rel (%p475) target = $region52
      $region51: #{trajectory_generator_forward.2} parent=11 // pred_region
        _
      $region52: #{trajectory_generator_forward.2} parent=11 // pred_fallthru
        _
      // Predicated region
      $region53: #{trajectory_generator_forward.2} parent=11 // pred_check
        %p478 = pneg %p281
      $region54: #{trajectory_generator_forward.2} parent=11 // pred_check_branch
        %480 = sbr.rel (%p478) target = $region56
      $region55: #{trajectory_generator_forward.2} parent=11 // pred_region
        _
      $region56: #{trajectory_generator_forward.2} parent=11 // pred_fallthru
        _
      // Predicated region
      $region57: #{trajectory_generator_forward.2} parent=11 // pred_check
        %p481 = pneg %p302
      $region58: #{trajectory_generator_forward.2} parent=11 // pred_check_branch
        %483 = sbr.rel (%p481) target = $region60
      $region59: #{trajectory_generator_forward.2} parent=11 // pred_region
        _
      $region60: #{trajectory_generator_forward.2} parent=11 // pred_fallthru
        _
      // Predicated region
      $region61: #{trajectory_generator_forward.2} parent=11 // pred_check
        %p484 = pneg %p323
      $region62: #{trajectory_generator_forward.2} parent=11 // pred_check_branch
        %486 = sbr.rel (%p484) target = $region64
      $region63: #{trajectory_generator_forward.2} parent=11 // pred_region
        _
      $region64: #{trajectory_generator_forward.2} parent=11 // pred_fallthru
        _
      // Predicated region
      $region65: #{trajectory_generator_forward.2} parent=11 // pred_check
        %p487 = pneg %p344
      $region66: #{trajectory_generator_forward.2} parent=11 // pred_check_branch
        %489 = sbr.rel (%p487) target = $region68
      $region67: #{trajectory_generator_forward.2} parent=11 // pred_region
        _
      $region68: #{trajectory_generator_forward.2} parent=11 // pred_fallthru
        _
      // Predicated region
      $region69: #{trajectory_generator_forward.2} parent=11 // pred_check
        %p490 = pneg %p365
      $region70: #{trajectory_generator_forward.2} parent=11 // pred_check_branch
        %492 = sbr.rel (%p490) target = $region72
      $region71: #{trajectory_generator_forward.2} parent=11 // pred_region
        _
      $region72: #{trajectory_generator_forward.2} parent=11 // pred_fallthru
        _
      // Predicated region
      $region73: #{trajectory_generator_forward.2} parent=11 // pred_check
        %p493 = pneg %p386
      $region74: #{trajectory_generator_forward.2} parent=11 // pred_check_branch
        %495 = sbr.rel (%p493) target = $region76
      $region75: #{trajectory_generator_forward.2} parent=11 // pred_region
        _
      $region76: #{trajectory_generator_forward.2} parent=11 // pred_fallthru
        _
      // Predicated region
      $region77: #{trajectory_generator_forward.2} parent=11 // pred_check
        %p496 = pneg %p407
      $region78: #{trajectory_generator_forward.2} parent=11 // pred_check_branch
        %498 = sbr.rel (%p496) target = $region80
      $region79: #{trajectory_generator_forward.2} parent=11 // pred_region
        _
      $region80: #{trajectory_generator_forward.2} parent=11 // pred_fallthru
        _
    $region12: #{trajectory_generator_forward.2} parent=5 // pred_fallthru
      _
    %p499 = scmp.lt.s32.totalorder %s24, 2
    // Predicated region
    $region81: #{trajectory_generator_forward.2} parent=5 // pred_check
      %p500 = pneg %p499
    $region82: #{trajectory_generator_forward.2} parent=5 // pred_check_branch
      %502 = sbr.rel (%p500) target = $region84
    $region83: #{trajectory_generator_forward.2} parent=5 // pred_region
      // Predicated region
      $region85: #{trajectory_generator_forward.2} parent=83 // pred_check
        %p503 = pneg %p44
      $region86: #{trajectory_generator_forward.2} parent=83 // pred_check_branch
        %505 = sbr.rel (%p503) target = $region88
      $region87: #{trajectory_generator_forward.2} parent=83 // pred_region
        %p506 = scmp.lt.s32.totalorder %s24, 1
        %s507 = scalar_select %p506, %s24, 1
        %s508 = smul.addr %s507, 8
        %s509 = scalar_lea.vmem %s0, %s508
      $region88: #{trajectory_generator_forward.2} parent=83 // pred_fallthru
        _
    $region84: #{trajectory_generator_forward.2} parent=5 // pred_fallthru
      _
    %p510 = scmp.le.s32.totalorder 1, %s24
    %p511 = scmp.lt.s32.totalorder %s24, 3
    %p512 = pnand %p510, %p511
    %p513 = pneg %p512
    // Predicated region
    $region89: #{trajectory_generator_forward.2} parent=5 // pred_check
      _
    $region90: #{trajectory_generator_forward.2} parent=5 // pred_check_branch
      %515 = sbr.rel (%p512) target = $region92
    $region91: #{trajectory_generator_forward.2} parent=5 // pred_region
      %s516 = ssub.s32 %s24, 1
      %p517 = scmp.lt.s32.totalorder %s29, 1
      %s518 = scalar_select %p517, %s29, 1
      %s519 = smul.addr %s518, 8
      %s520 = scalar_lea.vmem %s0, %s519
      %p521 = pneg %p50
      %p522 = pneg %p47
      %p523 = pneg %p71
      %p524 = pneg %p68
      %p525 = pneg %p92
      %p526 = pneg %p89
      %p527 = pneg %p113
      %p528 = pneg %p110
      %p529 = pneg %p134
      %p530 = pneg %p131
      %p531 = pneg %p155
      %p532 = pneg %p152
      %p533 = pneg %p176
      %p534 = pneg %p173
      %p535 = pneg %p197
      %p536 = pneg %p194
      %p537 = pneg %p218
      %p538 = pneg %p215
      %p539 = pneg %p239
      %p540 = pneg %p236
      %p541 = pneg %p260
      %p542 = pneg %p257
      %p543 = pneg %p281
      %p544 = pneg %p278
      %p545 = pneg %p302
      %p546 = pneg %p299
      %p547 = pneg %p323
      %p548 = pneg %p320
      %p549 = pneg %p344
      %p550 = pneg %p341
      %p551 = pneg %p365
      %p552 = pneg %p362
      %p553 = pneg %p386
      %p554 = pneg %p383
      %p555 = pneg %p407
      %p556 = pneg %p404
      %p557 = pneg %p433
      %p558 = pneg %p430
      %p559 = scmp.lt.s32.totalorder %s29, 1
      %s560 = scalar_select %p559, %s29, 1
      %s561 = smul.addr %s560, 8
      %s562 = scalar_lea.vmem %s18, %s561
      %p563 = scmp.lt.s32.totalorder %s29, 1
      %s564 = scalar_select %p563, %s29, 1
      %s565 = smul.addr %s564, 8
      %s566 = scalar_lea.vmem %s0, %s565
      %p567 = scmp.lt.s32.totalorder %s29, 1
      %s568 = scalar_select %p567, %s29, 1
      %s569 = smul.addr %s568, 8
      %s570 = scalar_lea.vmem %s18, %s569
      %v572 = vld [vmem:[%s566] sm:$0x7f]
      %v573 = vld [vmem:[%s1] sm:$0x3]
      %v574 = vpack.c.bf16 %v572, %v572
      %v575 = vpack.c.bf16 %v573, %v573
      %v576 = vld [vmem:[%s2] sm:$0x1]
      %v578 = vlaneseq
      %v579 = vshrl.u32 %v578, 7
      %v580 = vsub.s32 0, %v579
      %v581 = vrot.slane %v576, %v580
      %vm583 = vcmask 15360
      %v585 = vsel %vm583, %v574, 0
      %vm587 = vcmask 1040384
      %v589 = vsel %vm587, %v575, 0
      %591 = vmatprep.subr.bf16.mxu0 0
      %592 = vmatpush1.bf16.msra.mxu0 0
      %593 = vmatprep.subr.bf16.mxu0 0
      %594 = vmatpush1.bf16.msra.mxu0 0
      %595 = vmatprep.subr.bf16.mxu0 0
      %596 = vmatpush1.bf16.msra.mxu0 0
      %597 = vmatprep.subr.bf16.mxu0 0
      %598 = vmatpush1.bf16.msra.mxu0 0
      %599 = vmatprep.subr.bf16.mxu0 0
      %600 = vmatpush1.bf16.msra.mxu0 0
      %601 = vmatprep.subr.bf16.mxu0 0
      %602 = vmatpush1.bf16.msra.mxu0 0
      %603 = vmatprep.subr.bf16.mxu0 0
      %604 = vmatpush1.bf16.msra.mxu0 0
      %605 = vmatprep.subr.bf16.mxu0 0
      %606 = vmatpush1.bf16.msra.mxu0 %v589
      %607 = vmatprep.subr.bf16.mxu0 0
      %608 = vmatpush2.bf16.msra.mxu0 0
      %609 = vmatprep.subr.bf16.mxu0 0
      %610 = vmatpush2.bf16.msra.mxu0 0
      %611 = vmatprep.subr.bf16.mxu0 0
      %612 = vmatpush2.bf16.msra.mxu0 0
      %613 = vmatprep.subr.bf16.mxu0 0
      %614 = vmatpush2.bf16.msra.mxu0 0
      %615 = vmatprep.subr.bf16.mxu0 0
      %616 = vmatpush2.bf16.msra.mxu0 0
      %617 = vmatprep.subr.bf16.mxu0 0
      %618 = vmatpush2.bf16.msra.mxu0 0
      %619 = vmatprep.subr.bf16.mxu0 0
      %620 = vmatpush2.bf16.msra.mxu0 0
      %621 = vmatprep.subr.bf16.mxu0 0
      %622 = vmatpush2.bf16.msra.mxu0 0
      %623 = vmatprep.mubr.bf16.mxu0 0
      %624 = vmatmul.mubr.bf16.gmra.mxu0 %v585
      %v625 = vpop.f32.mrf.mxu0
      %v626 = vadd.f32 %v581, %v625
      %v627 = vpop.f32.mrf.mxu0
      %v628 = vpop.f32.mrf.mxu0
      %v629 = vpop.f32.mrf.mxu0
      %630 = vdwg.mxu0
      %v631 = vld [vmem:[%s3] sm:$0x7f]
      %v632 = vadd.f32 %v626, %v631
      %vm633 = vcmask 522240
      %v634 = vsel %vm633, %v632, 0.0
      %635 = vadd.xlane.f32.xlu0 %v634
      %v636 = vpop.xlane.xlu0 %635
      %v637 = vrcp.pop 64.0
      %v638 = vmul.f32 %v636, %v637
      %v639 = vsub.f32 %v632, %v638
      %v640 = vmul.f32 %v639, %v639
      %v641 = vsel %vm633, %v640, 0.0
      %642 = vadd.xlane.f32.xlu0 %v641
      %v643 = vpop.xlane.xlu0 %642
      %v644 = vmul.f32 %v643, 0.015873017
      %v645 = vrsqrt.pop %v644
      %v646 = vmul.f32 %v644, %v645
      %vm647 = vcmp.eq.f32.partialorder %v644, inf
      %v648 = vsel %vm647, %v644, %v646
      %vm649 = vcmp.eq.f32.partialorder %v644, 0.0
      %v650 = vand.u32 %v644, 2147483648
      %v651 = vsel %vm649, %v650, %v648
      %v652 = vld [vmem:[%s4] sm:$0x1]
      %v654 = vlaneseq
      %v655 = vshrl.u32 %v654, 7
      %v656 = vsub.s32 0, %v655
      %v657 = vrot.slane %v652, %v656
      %v659 = vmul.f32 %v657, %v639
      %v660 = vadd.f32 %v651, 1e-06
      %v661 = vrcp.pop %v660
      %v662 = vmul.f32 %v659, %v661
      %v663 = vld [vmem:[%s5] sm:$0x1]
      %v665 = vlaneseq
      %v666 = vshrl.u32 %v665, 7
      %v667 = vsub.s32 0, %v666
      %v668 = vrot.slane %v663, %v667
      %v670 = vadd.f32 %v662, %v668
      %v671 = vld [vmem:[%s6] sm:$0xff]
      %v672 = vld [vmem:[%s6 + $0x8] sm:$0xff]
      %v673 = vld [vmem:[%s6 + $0x10] sm:$0xff]
      %v674 = vld [vmem:[%s6 + $0x18] sm:$0xff]
      %v675 = vld [vmem:[%s6 + $0x20] sm:$0xff]
      %v676 = vld [vmem:[%s6 + $0x28] sm:$0xff]
      %v677 = vld [vmem:[%s6 + $0x30] sm:$0xff]
      %v678 = vld [vmem:[%s6 + $0x38] sm:$0xff]
      %v679 = vld [vmem:[%s6 + $0x40] sm:$0xff]
      %v680 = vld [vmem:[%s6 + $0x48] sm:$0xff]
      %v681 = vld [vmem:[%s6 + $0x50] sm:$0xff]
      %v682 = vld [vmem:[%s6 + $0x58] sm:$0xff]
      %v683 = vld [vmem:[%s6 + $0x60] sm:$0xff]
      %v684 = vld [vmem:[%s6 + $0x68] sm:$0xff]
      %v685 = vld [vmem:[%s6 + $0x70] sm:$0xff]
      %v686 = vld [vmem:[%s6 + $0x78] sm:$0xff]
      %v687 = vpack.c.bf16 %v670, %v670
      %v688 = vpack.c.bf16 %v673, %v671
      %v689 = vpack.c.bf16 %v674, %v672
      %v690 = vpack.c.bf16 %v677, %v675
      %v691 = vpack.c.bf16 %v678, %v676
      %v692 = vpack.c.bf16 %v681, %v679
      %v693 = vpack.c.bf16 %v682, %v680
      %v694 = vpack.c.bf16 %v685, %v683
      %v695 = vpack.c.bf16 %v686, %v684
      %v696 = vld [vmem:[%s7] sm:$0x3]
      %v698 = vlaneseq
      %v699 = vshrl.u32 %v698, 7
      %v700 = vsub.s32 0, %v699
      %v701 = vrot.slane %v696, %v700
      %v702 = vlaneseq
      %v703 = vshrl.u32 %v702, 7
      %v704 = vsub.s32 1, %v703
      %v705 = vrot.slane %v696, %v704
      %vm708 = vcmask 523264
      %v710 = vsel %vm708, %v687, 0
      %712 = vmatprep.subr.bf16.mxu0 0
      %713 = vmatpush1.bf16.msra.mxu0 0
      %714 = vmatprep.subr.bf16.mxu0 0
      %715 = vmatpush1.bf16.msra.mxu0 0
      %716 = vmatprep.subr.bf16.mxu0 0
      %717 = vmatpush1.bf16.msra.mxu0 0
      %718 = vmatprep.subr.bf16.mxu0 0
      %719 = vmatpush1.bf16.msra.mxu0 0
      %720 = vmatprep.subr.bf16.mxu0 %v695
      %721 = vmatpush1.bf16.msra.mxu0 %v694
      %722 = vmatprep.subr.bf16.mxu0 %v693
      %723 = vmatpush1.bf16.msra.mxu0 %v692
      %724 = vmatprep.subr.bf16.mxu0 %v691
      %725 = vmatpush1.bf16.msra.mxu0 %v690
      %726 = vmatprep.subr.bf16.mxu0 %v689
      %727 = vmatpush1.bf16.msra.mxu0 %v688
      %728 = vmatprep.subr.bf16.mxu0 0
      %729 = vmatpush2.bf16.msra.mxu0 0
      %730 = vmatprep.subr.bf16.mxu0 0
      %731 = vmatpush2.bf16.msra.mxu0 0
      %732 = vmatprep.subr.bf16.mxu0 0
      %733 = vmatpush2.bf16.msra.mxu0 0
      %734 = vmatprep.subr.bf16.mxu0 0
      %735 = vmatpush2.bf16.msra.mxu0 0
      %736 = vmatprep.subr.bf16.mxu0 0
      %737 = vmatpush2.bf16.msra.mxu0 0
      %738 = vmatprep.subr.bf16.mxu0 0
      %739 = vmatpush2.bf16.msra.mxu0 0
      %740 = vmatprep.subr.bf16.mxu0 0
      %741 = vmatpush2.bf16.msra.mxu0 0
      %742 = vmatprep.subr.bf16.mxu0 0
      %743 = vmatpush2.bf16.msra.mxu0 0
      %744 = vmatprep.mubr.bf16.mxu0 0
      %745 = vmatmul.mubr.bf16.gmra.mxu0 %v710
      %v746 = vpop.f32.mrf.mxu0
      %v747 = vadd.f32 %v701, %v746
      %v748 = vpop.f32.mrf.mxu0
      %v749 = vadd.f32 %v705, %v748
      %v750 = vpop.f32.mrf.mxu0
      %v751 = vpop.f32.mrf.mxu0
      %752 = vdwg.mxu0
      %v753 = vpack.c.bf16 %v747, %v747
      %755 = vrot.lane.b32.xlu0 %v753, 64
      %v756 = vpop.permute.xlu0 %755
      %vm757 = vcmask 64512
      %v759 = vsel %vm757, %v753, 0
      %v762 = vsel %vm757, %v756, 0
      %764 = vmatprep.subr.bf16.mxu0 0
      %765 = vmatpush1.bf16.xpose.msra.mxu0 0
      %766 = vmatprep.subr.bf16.mxu0 0
      %767 = vmatpush1.bf16.xpose.msra.mxu0 0
      %768 = vmatprep.subr.bf16.mxu0 0
      %769 = vmatpush1.bf16.xpose.msra.mxu0 0
      %770 = vmatprep.subr.bf16.mxu0 0
      %771 = vmatpush1.bf16.xpose.msra.mxu0 0
      %772 = vmatprep.subr.bf16.mxu0 0
      %773 = vmatpush1.bf16.xpose.msra.mxu0 0
      %774 = vmatprep.subr.bf16.mxu0 0
      %775 = vmatpush1.bf16.xpose.msra.mxu0 0
      %776 = vmatprep.subr.bf16.mxu0 0
      %777 = vmatpush1.bf16.xpose.msra.mxu0 0
      %778 = vmatprep.subr.bf16.mxu0 0
      %779 = vmatpush1.bf16.xpose.msra.mxu0 %v762
      %780 = vmatprep.subr.bf16.mxu0 0
      %781 = vmatpush2.bf16.xpose.msra.mxu0 0
      %782 = vmatprep.subr.bf16.mxu0 0
      %783 = vmatpush2.bf16.xpose.msra.mxu0 0
      %784 = vmatprep.subr.bf16.mxu0 0
      %785 = vmatpush2.bf16.xpose.msra.mxu0 0
      %786 = vmatprep.subr.bf16.mxu0 0
      %787 = vmatpush2.bf16.xpose.msra.mxu0 0
      %788 = vmatprep.subr.bf16.mxu0 0
      %789 = vmatpush2.bf16.xpose.msra.mxu0 0
      %790 = vmatprep.subr.bf16.mxu0 0
      %791 = vmatpush2.bf16.xpose.msra.mxu0 0
      %792 = vmatprep.subr.bf16.mxu0 0
      %793 = vmatpush2.bf16.xpose.msra.mxu0 0
      %794 = vmatprep.subr.bf16.mxu0 0
      %795 = vmatpush2.bf16.xpose.msra.mxu0 0
      %796 = vmatprep.mubr.bf16.mxu0 0
      %797 = vmatmul.mubr.bf16.gmra.mxu0 %v759
      %v798 = vpop.f32.mrf.mxu0
      %v799 = vadd.f32 0.0, %v798
      %v800 = vpop.f32.mrf.mxu0
      %v801 = vpop.f32.mrf.mxu0
      %v802 = vpop.f32.mrf.mxu0
      %803 = vdwg.mxu0
      %v804 = vmul.f32 %v799, 0.35355338
      %vm805 = vcmask 55296
      %v806 = vsel %vm805, %v804, -inf
      %807 = vmax.xlane.f32.xlu0 %v806
      %v808 = vpop.xlane.xlu0 %807
      %v809 = vsub.f32 %v804, %v808
      %v810 = vmul.f32 %v809, 1.442695
      %v811 = vpow.pop %v810
      %v812 = vsel %vm805, %v811, 0.0
      %813 = vadd.xlane.f32.xlu0 %v812
      %v814 = vpop.xlane.xlu0 %813
      %v815 = vrcp.pop %v814
      %v816 = vmul.f32 %v811, %v815
      %v817 = vpack.c.bf16 %v816, %v816
      %v818 = vpack.c.bf16 %v749, %v749
      %vm819 = vcmask 56320
      %v821 = vsel %vm819, %v817, 0
      %vm823 = vcmask 1042432
      %vm824 = vcmask 1043456
      %v825 = vsel %vm823, 4294967295, 65535
      %v826 = vsel %vm824, %v825, 0
      %v828 = vand.u32 %v818, %v826
      %830 = vmatprep.subr.bf16.mxu0 0
      %831 = vmatpush1.bf16.msra.mxu0 0
      %832 = vmatprep.subr.bf16.mxu0 0
      %833 = vmatpush1.bf16.msra.mxu0 0
      %834 = vmatprep.subr.bf16.mxu0 0
      %835 = vmatpush1.bf16.msra.mxu0 0
      %836 = vmatprep.subr.bf16.mxu0 0
      %837 = vmatpush1.bf16.msra.mxu0 0
      %838 = vmatprep.subr.bf16.mxu0 0
      %839 = vmatpush1.bf16.msra.mxu0 0
      %840 = vmatprep.subr.bf16.mxu0 0
      %841 = vmatpush1.bf16.msra.mxu0 0
      %842 = vmatprep.subr.bf16.mxu0 0
      %843 = vmatpush1.bf16.msra.mxu0 0
      %844 = vmatprep.subr.bf16.mxu0 0
      %845 = vmatpush1.bf16.msra.mxu0 %v828
      %846 = vmatprep.subr.bf16.mxu0 0
      %847 = vmatpush2.bf16.msra.mxu0 0
      %848 = vmatprep.subr.bf16.mxu0 0
      %849 = vmatpush2.bf16.msra.mxu0 0
      %850 = vmatprep.subr.bf16.mxu0 0
      %851 = vmatpush2.bf16.msra.mxu0 0
      %852 = vmatprep.subr.bf16.mxu0 0
      %853 = vmatpush2.bf16.msra.mxu0 0
      %854 = vmatprep.subr.bf16.mxu0 0
      %855 = vmatpush2.bf16.msra.mxu0 0
      %856 = vmatprep.subr.bf16.mxu0 0
      %857 = vmatpush2.bf16.msra.mxu0 0
      %858 = vmatprep.subr.bf16.mxu0 0
      %859 = vmatpush2.bf16.msra.mxu0 0
      %860 = vmatprep.subr.bf16.mxu0 0
      %861 = vmatpush2.bf16.msra.mxu0 0
      %862 = vmatprep.mubr.bf16.mxu0 0
      %863 = vmatmul.mubr.bf16.gmra.mxu0 %v821
      %v864 = vpop.f32.mrf.mxu0
      %v865 = vadd.f32 0.0, %v864
      %v866 = vpop.f32.mrf.mxu0
      %v867 = vpop.f32.mrf.mxu0
      %v868 = vpop.f32.mrf.mxu0
      %869 = vdwg.mxu0
      %v870 = vld [vmem:[%s8] sm:$0xff]
      %v871 = vpack.c.bf16 %v865, %v865
      %v872 = vpack.c.bf16 %v870, %v870
      %873 = vrot.lane.b32.xlu0 %v753, 120
      %v874 = vpop.permute.xlu0 %873
      %875 = vrot.lane.b32.xlu0 %v753, 56
      %v876 = vpop.permute.xlu0 %875
      %v878 = vsel %vm757, %v874, 0
      %v881 = vsel %vm757, %v876, 0
      %883 = vmatprep.subr.bf16.mxu0 0
      %884 = vmatpush1.bf16.xpose.msra.mxu0 0
      %885 = vmatprep.subr.bf16.mxu0 0
      %886 = vmatpush1.bf16.xpose.msra.mxu0 0
      %887 = vmatprep.subr.bf16.mxu0 0
      %888 = vmatpush1.bf16.xpose.msra.mxu0 0
      %889 = vmatprep.subr.bf16.mxu0 0
      %890 = vmatpush1.bf16.xpose.msra.mxu0 0
      %891 = vmatprep.subr.bf16.mxu0 0
      %892 = vmatpush1.bf16.xpose.msra.mxu0 0
      %893 = vmatprep.subr.bf16.mxu0 0
      %894 = vmatpush1.bf16.xpose.msra.mxu0 0
      %895 = vmatprep.subr.bf16.mxu0 0
      %896 = vmatpush1.bf16.xpose.msra.mxu0 0
      %897 = vmatprep.subr.bf16.mxu0 0
      %898 = vmatpush1.bf16.xpose.msra.mxu0 %v881
      %899 = vmatprep.subr.bf16.mxu0 0
      %900 = vmatpush2.bf16.xpose.msra.mxu0 0
      %901 = vmatprep.subr.bf16.mxu0 0
      %902 = vmatpush2.bf16.xpose.msra.mxu0 0
      %903 = vmatprep.subr.bf16.mxu0 0
      %904 = vmatpush2.bf16.xpose.msra.mxu0 0
      %905 = vmatprep.subr.bf16.mxu0 0
      %906 = vmatpush2.bf16.xpose.msra.mxu0 0
      %907 = vmatprep.subr.bf16.mxu0 0
      %908 = vmatpush2.bf16.xpose.msra.mxu0 0
      %909 = vmatprep.subr.bf16.mxu0 0
      %910 = vmatpush2.bf16.xpose.msra.mxu0 0
      %911 = vmatprep.subr.bf16.mxu0 0
      %912 = vmatpush2.bf16.xpose.msra.mxu0 0
      %913 = vmatprep.subr.bf16.mxu0 0
      %914 = vmatpush2.bf16.xpose.msra.mxu0 0
      %915 = vmatprep.mubr.bf16.mxu0 0
      %916 = vmatmul.mubr.bf16.gmra.mxu0 %v878
      %v917 = vpop.f32.mrf.mxu0
      %v918 = vadd.f32 0.0, %v917
      %v919 = vpop.f32.mrf.mxu0
      %v920 = vpop.f32.mrf.mxu0
      %v921 = vpop.f32.mrf.mxu0
      %922 = vdwg.mxu0
      %v923 = vmul.f32 %v918, 0.35355338
      %v924 = vsel %vm805, %v923, -inf
      %925 = vmax.xlane.f32.xlu0 %v924
      %v926 = vpop.xlane.xlu0 %925
      %v927 = vsub.f32 %v923, %v926
      %v928 = vmul.f32 %v927, 1.442695
      %v929 = vpow.pop %v928
      %v930 = vsel %vm805, %v929, 0.0
      %931 = vadd.xlane.f32.xlu0 %v930
      %v932 = vpop.xlane.xlu0 %931
      %v933 = vrcp.pop %v932
      %v934 = vmul.f32 %v929, %v933
      %v935 = vpack.c.bf16 %v934, %v934
      %937 = vrot.lane.b32.xlu0 %v818, 120
      %v938 = vpop.permute.xlu0 %937
      %v940 = vsel %vm819, %v935, 0
      %v943 = vand.u32 %v938, %v826
      %945 = vmatprep.subr.bf16.mxu0 0
      %946 = vmatpush1.bf16.msra.mxu0 0
      %947 = vmatprep.subr.bf16.mxu0 0
      %948 = vmatpush1.bf16.msra.mxu0 0
      %949 = vmatprep.subr.bf16.mxu0 0
      %950 = vmatpush1.bf16.msra.mxu0 0
      %951 = vmatprep.subr.bf16.mxu0 0
      %952 = vmatpush1.bf16.msra.mxu0 0
      %953 = vmatprep.subr.bf16.mxu0 0
      %954 = vmatpush1.bf16.msra.mxu0 0
      %955 = vmatprep.subr.bf16.mxu0 0
      %956 = vmatpush1.bf16.msra.mxu0 0
      %957 = vmatprep.subr.bf16.mxu0 0
      %958 = vmatpush1.bf16.msra.mxu0 0
      %959 = vmatprep.subr.bf16.mxu0 0
      %960 = vmatpush1.bf16.msra.mxu0 %v943
      %961 = vmatprep.subr.bf16.mxu0 0
      %962 = vmatpush2.bf16.msra.mxu0 0
      %963 = vmatprep.subr.bf16.mxu0 0
      %964 = vmatpush2.bf16.msra.mxu0 0
      %965 = vmatprep.subr.bf16.mxu0 0
      %966 = vmatpush2.bf16.msra.mxu0 0
      %967 = vmatprep.subr.bf16.mxu0 0
      %968 = vmatpush2.bf16.msra.mxu0 0
      %969 = vmatprep.subr.bf16.mxu0 0
      %970 = vmatpush2.bf16.msra.mxu0 0
      %971 = vmatprep.subr.bf16.mxu0 0
      %972 = vmatpush2.bf16.msra.mxu0 0
      %973 = vmatprep.subr.bf16.mxu0 0
      %974 = vmatpush2.bf16.msra.mxu0 0
      %975 = vmatprep.subr.bf16.mxu0 0
      %976 = vmatpush2.bf16.msra.mxu0 0
      %977 = vmatprep.mubr.bf16.mxu0 0
      %978 = vmatmul.mubr.bf16.gmra.mxu0 %v940
      %v979 = vpop.f32.mrf.mxu0
      %v980 = vadd.f32 0.0, %v979
      %v981 = vpop.f32.mrf.mxu0
      %v982 = vpop.f32.mrf.mxu0
      %v983 = vpop.f32.mrf.mxu0
      %984 = vdwg.mxu0
      %v985 = vld [vmem:[%s8 + $0x8] sm:$0xff]
      %v986 = vpack.c.bf16 %v980, %v980
      %v987 = vpack.c.bf16 %v985, %v985
      %v989 = vsel %vm757, %v986, 0
      %v992 = vsel %vm824, %v987, 0
      %994 = vmatprep.subr.bf16.mxu0 0
      %995 = vmatpush1.bf16.msra.mxu0 0
      %996 = vmatprep.subr.bf16.mxu0 0
      %997 = vmatpush1.bf16.msra.mxu0 0
      %998 = vmatprep.subr.bf16.mxu0 0
      %999 = vmatpush1.bf16.msra.mxu0 0
      %1000 = vmatprep.subr.bf16.mxu0 0
      %1001 = vmatpush1.bf16.msra.mxu0 0
      %1002 = vmatprep.subr.bf16.mxu0 0
      %1003 = vmatpush1.bf16.msra.mxu0 0
      %1004 = vmatprep.subr.bf16.mxu0 0
      %1005 = vmatpush1.bf16.msra.mxu0 0
      %1006 = vmatprep.subr.bf16.mxu0 0
      %1007 = vmatpush1.bf16.msra.mxu0 0
      %1008 = vmatprep.subr.bf16.mxu0 0
      %1009 = vmatpush1.bf16.msra.mxu0 %v992
      %1010 = vmatprep.subr.bf16.mxu0 0
      %1011 = vmatpush2.bf16.msra.mxu0 0
      %1012 = vmatprep.subr.bf16.mxu0 0
      %1013 = vmatpush2.bf16.msra.mxu0 0
      %1014 = vmatprep.subr.bf16.mxu0 0
      %1015 = vmatpush2.bf16.msra.mxu0 0
      %1016 = vmatprep.subr.bf16.mxu0 0
      %1017 = vmatpush2.bf16.msra.mxu0 0
      %1018 = vmatprep.subr.bf16.mxu0 0
      %1019 = vmatpush2.bf16.msra.mxu0 0
      %1020 = vmatprep.subr.bf16.mxu0 0
      %1021 = vmatpush2.bf16.msra.mxu0 0
      %1022 = vmatprep.subr.bf16.mxu0 0
      %1023 = vmatpush2.bf16.msra.mxu0 0
      %1024 = vmatprep.subr.bf16.mxu0 0
      %1025 = vmatpush2.bf16.msra.mxu0 0
      %1026 = vmatprep.mubr.bf16.mxu0 0
      %1027 = vmatmul.mubr.bf16.gmra.mxu0 %v989
      %v1028 = vpop.f32.mrf.mxu0
      %v1029 = vadd.f32 0.0, %v1028
      %v1030 = vpop.f32.mrf.mxu0
      %v1031 = vpop.f32.mrf.mxu0
      %v1032 = vpop.f32.mrf.mxu0
      %1033 = vdwg.mxu0
      %v1035 = vsel %vm757, %v871, 0
      %v1038 = vsel %vm824, %v872, 0
      %1040 = vmatprep.subr.bf16.mxu0 0
      %1041 = vmatpush1.bf16.msra.mxu0 0
      %1042 = vmatprep.subr.bf16.mxu0 0
      %1043 = vmatpush1.bf16.msra.mxu0 0
      %1044 = vmatprep.subr.bf16.mxu0 0
      %1045 = vmatpush1.bf16.msra.mxu0 0
      %1046 = vmatprep.subr.bf16.mxu0 0
      %1047 = vmatpush1.bf16.msra.mxu0 0
      %1048 = vmatprep.subr.bf16.mxu0 0
      %1049 = vmatpush1.bf16.msra.mxu0 0
      %1050 = vmatprep.subr.bf16.mxu0 0
      %1051 = vmatpush1.bf16.msra.mxu0 0
      %1052 = vmatprep.subr.bf16.mxu0 0
      %1053 = vmatpush1.bf16.msra.mxu0 0
      %1054 = vmatprep.subr.bf16.mxu0 0
      %1055 = vmatpush1.bf16.msra.mxu0 %v1038
      %1056 = vmatprep.subr.bf16.mxu0 0
      %1057 = vmatpush2.bf16.msra.mxu0 0
      %1058 = vmatprep.subr.bf16.mxu0 0
      %1059 = vmatpush2.bf16.msra.mxu0 0
      %1060 = vmatprep.subr.bf16.mxu0 0
      %1061 = vmatpush2.bf16.msra.mxu0 0
      %1062 = vmatprep.subr.bf16.mxu0 0
      %1063 = vmatpush2.bf16.msra.mxu0 0
      %1064 = vmatprep.subr.bf16.mxu0 0
      %1065 = vmatpush2.bf16.msra.mxu0 0
      %1066 = vmatprep.subr.bf16.mxu0 0
      %1067 = vmatpush2.bf16.msra.mxu0 0
      %1068 = vmatprep.subr.bf16.mxu0 0
      %1069 = vmatpush2.bf16.msra.mxu0 0
      %1070 = vmatprep.subr.bf16.mxu0 0
      %1071 = vmatpush2.bf16.msra.mxu0 0
      %1072 = vmatprep.mubr.bf16.mxu0 0
      %1073 = vmatmul.mubr.bf16.gmra.mxu0 %v1035
      %v1074 = vpop.f32.mrf.mxu0
      %v1075 = vadd.f32 %v1029, %v1074
      %v1076 = vpop.f32.mrf.mxu0
      %v1077 = vpop.f32.mrf.mxu0
      %v1078 = vpop.f32.mrf.mxu0
      %1079 = vdwg.mxu0
      %1080 = vrot.lane.b32.xlu0 %v753, 112
      %v1081 = vpop.permute.xlu0 %1080
      %1082 = vrot.lane.b32.xlu0 %v753, 48
      %v1083 = vpop.permute.xlu0 %1082
      %v1085 = vsel %vm757, %v1081, 0
      %v1088 = vsel %vm757, %v1083, 0
      %1090 = vmatprep.subr.bf16.mxu0 0
      %1091 = vmatpush1.bf16.xpose.msra.mxu0 0
      %1092 = vmatprep.subr.bf16.mxu0 0
      %1093 = vmatpush1.bf16.xpose.msra.mxu0 0
      %1094 = vmatprep.subr.bf16.mxu0 0
      %1095 = vmatpush1.bf16.xpose.msra.mxu0 0
      %1096 = vmatprep.subr.bf16.mxu0 0
      %1097 = vmatpush1.bf16.xpose.msra.mxu0 0
      %1098 = vmatprep.subr.bf16.mxu0 0
      %1099 = vmatpush1.bf16.xpose.msra.mxu0 0
      %1100 = vmatprep.subr.bf16.mxu0 0
      %1101 = vmatpush1.bf16.xpose.msra.mxu0 0
      %1102 = vmatprep.subr.bf16.mxu0 0
      %1103 = vmatpush1.bf16.xpose.msra.mxu0 0
      %1104 = vmatprep.subr.bf16.mxu0 0
      %1105 = vmatpush1.bf16.xpose.msra.mxu0 %v1088
      %1106 = vmatprep.subr.bf16.mxu0 0
      %1107 = vmatpush2.bf16.xpose.msra.mxu0 0
      %1108 = vmatprep.subr.bf16.mxu0 0
      %1109 = vmatpush2.bf16.xpose.msra.mxu0 0
      %1110 = vmatprep.subr.bf16.mxu0 0
      %1111 = vmatpush2.bf16.xpose.msra.mxu0 0
      %1112 = vmatprep.subr.bf16.mxu0 0
      %1113 = vmatpush2.bf16.xpose.msra.mxu0 0
      %1114 = vmatprep.subr.bf16.mxu0 0
      %1115 = vmatpush2.bf16.xpose.msra.mxu0 0
      %1116 = vmatprep.subr.bf16.mxu0 0
      %1117 = vmatpush2.bf16.xpose.msra.mxu0 0
      %1118 = vmatprep.subr.bf16.mxu0 0
      %1119 = vmatpush2.bf16.xpose.msra.mxu0 0
      %1120 = vmatprep.subr.bf16.mxu0 0
      %1121 = vmatpush2.bf16.xpose.msra.mxu0 0
      %1122 = vmatprep.mubr.bf16.mxu0 0
      %1123 = vmatmul.mubr.bf16.gmra.mxu0 %v1085
      %v1124 = vpop.f32.mrf.mxu0
      %v1125 = vadd.f32 0.0, %v1124
      %v1126 = vpop.f32.mrf.mxu0
      %v1127 = vpop.f32.mrf.mxu0
      %v1128 = vpop.f32.mrf.mxu0
      %1129 = vdwg.mxu0
      %v1130 = vmul.f32 %v1125, 0.35355338
      %v1131 = vsel %vm805, %v1130, -inf
      %1132 = vmax.xlane.f32.xlu0 %v1131
      %v1133 = vpop.xlane.xlu0 %1132
      %v1134 = vsub.f32 %v1130, %v1133
      %v1135 = vmul.f32 %v1134, 1.442695
      %v1136 = vpow.pop %v1135
      %v1137 = vsel %vm805, %v1136, 0.0
      %1138 = vadd.xlane.f32.xlu0 %v1137
      %v1139 = vpop.xlane.xlu0 %1138
      %v1140 = vrcp.pop %v1139
      %v1141 = vmul.f32 %v1136, %v1140
      %v1142 = vpack.c.bf16 %v1141, %v1141
      %1143 = vrot.lane.b32.xlu0 %v818, 112
      %v1144 = vpop.permute.xlu0 %1143
      %v1146 = vsel %vm819, %v1142, 0
      %v1149 = vand.u32 %v1144, %v826
      %1151 = vmatprep.subr.bf16.mxu0 0
      %1152 = vmatpush1.bf16.msra.mxu0 0
      %1153 = vmatprep.subr.bf16.mxu0 0
      %1154 = vmatpush1.bf16.msra.mxu0 0
      %1155 = vmatprep.subr.bf16.mxu0 0
      %1156 = vmatpush1.bf16.msra.mxu0 0
      %1157 = vmatprep.subr.bf16.mxu0 0
      %1158 = vmatpush1.bf16.msra.mxu0 0
      %1159 = vmatprep.subr.bf16.mxu0 0
      %1160 = vmatpush1.bf16.msra.mxu0 0
      %1161 = vmatprep.subr.bf16.mxu0 0
      %1162 = vmatpush1.bf16.msra.mxu0 0
      %1163 = vmatprep.subr.bf16.mxu0 0
      %1164 = vmatpush1.bf16.msra.mxu0 0
      %1165 = vmatprep.subr.bf16.mxu0 0
      %1166 = vmatpush1.bf16.msra.mxu0 %v1149
      %1167 = vmatprep.subr.bf16.mxu0 0
      %1168 = vmatpush2.bf16.msra.mxu0 0
      %1169 = vmatprep.subr.bf16.mxu0 0
      %1170 = vmatpush2.bf16.msra.mxu0 0
      %1171 = vmatprep.subr.bf16.mxu0 0
      %1172 = vmatpush2.bf16.msra.mxu0 0
      %1173 = vmatprep.subr.bf16.mxu0 0
      %1174 = vmatpush2.bf16.msra.mxu0 0
      %1175 = vmatprep.subr.bf16.mxu0 0
      %1176 = vmatpush2.bf16.msra.mxu0 0
      %1177 = vmatprep.subr.bf16.mxu0 0
      %1178 = vmatpush2.bf16.msra.mxu0 0
      %1179 = vmatprep.subr.bf16.mxu0 0
      %1180 = vmatpush2.bf16.msra.mxu0 0
      %1181 = vmatprep.subr.bf16.mxu0 0
      %1182 = vmatpush2.bf16.msra.mxu0 0
      %1183 = vmatprep.mubr.bf16.mxu0 0
      %1184 = vmatmul.mubr.bf16.gmra.mxu0 %v1146
      %v1185 = vpop.f32.mrf.mxu0
      %v1186 = vadd.f32 0.0, %v1185
      %v1187 = vpop.f32.mrf.mxu0
      %v1188 = vpop.f32.mrf.mxu0
      %v1189 = vpop.f32.mrf.mxu0
      %1190 = vdwg.mxu0
      %v1191 = vld [vmem:[%s8 + $0x10] sm:$0xff]
      %v1192 = vpack.c.bf16 %v1186, %v1186
      %v1193 = vpack.c.bf16 %v1191, %v1191
      %v1195 = vsel %vm757, %v1192, 0
      %v1198 = vsel %vm824, %v1193, 0
      %1200 = vmatprep.subr.bf16.mxu0 0
      %1201 = vmatpush1.bf16.msra.mxu0 0
      %1202 = vmatprep.subr.bf16.mxu0 0
      %1203 = vmatpush1.bf16.msra.mxu0 0
      %1204 = vmatprep.subr.bf16.mxu0 0
      %1205 = vmatpush1.bf16.msra.mxu0 0
      %1206 = vmatprep.subr.bf16.mxu0 0
      %1207 = vmatpush1.bf16.msra.mxu0 0
      %1208 = vmatprep.subr.bf16.mxu0 0
      %1209 = vmatpush1.bf16.msra.mxu0 0
      %1210 = vmatprep.subr.bf16.mxu0 0
      %1211 = vmatpush1.bf16.msra.mxu0 0
      %1212 = vmatprep.subr.bf16.mxu0 0
      %1213 = vmatpush1.bf16.msra.mxu0 0
      %1214 = vmatprep.subr.bf16.mxu0 0
      %1215 = vmatpush1.bf16.msra.mxu0 %v1198
      %1216 = vmatprep.subr.bf16.mxu0 0
      %1217 = vmatpush2.bf16.msra.mxu0 0
      %1218 = vmatprep.subr.bf16.mxu0 0
      %1219 = vmatpush2.bf16.msra.mxu0 0
      %1220 = vmatprep.subr.bf16.mxu0 0
      %1221 = vmatpush2.bf16.msra.mxu0 0
      %1222 = vmatprep.subr.bf16.mxu0 0
      %1223 = vmatpush2.bf16.msra.mxu0 0
      %1224 = vmatprep.subr.bf16.mxu0 0
      %1225 = vmatpush2.bf16.msra.mxu0 0
      %1226 = vmatprep.subr.bf16.mxu0 0
      %1227 = vmatpush2.bf16.msra.mxu0 0
      %1228 = vmatprep.subr.bf16.mxu0 0
      %1229 = vmatpush2.bf16.msra.mxu0 0
      %1230 = vmatprep.subr.bf16.mxu0 0
      %1231 = vmatpush2.bf16.msra.mxu0 0
      %1232 = vmatprep.mubr.bf16.mxu0 0
      %1233 = vmatmul.mubr.bf16.gmra.mxu0 %v1195
      %v1234 = vpop.f32.mrf.mxu0
      %v1235 = vadd.f32 0.0, %v1234
      %v1236 = vpop.f32.mrf.mxu0
      %v1237 = vpop.f32.mrf.mxu0
      %v1238 = vpop.f32.mrf.mxu0
      %1239 = vdwg.mxu0
      %v1240 = vadd.f32 %v1075, %v1235
      %1241 = vrot.lane.b32.xlu0 %v753, 104
      %v1242 = vpop.permute.xlu0 %1241
      %1243 = vrot.lane.b32.xlu0 %v753, 40
      %v1244 = vpop.permute.xlu0 %1243
      %v1246 = vsel %vm757, %v1242, 0
      %v1249 = vsel %vm757, %v1244, 0
      %1251 = vmatprep.subr.bf16.mxu0 0
      %1252 = vmatpush1.bf16.xpose.msra.mxu0 0
      %1253 = vmatprep.subr.bf16.mxu0 0
      %1254 = vmatpush1.bf16.xpose.msra.mxu0 0
      %1255 = vmatprep.subr.bf16.mxu0 0
      %1256 = vmatpush1.bf16.xpose.msra.mxu0 0
      %1257 = vmatprep.subr.bf16.mxu0 0
      %1258 = vmatpush1.bf16.xpose.msra.mxu0 0
      %1259 = vmatprep.subr.bf16.mxu0 0
      %1260 = vmatpush1.bf16.xpose.msra.mxu0 0
      %1261 = vmatprep.subr.bf16.mxu0 0
      %1262 = vmatpush1.bf16.xpose.msra.mxu0 0
      %1263 = vmatprep.subr.bf16.mxu0 0
      %1264 = vmatpush1.bf16.xpose.msra.mxu0 0
      %1265 = vmatprep.subr.bf16.mxu0 0
      %1266 = vmatpush1.bf16.xpose.msra.mxu0 %v1249
      %1267 = vmatprep.subr.bf16.mxu0 0
      %1268 = vmatpush2.bf16.xpose.msra.mxu0 0
      %1269 = vmatprep.subr.bf16.mxu0 0
      %1270 = vmatpush2.bf16.xpose.msra.mxu0 0
      %1271 = vmatprep.subr.bf16.mxu0 0
      %1272 = vmatpush2.bf16.xpose.msra.mxu0 0
      %1273 = vmatprep.subr.bf16.mxu0 0
      %1274 = vmatpush2.bf16.xpose.msra.mxu0 0
      %1275 = vmatprep.subr.bf16.mxu0 0
      %1276 = vmatpush2.bf16.xpose.msra.mxu0 0
      %1277 = vmatprep.subr.bf16.mxu0 0
      %1278 = vmatpush2.bf16.xpose.msra.mxu0 0
      %1279 = vmatprep.subr.bf16.mxu0 0
      %1280 = vmatpush2.bf16.xpose.msra.mxu0 0
      %1281 = vmatprep.subr.bf16.mxu0 0
      %1282 = vmatpush2.bf16.xpose.msra.mxu0 0
      %1283 = vmatprep.mubr.bf16.mxu0 0
      %1284 = vmatmul.mubr.bf16.gmra.mxu0 %v1246
      %v1285 = vpop.f32.mrf.mxu0
      %v1286 = vadd.f32 0.0, %v1285
      %v1287 = vpop.f32.mrf.mxu0
      %v1288 = vpop.f32.mrf.mxu0
      %v1289 = vpop.f32.mrf.mxu0
      %1290 = vdwg.mxu0
      %v1291 = vmul.f32 %v1286, 0.35355338
      %v1292 = vsel %vm805, %v1291, -inf
      %1293 = vmax.xlane.f32.xlu0 %v1292
      %v1294 = vpop.xlane.xlu0 %1293
      %v1295 = vsub.f32 %v1291, %v1294
      %v1296 = vmul.f32 %v1295, 1.442695
      %v1297 = vpow.pop %v1296
      %v1298 = vsel %vm805, %v1297, 0.0
      %1299 = vadd.xlane.f32.xlu0 %v1298
      %v1300 = vpop.xlane.xlu0 %1299
      %v1301 = vrcp.pop %v1300
      %v1302 = vmul.f32 %v1297, %v1301
      %v1303 = vpack.c.bf16 %v1302, %v1302
      %1304 = vrot.lane.b32.xlu0 %v818, 104
      %v1305 = vpop.permute.xlu0 %1304
      %v1307 = vsel %vm819, %v1303, 0
      %v1310 = vand.u32 %v1305, %v826
      %1312 = vmatprep.subr.bf16.mxu0 0
      %1313 = vmatpush1.bf16.msra.mxu0 0
      %1314 = vmatprep.subr.bf16.mxu0 0
      %1315 = vmatpush1.bf16.msra.mxu0 0
      %1316 = vmatprep.subr.bf16.mxu0 0
      %1317 = vmatpush1.bf16.msra.mxu0 0
      %1318 = vmatprep.subr.bf16.mxu0 0
      %1319 = vmatpush1.bf16.msra.mxu0 0
      %1320 = vmatprep.subr.bf16.mxu0 0
      %1321 = vmatpush1.bf16.msra.mxu0 0
      %1322 = vmatprep.subr.bf16.mxu0 0
      %1323 = vmatpush1.bf16.msra.mxu0 0
      %1324 = vmatprep.subr.bf16.mxu0 0
      %1325 = vmatpush1.bf16.msra.mxu0 0
      %1326 = vmatprep.subr.bf16.mxu0 0
      %1327 = vmatpush1.bf16.msra.mxu0 %v1310
      %1328 = vmatprep.subr.bf16.mxu0 0
      %1329 = vmatpush2.bf16.msra.mxu0 0
      %1330 = vmatprep.subr.bf16.mxu0 0
      %1331 = vmatpush2.bf16.msra.mxu0 0
      %1332 = vmatprep.subr.bf16.mxu0 0
      %1333 = vmatpush2.bf16.msra.mxu0 0
      %1334 = vmatprep.subr.bf16.mxu0 0
      %1335 = vmatpush2.bf16.msra.mxu0 0
      %1336 = vmatprep.subr.bf16.mxu0 0
      %1337 = vmatpush2.bf16.msra.mxu0 0
      %1338 = vmatprep.subr.bf16.mxu0 0
      %1339 = vmatpush2.bf16.msra.mxu0 0
      %1340 = vmatprep.subr.bf16.mxu0 0
      %1341 = vmatpush2.bf16.msra.mxu0 0
      %1342 = vmatprep.subr.bf16.mxu0 0
      %1343 = vmatpush2.bf16.msra.mxu0 0
      %1344 = vmatprep.mubr.bf16.mxu0 0
      %1345 = vmatmul.mubr.bf16.gmra.mxu0 %v1307
      %v1346 = vpop.f32.mrf.mxu0
      %v1347 = vadd.f32 0.0, %v1346
      %v1348 = vpop.f32.mrf.mxu0
      %v1349 = vpop.f32.mrf.mxu0
      %v1350 = vpop.f32.mrf.mxu0
      %1351 = vdwg.mxu0
      %v1352 = vld [vmem:[%s8 + $0x18] sm:$0xff]
      %v1353 = vpack.c.bf16 %v1347, %v1347
      %v1354 = vpack.c.bf16 %v1352, %v1352
      %v1356 = vsel %vm757, %v1353, 0
      %v1359 = vsel %vm824, %v1354, 0
      %1361 = vmatprep.subr.bf16.mxu0 0
      %1362 = vmatpush1.bf16.msra.mxu0 0
      %1363 = vmatprep.subr.bf16.mxu0 0
      %1364 = vmatpush1.bf16.msra.mxu0 0
      %1365 = vmatprep.subr.bf16.mxu0 0
      %1366 = vmatpush1.bf16.msra.mxu0 0
      %1367 = vmatprep.subr.bf16.mxu0 0
      %1368 = vmatpush1.bf16.msra.mxu0 0
      %1369 = vmatprep.subr.bf16.mxu0 0
      %1370 = vmatpush1.bf16.msra.mxu0 0
      %1371 = vmatprep.subr.bf16.mxu0 0
      %1372 = vmatpush1.bf16.msra.mxu0 0
      %1373 = vmatprep.subr.bf16.mxu0 0
      %1374 = vmatpush1.bf16.msra.mxu0 0
      %1375 = vmatprep.subr.bf16.mxu0 0
      %1376 = vmatpush1.bf16.msra.mxu0 %v1359
      %1377 = vmatprep.subr.bf16.mxu0 0
      %1378 = vmatpush2.bf16.msra.mxu0 0
      %1379 = vmatprep.subr.bf16.mxu0 0
      %1380 = vmatpush2.bf16.msra.mxu0 0
      %1381 = vmatprep.subr.bf16.mxu0 0
      %1382 = vmatpush2.bf16.msra.mxu0 0
      %1383 = vmatprep.subr.bf16.mxu0 0
      %1384 = vmatpush2.bf16.msra.mxu0 0
      %1385 = vmatprep.subr.bf16.mxu0 0
      %1386 = vmatpush2.bf16.msra.mxu0 0
      %1387 = vmatprep.subr.bf16.mxu0 0
      %1388 = vmatpush2.bf16.msra.mxu0 0
      %1389 = vmatprep.subr.bf16.mxu0 0
      %1390 = vmatpush2.bf16.msra.mxu0 0
      %1391 = vmatprep.subr.bf16.mxu0 0
      %1392 = vmatpush2.bf16.msra.mxu0 0
      %1393 = vmatprep.mubr.bf16.mxu0 0
      %1394 = vmatmul.mubr.bf16.gmra.mxu0 %v1356
      %v1395 = vpop.f32.mrf.mxu0
      %v1396 = vadd.f32 0.0, %v1395
      %v1397 = vpop.f32.mrf.mxu0
      %v1398 = vpop.f32.mrf.mxu0
      %v1399 = vpop.f32.mrf.mxu0
      %1400 = vdwg.mxu0
      %v1401 = vadd.f32 %v1240, %v1396
      %1402 = vrot.lane.b32.xlu0 %v753, 96
      %v1403 = vpop.permute.xlu0 %1402
      %1404 = vrot.lane.b32.xlu0 %v753, 32
      %v1405 = vpop.permute.xlu0 %1404
      %v1407 = vsel %vm757, %v1403, 0
      %v1410 = vsel %vm757, %v1405, 0
      %1412 = vmatprep.subr.bf16.mxu0 0
      %1413 = vmatpush1.bf16.xpose.msra.mxu0 0
      %1414 = vmatprep.subr.bf16.mxu0 0
      %1415 = vmatpush1.bf16.xpose.msra.mxu0 0
      %1416 = vmatprep.subr.bf16.mxu0 0
      %1417 = vmatpush1.bf16.xpose.msra.mxu0 0
      %1418 = vmatprep.subr.bf16.mxu0 0
      %1419 = vmatpush1.bf16.xpose.msra.mxu0 0
      %1420 = vmatprep.subr.bf16.mxu0 0
      %1421 = vmatpush1.bf16.xpose.msra.mxu0 0
      %1422 = vmatprep.subr.bf16.mxu0 0
      %1423 = vmatpush1.bf16.xpose.msra.mxu0 0
      %1424 = vmatprep.subr.bf16.mxu0 0
      %1425 = vmatpush1.bf16.xpose.msra.mxu0 0
      %1426 = vmatprep.subr.bf16.mxu0 0
      %1427 = vmatpush1.bf16.xpose.msra.mxu0 %v1410
      %1428 = vmatprep.subr.bf16.mxu0 0
      %1429 = vmatpush2.bf16.xpose.msra.mxu0 0
      %1430 = vmatprep.subr.bf16.mxu0 0
      %1431 = vmatpush2.bf16.xpose.msra.mxu0 0
      %1432 = vmatprep.subr.bf16.mxu0 0
      %1433 = vmatpush2.bf16.xpose.msra.mxu0 0
      %1434 = vmatprep.subr.bf16.mxu0 0
      %1435 = vmatpush2.bf16.xpose.msra.mxu0 0
      %1436 = vmatprep.subr.bf16.mxu0 0
      %1437 = vmatpush2.bf16.xpose.msra.mxu0 0
      %1438 = vmatprep.subr.bf16.mxu0 0
      %1439 = vmatpush2.bf16.xpose.msra.mxu0 0
      %1440 = vmatprep.subr.bf16.mxu0 0
      %1441 = vmatpush2.bf16.xpose.msra.mxu0 0
      %1442 = vmatprep.subr.bf16.mxu0 0
      %1443 = vmatpush2.bf16.xpose.msra.mxu0 0
      %1444 = vmatprep.mubr.bf16.mxu0 0
      %1445 = vmatmul.mubr.bf16.gmra.mxu0 %v1407
      %v1446 = vpop.f32.mrf.mxu0
      %v1447 = vadd.f32 0.0, %v1446
      %v1448 = vpop.f32.mrf.mxu0
      %v1449 = vpop.f32.mrf.mxu0
      %v1450 = vpop.f32.mrf.mxu0
      %1451 = vdwg.mxu0
      %v1452 = vmul.f32 %v1447, 0.35355338
      %v1453 = vsel %vm805, %v1452, -inf
      %1454 = vmax.xlane.f32.xlu0 %v1453
      %v1455 = vpop.xlane.xlu0 %1454
      %v1456 = vsub.f32 %v1452, %v1455
      %v1457 = vmul.f32 %v1456, 1.442695
      %v1458 = vpow.pop %v1457
      %v1459 = vsel %vm805, %v1458, 0.0
      %1460 = vadd.xlane.f32.xlu0 %v1459
      %v1461 = vpop.xlane.xlu0 %1460
      %v1462 = vrcp.pop %v1461
      %v1463 = vmul.f32 %v1458, %v1462
      %v1464 = vpack.c.bf16 %v1463, %v1463
      %1465 = vrot.lane.b32.xlu0 %v818, 96
      %v1466 = vpop.permute.xlu0 %1465
      %v1468 = vsel %vm819, %v1464, 0
      %v1471 = vand.u32 %v1466, %v826
      %1473 = vmatprep.subr.bf16.mxu0 0
      %1474 = vmatpush1.bf16.msra.mxu0 0
      %1475 = vmatprep.subr.bf16.mxu0 0
      %1476 = vmatpush1.bf16.msra.mxu0 0
      %1477 = vmatprep.subr.bf16.mxu0 0
      %1478 = vmatpush1.bf16.msra.mxu0 0
      %1479 = vmatprep.subr.bf16.mxu0 0
      %1480 = vmatpush1.bf16.msra.mxu0 0
      %1481 = vmatprep.subr.bf16.mxu0 0
      %1482 = vmatpush1.bf16.msra.mxu0 0
      %1483 = vmatprep.subr.bf16.mxu0 0
      %1484 = vmatpush1.bf16.msra.mxu0 0
      %1485 = vmatprep.subr.bf16.mxu0 0
      %1486 = vmatpush1.bf16.msra.mxu0 0
      %1487 = vmatprep.subr.bf16.mxu0 0
      %1488 = vmatpush1.bf16.msra.mxu0 %v1471
      %1489 = vmatprep.subr.bf16.mxu0 0
      %1490 = vmatpush2.bf16.msra.mxu0 0
      %1491 = vmatprep.subr.bf16.mxu0 0
      %1492 = vmatpush2.bf16.msra.mxu0 0
      %1493 = vmatprep.subr.bf16.mxu0 0
      %1494 = vmatpush2.bf16.msra.mxu0 0
      %1495 = vmatprep.subr.bf16.mxu0 0
      %1496 = vmatpush2.bf16.msra.mxu0 0
      %1497 = vmatprep.subr.bf16.mxu0 0
      %1498 = vmatpush2.bf16.msra.mxu0 0
      %1499 = vmatprep.subr.bf16.mxu0 0
      %1500 = vmatpush2.bf16.msra.mxu0 0
      %1501 = vmatprep.subr.bf16.mxu0 0
      %1502 = vmatpush2.bf16.msra.mxu0 0
      %1503 = vmatprep.subr.bf16.mxu0 0
      %1504 = vmatpush2.bf16.msra.mxu0 0
      %1505 = vmatprep.mubr.bf16.mxu0 0
      %1506 = vmatmul.mubr.bf16.gmra.mxu0 %v1468
      %v1507 = vpop.f32.mrf.mxu0
      %v1508 = vadd.f32 0.0, %v1507
      %v1509 = vpop.f32.mrf.mxu0
      %v1510 = vpop.f32.mrf.mxu0
      %v1511 = vpop.f32.mrf.mxu0
      %1512 = vdwg.mxu0
      %v1513 = vld [vmem:[%s8 + $0x20] sm:$0xff]
      %v1514 = vpack.c.bf16 %v1508, %v1508
      %v1515 = vpack.c.bf16 %v1513, %v1513
      %v1517 = vsel %vm757, %v1514, 0
      %v1520 = vsel %vm824, %v1515, 0
      %1522 = vmatprep.subr.bf16.mxu0 0
      %1523 = vmatpush1.bf16.msra.mxu0 0
      %1524 = vmatprep.subr.bf16.mxu0 0
      %1525 = vmatpush1.bf16.msra.mxu0 0
      %1526 = vmatprep.subr.bf16.mxu0 0
      %1527 = vmatpush1.bf16.msra.mxu0 0
      %1528 = vmatprep.subr.bf16.mxu0 0
      %1529 = vmatpush1.bf16.msra.mxu0 0
      %1530 = vmatprep.subr.bf16.mxu0 0
      %1531 = vmatpush1.bf16.msra.mxu0 0
      %1532 = vmatprep.subr.bf16.mxu0 0
      %1533 = vmatpush1.bf16.msra.mxu0 0
      %1534 = vmatprep.subr.bf16.mxu0 0
      %1535 = vmatpush1.bf16.msra.mxu0 0
      %1536 = vmatprep.subr.bf16.mxu0 0
      %1537 = vmatpush1.bf16.msra.mxu0 %v1520
      %1538 = vmatprep.subr.bf16.mxu0 0
      %1539 = vmatpush2.bf16.msra.mxu0 0
      %1540 = vmatprep.subr.bf16.mxu0 0
      %1541 = vmatpush2.bf16.msra.mxu0 0
      %1542 = vmatprep.subr.bf16.mxu0 0
      %1543 = vmatpush2.bf16.msra.mxu0 0
      %1544 = vmatprep.subr.bf16.mxu0 0
      %1545 = vmatpush2.bf16.msra.mxu0 0
      %1546 = vmatprep.subr.bf16.mxu0 0
      %1547 = vmatpush2.bf16.msra.mxu0 0
      %1548 = vmatprep.subr.bf16.mxu0 0
      %1549 = vmatpush2.bf16.msra.mxu0 0
      %1550 = vmatprep.subr.bf16.mxu0 0
      %1551 = vmatpush2.bf16.msra.mxu0 0
      %1552 = vmatprep.subr.bf16.mxu0 0
      %1553 = vmatpush2.bf16.msra.mxu0 0
      %1554 = vmatprep.mubr.bf16.mxu0 0
      %1555 = vmatmul.mubr.bf16.gmra.mxu0 %v1517
      %v1556 = vpop.f32.mrf.mxu0
      %v1557 = vadd.f32 0.0, %v1556
      %v1558 = vpop.f32.mrf.mxu0
      %v1559 = vpop.f32.mrf.mxu0
      %v1560 = vpop.f32.mrf.mxu0
      %1561 = vdwg.mxu0
      %v1562 = vadd.f32 %v1401, %v1557
      %1563 = vrot.lane.b32.xlu0 %v753, 88
      %v1564 = vpop.permute.xlu0 %1563
      %1565 = vrot.lane.b32.xlu0 %v753, 24
      %v1566 = vpop.permute.xlu0 %1565
      %v1568 = vsel %vm757, %v1564, 0
      %v1571 = vsel %vm757, %v1566, 0
      %1573 = vmatprep.subr.bf16.mxu0 0
      %1574 = vmatpush1.bf16.xpose.msra.mxu0 0
      %1575 = vmatprep.subr.bf16.mxu0 0
      %1576 = vmatpush1.bf16.xpose.msra.mxu0 0
      %1577 = vmatprep.subr.bf16.mxu0 0
      %1578 = vmatpush1.bf16.xpose.msra.mxu0 0
      %1579 = vmatprep.subr.bf16.mxu0 0
      %1580 = vmatpush1.bf16.xpose.msra.mxu0 0
      %1581 = vmatprep.subr.bf16.mxu0 0
      %1582 = vmatpush1.bf16.xpose.msra.mxu0 0
      %1583 = vmatprep.subr.bf16.mxu0 0
      %1584 = vmatpush1.bf16.xpose.msra.mxu0 0
      %1585 = vmatprep.subr.bf16.mxu0 0
      %1586 = vmatpush1.bf16.xpose.msra.mxu0 0
      %1587 = vmatprep.subr.bf16.mxu0 0
      %1588 = vmatpush1.bf16.xpose.msra.mxu0 %v1571
      %1589 = vmatprep.subr.bf16.mxu0 0
      %1590 = vmatpush2.bf16.xpose.msra.mxu0 0
      %1591 = vmatprep.subr.bf16.mxu0 0
      %1592 = vmatpush2.bf16.xpose.msra.mxu0 0
      %1593 = vmatprep.subr.bf16.mxu0 0
      %1594 = vmatpush2.bf16.xpose.msra.mxu0 0
      %1595 = vmatprep.subr.bf16.mxu0 0
      %1596 = vmatpush2.bf16.xpose.msra.mxu0 0
      %1597 = vmatprep.subr.bf16.mxu0 0
      %1598 = vmatpush2.bf16.xpose.msra.mxu0 0
      %1599 = vmatprep.subr.bf16.mxu0 0
      %1600 = vmatpush2.bf16.xpose.msra.mxu0 0
      %1601 = vmatprep.subr.bf16.mxu0 0
      %1602 = vmatpush2.bf16.xpose.msra.mxu0 0
      %1603 = vmatprep.subr.bf16.mxu0 0
      %1604 = vmatpush2.bf16.xpose.msra.mxu0 0
      %1605 = vmatprep.mubr.bf16.mxu0 0
      %1606 = vmatmul.mubr.bf16.gmra.mxu0 %v1568
      %v1607 = vpop.f32.mrf.mxu0
      %v1608 = vadd.f32 0.0, %v1607
      %v1609 = vpop.f32.mrf.mxu0
      %v1610 = vpop.f32.mrf.mxu0
      %v1611 = vpop.f32.mrf.mxu0
      %1612 = vdwg.mxu0
      %v1613 = vmul.f32 %v1608, 0.35355338
      %v1614 = vsel %vm805, %v1613, -inf
      %1615 = vmax.xlane.f32.xlu0 %v1614
      %v1616 = vpop.xlane.xlu0 %1615
      %v1617 = vsub.f32 %v1613, %v1616
      %v1618 = vmul.f32 %v1617, 1.442695
      %v1619 = vpow.pop %v1618
      %v1620 = vsel %vm805, %v1619, 0.0
      %1621 = vadd.xlane.f32.xlu0 %v1620
      %v1622 = vpop.xlane.xlu0 %1621
      %v1623 = vrcp.pop %v1622
      %v1624 = vmul.f32 %v1619, %v1623
      %v1625 = vpack.c.bf16 %v1624, %v1624
      %1626 = vrot.lane.b32.xlu0 %v818, 88
      %v1627 = vpop.permute.xlu0 %1626
      %v1629 = vsel %vm819, %v1625, 0
      %v1632 = vand.u32 %v1627, %v826
      %1634 = vmatprep.subr.bf16.mxu0 0
      %1635 = vmatpush1.bf16.msra.mxu0 0
      %1636 = vmatprep.subr.bf16.mxu0 0
      %1637 = vmatpush1.bf16.msra.mxu0 0
      %1638 = vmatprep.subr.bf16.mxu0 0
      %1639 = vmatpush1.bf16.msra.mxu0 0
      %1640 = vmatprep.subr.bf16.mxu0 0
      %1641 = vmatpush1.bf16.msra.mxu0 0
      %1642 = vmatprep.subr.bf16.mxu0 0
      %1643 = vmatpush1.bf16.msra.mxu0 0
      %1644 = vmatprep.subr.bf16.mxu0 0
      %1645 = vmatpush1.bf16.msra.mxu0 0
      %1646 = vmatprep.subr.bf16.mxu0 0
      %1647 = vmatpush1.bf16.msra.mxu0 0
      %1648 = vmatprep.subr.bf16.mxu0 0
      %1649 = vmatpush1.bf16.msra.mxu0 %v1632
      %1650 = vmatprep.subr.bf16.mxu0 0
      %1651 = vmatpush2.bf16.msra.mxu0 0
      %1652 = vmatprep.subr.bf16.mxu0 0
      %1653 = vmatpush2.bf16.msra.mxu0 0
      %1654 = vmatprep.subr.bf16.mxu0 0
      %1655 = vmatpush2.bf16.msra.mxu0 0
      %1656 = vmatprep.subr.bf16.mxu0 0
      %1657 = vmatpush2.bf16.msra.mxu0 0
      %1658 = vmatprep.subr.bf16.mxu0 0
      %1659 = vmatpush2.bf16.msra.mxu0 0
      %1660 = vmatprep.subr.bf16.mxu0 0
      %1661 = vmatpush2.bf16.msra.mxu0 0
      %1662 = vmatprep.subr.bf16.mxu0 0
      %1663 = vmatpush2.bf16.msra.mxu0 0
      %1664 = vmatprep.subr.bf16.mxu0 0
      %1665 = vmatpush2.bf16.msra.mxu0 0
      %1666 = vmatprep.mubr.bf16.mxu0 0
      %1667 = vmatmul.mubr.bf16.gmra.mxu0 %v1629
      %v1668 = vpop.f32.mrf.mxu0
      %v1669 = vadd.f32 0.0, %v1668
      %v1670 = vpop.f32.mrf.mxu0
      %v1671 = vpop.f32.mrf.mxu0
      %v1672 = vpop.f32.mrf.mxu0
      %1673 = vdwg.mxu0
      %v1674 = vld [vmem:[%s8 + $0x28] sm:$0xff]
      %v1675 = vpack.c.bf16 %v1669, %v1669
      %v1676 = vpack.c.bf16 %v1674, %v1674
      %v1678 = vsel %vm757, %v1675, 0
      %v1681 = vsel %vm824, %v1676, 0
      %1683 = vmatprep.subr.bf16.mxu0 0
      %1684 = vmatpush1.bf16.msra.mxu0 0
      %1685 = vmatprep.subr.bf16.mxu0 0
      %1686 = vmatpush1.bf16.msra.mxu0 0
      %1687 = vmatprep.subr.bf16.mxu0 0
      %1688 = vmatpush1.bf16.msra.mxu0 0
      %1689 = vmatprep.subr.bf16.mxu0 0
      %1690 = vmatpush1.bf16.msra.mxu0 0
      %1691 = vmatprep.subr.bf16.mxu0 0
      %1692 = vmatpush1.bf16.msra.mxu0 0
      %1693 = vmatprep.subr.bf16.mxu0 0
      %1694 = vmatpush1.bf16.msra.mxu0 0
      %1695 = vmatprep.subr.bf16.mxu0 0
      %1696 = vmatpush1.bf16.msra.mxu0 0
      %1697 = vmatprep.subr.bf16.mxu0 0
      %1698 = vmatpush1.bf16.msra.mxu0 %v1681
      %1699 = vmatprep.subr.bf16.mxu0 0
      %1700 = vmatpush2.bf16.msra.mxu0 0
      %1701 = vmatprep.subr.bf16.mxu0 0
      %1702 = vmatpush2.bf16.msra.mxu0 0
      %1703 = vmatprep.subr.bf16.mxu0 0
      %1704 = vmatpush2.bf16.msra.mxu0 0
      %1705 = vmatprep.subr.bf16.mxu0 0
      %1706 = vmatpush2.bf16.msra.mxu0 0
      %1707 = vmatprep.subr.bf16.mxu0 0
      %1708 = vmatpush2.bf16.msra.mxu0 0
      %1709 = vmatprep.subr.bf16.mxu0 0
      %1710 = vmatpush2.bf16.msra.mxu0 0
      %1711 = vmatprep.subr.bf16.mxu0 0
      %1712 = vmatpush2.bf16.msra.mxu0 0
      %1713 = vmatprep.subr.bf16.mxu0 0
      %1714 = vmatpush2.bf16.msra.mxu0 0
      %1715 = vmatprep.mubr.bf16.mxu0 0
      %1716 = vmatmul.mubr.bf16.gmra.mxu0 %v1678
      %v1717 = vpop.f32.mrf.mxu0
      %v1718 = vadd.f32 0.0, %v1717
      %v1719 = vpop.f32.mrf.mxu0
      %v1720 = vpop.f32.mrf.mxu0
      %v1721 = vpop.f32.mrf.mxu0
      %1722 = vdwg.mxu0
      %v1723 = vadd.f32 %v1562, %v1718
      %1724 = vrot.lane.b32.xlu0 %v753, 80
      %v1725 = vpop.permute.xlu0 %1724
      %1726 = vrot.lane.b32.xlu0 %v753, 16
      %v1727 = vpop.permute.xlu0 %1726
      %v1729 = vsel %vm757, %v1725, 0
      %v1732 = vsel %vm757, %v1727, 0
      %1734 = vmatprep.subr.bf16.mxu0 0
      %1735 = vmatpush1.bf16.xpose.msra.mxu0 0
      %1736 = vmatprep.subr.bf16.mxu0 0
      %1737 = vmatpush1.bf16.xpose.msra.mxu0 0
      %1738 = vmatprep.subr.bf16.mxu0 0
      %1739 = vmatpush1.bf16.xpose.msra.mxu0 0
      %1740 = vmatprep.subr.bf16.mxu0 0
      %1741 = vmatpush1.bf16.xpose.msra.mxu0 0
      %1742 = vmatprep.subr.bf16.mxu0 0
      %1743 = vmatpush1.bf16.xpose.msra.mxu0 0
      %1744 = vmatprep.subr.bf16.mxu0 0
      %1745 = vmatpush1.bf16.xpose.msra.mxu0 0
      %1746 = vmatprep.subr.bf16.mxu0 0
      %1747 = vmatpush1.bf16.xpose.msra.mxu0 0
      %1748 = vmatprep.subr.bf16.mxu0 0
      %1749 = vmatpush1.bf16.xpose.msra.mxu0 %v1732
      %1750 = vmatprep.subr.bf16.mxu0 0
      %1751 = vmatpush2.bf16.xpose.msra.mxu0 0
      %1752 = vmatprep.subr.bf16.mxu0 0
      %1753 = vmatpush2.bf16.xpose.msra.mxu0 0
      %1754 = vmatprep.subr.bf16.mxu0 0
      %1755 = vmatpush2.bf16.xpose.msra.mxu0 0
      %1756 = vmatprep.subr.bf16.mxu0 0
      %1757 = vmatpush2.bf16.xpose.msra.mxu0 0
      %1758 = vmatprep.subr.bf16.mxu0 0
      %1759 = vmatpush2.bf16.xpose.msra.mxu0 0
      %1760 = vmatprep.subr.bf16.mxu0 0
      %1761 = vmatpush2.bf16.xpose.msra.mxu0 0
      %1762 = vmatprep.subr.bf16.mxu0 0
      %1763 = vmatpush2.bf16.xpose.msra.mxu0 0
      %1764 = vmatprep.subr.bf16.mxu0 0
      %1765 = vmatpush2.bf16.xpose.msra.mxu0 0
      %1766 = vmatprep.mubr.bf16.mxu0 0
      %1767 = vmatmul.mubr.bf16.gmra.mxu0 %v1729
      %v1768 = vpop.f32.mrf.mxu0
      %v1769 = vadd.f32 0.0, %v1768
      %v1770 = vpop.f32.mrf.mxu0
      %v1771 = vpop.f32.mrf.mxu0
      %v1772 = vpop.f32.mrf.mxu0
      %1773 = vdwg.mxu0
      %v1774 = vmul.f32 %v1769, 0.35355338
      %v1775 = vsel %vm805, %v1774, -inf
      %1776 = vmax.xlane.f32.xlu0 %v1775
      %v1777 = vpop.xlane.xlu0 %1776
      %v1778 = vsub.f32 %v1774, %v1777
      %v1779 = vmul.f32 %v1778, 1.442695
      %v1780 = vpow.pop %v1779
      %v1781 = vsel %vm805, %v1780, 0.0
      %1782 = vadd.xlane.f32.xlu0 %v1781
      %v1783 = vpop.xlane.xlu0 %1782
      %v1784 = vrcp.pop %v1783
      %v1785 = vmul.f32 %v1780, %v1784
      %v1786 = vpack.c.bf16 %v1785, %v1785
      %1787 = vrot.lane.b32.xlu0 %v818, 80
      %v1788 = vpop.permute.xlu0 %1787
      %v1790 = vsel %vm819, %v1786, 0
      %v1793 = vand.u32 %v1788, %v826
      %1795 = vmatprep.subr.bf16.mxu0 0
      %1796 = vmatpush1.bf16.msra.mxu0 0
      %1797 = vmatprep.subr.bf16.mxu0 0
      %1798 = vmatpush1.bf16.msra.mxu0 0
      %1799 = vmatprep.subr.bf16.mxu0 0
      %1800 = vmatpush1.bf16.msra.mxu0 0
      %1801 = vmatprep.subr.bf16.mxu0 0
      %1802 = vmatpush1.bf16.msra.mxu0 0
      %1803 = vmatprep.subr.bf16.mxu0 0
      %1804 = vmatpush1.bf16.msra.mxu0 0
      %1805 = vmatprep.subr.bf16.mxu0 0
      %1806 = vmatpush1.bf16.msra.mxu0 0
      %1807 = vmatprep.subr.bf16.mxu0 0
      %1808 = vmatpush1.bf16.msra.mxu0 0
      %1809 = vmatprep.subr.bf16.mxu0 0
      %1810 = vmatpush1.bf16.msra.mxu0 %v1793
      %1811 = vmatprep.subr.bf16.mxu0 0
      %1812 = vmatpush2.bf16.msra.mxu0 0
      %1813 = vmatprep.subr.bf16.mxu0 0
      %1814 = vmatpush2.bf16.msra.mxu0 0
      %1815 = vmatprep.subr.bf16.mxu0 0
      %1816 = vmatpush2.bf16.msra.mxu0 0
      %1817 = vmatprep.subr.bf16.mxu0 0
      %1818 = vmatpush2.bf16.msra.mxu0 0
      %1819 = vmatprep.subr.bf16.mxu0 0
      %1820 = vmatpush2.bf16.msra.mxu0 0
      %1821 = vmatprep.subr.bf16.mxu0 0
      %1822 = vmatpush2.bf16.msra.mxu0 0
      %1823 = vmatprep.subr.bf16.mxu0 0
      %1824 = vmatpush2.bf16.msra.mxu0 0
      %1825 = vmatprep.subr.bf16.mxu0 0
      %1826 = vmatpush2.bf16.msra.mxu0 0
      %1827 = vmatprep.mubr.bf16.mxu0 0
      %1828 = vmatmul.mubr.bf16.gmra.mxu0 %v1790
      %v1829 = vpop.f32.mrf.mxu0
      %v1830 = vadd.f32 0.0, %v1829
      %v1831 = vpop.f32.mrf.mxu0
      %v1832 = vpop.f32.mrf.mxu0
      %v1833 = vpop.f32.mrf.mxu0
      %1834 = vdwg.mxu0
      %v1835 = vld [vmem:[%s8 + $0x30] sm:$0xff]
      %v1836 = vpack.c.bf16 %v1830, %v1830
      %v1837 = vpack.c.bf16 %v1835, %v1835
      %v1839 = vsel %vm757, %v1836, 0
      %v1842 = vsel %vm824, %v1837, 0
      %1844 = vmatprep.subr.bf16.mxu0 0
      %1845 = vmatpush1.bf16.msra.mxu0 0
      %1846 = vmatprep.subr.bf16.mxu0 0
      %1847 = vmatpush1.bf16.msra.mxu0 0
      %1848 = vmatprep.subr.bf16.mxu0 0
      %1849 = vmatpush1.bf16.msra.mxu0 0
      %1850 = vmatprep.subr.bf16.mxu0 0
      %1851 = vmatpush1.bf16.msra.mxu0 0
      %1852 = vmatprep.subr.bf16.mxu0 0
      %1853 = vmatpush1.bf16.msra.mxu0 0
      %1854 = vmatprep.subr.bf16.mxu0 0
      %1855 = vmatpush1.bf16.msra.mxu0 0
      %1856 = vmatprep.subr.bf16.mxu0 0
      %1857 = vmatpush1.bf16.msra.mxu0 0
      %1858 = vmatprep.subr.bf16.mxu0 0
      %1859 = vmatpush1.bf16.msra.mxu0 %v1842
      %1860 = vmatprep.subr.bf16.mxu0 0
      %1861 = vmatpush2.bf16.msra.mxu0 0
      %1862 = vmatprep.subr.bf16.mxu0 0
      %1863 = vmatpush2.bf16.msra.mxu0 0
      %1864 = vmatprep.subr.bf16.mxu0 0
      %1865 = vmatpush2.bf16.msra.mxu0 0
      %1866 = vmatprep.subr.bf16.mxu0 0
      %1867 = vmatpush2.bf16.msra.mxu0 0
      %1868 = vmatprep.subr.bf16.mxu0 0
      %1869 = vmatpush2.bf16.msra.mxu0 0
      %1870 = vmatprep.subr.bf16.mxu0 0
      %1871 = vmatpush2.bf16.msra.mxu0 0
      %1872 = vmatprep.subr.bf16.mxu0 0
      %1873 = vmatpush2.bf16.msra.mxu0 0
      %1874 = vmatprep.subr.bf16.mxu0 0
      %1875 = vmatpush2.bf16.msra.mxu0 0
      %1876 = vmatprep.mubr.bf16.mxu0 0
      %1877 = vmatmul.mubr.bf16.gmra.mxu0 %v1839
      %v1878 = vpop.f32.mrf.mxu0
      %v1879 = vadd.f32 0.0, %v1878
      %v1880 = vpop.f32.mrf.mxu0
      %v1881 = vpop.f32.mrf.mxu0
      %v1882 = vpop.f32.mrf.mxu0
      %1883 = vdwg.mxu0
      %v1884 = vadd.f32 %v1723, %v1879
      %1885 = vrot.lane.b32.xlu0 %v753, 72
      %v1886 = vpop.permute.xlu0 %1885
      %1887 = vrot.lane.b32.xlu0 %v753, 8
      %v1888 = vpop.permute.xlu0 %1887
      %v1890 = vsel %vm757, %v1886, 0
      %v1893 = vsel %vm757, %v1888, 0
      %1895 = vmatprep.subr.bf16.mxu0 0
      %1896 = vmatpush1.bf16.xpose.msra.mxu0 0
      %1897 = vmatprep.subr.bf16.mxu0 0
      %1898 = vmatpush1.bf16.xpose.msra.mxu0 0
      %1899 = vmatprep.subr.bf16.mxu0 0
      %1900 = vmatpush1.bf16.xpose.msra.mxu0 0
      %1901 = vmatprep.subr.bf16.mxu0 0
      %1902 = vmatpush1.bf16.xpose.msra.mxu0 0
      %1903 = vmatprep.subr.bf16.mxu0 0
      %1904 = vmatpush1.bf16.xpose.msra.mxu0 0
      %1905 = vmatprep.subr.bf16.mxu0 0
      %1906 = vmatpush1.bf16.xpose.msra.mxu0 0
      %1907 = vmatprep.subr.bf16.mxu0 0
      %1908 = vmatpush1.bf16.xpose.msra.mxu0 0
      %1909 = vmatprep.subr.bf16.mxu0 0
      %1910 = vmatpush1.bf16.xpose.msra.mxu0 %v1893
      %1911 = vmatprep.subr.bf16.mxu0 0
      %1912 = vmatpush2.bf16.xpose.msra.mxu0 0
      %1913 = vmatprep.subr.bf16.mxu0 0
      %1914 = vmatpush2.bf16.xpose.msra.mxu0 0
      %1915 = vmatprep.subr.bf16.mxu0 0
      %1916 = vmatpush2.bf16.xpose.msra.mxu0 0
      %1917 = vmatprep.subr.bf16.mxu0 0
      %1918 = vmatpush2.bf16.xpose.msra.mxu0 0
      %1919 = vmatprep.subr.bf16.mxu0 0
      %1920 = vmatpush2.bf16.xpose.msra.mxu0 0
      %1921 = vmatprep.subr.bf16.mxu0 0
      %1922 = vmatpush2.bf16.xpose.msra.mxu0 0
      %1923 = vmatprep.subr.bf16.mxu0 0
      %1924 = vmatpush2.bf16.xpose.msra.mxu0 0
      %1925 = vmatprep.subr.bf16.mxu0 0
      %1926 = vmatpush2.bf16.xpose.msra.mxu0 0
      %1927 = vmatprep.mubr.bf16.mxu0 0
      %1928 = vmatmul.mubr.bf16.gmra.mxu0 %v1890
      %v1929 = vpop.f32.mrf.mxu0
      %v1930 = vadd.f32 0.0, %v1929
      %v1931 = vpop.f32.mrf.mxu0
      %v1932 = vpop.f32.mrf.mxu0
      %v1933 = vpop.f32.mrf.mxu0
      %1934 = vdwg.mxu0
      %v1935 = vmul.f32 %v1930, 0.35355338
      %v1936 = vsel %vm805, %v1935, -inf
      %1937 = vmax.xlane.f32.xlu0 %v1936
      %v1938 = vpop.xlane.xlu0 %1937
      %v1939 = vsub.f32 %v1935, %v1938
      %v1940 = vmul.f32 %v1939, 1.442695
      %v1941 = vpow.pop %v1940
      %v1942 = vsel %vm805, %v1941, 0.0
      %1943 = vadd.xlane.f32.xlu0 %v1942
      %v1944 = vpop.xlane.xlu0 %1943
      %v1945 = vrcp.pop %v1944
      %v1946 = vmul.f32 %v1941, %v1945
      %v1947 = vpack.c.bf16 %v1946, %v1946
      %1948 = vrot.lane.b32.xlu0 %v818, 72
      %v1949 = vpop.permute.xlu0 %1948
      %v1951 = vsel %vm819, %v1947, 0
      %v1954 = vand.u32 %v1949, %v826
      %1956 = vmatprep.subr.bf16.mxu0 0
      %1957 = vmatpush1.bf16.msra.mxu0 0
      %1958 = vmatprep.subr.bf16.mxu0 0
      %1959 = vmatpush1.bf16.msra.mxu0 0
      %1960 = vmatprep.subr.bf16.mxu0 0
      %1961 = vmatpush1.bf16.msra.mxu0 0
      %1962 = vmatprep.subr.bf16.mxu0 0
      %1963 = vmatpush1.bf16.msra.mxu0 0
      %1964 = vmatprep.subr.bf16.mxu0 0
      %1965 = vmatpush1.bf16.msra.mxu0 0
      %1966 = vmatprep.subr.bf16.mxu0 0
      %1967 = vmatpush1.bf16.msra.mxu0 0
      %1968 = vmatprep.subr.bf16.mxu0 0
      %1969 = vmatpush1.bf16.msra.mxu0 0
      %1970 = vmatprep.subr.bf16.mxu0 0
      %1971 = vmatpush1.bf16.msra.mxu0 %v1954
      %1972 = vmatprep.subr.bf16.mxu0 0
      %1973 = vmatpush2.bf16.msra.mxu0 0
      %1974 = vmatprep.subr.bf16.mxu0 0
      %1975 = vmatpush2.bf16.msra.mxu0 0
      %1976 = vmatprep.subr.bf16.mxu0 0
      %1977 = vmatpush2.bf16.msra.mxu0 0
      %1978 = vmatprep.subr.bf16.mxu0 0
      %1979 = vmatpush2.bf16.msra.mxu0 0
      %1980 = vmatprep.subr.bf16.mxu0 0
      %1981 = vmatpush2.bf16.msra.mxu0 0
      %1982 = vmatprep.subr.bf16.mxu0 0
      %1983 = vmatpush2.bf16.msra.mxu0 0
      %1984 = vmatprep.subr.bf16.mxu0 0
      %1985 = vmatpush2.bf16.msra.mxu0 0
      %1986 = vmatprep.subr.bf16.mxu0 0
      %1987 = vmatpush2.bf16.msra.mxu0 0
      %1988 = vmatprep.mubr.bf16.mxu0 0
      %1989 = vmatmul.mubr.bf16.gmra.mxu0 %v1951
      %v1990 = vpop.f32.mrf.mxu0
      %v1991 = vadd.f32 0.0, %v1990
      %v1992 = vpop.f32.mrf.mxu0
      %v1993 = vpop.f32.mrf.mxu0
      %v1994 = vpop.f32.mrf.mxu0
      %1995 = vdwg.mxu0
      %v1996 = vld [vmem:[%s8 + $0x38] sm:$0xff]
      %v1997 = vpack.c.bf16 %v1991, %v1991
      %v1998 = vpack.c.bf16 %v1996, %v1996
      %v2000 = vsel %vm757, %v1997, 0
      %v2003 = vsel %vm824, %v1998, 0
      %2005 = vmatprep.subr.bf16.mxu0 0
      %2006 = vmatpush1.bf16.msra.mxu0 0
      %2007 = vmatprep.subr.bf16.mxu0 0
      %2008 = vmatpush1.bf16.msra.mxu0 0
      %2009 = vmatprep.subr.bf16.mxu0 0
      %2010 = vmatpush1.bf16.msra.mxu0 0
      %2011 = vmatprep.subr.bf16.mxu0 0
      %2012 = vmatpush1.bf16.msra.mxu0 0
      %2013 = vmatprep.subr.bf16.mxu0 0
      %2014 = vmatpush1.bf16.msra.mxu0 0
      %2015 = vmatprep.subr.bf16.mxu0 0
      %2016 = vmatpush1.bf16.msra.mxu0 0
      %2017 = vmatprep.subr.bf16.mxu0 0
      %2018 = vmatpush1.bf16.msra.mxu0 0
      %2019 = vmatprep.subr.bf16.mxu0 0
      %2020 = vmatpush1.bf16.msra.mxu0 %v2003
      %2021 = vmatprep.subr.bf16.mxu0 0
      %2022 = vmatpush2.bf16.msra.mxu0 0
      %2023 = vmatprep.subr.bf16.mxu0 0
      %2024 = vmatpush2.bf16.msra.mxu0 0
      %2025 = vmatprep.subr.bf16.mxu0 0
      %2026 = vmatpush2.bf16.msra.mxu0 0
      %2027 = vmatprep.subr.bf16.mxu0 0
      %2028 = vmatpush2.bf16.msra.mxu0 0
      %2029 = vmatprep.subr.bf16.mxu0 0
      %2030 = vmatpush2.bf16.msra.mxu0 0
      %2031 = vmatprep.subr.bf16.mxu0 0
      %2032 = vmatpush2.bf16.msra.mxu0 0
      %2033 = vmatprep.subr.bf16.mxu0 0
      %2034 = vmatpush2.bf16.msra.mxu0 0
      %2035 = vmatprep.subr.bf16.mxu0 0
      %2036 = vmatpush2.bf16.msra.mxu0 0
      %2037 = vmatprep.mubr.bf16.mxu0 0
      %2038 = vmatmul.mubr.bf16.gmra.mxu0 %v2000
      %v2039 = vpop.f32.mrf.mxu0
      %v2040 = vadd.f32 0.0, %v2039
      %v2041 = vpop.f32.mrf.mxu0
      %v2042 = vpop.f32.mrf.mxu0
      %v2043 = vpop.f32.mrf.mxu0
      %2044 = vdwg.mxu0
      %v2045 = vadd.f32 %v1884, %v2040
      %v2046 = vld [vmem:[%s9] sm:$0x1]
      %v2048 = vlaneseq
      %v2049 = vshrl.u32 %v2048, 7
      %v2050 = vsub.s32 0, %v2049
      %v2051 = vrot.slane %v2046, %v2050
      %v2053 = vadd.f32 %v2045, %v2051
      %v2054 = vadd.f32 %v632, %v2053
      %v2055 = vsel %vm633, %v2054, 0.0
      %2056 = vadd.xlane.f32.xlu0 %v2055
      %v2057 = vpop.xlane.xlu0 %2056
      %v2058 = vmul.f32 %v2057, %v637
      %v2059 = vsub.f32 %v2054, %v2058
      %v2060 = vmul.f32 %v2059, %v2059
      %v2061 = vsel %vm633, %v2060, 0.0
      %2062 = vadd.xlane.f32.xlu0 %v2061
      %v2063 = vpop.xlane.xlu0 %2062
      %v2064 = vmul.f32 %v2063, 0.015873017
      %v2065 = vrsqrt.pop %v2064
      %v2066 = vmul.f32 %v2064, %v2065
      %vm2067 = vcmp.eq.f32.partialorder %v2064, inf
      %v2068 = vsel %vm2067, %v2064, %v2066
      %vm2069 = vcmp.eq.f32.partialorder %v2064, 0.0
      %v2070 = vand.u32 %v2064, 2147483648
      %v2071 = vsel %vm2069, %v2070, %v2068
      %v2072 = vld [vmem:[%s10] sm:$0x1]
      %v2074 = vlaneseq
      %v2075 = vshrl.u32 %v2074, 7
      %v2076 = vsub.s32 0, %v2075
      %v2077 = vrot.slane %v2072, %v2076
      %v2079 = vmul.f32 %v2077, %v2059
      %v2080 = vadd.f32 %v2071, 1e-06
      %v2081 = vrcp.pop %v2080
      %v2082 = vmul.f32 %v2079, %v2081
      %v2083 = vld [vmem:[%s11] sm:$0x1]
      %v2085 = vlaneseq
      %v2086 = vshrl.u32 %v2085, 7
      %v2087 = vsub.s32 0, %v2086
      %v2088 = vrot.slane %v2083, %v2087
      %v2090 = vadd.f32 %v2082, %v2088
      %v2091 = vld [vmem:[%s12] sm:$0xff]
      %v2092 = vld [vmem:[%s12 + $0x8] sm:$0xff]
      %v2093 = vld [vmem:[%s12 + $0x10] sm:$0xff]
      %v2094 = vld [vmem:[%s12 + $0x18] sm:$0xff]
      %v2095 = vld [vmem:[%s12 + $0x20] sm:$0xff]
      %v2096 = vld [vmem:[%s12 + $0x28] sm:$0xff]
      %v2097 = vld [vmem:[%s12 + $0x30] sm:$0xff]
      %v2098 = vld [vmem:[%s12 + $0x38] sm:$0xff]
      %v2099 = vpack.c.bf16 %v2090, %v2090
      %v2100 = vpack.c.bf16 %v2092, %v2091
      %v2101 = vpack.c.bf16 %v2094, %v2093
      %v2102 = vpack.c.bf16 %v2096, %v2095
      %v2103 = vpack.c.bf16 %v2098, %v2097
      %v2104 = vld [vmem:[%s13] sm:$0x1]
      %v2106 = vlaneseq
      %v2107 = vshrl.u32 %v2106, 7
      %v2108 = vsub.s32 0, %v2107
      %v2109 = vrot.slane %v2104, %v2108
      %v2112 = vsel %vm708, %v2099, 0
      %2114 = vmatprep.subr.bf16.mxu0 0
      %2115 = vmatpush1.bf16.msra.mxu0 0
      %2116 = vmatprep.subr.bf16.mxu0 0
      %2117 = vmatpush1.bf16.msra.mxu0 0
      %2118 = vmatprep.subr.bf16.mxu0 0
      %2119 = vmatpush1.bf16.msra.mxu0 0
      %2120 = vmatprep.subr.bf16.mxu0 0
      %2121 = vmatpush1.bf16.msra.mxu0 0
      %2122 = vmatprep.subr.bf16.mxu0 0
      %2123 = vmatpush1.bf16.msra.mxu0 %v2103
      %2124 = vmatprep.subr.bf16.mxu0 0
      %2125 = vmatpush1.bf16.msra.mxu0 %v2102
      %2126 = vmatprep.subr.bf16.mxu0 0
      %2127 = vmatpush1.bf16.msra.mxu0 %v2101
      %2128 = vmatprep.subr.bf16.mxu0 0
      %2129 = vmatpush1.bf16.msra.mxu0 %v2100
      %2130 = vmatprep.subr.bf16.mxu0 0
      %2131 = vmatpush2.bf16.msra.mxu0 0
      %2132 = vmatprep.subr.bf16.mxu0 0
      %2133 = vmatpush2.bf16.msra.mxu0 0
      %2134 = vmatprep.subr.bf16.mxu0 0
      %2135 = vmatpush2.bf16.msra.mxu0 0
      %2136 = vmatprep.subr.bf16.mxu0 0
      %2137 = vmatpush2.bf16.msra.mxu0 0
      %2138 = vmatprep.subr.bf16.mxu0 0
      %2139 = vmatpush2.bf16.msra.mxu0 0
      %2140 = vmatprep.subr.bf16.mxu0 0
      %2141 = vmatpush2.bf16.msra.mxu0 0
      %2142 = vmatprep.subr.bf16.mxu0 0
      %2143 = vmatpush2.bf16.msra.mxu0 0
      %2144 = vmatprep.subr.bf16.mxu0 0
      %2145 = vmatpush2.bf16.msra.mxu0 0
      %2146 = vmatprep.mubr.bf16.mxu0 0
      %2147 = vmatmul.mubr.bf16.gmra.mxu0 %v2112
      %v2148 = vpop.f32.mrf.mxu0
      %v2149 = vadd.f32 %v2109, %v2148
      %v2150 = vpop.f32.mrf.mxu0
      %v2151 = vpop.f32.mrf.mxu0
      %v2152 = vpop.f32.mrf.mxu0
      %2153 = vdwg.mxu0
      %v2154 = vmax.f32 %v2149, 0.0
      %v2155 = vld [vmem:[%s14] sm:$0xff]
      %v2156 = vld [vmem:[%s14 + $0x8] sm:$0xff]
      %v2157 = vld [vmem:[%s14 + $0x10] sm:$0xff]
      %v2158 = vld [vmem:[%s14 + $0x18] sm:$0xff]
      %v2159 = vld [vmem:[%s14 + $0x20] sm:$0xff]
      %v2160 = vld [vmem:[%s14 + $0x28] sm:$0xff]
      %v2161 = vld [vmem:[%s14 + $0x30] sm:$0xff]
      %v2162 = vld [vmem:[%s14 + $0x38] sm:$0xff]
      %v2163 = vld [vmem:[%s14 + $0x40] sm:$0xff]
      %v2164 = vld [vmem:[%s14 + $0x48] sm:$0xff]
      %v2165 = vld [vmem:[%s14 + $0x50] sm:$0xff]
      %v2166 = vld [vmem:[%s14 + $0x58] sm:$0xff]
      %v2167 = vld [vmem:[%s14 + $0x60] sm:$0xff]
      %v2168 = vld [vmem:[%s14 + $0x68] sm:$0xff]
      %v2169 = vld [vmem:[%s14 + $0x70] sm:$0xff]
      %v2170 = vld [vmem:[%s14 + $0x78] sm:$0xff]
      %v2171 = vpack.c.bf16 %v2154, %v2154
      %v2172 = vpack.c.bf16 %v2156, %v2155
      %v2173 = vpack.c.bf16 %v2158, %v2157
      %v2174 = vpack.c.bf16 %v2160, %v2159
      %v2175 = vpack.c.bf16 %v2162, %v2161
      %v2176 = vpack.c.bf16 %v2164, %v2163
      %v2177 = vpack.c.bf16 %v2166, %v2165
      %v2178 = vpack.c.bf16 %v2168, %v2167
      %v2179 = vpack.c.bf16 %v2170, %v2169
      %v2180 = vld [vmem:[%s15] sm:$0x1]
      %v2182 = vlaneseq
      %v2183 = vshrl.u32 %v2182, 7
      %v2184 = vsub.s32 0, %v2183
      %v2185 = vrot.slane %v2180, %v2184
      %2187 = vmatprep.subr.bf16.mxu0 0
      %2188 = vmatpush1.bf16.msra.mxu0 %v2179
      %2189 = vmatprep.subr.bf16.mxu0 0
      %2190 = vmatpush1.bf16.msra.mxu0 %v2178
      %2191 = vmatprep.subr.bf16.mxu0 0
      %2192 = vmatpush1.bf16.msra.mxu0 %v2177
      %2193 = vmatprep.subr.bf16.mxu0 0
      %2194 = vmatpush1.bf16.msra.mxu0 %v2176
      %2195 = vmatprep.subr.bf16.mxu0 0
      %2196 = vmatpush1.bf16.msra.mxu0 %v2175
      %2197 = vmatprep.subr.bf16.mxu0 0
      %2198 = vmatpush1.bf16.msra.mxu0 %v2174
      %2199 = vmatprep.subr.bf16.mxu0 0
      %2200 = vmatpush1.bf16.msra.mxu0 %v2173
      %2201 = vmatprep.subr.bf16.mxu0 0
      %2202 = vmatpush1.bf16.msra.mxu0 %v2172
      %2203 = vmatprep.subr.bf16.mxu0 0
      %2204 = vmatpush2.bf16.msra.mxu0 0
      %2205 = vmatprep.subr.bf16.mxu0 0
      %2206 = vmatpush2.bf16.msra.mxu0 0
      %2207 = vmatprep.subr.bf16.mxu0 0
      %2208 = vmatpush2.bf16.msra.mxu0 0
      %2209 = vmatprep.subr.bf16.mxu0 0
      %2210 = vmatpush2.bf16.msra.mxu0 0
      %2211 = vmatprep.subr.bf16.mxu0 0
      %2212 = vmatpush2.bf16.msra.mxu0 0
      %2213 = vmatprep.subr.bf16.mxu0 0
      %2214 = vmatpush2.bf16.msra.mxu0 0
      %2215 = vmatprep.subr.bf16.mxu0 0
      %2216 = vmatpush2.bf16.msra.mxu0 0
      %2217 = vmatprep.subr.bf16.mxu0 0
      %2218 = vmatpush2.bf16.msra.mxu0 0
      %2219 = vmatprep.mubr.bf16.mxu0 0
      %2220 = vmatmul.mubr.bf16.gmra.mxu0 %v2171
      %v2221 = vpop.f32.mrf.mxu0
      %v2222 = vadd.f32 %v2185, %v2221
      %v2223 = vpop.f32.mrf.mxu0
      %v2224 = vpop.f32.mrf.mxu0
      %v2225 = vpop.f32.mrf.mxu0
      %2226 = vdwg.mxu0
      %v2227 = vadd.f32 %v2054, %v2222
      %v2228 = vsel %vm633, %v2227, 0.0
      %2229 = vadd.xlane.f32.xlu0 %v2228
      %v2230 = vpop.xlane.xlu0 %2229
      %v2231 = vmul.f32 %v2230, %v637
      %v2232 = vsub.f32 %v2227, %v2231
      %v2233 = vmul.f32 %v2232, %v2232
      %v2234 = vsel %vm633, %v2233, 0.0
      %2235 = vadd.xlane.f32.xlu0 %v2234
      %v2236 = vpop.xlane.xlu0 %2235
      %v2237 = vmul.f32 %v2236, 0.015873017
      %v2238 = vrsqrt.pop %v2237
      %v2239 = vmul.f32 %v2237, %v2238
      %vm2240 = vcmp.eq.f32.partialorder %v2237, inf
      %v2241 = vsel %vm2240, %v2237, %v2239
      %vm2242 = vcmp.eq.f32.partialorder %v2237, 0.0
      %v2243 = vand.u32 %v2237, 2147483648
      %v2244 = vsel %vm2242, %v2243, %v2241
      %v2245 = vld [vmem:[%s16] sm:$0x1]
      %v2247 = vlaneseq
      %v2248 = vshrl.u32 %v2247, 7
      %v2249 = vsub.s32 0, %v2248
      %v2250 = vrot.slane %v2245, %v2249
      %v2252 = vmul.f32 %v2250, %v2232
      %v2253 = vadd.f32 %v2244, 1e-06
      %v2254 = vrcp.pop %v2253
      %v2255 = vmul.f32 %v2252, %v2254
      %v2256 = vld [vmem:[%s17] sm:$0x1]
      %v2258 = vlaneseq
      %v2259 = vshrl.u32 %v2258, 7
      %v2260 = vsub.s32 0, %v2259
      %v2261 = vrot.slane %v2256, %v2260
      %v2263 = vadd.f32 %v2255, %v2261
      %2264 = vst.msk [vmem:[%s570] sm:$0x7f] %vm633, %v2263
      %p2265 = scmp.lt.s32.totalorder %s29, 1
      %s2266 = scalar_select %p2265, %s29, 1
      %s2267 = smul.addr %s2266, 8
      %s2268 = scalar_lea.vmem %s18, %s2267
      // Predicated region
      $region93: #{trajectory_generator_forward.2} parent=91 // pred_check
        %p2269 = pneg %p430
      $region94: #{trajectory_generator_forward.2} parent=91 // pred_check_branch
        %2271 = sbr.rel (%p2269) target = $region96
      $region95: #{trajectory_generator_forward.2} parent=91 // pred_region
        _
      $region96: #{trajectory_generator_forward.2} parent=91 // pred_fallthru
        _
    $region92: #{trajectory_generator_forward.2} parent=5 // pred_fallthru
      _
    %p2272 = scmp.le.s32.totalorder 2, %s24
    // Predicated region
    $region97: #{trajectory_generator_forward.2} parent=5 // pred_check
      %p2273 = pneg %p2272
    $region98: #{trajectory_generator_forward.2} parent=5 // pred_check_branch
      %2275 = sbr.rel (%p2273) target = $region100
    $region99: #{trajectory_generator_forward.2} parent=5 // pred_region
      %s2276 = ssub.s32 %s24, 2
      // Predicated region
      $region101: #{trajectory_generator_forward.2} parent=99 // pred_check
        %p2277 = pneg %p436
      $region102: #{trajectory_generator_forward.2} parent=99 // pred_check_branch
        %2279 = sbr.rel (%p2277) target = $region104
      $region103: #{trajectory_generator_forward.2} parent=99 // pred_region
        %p2280 = scmp.lt.s32.totalorder %s30, 1
        %s2281 = scalar_select %p2280, %s30, 1
        %s2282 = smul.addr %s2281, 8
        %s2283 = scalar_lea.vmem %s18, %s2282
      $region104: #{trajectory_generator_forward.2} parent=99 // pred_fallthru
        _
    $region100: #{trajectory_generator_forward.2} parent=5 // pred_fallthru
      _
  $region6: #{trajectory_generator_forward.2} parent=0 // loop_footer
    %s28 = sadd.s32 1, %s24
  $region7: #{trajectory_generator_forward.2} parent=0 // loop_footer_branch
    %23 = sbr.rel target = $region3
  $region8: #{trajectory_generator_forward.2} parent=0 // loop_exit
    _

// kernel: trajectory_generator_forward.3
$region0: #{trajectory_generator_forward.3}
  #allocation0 [shape = 'u32[]', space=smem, size = 0x4, offset = 0x4, fixed_abs, tag = 'smem constant byte address 0x4 - core index']
  #allocation1 [shape = 'u32[144,128]{1,0:T(1,128)}', space=vmem, size = 0x12000, scoped, tag = 'internal scratch']
  %s0 = inlined_call_operand.smem [shape: u32[30], index: -1, kind: input, shape index: {}]
  %s1 = sld [smem:[%s0]]
  %s2 = scalar_lea.smem %s0, 1
  %s3 = sld [smem:[%s2]]
  %s4 = scalar_lea.smem %s0, 2
  %s5 = sld [smem:[%s4]]
  %s6 = scalar_lea.smem %s0, 3
  %s7 = sld [smem:[%s6]]
  %s8 = scalar_lea.smem %s0, 4
  %s9 = sld [smem:[%s8]]
  %s10 = scalar_lea.smem %s0, 5
  %s11 = sld [smem:[%s10]]
  %s12 = scalar_lea.smem %s0, 6
  %s13 = sld [smem:[%s12]]
  %s14 = scalar_lea.smem %s0, 7
  %s15 = sld [smem:[%s14]]
  %s16 = scalar_lea.smem %s0, 8
  %s17 = sld [smem:[%s16]]
  %s18 = scalar_lea.smem %s0, 9
  %s19 = sld [smem:[%s18]]
  %s20 = scalar_lea.smem %s0, 10
  %s21 = sld [smem:[%s20]]
  %s22 = scalar_lea.smem %s0, 11
  %s23 = sld [smem:[%s22]]
  %s24 = scalar_lea.smem %s0, 12
  %s25 = sld [smem:[%s24]]
  %s26 = scalar_lea.smem %s0, 13
  %s27 = sld [smem:[%s26]]
  %s28 = scalar_lea.smem %s0, 14
  %s29 = sld [smem:[%s28]]
  %s30 = scalar_lea.smem %s0, 15
  %s31 = sld [smem:[%s30]]
  %s32 = scalar_lea.smem %s0, 16
  %s33 = sld [smem:[%s32]]
  %s34 = scalar_lea.smem %s0, 17
  %s35 = sld [smem:[%s34]]
  %s36 = scalar_lea.smem %s0, 18
  %s37 = sld [smem:[%s36]]
  %s38 = scalar_lea.smem %s0, 19
  %s39 = sld [smem:[%s38]]
  %s40 = scalar_lea.smem %s0, 20
  %s41 = sld [smem:[%s40]]
  %s42 = scalar_lea.smem %s0, 21
  %s43 = sld [smem:[%s42]]
  %s44 = scalar_lea.smem %s0, 22
  %s45 = sld [smem:[%s44]]
  %s46 = scalar_lea.smem %s0, 23
  %s47 = sld [smem:[%s46]]
  %s48 = scalar_lea.smem %s0, 24
  %s49 = sld [smem:[%s48]]
  %s50 = scalar_lea.smem %s0, 25
  %s51 = sld [smem:[%s50]]
  %s52 = scalar_lea.smem %s0, 26
  %s53 = sld [smem:[%s52]]
  %s54 = scalar_lea.smem %s0, 27
  %s55 = sld [smem:[%s54]]
  %s56 = scalar_lea.smem %s0, 28
  %s57 = sld [smem:[%s56]]
  %s58 = scalar_lea.smem %s0, 29
  %s59 = sld [smem:[%s58]]
  %s60 = sld [smem:[#allocation0]]
  $region149: #{trajectory_generator_forward.3} parent=0
    _
  %s62 = ssub.s32 1, %s60
  %s63 = scalar_select 0, %s62, %s60
  loop: start=0, step=1, limit=4
  $region2: #{trajectory_generator_forward.3} parent=0 // loop_pre_header
    _
  $region3: #{trajectory_generator_forward.3} parent=0 // loop_header
    %s65 = sphi 0, %s69
    %p66 = scmp.ge.s32.totalorder %s65, 4
    %s75 = sphi 0, %s77
    %s78 = sphi 0, %s75
    %s79 = sphi 0, %s78
    %s95 = sphi 0, %s79
    %s101 = sphi 0, %s103
    %s104 = sphi 0, %s101
    %s105 = sphi 0, %s104
    %s121 = sphi 0, %s105
    %s125 = sphi 0, %s125
    %s127 = sphi 0, %s125
    %s128 = sphi 0, %s127
    %s142 = sphi 0, %s128
    %s146 = sphi 0, %s146
    %s148 = sphi 0, %s146
    %s149 = sphi 0, %s148
    %s163 = sphi 0, %s149
    %s167 = sphi 0, %s167
    %s169 = sphi 0, %s167
    %s170 = sphi 0, %s169
    %s184 = sphi 0, %s170
    %s188 = sphi 0, %s188
    %s190 = sphi 0, %s188
    %s191 = sphi 0, %s190
    %s205 = sphi 0, %s191
    %s209 = sphi 0, %s209
    %s211 = sphi 0, %s209
    %s212 = sphi 0, %s211
    %s226 = sphi 0, %s212
    %s230 = sphi 0, %s230
    %s232 = sphi 0, %s230
    %s233 = sphi 0, %s232
    %s247 = sphi 0, %s233
    %s251 = sphi 0, %s251
    %s253 = sphi 0, %s251
    %s254 = sphi 0, %s253
    %s268 = sphi 0, %s254
    %s272 = sphi 0, %s272
    %s274 = sphi 0, %s272
    %s275 = sphi 0, %s274
    %s289 = sphi 0, %s275
    %s293 = sphi 0, %s293
    %s295 = sphi 0, %s293
    %s296 = sphi 0, %s295
    %s310 = sphi 0, %s296
    %s314 = sphi 0, %s314
    %s316 = sphi 0, %s314
    %s317 = sphi 0, %s316
    %s331 = sphi 0, %s317
    %s335 = sphi 0, %s335
    %s337 = sphi 0, %s335
    %s338 = sphi 0, %s337
    %s352 = sphi 0, %s338
    %s356 = sphi 0, %s356
    %s358 = sphi 0, %s356
    %s359 = sphi 0, %s358
    %s373 = sphi 0, %s359
    %s377 = sphi 0, %s377
    %s379 = sphi 0, %s377
    %s380 = sphi 0, %s379
    %s394 = sphi 0, %s380
    %s398 = sphi 0, %s398
    %s400 = sphi 0, %s398
    %s401 = sphi 0, %s400
    %s415 = sphi 0, %s401
    %s419 = sphi 0, %s419
    %s421 = sphi 0, %s419
    %s422 = sphi 0, %s421
    %s436 = sphi 0, %s422
    %s440 = sphi 0, %s440
    %s442 = sphi 0, %s440
    %s443 = sphi 0, %s442
    %s457 = sphi 0, %s443
    %s461 = sphi 0, %s461
    %s463 = sphi 0, %s461
    %s464 = sphi 0, %s463
    %s478 = sphi 0, %s464
    %s482 = sphi 0, %s482
    %s484 = sphi 0, %s482
    %s485 = sphi 0, %s484
    %s499 = sphi 0, %s485
    %s503 = sphi 0, %s503
    %s505 = sphi 0, %s503
    %s506 = sphi 0, %s505
    %s520 = sphi 0, %s506
    %s524 = sphi 0, %s524
    %s526 = sphi 0, %s524
    %s527 = sphi 0, %s526
    %s541 = sphi 0, %s527
    %s545 = sphi 0, %s545
    %s547 = sphi 0, %s545
    %s548 = sphi 0, %s547
    %s562 = sphi 0, %s548
    %s566 = sphi 0, %s566
    %s568 = sphi 0, %s566
    %s569 = sphi 0, %s568
    %s583 = sphi 0, %s569
    %s587 = sphi 0, %s587
    %s589 = sphi 0, %s587
    %s590 = sphi 0, %s589
    %s604 = sphi 0, %s590
    %s608 = sphi 0, %s608
    %s610 = sphi 0, %s608
    %s611 = sphi 0, %s610
    %s625 = sphi 0, %s611
    %s629 = sphi 0, %s629
    %s631 = sphi 0, %s629
    %s632 = sphi 0, %s631
    %s646 = sphi 0, %s632
    %s650 = sphi 0, %s650
    %s652 = sphi 0, %s650
    %s653 = sphi 0, %s652
    %s667 = sphi 0, %s653
    %s671 = sphi 0, %s671
    %s673 = sphi 0, %s671
    %s674 = sphi 0, %s673
    %s688 = sphi 0, %s674
    %s694 = sphi 0, %s696
    %s697 = sphi 0, %s694
    %s698 = sphi 0, %s697
    %s714 = sphi 0, %s698
  $region4: #{trajectory_generator_forward.3} parent=0 // loop_header_branch
    %68 = sbr.rel (%p66) target = $region8
  $region5: #{trajectory_generator_forward.3} parent=0 // loop_body
    %s70 = ssub.s32 %s65, 1
    %s71 = ssub.s32 %s65, 2
    %s72 = sadd.s32 %s65, 1
    %s73 = ssub.s32 %s65, %s72
    %p74 = scmp.eq.s32.totalorder %s73, 0
    %s76 = sadd.s32 %s75, 1
    %s77 = scalar_select %p74, %s75, %s76
    %p80 = pneg %p74
    %p81 = scmp.eq.s32.totalorder %s65, 1
    %p82 = por %p80, %p81
    %p83 = scmp.ne.s32.totalorder %s75, %s78
    %p84 = scmp.eq.s32.totalorder %s65, 0
    %p85 = por %p83, %p84
    %p86 = scmp.ne.s32.totalorder %s75, %s78
    %p87 = scmp.eq.s32.totalorder %s70, 1
    %p88 = por %p86, %p87
    %p89 = scmp.ne.s32.totalorder %s78, %s79
    %p90 = scmp.eq.s32.totalorder %s70, 0
    %p91 = por %p89, %p90
    %p92 = scmp.ne.s32.totalorder %s78, %s79
    %p93 = scmp.eq.s32.totalorder %s71, 1
    %p94 = por %p92, %p93
    %p96 = scmp.ne.s32.totalorder %s79, %s95
    %p97 = scmp.eq.s32.totalorder %s71, 0
    %p98 = por %p96, %p97
    %s99 = ssub.s32 %s65, %s72
    %p100 = scmp.eq.s32.totalorder %s99, 0
    %s102 = sadd.s32 %s101, 1
    %s103 = scalar_select %p100, %s101, %s102
    %p106 = pneg %p100
    %p107 = scmp.eq.s32.totalorder %s65, 1
    %p108 = por %p106, %p107
    %p109 = scmp.ne.s32.totalorder %s101, %s104
    %p110 = scmp.eq.s32.totalorder %s65, 0
    %p111 = por %p109, %p110
    %p112 = scmp.ne.s32.totalorder %s101, %s104
    %p113 = scmp.eq.s32.totalorder %s70, 1
    %p114 = por %p112, %p113
    %p115 = scmp.ne.s32.totalorder %s104, %s105
    %p116 = scmp.eq.s32.totalorder %s70, 0
    %p117 = por %p115, %p116
    %p118 = scmp.ne.s32.totalorder %s104, %s105
    %p119 = scmp.eq.s32.totalorder %s71, 1
    %p120 = por %p118, %p119
    %p122 = scmp.ne.s32.totalorder %s105, %s121
    %p123 = scmp.eq.s32.totalorder %s71, 0
    %p124 = por %p122, %p123
    %s126 = sadd.s32 %s125, 1
    %p129 = scmp.eq.s32.totalorder %s65, 1
    %p130 = scmp.ne.s32.totalorder %s125, %s127
    %p131 = scmp.eq.s32.totalorder %s65, 0
    %p132 = por %p130, %p131
    %p133 = scmp.ne.s32.totalorder %s125, %s127
    %p134 = scmp.eq.s32.totalorder %s70, 1
    %p135 = por %p133, %p134
    %p136 = scmp.ne.s32.totalorder %s127, %s128
    %p137 = scmp.eq.s32.totalorder %s70, 0
    %p138 = por %p136, %p137
    %p139 = scmp.ne.s32.totalorder %s127, %s128
    %p140 = scmp.eq.s32.totalorder %s71, 1
    %p141 = por %p139, %p140
    %p143 = scmp.ne.s32.totalorder %s128, %s142
    %p144 = scmp.eq.s32.totalorder %s71, 0
    %p145 = por %p143, %p144
    %s147 = sadd.s32 %s146, 1
    %p150 = scmp.eq.s32.totalorder %s65, 1
    %p151 = scmp.ne.s32.totalorder %s146, %s148
    %p152 = scmp.eq.s32.totalorder %s65, 0
    %p153 = por %p151, %p152
    %p154 = scmp.ne.s32.totalorder %s146, %s148
    %p155 = scmp.eq.s32.totalorder %s70, 1
    %p156 = por %p154, %p155
    %p157 = scmp.ne.s32.totalorder %s148, %s149
    %p158 = scmp.eq.s32.totalorder %s70, 0
    %p159 = por %p157, %p158
    %p160 = scmp.ne.s32.totalorder %s148, %s149
    %p161 = scmp.eq.s32.totalorder %s71, 1
    %p162 = por %p160, %p161
    %p164 = scmp.ne.s32.totalorder %s149, %s163
    %p165 = scmp.eq.s32.totalorder %s71, 0
    %p166 = por %p164, %p165
    %s168 = sadd.s32 %s167, 1
    %p171 = scmp.eq.s32.totalorder %s65, 1
    %p172 = scmp.ne.s32.totalorder %s167, %s169
    %p173 = scmp.eq.s32.totalorder %s65, 0
    %p174 = por %p172, %p173
    %p175 = scmp.ne.s32.totalorder %s167, %s169
    %p176 = scmp.eq.s32.totalorder %s70, 1
    %p177 = por %p175, %p176
    %p178 = scmp.ne.s32.totalorder %s169, %s170
    %p179 = scmp.eq.s32.totalorder %s70, 0
    %p180 = por %p178, %p179
    %p181 = scmp.ne.s32.totalorder %s169, %s170
    %p182 = scmp.eq.s32.totalorder %s71, 1
    %p183 = por %p181, %p182
    %p185 = scmp.ne.s32.totalorder %s170, %s184
    %p186 = scmp.eq.s32.totalorder %s71, 0
    %p187 = por %p185, %p186
    %s189 = sadd.s32 %s188, 1
    %p192 = scmp.eq.s32.totalorder %s65, 1
    %p193 = scmp.ne.s32.totalorder %s188, %s190
    %p194 = scmp.eq.s32.totalorder %s65, 0
    %p195 = por %p193, %p194
    %p196 = scmp.ne.s32.totalorder %s188, %s190
    %p197 = scmp.eq.s32.totalorder %s70, 1
    %p198 = por %p196, %p197
    %p199 = scmp.ne.s32.totalorder %s190, %s191
    %p200 = scmp.eq.s32.totalorder %s70, 0
    %p201 = por %p199, %p200
    %p202 = scmp.ne.s32.totalorder %s190, %s191
    %p203 = scmp.eq.s32.totalorder %s71, 1
    %p204 = por %p202, %p203
    %p206 = scmp.ne.s32.totalorder %s191, %s205
    %p207 = scmp.eq.s32.totalorder %s71, 0
    %p208 = por %p206, %p207
    %s210 = sadd.s32 %s209, 1
    %p213 = scmp.eq.s32.totalorder %s65, 1
    %p214 = scmp.ne.s32.totalorder %s209, %s211
    %p215 = scmp.eq.s32.totalorder %s65, 0
    %p216 = por %p214, %p215
    %p217 = scmp.ne.s32.totalorder %s209, %s211
    %p218 = scmp.eq.s32.totalorder %s70, 1
    %p219 = por %p217, %p218
    %p220 = scmp.ne.s32.totalorder %s211, %s212
    %p221 = scmp.eq.s32.totalorder %s70, 0
    %p222 = por %p220, %p221
    %p223 = scmp.ne.s32.totalorder %s211, %s212
    %p224 = scmp.eq.s32.totalorder %s71, 1
    %p225 = por %p223, %p224
    %p227 = scmp.ne.s32.totalorder %s212, %s226
    %p228 = scmp.eq.s32.totalorder %s71, 0
    %p229 = por %p227, %p228
    %s231 = sadd.s32 %s230, 1
    %p234 = scmp.eq.s32.totalorder %s65, 1
    %p235 = scmp.ne.s32.totalorder %s230, %s232
    %p236 = scmp.eq.s32.totalorder %s65, 0
    %p237 = por %p235, %p236
    %p238 = scmp.ne.s32.totalorder %s230, %s232
    %p239 = scmp.eq.s32.totalorder %s70, 1
    %p240 = por %p238, %p239
    %p241 = scmp.ne.s32.totalorder %s232, %s233
    %p242 = scmp.eq.s32.totalorder %s70, 0
    %p243 = por %p241, %p242
    %p244 = scmp.ne.s32.totalorder %s232, %s233
    %p245 = scmp.eq.s32.totalorder %s71, 1
    %p246 = por %p244, %p245
    %p248 = scmp.ne.s32.totalorder %s233, %s247
    %p249 = scmp.eq.s32.totalorder %s71, 0
    %p250 = por %p248, %p249
    %s252 = sadd.s32 %s251, 1
    %p255 = scmp.eq.s32.totalorder %s65, 1
    %p256 = scmp.ne.s32.totalorder %s251, %s253
    %p257 = scmp.eq.s32.totalorder %s65, 0
    %p258 = por %p256, %p257
    %p259 = scmp.ne.s32.totalorder %s251, %s253
    %p260 = scmp.eq.s32.totalorder %s70, 1
    %p261 = por %p259, %p260
    %p262 = scmp.ne.s32.totalorder %s253, %s254
    %p263 = scmp.eq.s32.totalorder %s70, 0
    %p264 = por %p262, %p263
    %p265 = scmp.ne.s32.totalorder %s253, %s254
    %p266 = scmp.eq.s32.totalorder %s71, 1
    %p267 = por %p265, %p266
    %p269 = scmp.ne.s32.totalorder %s254, %s268
    %p270 = scmp.eq.s32.totalorder %s71, 0
    %p271 = por %p269, %p270
    %s273 = sadd.s32 %s272, 1
    %p276 = scmp.eq.s32.totalorder %s65, 1
    %p277 = scmp.ne.s32.totalorder %s272, %s274
    %p278 = scmp.eq.s32.totalorder %s65, 0
    %p279 = por %p277, %p278
    %p280 = scmp.ne.s32.totalorder %s272, %s274
    %p281 = scmp.eq.s32.totalorder %s70, 1
    %p282 = por %p280, %p281
    %p283 = scmp.ne.s32.totalorder %s274, %s275
    %p284 = scmp.eq.s32.totalorder %s70, 0
    %p285 = por %p283, %p284
    %p286 = scmp.ne.s32.totalorder %s274, %s275
    %p287 = scmp.eq.s32.totalorder %s71, 1
    %p288 = por %p286, %p287
    %p290 = scmp.ne.s32.totalorder %s275, %s289
    %p291 = scmp.eq.s32.totalorder %s71, 0
    %p292 = por %p290, %p291
    %s294 = sadd.s32 %s293, 1
    %p297 = scmp.eq.s32.totalorder %s65, 1
    %p298 = scmp.ne.s32.totalorder %s293, %s295
    %p299 = scmp.eq.s32.totalorder %s65, 0
    %p300 = por %p298, %p299
    %p301 = scmp.ne.s32.totalorder %s293, %s295
    %p302 = scmp.eq.s32.totalorder %s70, 1
    %p303 = por %p301, %p302
    %p304 = scmp.ne.s32.totalorder %s295, %s296
    %p305 = scmp.eq.s32.totalorder %s70, 0
    %p306 = por %p304, %p305
    %p307 = scmp.ne.s32.totalorder %s295, %s296
    %p308 = scmp.eq.s32.totalorder %s71, 1
    %p309 = por %p307, %p308
    %p311 = scmp.ne.s32.totalorder %s296, %s310
    %p312 = scmp.eq.s32.totalorder %s71, 0
    %p313 = por %p311, %p312
    %s315 = sadd.s32 %s314, 1
    %p318 = scmp.eq.s32.totalorder %s65, 1
    %p319 = scmp.ne.s32.totalorder %s314, %s316
    %p320 = scmp.eq.s32.totalorder %s65, 0
    %p321 = por %p319, %p320
    %p322 = scmp.ne.s32.totalorder %s314, %s316
    %p323 = scmp.eq.s32.totalorder %s70, 1
    %p324 = por %p322, %p323
    %p325 = scmp.ne.s32.totalorder %s316, %s317
    %p326 = scmp.eq.s32.totalorder %s70, 0
    %p327 = por %p325, %p326
    %p328 = scmp.ne.s32.totalorder %s316, %s317
    %p329 = scmp.eq.s32.totalorder %s71, 1
    %p330 = por %p328, %p329
    %p332 = scmp.ne.s32.totalorder %s317, %s331
    %p333 = scmp.eq.s32.totalorder %s71, 0
    %p334 = por %p332, %p333
    %s336 = sadd.s32 %s335, 1
    %p339 = scmp.eq.s32.totalorder %s65, 1
    %p340 = scmp.ne.s32.totalorder %s335, %s337
    %p341 = scmp.eq.s32.totalorder %s65, 0
    %p342 = por %p340, %p341
    %p343 = scmp.ne.s32.totalorder %s335, %s337
    %p344 = scmp.eq.s32.totalorder %s70, 1
    %p345 = por %p343, %p344
    %p346 = scmp.ne.s32.totalorder %s337, %s338
    %p347 = scmp.eq.s32.totalorder %s70, 0
    %p348 = por %p346, %p347
    %p349 = scmp.ne.s32.totalorder %s337, %s338
    %p350 = scmp.eq.s32.totalorder %s71, 1
    %p351 = por %p349, %p350
    %p353 = scmp.ne.s32.totalorder %s338, %s352
    %p354 = scmp.eq.s32.totalorder %s71, 0
    %p355 = por %p353, %p354
    %s357 = sadd.s32 %s356, 1
    %p360 = scmp.eq.s32.totalorder %s65, 1
    %p361 = scmp.ne.s32.totalorder %s356, %s358
    %p362 = scmp.eq.s32.totalorder %s65, 0
    %p363 = por %p361, %p362
    %p364 = scmp.ne.s32.totalorder %s356, %s358
    %p365 = scmp.eq.s32.totalorder %s70, 1
    %p366 = por %p364, %p365
    %p367 = scmp.ne.s32.totalorder %s358, %s359
    %p368 = scmp.eq.s32.totalorder %s70, 0
    %p369 = por %p367, %p368
    %p370 = scmp.ne.s32.totalorder %s358, %s359
    %p371 = scmp.eq.s32.totalorder %s71, 1
    %p372 = por %p370, %p371
    %p374 = scmp.ne.s32.totalorder %s359, %s373
    %p375 = scmp.eq.s32.totalorder %s71, 0
    %p376 = por %p374, %p375
    %s378 = sadd.s32 %s377, 1
    %p381 = scmp.eq.s32.totalorder %s65, 1
    %p382 = scmp.ne.s32.totalorder %s377, %s379
    %p383 = scmp.eq.s32.totalorder %s65, 0
    %p384 = por %p382, %p383
    %p385 = scmp.ne.s32.totalorder %s377, %s379
    %p386 = scmp.eq.s32.totalorder %s70, 1
    %p387 = por %p385, %p386
    %p388 = scmp.ne.s32.totalorder %s379, %s380
    %p389 = scmp.eq.s32.totalorder %s70, 0
    %p390 = por %p388, %p389
    %p391 = scmp.ne.s32.totalorder %s379, %s380
    %p392 = scmp.eq.s32.totalorder %s71, 1
    %p393 = por %p391, %p392
    %p395 = scmp.ne.s32.totalorder %s380, %s394
    %p396 = scmp.eq.s32.totalorder %s71, 0
    %p397 = por %p395, %p396
    %s399 = sadd.s32 %s398, 1
    %p402 = scmp.eq.s32.totalorder %s65, 1
    %p403 = scmp.ne.s32.totalorder %s398, %s400
    %p404 = scmp.eq.s32.totalorder %s65, 0
    %p405 = por %p403, %p404
    %p406 = scmp.ne.s32.totalorder %s398, %s400
    %p407 = scmp.eq.s32.totalorder %s70, 1
    %p408 = por %p406, %p407
    %p409 = scmp.ne.s32.totalorder %s400, %s401
    %p410 = scmp.eq.s32.totalorder %s70, 0
    %p411 = por %p409, %p410
    %p412 = scmp.ne.s32.totalorder %s400, %s401
    %p413 = scmp.eq.s32.totalorder %s71, 1
    %p414 = por %p412, %p413
    %p416 = scmp.ne.s32.totalorder %s401, %s415
    %p417 = scmp.eq.s32.totalorder %s71, 0
    %p418 = por %p416, %p417
    %s420 = sadd.s32 %s419, 1
    %p423 = scmp.eq.s32.totalorder %s65, 1
    %p424 = scmp.ne.s32.totalorder %s419, %s421
    %p425 = scmp.eq.s32.totalorder %s65, 0
    %p426 = por %p424, %p425
    %p427 = scmp.ne.s32.totalorder %s419, %s421
    %p428 = scmp.eq.s32.totalorder %s70, 1
    %p429 = por %p427, %p428
    %p430 = scmp.ne.s32.totalorder %s421, %s422
    %p431 = scmp.eq.s32.totalorder %s70, 0
    %p432 = por %p430, %p431
    %p433 = scmp.ne.s32.totalorder %s421, %s422
    %p434 = scmp.eq.s32.totalorder %s71, 1
    %p435 = por %p433, %p434
    %p437 = scmp.ne.s32.totalorder %s422, %s436
    %p438 = scmp.eq.s32.totalorder %s71, 0
    %p439 = por %p437, %p438
    %s441 = sadd.s32 %s440, 1
    %p444 = scmp.eq.s32.totalorder %s65, 1
    %p445 = scmp.ne.s32.totalorder %s440, %s442
    %p446 = scmp.eq.s32.totalorder %s65, 0
    %p447 = por %p445, %p446
    %p448 = scmp.ne.s32.totalorder %s440, %s442
    %p449 = scmp.eq.s32.totalorder %s70, 1
    %p450 = por %p448, %p449
    %p451 = scmp.ne.s32.totalorder %s442, %s443
    %p452 = scmp.eq.s32.totalorder %s70, 0
    %p453 = por %p451, %p452
    %p454 = scmp.ne.s32.totalorder %s442, %s443
    %p455 = scmp.eq.s32.totalorder %s71, 1
    %p456 = por %p454, %p455
    %p458 = scmp.ne.s32.totalorder %s443, %s457
    %p459 = scmp.eq.s32.totalorder %s71, 0
    %p460 = por %p458, %p459
    %s462 = sadd.s32 %s461, 1
    %p465 = scmp.eq.s32.totalorder %s65, 1
    %p466 = scmp.ne.s32.totalorder %s461, %s463
    %p467 = scmp.eq.s32.totalorder %s65, 0
    %p468 = por %p466, %p467
    %p469 = scmp.ne.s32.totalorder %s461, %s463
    %p470 = scmp.eq.s32.totalorder %s70, 1
    %p471 = por %p469, %p470
    %p472 = scmp.ne.s32.totalorder %s463, %s464
    %p473 = scmp.eq.s32.totalorder %s70, 0
    %p474 = por %p472, %p473
    %p475 = scmp.ne.s32.totalorder %s463, %s464
    %p476 = scmp.eq.s32.totalorder %s71, 1
    %p477 = por %p475, %p476
    %p479 = scmp.ne.s32.totalorder %s464, %s478
    %p480 = scmp.eq.s32.totalorder %s71, 0
    %p481 = por %p479, %p480
    %s483 = sadd.s32 %s482, 1
    %p486 = scmp.eq.s32.totalorder %s65, 1
    %p487 = scmp.ne.s32.totalorder %s482, %s484
    %p488 = scmp.eq.s32.totalorder %s65, 0
    %p489 = por %p487, %p488
    %p490 = scmp.ne.s32.totalorder %s482, %s484
    %p491 = scmp.eq.s32.totalorder %s70, 1
    %p492 = por %p490, %p491
    %p493 = scmp.ne.s32.totalorder %s484, %s485
    %p494 = scmp.eq.s32.totalorder %s70, 0
    %p495 = por %p493, %p494
    %p496 = scmp.ne.s32.totalorder %s484, %s485
    %p497 = scmp.eq.s32.totalorder %s71, 1
    %p498 = por %p496, %p497
    %p500 = scmp.ne.s32.totalorder %s485, %s499
    %p501 = scmp.eq.s32.totalorder %s71, 0
    %p502 = por %p500, %p501
    %s504 = sadd.s32 %s503, 1
    %p507 = scmp.eq.s32.totalorder %s65, 1
    %p508 = scmp.ne.s32.totalorder %s503, %s505
    %p509 = scmp.eq.s32.totalorder %s65, 0
    %p510 = por %p508, %p509
    %p511 = scmp.ne.s32.totalorder %s503, %s505
    %p512 = scmp.eq.s32.totalorder %s70, 1
    %p513 = por %p511, %p512
    %p514 = scmp.ne.s32.totalorder %s505, %s506
    %p515 = scmp.eq.s32.totalorder %s70, 0
    %p516 = por %p514, %p515
    %p517 = scmp.ne.s32.totalorder %s505, %s506
    %p518 = scmp.eq.s32.totalorder %s71, 1
    %p519 = por %p517, %p518
    %p521 = scmp.ne.s32.totalorder %s506, %s520
    %p522 = scmp.eq.s32.totalorder %s71, 0
    %p523 = por %p521, %p522
    %s525 = sadd.s32 %s524, 1
    %p528 = scmp.eq.s32.totalorder %s65, 1
    %p529 = scmp.ne.s32.totalorder %s524, %s526
    %p530 = scmp.eq.s32.totalorder %s65, 0
    %p531 = por %p529, %p530
    %p532 = scmp.ne.s32.totalorder %s524, %s526
    %p533 = scmp.eq.s32.totalorder %s70, 1
    %p534 = por %p532, %p533
    %p535 = scmp.ne.s32.totalorder %s526, %s527
    %p536 = scmp.eq.s32.totalorder %s70, 0
    %p537 = por %p535, %p536
    %p538 = scmp.ne.s32.totalorder %s526, %s527
    %p539 = scmp.eq.s32.totalorder %s71, 1
    %p540 = por %p538, %p539
    %p542 = scmp.ne.s32.totalorder %s527, %s541
    %p543 = scmp.eq.s32.totalorder %s71, 0
    %p544 = por %p542, %p543
    %s546 = sadd.s32 %s545, 1
    %p549 = scmp.eq.s32.totalorder %s65, 1
    %p550 = scmp.ne.s32.totalorder %s545, %s547
    %p551 = scmp.eq.s32.totalorder %s65, 0
    %p552 = por %p550, %p551
    %p553 = scmp.ne.s32.totalorder %s545, %s547
    %p554 = scmp.eq.s32.totalorder %s70, 1
    %p555 = por %p553, %p554
    %p556 = scmp.ne.s32.totalorder %s547, %s548
    %p557 = scmp.eq.s32.totalorder %s70, 0
    %p558 = por %p556, %p557
    %p559 = scmp.ne.s32.totalorder %s547, %s548
    %p560 = scmp.eq.s32.totalorder %s71, 1
    %p561 = por %p559, %p560
    %p563 = scmp.ne.s32.totalorder %s548, %s562
    %p564 = scmp.eq.s32.totalorder %s71, 0
    %p565 = por %p563, %p564
    %s567 = sadd.s32 %s566, 1
    %p570 = scmp.eq.s32.totalorder %s65, 1
    %p571 = scmp.ne.s32.totalorder %s566, %s568
    %p572 = scmp.eq.s32.totalorder %s65, 0
    %p573 = por %p571, %p572
    %p574 = scmp.ne.s32.totalorder %s566, %s568
    %p575 = scmp.eq.s32.totalorder %s70, 1
    %p576 = por %p574, %p575
    %p577 = scmp.ne.s32.totalorder %s568, %s569
    %p578 = scmp.eq.s32.totalorder %s70, 0
    %p579 = por %p577, %p578
    %p580 = scmp.ne.s32.totalorder %s568, %s569
    %p581 = scmp.eq.s32.totalorder %s71, 1
    %p582 = por %p580, %p581
    %p584 = scmp.ne.s32.totalorder %s569, %s583
    %p585 = scmp.eq.s32.totalorder %s71, 0
    %p586 = por %p584, %p585
    %s588 = sadd.s32 %s587, 1
    %p591 = scmp.eq.s32.totalorder %s65, 1
    %p592 = scmp.ne.s32.totalorder %s587, %s589
    %p593 = scmp.eq.s32.totalorder %s65, 0
    %p594 = por %p592, %p593
    %p595 = scmp.ne.s32.totalorder %s587, %s589
    %p596 = scmp.eq.s32.totalorder %s70, 1
    %p597 = por %p595, %p596
    %p598 = scmp.ne.s32.totalorder %s589, %s590
    %p599 = scmp.eq.s32.totalorder %s70, 0
    %p600 = por %p598, %p599
    %p601 = scmp.ne.s32.totalorder %s589, %s590
    %p602 = scmp.eq.s32.totalorder %s71, 1
    %p603 = por %p601, %p602
    %p605 = scmp.ne.s32.totalorder %s590, %s604
    %p606 = scmp.eq.s32.totalorder %s71, 0
    %p607 = por %p605, %p606
    %s609 = sadd.s32 %s608, 1
    %p612 = scmp.eq.s32.totalorder %s65, 1
    %p613 = scmp.ne.s32.totalorder %s608, %s610
    %p614 = scmp.eq.s32.totalorder %s65, 0
    %p615 = por %p613, %p614
    %p616 = scmp.ne.s32.totalorder %s608, %s610
    %p617 = scmp.eq.s32.totalorder %s70, 1
    %p618 = por %p616, %p617
    %p619 = scmp.ne.s32.totalorder %s610, %s611
    %p620 = scmp.eq.s32.totalorder %s70, 0
    %p621 = por %p619, %p620
    %p622 = scmp.ne.s32.totalorder %s610, %s611
    %p623 = scmp.eq.s32.totalorder %s71, 1
    %p624 = por %p622, %p623
    %p626 = scmp.ne.s32.totalorder %s611, %s625
    %p627 = scmp.eq.s32.totalorder %s71, 0
    %p628 = por %p626, %p627
    %s630 = sadd.s32 %s629, 1
    %p633 = scmp.eq.s32.totalorder %s65, 1
    %p634 = scmp.ne.s32.totalorder %s629, %s631
    %p635 = scmp.eq.s32.totalorder %s65, 0
    %p636 = por %p634, %p635
    %p637 = scmp.ne.s32.totalorder %s629, %s631
    %p638 = scmp.eq.s32.totalorder %s70, 1
    %p639 = por %p637, %p638
    %p640 = scmp.ne.s32.totalorder %s631, %s632
    %p641 = scmp.eq.s32.totalorder %s70, 0
    %p642 = por %p640, %p641
    %p643 = scmp.ne.s32.totalorder %s631, %s632
    %p644 = scmp.eq.s32.totalorder %s71, 1
    %p645 = por %p643, %p644
    %p647 = scmp.ne.s32.totalorder %s632, %s646
    %p648 = scmp.eq.s32.totalorder %s71, 0
    %p649 = por %p647, %p648
    %s651 = sadd.s32 %s650, 1
    %p654 = scmp.eq.s32.totalorder %s65, 1
    %p655 = scmp.ne.s32.totalorder %s650, %s652
    %p656 = scmp.eq.s32.totalorder %s65, 0
    %p657 = por %p655, %p656
    %p658 = scmp.ne.s32.totalorder %s650, %s652
    %p659 = scmp.eq.s32.totalorder %s70, 1
    %p660 = por %p658, %p659
    %p661 = scmp.ne.s32.totalorder %s652, %s653
    %p662 = scmp.eq.s32.totalorder %s70, 0
    %p663 = por %p661, %p662
    %p664 = scmp.ne.s32.totalorder %s652, %s653
    %p665 = scmp.eq.s32.totalorder %s71, 1
    %p666 = por %p664, %p665
    %p668 = scmp.ne.s32.totalorder %s653, %s667
    %p669 = scmp.eq.s32.totalorder %s71, 0
    %p670 = por %p668, %p669
    %s672 = sadd.s32 %s671, 1
    %p675 = scmp.eq.s32.totalorder %s65, 1
    %p676 = scmp.ne.s32.totalorder %s671, %s673
    %p677 = scmp.eq.s32.totalorder %s65, 0
    %p678 = por %p676, %p677
    %p679 = scmp.ne.s32.totalorder %s671, %s673
    %p680 = scmp.eq.s32.totalorder %s70, 1
    %p681 = por %p679, %p680
    %p682 = scmp.ne.s32.totalorder %s673, %s674
    %p683 = scmp.eq.s32.totalorder %s70, 0
    %p684 = por %p682, %p683
    %p685 = scmp.ne.s32.totalorder %s673, %s674
    %p686 = scmp.eq.s32.totalorder %s71, 1
    %p687 = por %p685, %p686
    %p689 = scmp.ne.s32.totalorder %s674, %s688
    %p690 = scmp.eq.s32.totalorder %s71, 0
    %p691 = por %p689, %p690
    %s692 = ssub.s32 %s65, %s72
    %p693 = scmp.eq.s32.totalorder %s692, 0
    %s695 = sadd.s32 %s694, 1
    %s696 = scalar_select %p693, %s694, %s695
    %p699 = pneg %p693
    %p700 = scmp.eq.s32.totalorder %s65, 1
    %p701 = por %p699, %p700
    %p702 = scmp.ne.s32.totalorder %s694, %s697
    %p703 = scmp.eq.s32.totalorder %s65, 0
    %p704 = por %p702, %p703
    %p705 = scmp.ne.s32.totalorder %s694, %s697
    %p706 = scmp.eq.s32.totalorder %s70, 1
    %p707 = por %p705, %p706
    %p708 = scmp.ne.s32.totalorder %s697, %s698
    %p709 = scmp.eq.s32.totalorder %s70, 0
    %p710 = por %p708, %p709
    %p711 = scmp.ne.s32.totalorder %s697, %s698
    %p712 = scmp.eq.s32.totalorder %s71, 1
    %p713 = por %p711, %p712
    %p715 = scmp.ne.s32.totalorder %s698, %s714
    %p716 = scmp.eq.s32.totalorder %s71, 0
    %p717 = por %p715, %p716
    %p718 = scmp.le.s32.totalorder 1, %s65
    %p719 = scmp.lt.s32.totalorder %s65, 3
    %p720 = pnand %p718, %p719
    %p721 = pneg %p720
    // Predicated region
    $region9: #{trajectory_generator_forward.3} parent=5 // pred_check
      _
    $region10: #{trajectory_generator_forward.3} parent=5 // pred_check_branch
      %723 = sbr.rel (%p720) target = $region12
    $region11: #{trajectory_generator_forward.3} parent=5 // pred_region
      %s724 = ssub.s32 %s65, 1
      // Predicated region
      $region13: #{trajectory_generator_forward.3} parent=11 // pred_check
        %p725 = pneg %p138
      $region14: #{trajectory_generator_forward.3} parent=11 // pred_check_branch
        %727 = sbr.rel (%p725) target = $region16
      $region15: #{trajectory_generator_forward.3} parent=11 // pred_region
        _
      $region16: #{trajectory_generator_forward.3} parent=11 // pred_fallthru
        _
      // Predicated region
      $region17: #{trajectory_generator_forward.3} parent=11 // pred_check
        %p728 = pneg %p159
      $region18: #{trajectory_generator_forward.3} parent=11 // pred_check_branch
        %730 = sbr.rel (%p728) target = $region20
      $region19: #{trajectory_generator_forward.3} parent=11 // pred_region
        _
      $region20: #{trajectory_generator_forward.3} parent=11 // pred_fallthru
        _
      // Predicated region
      $region21: #{trajectory_generator_forward.3} parent=11 // pred_check
        %p731 = pneg %p180
      $region22: #{trajectory_generator_forward.3} parent=11 // pred_check_branch
        %733 = sbr.rel (%p731) target = $region24
      $region23: #{trajectory_generator_forward.3} parent=11 // pred_region
        _
      $region24: #{trajectory_generator_forward.3} parent=11 // pred_fallthru
        _
      // Predicated region
      $region25: #{trajectory_generator_forward.3} parent=11 // pred_check
        %p734 = pneg %p201
      $region26: #{trajectory_generator_forward.3} parent=11 // pred_check_branch
        %736 = sbr.rel (%p734) target = $region28
      $region27: #{trajectory_generator_forward.3} parent=11 // pred_region
        _
      $region28: #{trajectory_generator_forward.3} parent=11 // pred_fallthru
        _
      // Predicated region
      $region29: #{trajectory_generator_forward.3} parent=11 // pred_check
        %p737 = pneg %p222
      $region30: #{trajectory_generator_forward.3} parent=11 // pred_check_branch
        %739 = sbr.rel (%p737) target = $region32
      $region31: #{trajectory_generator_forward.3} parent=11 // pred_region
        _
      $region32: #{trajectory_generator_forward.3} parent=11 // pred_fallthru
        _
      // Predicated region
      $region33: #{trajectory_generator_forward.3} parent=11 // pred_check
        %p740 = pneg %p243
      $region34: #{trajectory_generator_forward.3} parent=11 // pred_check_branch
        %742 = sbr.rel (%p740) target = $region36
      $region35: #{trajectory_generator_forward.3} parent=11 // pred_region
        _
      $region36: #{trajectory_generator_forward.3} parent=11 // pred_fallthru
        _
      // Predicated region
      $region37: #{trajectory_generator_forward.3} parent=11 // pred_check
        %p743 = pneg %p264
      $region38: #{trajectory_generator_forward.3} parent=11 // pred_check_branch
        %745 = sbr.rel (%p743) target = $region40
      $region39: #{trajectory_generator_forward.3} parent=11 // pred_region
        _
      $region40: #{trajectory_generator_forward.3} parent=11 // pred_fallthru
        _
      // Predicated region
      $region41: #{trajectory_generator_forward.3} parent=11 // pred_check
        %p746 = pneg %p285
      $region42: #{trajectory_generator_forward.3} parent=11 // pred_check_branch
        %748 = sbr.rel (%p746) target = $region44
      $region43: #{trajectory_generator_forward.3} parent=11 // pred_region
        _
      $region44: #{trajectory_generator_forward.3} parent=11 // pred_fallthru
        _
      // Predicated region
      $region45: #{trajectory_generator_forward.3} parent=11 // pred_check
        %p749 = pneg %p306
      $region46: #{trajectory_generator_forward.3} parent=11 // pred_check_branch
        %751 = sbr.rel (%p749) target = $region48
      $region47: #{trajectory_generator_forward.3} parent=11 // pred_region
        _
      $region48: #{trajectory_generator_forward.3} parent=11 // pred_fallthru
        _
      // Predicated region
      $region49: #{trajectory_generator_forward.3} parent=11 // pred_check
        %p752 = pneg %p327
      $region50: #{trajectory_generator_forward.3} parent=11 // pred_check_branch
        %754 = sbr.rel (%p752) target = $region52
      $region51: #{trajectory_generator_forward.3} parent=11 // pred_region
        _
      $region52: #{trajectory_generator_forward.3} parent=11 // pred_fallthru
        _
      // Predicated region
      $region53: #{trajectory_generator_forward.3} parent=11 // pred_check
        %p755 = pneg %p348
      $region54: #{trajectory_generator_forward.3} parent=11 // pred_check_branch
        %757 = sbr.rel (%p755) target = $region56
      $region55: #{trajectory_generator_forward.3} parent=11 // pred_region
        _
      $region56: #{trajectory_generator_forward.3} parent=11 // pred_fallthru
        _
      // Predicated region
      $region57: #{trajectory_generator_forward.3} parent=11 // pred_check
        %p758 = pneg %p369
      $region58: #{trajectory_generator_forward.3} parent=11 // pred_check_branch
        %760 = sbr.rel (%p758) target = $region60
      $region59: #{trajectory_generator_forward.3} parent=11 // pred_region
        _
      $region60: #{trajectory_generator_forward.3} parent=11 // pred_fallthru
        _
      // Predicated region
      $region61: #{trajectory_generator_forward.3} parent=11 // pred_check
        %p761 = pneg %p390
      $region62: #{trajectory_generator_forward.3} parent=11 // pred_check_branch
        %763 = sbr.rel (%p761) target = $region64
      $region63: #{trajectory_generator_forward.3} parent=11 // pred_region
        _
      $region64: #{trajectory_generator_forward.3} parent=11 // pred_fallthru
        _
      // Predicated region
      $region65: #{trajectory_generator_forward.3} parent=11 // pred_check
        %p764 = pneg %p411
      $region66: #{trajectory_generator_forward.3} parent=11 // pred_check_branch
        %766 = sbr.rel (%p764) target = $region68
      $region67: #{trajectory_generator_forward.3} parent=11 // pred_region
        _
      $region68: #{trajectory_generator_forward.3} parent=11 // pred_fallthru
        _
      // Predicated region
      $region69: #{trajectory_generator_forward.3} parent=11 // pred_check
        %p767 = pneg %p432
      $region70: #{trajectory_generator_forward.3} parent=11 // pred_check_branch
        %769 = sbr.rel (%p767) target = $region72
      $region71: #{trajectory_generator_forward.3} parent=11 // pred_region
        _
      $region72: #{trajectory_generator_forward.3} parent=11 // pred_fallthru
        _
      // Predicated region
      $region73: #{trajectory_generator_forward.3} parent=11 // pred_check
        %p770 = pneg %p453
      $region74: #{trajectory_generator_forward.3} parent=11 // pred_check_branch
        %772 = sbr.rel (%p770) target = $region76
      $region75: #{trajectory_generator_forward.3} parent=11 // pred_region
        _
      $region76: #{trajectory_generator_forward.3} parent=11 // pred_fallthru
        _
      // Predicated region
      $region77: #{trajectory_generator_forward.3} parent=11 // pred_check
        %p773 = pneg %p474
      $region78: #{trajectory_generator_forward.3} parent=11 // pred_check_branch
        %775 = sbr.rel (%p773) target = $region80
      $region79: #{trajectory_generator_forward.3} parent=11 // pred_region
        _
      $region80: #{trajectory_generator_forward.3} parent=11 // pred_fallthru
        _
      // Predicated region
      $region81: #{trajectory_generator_forward.3} parent=11 // pred_check
        %p776 = pneg %p495
      $region82: #{trajectory_generator_forward.3} parent=11 // pred_check_branch
        %778 = sbr.rel (%p776) target = $region84
      $region83: #{trajectory_generator_forward.3} parent=11 // pred_region
        _
      $region84: #{trajectory_generator_forward.3} parent=11 // pred_fallthru
        _
      // Predicated region
      $region85: #{trajectory_generator_forward.3} parent=11 // pred_check
        %p779 = pneg %p516
      $region86: #{trajectory_generator_forward.3} parent=11 // pred_check_branch
        %781 = sbr.rel (%p779) target = $region88
      $region87: #{trajectory_generator_forward.3} parent=11 // pred_region
        _
      $region88: #{trajectory_generator_forward.3} parent=11 // pred_fallthru
        _
      // Predicated region
      $region89: #{trajectory_generator_forward.3} parent=11 // pred_check
        %p782 = pneg %p537
      $region90: #{trajectory_generator_forward.3} parent=11 // pred_check_branch
        %784 = sbr.rel (%p782) target = $region92
      $region91: #{trajectory_generator_forward.3} parent=11 // pred_region
        _
      $region92: #{trajectory_generator_forward.3} parent=11 // pred_fallthru
        _
      // Predicated region
      $region93: #{trajectory_generator_forward.3} parent=11 // pred_check
        %p785 = pneg %p558
      $region94: #{trajectory_generator_forward.3} parent=11 // pred_check_branch
        %787 = sbr.rel (%p785) target = $region96
      $region95: #{trajectory_generator_forward.3} parent=11 // pred_region
        _
      $region96: #{trajectory_generator_forward.3} parent=11 // pred_fallthru
        _
      // Predicated region
      $region97: #{trajectory_generator_forward.3} parent=11 // pred_check
        %p788 = pneg %p579
      $region98: #{trajectory_generator_forward.3} parent=11 // pred_check_branch
        %790 = sbr.rel (%p788) target = $region100
      $region99: #{trajectory_generator_forward.3} parent=11 // pred_region
        _
      $region100: #{trajectory_generator_forward.3} parent=11 // pred_fallthru
        _
      // Predicated region
      $region101: #{trajectory_generator_forward.3} parent=11 // pred_check
        %p791 = pneg %p600
      $region102: #{trajectory_generator_forward.3} parent=11 // pred_check_branch
        %793 = sbr.rel (%p791) target = $region104
      $region103: #{trajectory_generator_forward.3} parent=11 // pred_region
        _
      $region104: #{trajectory_generator_forward.3} parent=11 // pred_fallthru
        _
      // Predicated region
      $region105: #{trajectory_generator_forward.3} parent=11 // pred_check
        %p794 = pneg %p621
      $region106: #{trajectory_generator_forward.3} parent=11 // pred_check_branch
        %796 = sbr.rel (%p794) target = $region108
      $region107: #{trajectory_generator_forward.3} parent=11 // pred_region
        _
      $region108: #{trajectory_generator_forward.3} parent=11 // pred_fallthru
        _
      // Predicated region
      $region109: #{trajectory_generator_forward.3} parent=11 // pred_check
        %p797 = pneg %p642
      $region110: #{trajectory_generator_forward.3} parent=11 // pred_check_branch
        %799 = sbr.rel (%p797) target = $region112
      $region111: #{trajectory_generator_forward.3} parent=11 // pred_region
        _
      $region112: #{trajectory_generator_forward.3} parent=11 // pred_fallthru
        _
      // Predicated region
      $region113: #{trajectory_generator_forward.3} parent=11 // pred_check
        %p800 = pneg %p663
      $region114: #{trajectory_generator_forward.3} parent=11 // pred_check_branch
        %802 = sbr.rel (%p800) target = $region116
      $region115: #{trajectory_generator_forward.3} parent=11 // pred_region
        _
      $region116: #{trajectory_generator_forward.3} parent=11 // pred_fallthru
        _
      // Predicated region
      $region117: #{trajectory_generator_forward.3} parent=11 // pred_check
        %p803 = pneg %p684
      $region118: #{trajectory_generator_forward.3} parent=11 // pred_check_branch
        %805 = sbr.rel (%p803) target = $region120
      $region119: #{trajectory_generator_forward.3} parent=11 // pred_region
        _
      $region120: #{trajectory_generator_forward.3} parent=11 // pred_fallthru
        _
    $region12: #{trajectory_generator_forward.3} parent=5 // pred_fallthru
      _
    %p806 = scmp.lt.s32.totalorder %s65, 2
    // Predicated region
    $region121: #{trajectory_generator_forward.3} parent=5 // pred_check
      %p807 = pneg %p806
    $region122: #{trajectory_generator_forward.3} parent=5 // pred_check_branch
      %809 = sbr.rel (%p807) target = $region124
    $region123: #{trajectory_generator_forward.3} parent=5 // pred_region
      // Predicated region
      $region125: #{trajectory_generator_forward.3} parent=123 // pred_check
        %p810 = pneg %p85
      $region126: #{trajectory_generator_forward.3} parent=123 // pred_check_branch
        %812 = sbr.rel (%p810) target = $region128
      $region127: #{trajectory_generator_forward.3} parent=123 // pred_region
        %p813 = scmp.lt.s32.totalorder %s65, 1
        %s814 = scalar_select %p813, %s65, 1
        %s815 = smul.addr %s814, 2
        %s816 = smul.addr %s815, 8
        %s817 = scalar_lea.vmem %s1, %s816
      $region128: #{trajectory_generator_forward.3} parent=123 // pred_fallthru
        _
      // Predicated region
      $region129: #{trajectory_generator_forward.3} parent=123 // pred_check
        %p818 = pneg %p111
      $region130: #{trajectory_generator_forward.3} parent=123 // pred_check_branch
        %820 = sbr.rel (%p818) target = $region132
      $region131: #{trajectory_generator_forward.3} parent=123 // pred_region
        %p821 = scmp.lt.s32.totalorder %s65, 1
        %s822 = scalar_select %p821, %s65, 1
        %s823 = smul.addr %s822, 8
        %s824 = scalar_lea.vmem %s3, %s823
      $region132: #{trajectory_generator_forward.3} parent=123 // pred_fallthru
        _
    $region124: #{trajectory_generator_forward.3} parent=5 // pred_fallthru
      _
    %p825 = scmp.le.s32.totalorder 1, %s65
    %p826 = scmp.lt.s32.totalorder %s65, 3
    %p827 = pnand %p825, %p826
    %p828 = pneg %p827
    // Predicated region
    $region133: #{trajectory_generator_forward.3} parent=5 // pred_check
      _
    $region134: #{trajectory_generator_forward.3} parent=5 // pred_check_branch
      %830 = sbr.rel (%p827) target = $region136
    $region135: #{trajectory_generator_forward.3} parent=5 // pred_region
      %s831 = ssub.s32 %s65, 1
      %p832 = scmp.lt.s32.totalorder %s70, 1
      %s833 = scalar_select %p832, %s70, 1
      %s834 = smul.addr %s833, 2
      %s835 = smul.addr %s834, 8
      %s836 = scalar_lea.vmem %s1, %s835
      %p837 = pneg %p91
      %p838 = pneg %p88
      %p839 = scmp.lt.s32.totalorder %s70, 1
      %s840 = scalar_select %p839, %s70, 1
      %s841 = smul.addr %s840, 8
      %s842 = scalar_lea.vmem %s3, %s841
      %p843 = pneg %p117
      %p844 = pneg %p114
      %p845 = pneg %p138
      %p846 = pneg %p135
      %p847 = pneg %p159
      %p848 = pneg %p156
      %p849 = pneg %p180
      %p850 = pneg %p177
      %p851 = pneg %p201
      %p852 = pneg %p198
      %p853 = pneg %p222
      %p854 = pneg %p219
      %p855 = pneg %p243
      %p856 = pneg %p240
      %p857 = pneg %p264
      %p858 = pneg %p261
      %p859 = pneg %p285
      %p860 = pneg %p282
      %p861 = pneg %p306
      %p862 = pneg %p303
      %p863 = pneg %p327
      %p864 = pneg %p324
      %p865 = pneg %p348
      %p866 = pneg %p345
      %p867 = pneg %p369
      %p868 = pneg %p366
      %p869 = pneg %p390
      %p870 = pneg %p387
      %p871 = pneg %p411
      %p872 = pneg %p408
      %p873 = pneg %p432
      %p874 = pneg %p429
      %p875 = pneg %p453
      %p876 = pneg %p450
      %p877 = pneg %p474
      %p878 = pneg %p471
      %p879 = pneg %p495
      %p880 = pneg %p492
      %p881 = pneg %p516
      %p882 = pneg %p513
      %p883 = pneg %p537
      %p884 = pneg %p534
      %p885 = pneg %p558
      %p886 = pneg %p555
      %p887 = pneg %p579
      %p888 = pneg %p576
      %p889 = pneg %p600
      %p890 = pneg %p597
      %p891 = pneg %p621
      %p892 = pneg %p618
      %p893 = pneg %p642
      %p894 = pneg %p639
      %p895 = pneg %p663
      %p896 = pneg %p660
      %p897 = pneg %p684
      %p898 = pneg %p681
      %p899 = pneg %p710
      %p900 = pneg %p707
      %p901 = scmp.lt.s32.totalorder %s70, 1
      %s902 = scalar_select %p901, %s70, 1
      %s903 = smul.addr %s902, 2
      %s904 = smul.addr %s903, 8
      %s905 = scalar_lea.vmem %s59, %s904
      %p906 = scmp.lt.s32.totalorder %s70, 1
      %s907 = scalar_select %p906, %s70, 1
      %s908 = smul.addr %s907, 2
      %s909 = smul.addr %s908, 8
      %s910 = scalar_lea.vmem %s1, %s909
      %p911 = scmp.lt.s32.totalorder %s70, 1
      %s912 = scalar_select %p911, %s70, 1
      %s913 = smul.addr %s912, 8
      %s914 = scalar_lea.vmem %s3, %s913
      %p915 = scmp.lt.s32.totalorder %s70, 1
      %s916 = scalar_select %p915, %s70, 1
      %s917 = smul.addr %s916, 2
      %s918 = smul.addr %s917, 8
      %s919 = scalar_lea.vmem %s59, %s918
      %v921 = vld [vmem:[%s910] sm:$0xff]
      %v922 = vld [vmem:[%s910 + $0x8] sm:$0xf]
      %v923 = vld [vmem:[%s914] sm:$0x7f]
      %v924 = vlaneseq
      %v925 = vshrl.u32 %v924, 7
      %v926 = vadd.s32 %v925, 8
      %v927 = vlaneseq
      %v928 = vand.u32 %v927, 127
      %vm929 = vcmp.ge.s32.totalorder %v925, %v928
      %vm930 = vcmp.ge.s32.totalorder %v926, %v928
      %v931 = vsel %vm929, 0.0, -1e+09
      %v932 = vsel %vm930, 0.0, -1e+09
      %v933 = vld [vmem:[%s5] sm:$0x7]
      %v934 = vpack.c.bf16 %v922, %v921
      %v935 = vpack.c.bf16 %v933, %v933
      %v936 = vld [vmem:[%s7] sm:$0x1]
      %v938 = vlaneseq
      %v939 = vshrl.u32 %v938, 7
      %v940 = vsub.s32 0, %v939
      %v941 = vrot.slane %v936, %v940
      %vm943 = vcmask 23552
      %v945 = vsel %vm943, %v934, 0
      %vm947 = vcmask 1040384
      %vm948 = vcmask 1041408
      %v949 = vsel %vm947, 4294967295, 65535
      %v950 = vsel %vm948, %v949, 0
      %v952 = vand.u32 %v935, %v950
      %954 = vmatprep.subr.bf16.mxu0 0
      %955 = vmatpush1.bf16.msra.mxu0 0
      %956 = vmatprep.subr.bf16.mxu0 0
      %957 = vmatpush1.bf16.msra.mxu0 0
      %958 = vmatprep.subr.bf16.mxu0 0
      %959 = vmatpush1.bf16.msra.mxu0 0
      %960 = vmatprep.subr.bf16.mxu0 0
      %961 = vmatpush1.bf16.msra.mxu0 0
      %962 = vmatprep.subr.bf16.mxu0 0
      %963 = vmatpush1.bf16.msra.mxu0 0
      %964 = vmatprep.subr.bf16.mxu0 0
      %965 = vmatpush1.bf16.msra.mxu0 0
      %966 = vmatprep.subr.bf16.mxu0 0
      %967 = vmatpush1.bf16.msra.mxu0 0
      %968 = vmatprep.subr.bf16.mxu0 0
      %969 = vmatpush1.bf16.msra.mxu0 %v952
      %970 = vmatprep.subr.bf16.mxu0 0
      %971 = vmatpush2.bf16.msra.mxu0 0
      %972 = vmatprep.subr.bf16.mxu0 0
      %973 = vmatpush2.bf16.msra.mxu0 0
      %974 = vmatprep.subr.bf16.mxu0 0
      %975 = vmatpush2.bf16.msra.mxu0 0
      %976 = vmatprep.subr.bf16.mxu0 0
      %977 = vmatpush2.bf16.msra.mxu0 0
      %978 = vmatprep.subr.bf16.mxu0 0
      %979 = vmatpush2.bf16.msra.mxu0 0
      %980 = vmatprep.subr.bf16.mxu0 0
      %981 = vmatpush2.bf16.msra.mxu0 0
      %982 = vmatprep.subr.bf16.mxu0 0
      %983 = vmatpush2.bf16.msra.mxu0 0
      %984 = vmatprep.subr.bf16.mxu0 0
      %985 = vmatpush2.bf16.msra.mxu0 0
      %986 = vmatprep.mubr.bf16.mxu0 0
      %987 = vmatmul.mubr.bf16.gmra.mxu0 %v945
      %v988 = vpop.f32.mrf.mxu0
      %v989 = vadd.f32 %v941, %v988
      %v990 = vpop.f32.mrf.mxu0
      %v991 = vpop.f32.mrf.mxu0
      %v992 = vadd.f32 %v941, %v991
      %v993 = vpop.f32.mrf.mxu0
      %994 = vdwg.mxu0
      %v995 = vld [vmem:[%s9] sm:$0xff]
      %v996 = vld [vmem:[%s9 + $0x8] sm:$0xf]
      %v997 = vadd.f32 %v989, %v995
      %v998 = vadd.f32 %v992, %v996
      %vm999 = vcmask 523264
      %v1000 = vsel %vm999, %v997, 0.0
      %1001 = vadd.xlane.f32.xlu0 %v1000
      %v1002 = vpop.xlane.xlu0 %1001
      %vm1003 = vcmask 519168
      %v1004 = vsel %vm1003, %v998, 0.0
      %1005 = vadd.xlane.f32.xlu0 %v1004
      %v1006 = vpop.xlane.xlu0 %1005
      %v1007 = vrcp.pop 64.0
      %v1008 = vmul.f32 %v1002, %v1007
      %v1009 = vmul.f32 %v1006, %v1007
      %v1010 = vsub.f32 %v997, %v1008
      %v1011 = vsub.f32 %v998, %v1009
      %v1012 = vmul.f32 %v1010, %v1010
      %v1013 = vmul.f32 %v1011, %v1011
      %v1014 = vsel %vm999, %v1012, 0.0
      %1015 = vadd.xlane.f32.xlu0 %v1014
      %v1016 = vpop.xlane.xlu0 %1015
      %v1017 = vsel %vm1003, %v1013, 0.0
      %1018 = vadd.xlane.f32.xlu0 %v1017
      %v1019 = vpop.xlane.xlu0 %1018
      %v1020 = vmul.f32 %v1016, 0.015873017
      %v1021 = vmul.f32 %v1019, 0.015873017
      %v1022 = vrsqrt.pop %v1020
      %v1023 = vmul.f32 %v1020, %v1022
      %vm1024 = vcmp.eq.f32.partialorder %v1020, inf
      %v1025 = vsel %vm1024, %v1020, %v1023
      %vm1026 = vcmp.eq.f32.partialorder %v1020, 0.0
      %v1027 = vand.u32 %v1020, 2147483648
      %v1028 = vsel %vm1026, %v1027, %v1025
      %v1029 = vrsqrt.pop %v1021
      %v1030 = vmul.f32 %v1021, %v1029
      %vm1031 = vcmp.eq.f32.partialorder %v1021, inf
      %v1032 = vsel %vm1031, %v1021, %v1030
      %vm1033 = vcmp.eq.f32.partialorder %v1021, 0.0
      %v1034 = vand.u32 %v1021, 2147483648
      %v1035 = vsel %vm1033, %v1034, %v1032
      %v1036 = vld [vmem:[%s11] sm:$0x1]
      %v1038 = vlaneseq
      %v1039 = vshrl.u32 %v1038, 7
      %v1040 = vsub.s32 0, %v1039
      %v1041 = vrot.slane %v1036, %v1040
      %v1043 = vmul.f32 %v1041, %v1010
      %v1044 = vmul.f32 %v1041, %v1011
      %v1045 = vadd.f32 %v1028, 1e-06
      %v1046 = vadd.f32 %v1035, 1e-06
      %v1047 = vrcp.pop %v1045
      %v1048 = vmul.f32 %v1043, %v1047
      %v1049 = vrcp.pop %v1046
      %v1050 = vmul.f32 %v1044, %v1049
      %v1051 = vld [vmem:[%s13] sm:$0x1]
      %v1053 = vlaneseq
      %v1054 = vshrl.u32 %v1053, 7
      %v1055 = vsub.s32 0, %v1054
      %v1056 = vrot.slane %v1051, %v1055
      %v1058 = vadd.f32 %v1048, %v1056
      %v1059 = vadd.f32 %v1050, %v1056
      %v1060 = vld [vmem:[%s15] sm:$0xff]
      %v1061 = vld [vmem:[%s15 + $0x8] sm:$0xff]
      %v1062 = vld [vmem:[%s15 + $0x10] sm:$0xff]
      %v1063 = vld [vmem:[%s15 + $0x18] sm:$0xff]
      %v1064 = vld [vmem:[%s15 + $0x20] sm:$0xff]
      %v1065 = vld [vmem:[%s15 + $0x28] sm:$0xff]
      %v1066 = vld [vmem:[%s15 + $0x30] sm:$0xff]
      %v1067 = vld [vmem:[%s15 + $0x38] sm:$0xff]
      %v1068 = vld [vmem:[%s15 + $0x40] sm:$0xff]
      %v1069 = vld [vmem:[%s15 + $0x48] sm:$0xff]
      %v1070 = vld [vmem:[%s15 + $0x50] sm:$0xff]
      %v1071 = vld [vmem:[%s15 + $0x58] sm:$0xff]
      %v1072 = vld [vmem:[%s15 + $0x60] sm:$0xff]
      %v1073 = vld [vmem:[%s15 + $0x68] sm:$0xff]
      %v1074 = vld [vmem:[%s15 + $0x70] sm:$0xff]
      %v1075 = vld [vmem:[%s15 + $0x78] sm:$0xff]
      %v1076 = vpack.c.bf16 %v1059, %v1058
      %v1077 = vpack.c.bf16 %v1062, %v1060
      %v1078 = vpack.c.bf16 %v1063, %v1061
      %v1079 = vpack.c.bf16 %v1066, %v1064
      %v1080 = vpack.c.bf16 %v1067, %v1065
      %v1081 = vpack.c.bf16 %v1070, %v1068
      %v1082 = vpack.c.bf16 %v1071, %v1069
      %v1083 = vpack.c.bf16 %v1074, %v1072
      %v1084 = vpack.c.bf16 %v1075, %v1073
      %v1085 = vld [vmem:[%s17] sm:$0x3]
      %v1087 = vlaneseq
      %v1088 = vshrl.u32 %v1087, 7
      %v1089 = vsub.s32 0, %v1088
      %v1090 = vrot.slane %v1085, %v1089
      %v1091 = vlaneseq
      %v1092 = vshrl.u32 %v1091, 7
      %v1093 = vsub.s32 1, %v1092
      %v1094 = vrot.slane %v1085, %v1093
      %v1098 = vsel %vm999, %v1076, 0
      %1100 = vmatprep.subr.bf16.mxu0 0
      %1101 = vmatpush1.bf16.msra.mxu0 0
      %1102 = vmatprep.subr.bf16.mxu0 0
      %1103 = vmatpush1.bf16.msra.mxu0 0
      %1104 = vmatprep.subr.bf16.mxu0 0
      %1105 = vmatpush1.bf16.msra.mxu0 0
      %1106 = vmatprep.subr.bf16.mxu0 0
      %1107 = vmatpush1.bf16.msra.mxu0 0
      %1108 = vmatprep.subr.bf16.mxu0 %v1084
      %1109 = vmatpush1.bf16.msra.mxu0 %v1083
      %1110 = vmatprep.subr.bf16.mxu0 %v1082
      %1111 = vmatpush1.bf16.msra.mxu0 %v1081
      %1112 = vmatprep.subr.bf16.mxu0 %v1080
      %1113 = vmatpush1.bf16.msra.mxu0 %v1079
      %1114 = vmatprep.subr.bf16.mxu0 %v1078
      %1115 = vmatpush1.bf16.msra.mxu0 %v1077
      %1116 = vmatprep.subr.bf16.mxu0 0
      %1117 = vmatpush2.bf16.msra.mxu0 0
      %1118 = vmatprep.subr.bf16.mxu0 0
      %1119 = vmatpush2.bf16.msra.mxu0 0
      %1120 = vmatprep.subr.bf16.mxu0 0
      %1121 = vmatpush2.bf16.msra.mxu0 0
      %1122 = vmatprep.subr.bf16.mxu0 0
      %1123 = vmatpush2.bf16.msra.mxu0 0
      %1124 = vmatprep.subr.bf16.mxu0 0
      %1125 = vmatpush2.bf16.msra.mxu0 0
      %1126 = vmatprep.subr.bf16.mxu0 0
      %1127 = vmatpush2.bf16.msra.mxu0 0
      %1128 = vmatprep.subr.bf16.mxu0 0
      %1129 = vmatpush2.bf16.msra.mxu0 0
      %1130 = vmatprep.subr.bf16.mxu0 0
      %1131 = vmatpush2.bf16.msra.mxu0 0
      %1132 = vmatprep.mubr.bf16.mxu0 0
      %1133 = vmatmul.mubr.bf16.gmra.mxu0 %v1098
      %v1134 = vpop.f32.mrf.mxu0
      %v1135 = vadd.f32 %v1090, %v1134
      %v1136 = vpop.f32.mrf.mxu0
      %v1137 = vadd.f32 %v1094, %v1136
      %v1138 = vpop.f32.mrf.mxu0
      %v1139 = vadd.f32 %v1090, %v1138
      %v1140 = vpop.f32.mrf.mxu0
      %v1141 = vadd.f32 %v1094, %v1140
      %1142 = vdwg.mxu0
      %v1143 = vpack.c.bf16 %v1139, %v1135
      %1145 = vrot.lane.b32.xlu0 %v1143, 64
      %v1146 = vpop.permute.xlu0 %1145
      %vm1147 = vcmask 64512
      %v1149 = vsel %vm1147, %v1143, 0
      %v1152 = vsel %vm1147, %v1146, 0
      %1154 = vmatprep.subr.bf16.mxu0 0
      %1155 = vmatpush1.bf16.xpose.msra.mxu0 0
      %1156 = vmatprep.subr.bf16.mxu0 0
      %1157 = vmatpush1.bf16.xpose.msra.mxu0 0
      %1158 = vmatprep.subr.bf16.mxu0 0
      %1159 = vmatpush1.bf16.xpose.msra.mxu0 0
      %1160 = vmatprep.subr.bf16.mxu0 0
      %1161 = vmatpush1.bf16.xpose.msra.mxu0 0
      %1162 = vmatprep.subr.bf16.mxu0 0
      %1163 = vmatpush1.bf16.xpose.msra.mxu0 0
      %1164 = vmatprep.subr.bf16.mxu0 0
      %1165 = vmatpush1.bf16.xpose.msra.mxu0 0
      %1166 = vmatprep.subr.bf16.mxu0 0
      %1167 = vmatpush1.bf16.xpose.msra.mxu0 0
      %1168 = vmatprep.subr.bf16.mxu0 0
      %1169 = vmatpush1.bf16.xpose.msra.mxu0 %v1152
      %1170 = vmatprep.subr.bf16.mxu0 0
      %1171 = vmatpush2.bf16.xpose.msra.mxu0 0
      %1172 = vmatprep.subr.bf16.mxu0 0
      %1173 = vmatpush2.bf16.xpose.msra.mxu0 0
      %1174 = vmatprep.subr.bf16.mxu0 0
      %1175 = vmatpush2.bf16.xpose.msra.mxu0 0
      %1176 = vmatprep.subr.bf16.mxu0 0
      %1177 = vmatpush2.bf16.xpose.msra.mxu0 0
      %1178 = vmatprep.subr.bf16.mxu0 0
      %1179 = vmatpush2.bf16.xpose.msra.mxu0 0
      %1180 = vmatprep.subr.bf16.mxu0 0
      %1181 = vmatpush2.bf16.xpose.msra.mxu0 0
      %1182 = vmatprep.subr.bf16.mxu0 0
      %1183 = vmatpush2.bf16.xpose.msra.mxu0 0
      %1184 = vmatprep.subr.bf16.mxu0 0
      %1185 = vmatpush2.bf16.xpose.msra.mxu0 0
      %1186 = vmatprep.mubr.bf16.mxu0 0
      %1187 = vmatmul.mubr.bf16.gmra.mxu0 %v1149
      %v1188 = vpop.f32.mrf.mxu0
      %v1189 = vadd.f32 0.0, %v1188
      %v1190 = vpop.f32.mrf.mxu0
      %v1191 = vpop.f32.mrf.mxu0
      %v1192 = vadd.f32 0.0, %v1191
      %v1193 = vpop.f32.mrf.mxu0
      %1194 = vdwg.mxu0
      %v1195 = vmul.f32 %v1189, 0.35355338
      %v1196 = vmul.f32 %v1192, 0.35355338
      %v1197 = vadd.f32 %v1195, %v931
      %v1198 = vadd.f32 %v1196, %v932
      %vm1199 = vcmask 97280
      %v1200 = vsel %vm1199, %v1197, -inf
      %1201 = vmax.xlane.f32.xlu0 %v1200
      %v1202 = vpop.xlane.xlu0 %1201
      %vm1203 = vcmask 93184
      %v1204 = vsel %vm1203, %v1198, -inf
      %1205 = vmax.xlane.f32.xlu0 %v1204
      %v1206 = vpop.xlane.xlu0 %1205
      %v1207 = vsub.f32 %v1197, %v1202
      %v1208 = vsub.f32 %v1198, %v1206
      %v1209 = vmul.f32 %v1207, 1.442695
      %v1210 = vpow.pop %v1209
      %v1211 = vmul.f32 %v1208, 1.442695
      %v1212 = vpow.pop %v1211
      %v1213 = vsel %vm1199, %v1210, 0.0
      %1214 = vadd.xlane.f32.xlu0 %v1213
      %v1215 = vpop.xlane.xlu0 %1214
      %v1216 = vsel %vm1203, %v1212, 0.0
      %1217 = vadd.xlane.f32.xlu0 %v1216
      %v1218 = vpop.xlane.xlu0 %1217
      %v1219 = vrcp.pop %v1215
      %v1220 = vmul.f32 %v1210, %v1219
      %v1221 = vrcp.pop %v1218
      %v1222 = vmul.f32 %v1212, %v1221
      %v1223 = vpack.c.bf16 %v1222, %v1220
      %v1224 = vpack.c.bf16 %v1141, %v1137
      %v1226 = vsel %vm1199, %v1223, 0
      %vm1228 = vcmask 1045504
      %v1230 = vsel %vm1228, %v1224, 0
      %1232 = vmatprep.subr.bf16.mxu0 0
      %1233 = vmatpush1.bf16.msra.mxu0 0
      %1234 = vmatprep.subr.bf16.mxu0 0
      %1235 = vmatpush1.bf16.msra.mxu0 0
      %1236 = vmatprep.subr.bf16.mxu0 0
      %1237 = vmatpush1.bf16.msra.mxu0 0
      %1238 = vmatprep.subr.bf16.mxu0 0
      %1239 = vmatpush1.bf16.msra.mxu0 0
      %1240 = vmatprep.subr.bf16.mxu0 0
      %1241 = vmatpush1.bf16.msra.mxu0 0
      %1242 = vmatprep.subr.bf16.mxu0 0
      %1243 = vmatpush1.bf16.msra.mxu0 0
      %1244 = vmatprep.subr.bf16.mxu0 0
      %1245 = vmatpush1.bf16.msra.mxu0 0
      %1246 = vmatprep.subr.bf16.mxu0 0
      %1247 = vmatpush1.bf16.msra.mxu0 %v1230
      %1248 = vmatprep.subr.bf16.mxu0 0
      %1249 = vmatpush2.bf16.msra.mxu0 0
      %1250 = vmatprep.subr.bf16.mxu0 0
      %1251 = vmatpush2.bf16.msra.mxu0 0
      %1252 = vmatprep.subr.bf16.mxu0 0
      %1253 = vmatpush2.bf16.msra.mxu0 0
      %1254 = vmatprep.subr.bf16.mxu0 0
      %1255 = vmatpush2.bf16.msra.mxu0 0
      %1256 = vmatprep.subr.bf16.mxu0 0
      %1257 = vmatpush2.bf16.msra.mxu0 0
      %1258 = vmatprep.subr.bf16.mxu0 0
      %1259 = vmatpush2.bf16.msra.mxu0 0
      %1260 = vmatprep.subr.bf16.mxu0 0
      %1261 = vmatpush2.bf16.msra.mxu0 0
      %1262 = vmatprep.subr.bf16.mxu0 0
      %1263 = vmatpush2.bf16.msra.mxu0 0
      %1264 = vmatprep.mubr.bf16.mxu0 0
      %1265 = vmatmul.mubr.bf16.gmra.mxu0 %v1226
      %v1266 = vpop.f32.mrf.mxu0
      %v1267 = vadd.f32 0.0, %v1266
      %v1268 = vpop.f32.mrf.mxu0
      %v1269 = vpop.f32.mrf.mxu0
      %v1270 = vadd.f32 0.0, %v1269
      %v1271 = vpop.f32.mrf.mxu0
      %1272 = vdwg.mxu0
      %v1273 = vld [vmem:[%s19] sm:$0xff]
      %v1274 = vpack.c.bf16 %v1270, %v1267
      %v1275 = vpack.c.bf16 %v1273, %v1273
      %1276 = vrot.lane.b32.xlu0 %v1143, 120
      %v1277 = vpop.permute.xlu0 %1276
      %1278 = vrot.lane.b32.xlu0 %v1143, 56
      %v1279 = vpop.permute.xlu0 %1278
      %v1281 = vsel %vm1147, %v1277, 0
      %v1284 = vsel %vm1147, %v1279, 0
      %1286 = vmatprep.subr.bf16.mxu0 0
      %1287 = vmatpush1.bf16.xpose.msra.mxu0 0
      %1288 = vmatprep.subr.bf16.mxu0 0
      %1289 = vmatpush1.bf16.xpose.msra.mxu0 0
      %1290 = vmatprep.subr.bf16.mxu0 0
      %1291 = vmatpush1.bf16.xpose.msra.mxu0 0
      %1292 = vmatprep.subr.bf16.mxu0 0
      %1293 = vmatpush1.bf16.xpose.msra.mxu0 0
      %1294 = vmatprep.subr.bf16.mxu0 0
      %1295 = vmatpush1.bf16.xpose.msra.mxu0 0
      %1296 = vmatprep.subr.bf16.mxu0 0
      %1297 = vmatpush1.bf16.xpose.msra.mxu0 0
      %1298 = vmatprep.subr.bf16.mxu0 0
      %1299 = vmatpush1.bf16.xpose.msra.mxu0 0
      %1300 = vmatprep.subr.bf16.mxu0 0
      %1301 = vmatpush1.bf16.xpose.msra.mxu0 %v1284
      %1302 = vmatprep.subr.bf16.mxu0 0
      %1303 = vmatpush2.bf16.xpose.msra.mxu0 0
      %1304 = vmatprep.subr.bf16.mxu0 0
      %1305 = vmatpush2.bf16.xpose.msra.mxu0 0
      %1306 = vmatprep.subr.bf16.mxu0 0
      %1307 = vmatpush2.bf16.xpose.msra.mxu0 0
      %1308 = vmatprep.subr.bf16.mxu0 0
      %1309 = vmatpush2.bf16.xpose.msra.mxu0 0
      %1310 = vmatprep.subr.bf16.mxu0 0
      %1311 = vmatpush2.bf16.xpose.msra.mxu0 0
      %1312 = vmatprep.subr.bf16.mxu0 0
      %1313 = vmatpush2.bf16.xpose.msra.mxu0 0
      %1314 = vmatprep.subr.bf16.mxu0 0
      %1315 = vmatpush2.bf16.xpose.msra.mxu0 0
      %1316 = vmatprep.subr.bf16.mxu0 0
      %1317 = vmatpush2.bf16.xpose.msra.mxu0 0
      %1318 = vmatprep.mubr.bf16.mxu0 0
      %1319 = vmatmul.mubr.bf16.gmra.mxu0 %v1281
      %v1320 = vpop.f32.mrf.mxu0
      %v1321 = vadd.f32 0.0, %v1320
      %v1322 = vpop.f32.mrf.mxu0
      %v1323 = vpop.f32.mrf.mxu0
      %v1324 = vadd.f32 0.0, %v1323
      %v1325 = vpop.f32.mrf.mxu0
      %1326 = vdwg.mxu0
      %v1327 = vmul.f32 %v1321, 0.35355338
      %v1328 = vmul.f32 %v1324, 0.35355338
      %v1329 = vadd.f32 %v1327, %v931
      %v1330 = vadd.f32 %v1328, %v932
      %v1331 = vsel %vm1199, %v1329, -inf
      %1332 = vmax.xlane.f32.xlu0 %v1331
      %v1333 = vpop.xlane.xlu0 %1332
      %v1334 = vsel %vm1203, %v1330, -inf
      %1335 = vmax.xlane.f32.xlu0 %v1334
      %v1336 = vpop.xlane.xlu0 %1335
      %v1337 = vsub.f32 %v1329, %v1333
      %v1338 = vsub.f32 %v1330, %v1336
      %v1339 = vmul.f32 %v1337, 1.442695
      %v1340 = vpow.pop %v1339
      %v1341 = vmul.f32 %v1338, 1.442695
      %v1342 = vpow.pop %v1341
      %v1343 = vsel %vm1199, %v1340, 0.0
      %1344 = vadd.xlane.f32.xlu0 %v1343
      %v1345 = vpop.xlane.xlu0 %1344
      %v1346 = vsel %vm1203, %v1342, 0.0
      %1347 = vadd.xlane.f32.xlu0 %v1346
      %v1348 = vpop.xlane.xlu0 %1347
      %v1349 = vrcp.pop %v1345
      %v1350 = vmul.f32 %v1340, %v1349
      %v1351 = vrcp.pop %v1348
      %v1352 = vmul.f32 %v1342, %v1351
      %v1353 = vpack.c.bf16 %v1352, %v1350
      %1355 = vrot.lane.b32.xlu0 %v1224, 120
      %v1356 = vpop.permute.xlu0 %1355
      %v1358 = vsel %vm1199, %v1353, 0
      %v1361 = vsel %vm1228, %v1356, 0
      %1363 = vmatprep.subr.bf16.mxu0 0
      %1364 = vmatpush1.bf16.msra.mxu0 0
      %1365 = vmatprep.subr.bf16.mxu0 0
      %1366 = vmatpush1.bf16.msra.mxu0 0
      %1367 = vmatprep.subr.bf16.mxu0 0
      %1368 = vmatpush1.bf16.msra.mxu0 0
      %1369 = vmatprep.subr.bf16.mxu0 0
      %1370 = vmatpush1.bf16.msra.mxu0 0
      %1371 = vmatprep.subr.bf16.mxu0 0
      %1372 = vmatpush1.bf16.msra.mxu0 0
      %1373 = vmatprep.subr.bf16.mxu0 0
      %1374 = vmatpush1.bf16.msra.mxu0 0
      %1375 = vmatprep.subr.bf16.mxu0 0
      %1376 = vmatpush1.bf16.msra.mxu0 0
      %1377 = vmatprep.subr.bf16.mxu0 0
      %1378 = vmatpush1.bf16.msra.mxu0 %v1361
      %1379 = vmatprep.subr.bf16.mxu0 0
      %1380 = vmatpush2.bf16.msra.mxu0 0
      %1381 = vmatprep.subr.bf16.mxu0 0
      %1382 = vmatpush2.bf16.msra.mxu0 0
      %1383 = vmatprep.subr.bf16.mxu0 0
      %1384 = vmatpush2.bf16.msra.mxu0 0
      %1385 = vmatprep.subr.bf16.mxu0 0
      %1386 = vmatpush2.bf16.msra.mxu0 0
      %1387 = vmatprep.subr.bf16.mxu0 0
      %1388 = vmatpush2.bf16.msra.mxu0 0
      %1389 = vmatprep.subr.bf16.mxu0 0
      %1390 = vmatpush2.bf16.msra.mxu0 0
      %1391 = vmatprep.subr.bf16.mxu0 0
      %1392 = vmatpush2.bf16.msra.mxu0 0
      %1393 = vmatprep.subr.bf16.mxu0 0
      %1394 = vmatpush2.bf16.msra.mxu0 0
      %1395 = vmatprep.mubr.bf16.mxu0 0
      %1396 = vmatmul.mubr.bf16.gmra.mxu0 %v1358
      %v1397 = vpop.f32.mrf.mxu0
      %v1398 = vadd.f32 0.0, %v1397
      %v1399 = vpop.f32.mrf.mxu0
      %v1400 = vpop.f32.mrf.mxu0
      %v1401 = vadd.f32 0.0, %v1400
      %v1402 = vpop.f32.mrf.mxu0
      %1403 = vdwg.mxu0
      %v1404 = vld [vmem:[%s19 + $0x8] sm:$0xff]
      %v1405 = vpack.c.bf16 %v1401, %v1398
      %v1406 = vpack.c.bf16 %v1404, %v1404
      %v1408 = vsel %vm1147, %v1405, 0
      %vm1410 = vcmask 1043456
      %v1412 = vsel %vm1410, %v1406, 0
      %1414 = vmatprep.subr.bf16.mxu0 0
      %1415 = vmatpush1.bf16.msra.mxu0 0
      %1416 = vmatprep.subr.bf16.mxu0 0
      %1417 = vmatpush1.bf16.msra.mxu0 0
      %1418 = vmatprep.subr.bf16.mxu0 0
      %1419 = vmatpush1.bf16.msra.mxu0 0
      %1420 = vmatprep.subr.bf16.mxu0 0
      %1421 = vmatpush1.bf16.msra.mxu0 0
      %1422 = vmatprep.subr.bf16.mxu0 0
      %1423 = vmatpush1.bf16.msra.mxu0 0
      %1424 = vmatprep.subr.bf16.mxu0 0
      %1425 = vmatpush1.bf16.msra.mxu0 0
      %1426 = vmatprep.subr.bf16.mxu0 0
      %1427 = vmatpush1.bf16.msra.mxu0 0
      %1428 = vmatprep.subr.bf16.mxu0 0
      %1429 = vmatpush1.bf16.msra.mxu0 %v1412
      %1430 = vmatprep.subr.bf16.mxu0 0
      %1431 = vmatpush2.bf16.msra.mxu0 0
      %1432 = vmatprep.subr.bf16.mxu0 0
      %1433 = vmatpush2.bf16.msra.mxu0 0
      %1434 = vmatprep.subr.bf16.mxu0 0
      %1435 = vmatpush2.bf16.msra.mxu0 0
      %1436 = vmatprep.subr.bf16.mxu0 0
      %1437 = vmatpush2.bf16.msra.mxu0 0
      %1438 = vmatprep.subr.bf16.mxu0 0
      %1439 = vmatpush2.bf16.msra.mxu0 0
      %1440 = vmatprep.subr.bf16.mxu0 0
      %1441 = vmatpush2.bf16.msra.mxu0 0
      %1442 = vmatprep.subr.bf16.mxu0 0
      %1443 = vmatpush2.bf16.msra.mxu0 0
      %1444 = vmatprep.subr.bf16.mxu0 0
      %1445 = vmatpush2.bf16.msra.mxu0 0
      %1446 = vmatprep.mubr.bf16.mxu0 0
      %1447 = vmatmul.mubr.bf16.gmra.mxu0 %v1408
      %v1448 = vpop.f32.mrf.mxu0
      %v1449 = vadd.f32 0.0, %v1448
      %v1450 = vpop.f32.mrf.mxu0
      %v1451 = vpop.f32.mrf.mxu0
      %v1452 = vadd.f32 0.0, %v1451
      %v1453 = vpop.f32.mrf.mxu0
      %1454 = vdwg.mxu0
      %v1456 = vsel %vm1147, %v1274, 0
      %v1459 = vsel %vm1410, %v1275, 0
      %1461 = vmatprep.subr.bf16.mxu0 0
      %1462 = vmatpush1.bf16.msra.mxu0 0
      %1463 = vmatprep.subr.bf16.mxu0 0
      %1464 = vmatpush1.bf16.msra.mxu0 0
      %1465 = vmatprep.subr.bf16.mxu0 0
      %1466 = vmatpush1.bf16.msra.mxu0 0
      %1467 = vmatprep.subr.bf16.mxu0 0
      %1468 = vmatpush1.bf16.msra.mxu0 0
      %1469 = vmatprep.subr.bf16.mxu0 0
      %1470 = vmatpush1.bf16.msra.mxu0 0
      %1471 = vmatprep.subr.bf16.mxu0 0
      %1472 = vmatpush1.bf16.msra.mxu0 0
      %1473 = vmatprep.subr.bf16.mxu0 0
      %1474 = vmatpush1.bf16.msra.mxu0 0
      %1475 = vmatprep.subr.bf16.mxu0 0
      %1476 = vmatpush1.bf16.msra.mxu0 %v1459
      %1477 = vmatprep.subr.bf16.mxu0 0
      %1478 = vmatpush2.bf16.msra.mxu0 0
      %1479 = vmatprep.subr.bf16.mxu0 0
      %1480 = vmatpush2.bf16.msra.mxu0 0
      %1481 = vmatprep.subr.bf16.mxu0 0
      %1482 = vmatpush2.bf16.msra.mxu0 0
      %1483 = vmatprep.subr.bf16.mxu0 0
      %1484 = vmatpush2.bf16.msra.mxu0 0
      %1485 = vmatprep.subr.bf16.mxu0 0
      %1486 = vmatpush2.bf16.msra.mxu0 0
      %1487 = vmatprep.subr.bf16.mxu0 0
      %1488 = vmatpush2.bf16.msra.mxu0 0
      %1489 = vmatprep.subr.bf16.mxu0 0
      %1490 = vmatpush2.bf16.msra.mxu0 0
      %1491 = vmatprep.subr.bf16.mxu0 0
      %1492 = vmatpush2.bf16.msra.mxu0 0
      %1493 = vmatprep.mubr.bf16.mxu0 0
      %1494 = vmatmul.mubr.bf16.gmra.mxu0 %v1456
      %v1495 = vpop.f32.mrf.mxu0
      %v1496 = vadd.f32 %v1449, %v1495
      %v1497 = vpop.f32.mrf.mxu0
      %v1498 = vpop.f32.mrf.mxu0
      %v1499 = vadd.f32 %v1452, %v1498
      %v1500 = vpop.f32.mrf.mxu0
      %1501 = vdwg.mxu0
      %1502 = vrot.lane.b32.xlu0 %v1143, 112
      %v1503 = vpop.permute.xlu0 %1502
      %1504 = vrot.lane.b32.xlu0 %v1143, 48
      %v1505 = vpop.permute.xlu0 %1504
      %v1507 = vsel %vm1147, %v1503, 0
      %v1510 = vsel %vm1147, %v1505, 0
      %1512 = vmatprep.subr.bf16.mxu0 0
      %1513 = vmatpush1.bf16.xpose.msra.mxu0 0
      %1514 = vmatprep.subr.bf16.mxu0 0
      %1515 = vmatpush1.bf16.xpose.msra.mxu0 0
      %1516 = vmatprep.subr.bf16.mxu0 0
      %1517 = vmatpush1.bf16.xpose.msra.mxu0 0
      %1518 = vmatprep.subr.bf16.mxu0 0
      %1519 = vmatpush1.bf16.xpose.msra.mxu0 0
      %1520 = vmatprep.subr.bf16.mxu0 0
      %1521 = vmatpush1.bf16.xpose.msra.mxu0 0
      %1522 = vmatprep.subr.bf16.mxu0 0
      %1523 = vmatpush1.bf16.xpose.msra.mxu0 0
      %1524 = vmatprep.subr.bf16.mxu0 0
      %1525 = vmatpush1.bf16.xpose.msra.mxu0 0
      %1526 = vmatprep.subr.bf16.mxu0 0
      %1527 = vmatpush1.bf16.xpose.msra.mxu0 %v1510
      %1528 = vmatprep.subr.bf16.mxu0 0
      %1529 = vmatpush2.bf16.xpose.msra.mxu0 0
      %1530 = vmatprep.subr.bf16.mxu0 0
      %1531 = vmatpush2.bf16.xpose.msra.mxu0 0
      %1532 = vmatprep.subr.bf16.mxu0 0
      %1533 = vmatpush2.bf16.xpose.msra.mxu0 0
      %1534 = vmatprep.subr.bf16.mxu0 0
      %1535 = vmatpush2.bf16.xpose.msra.mxu0 0
      %1536 = vmatprep.subr.bf16.mxu0 0
      %1537 = vmatpush2.bf16.xpose.msra.mxu0 0
      %1538 = vmatprep.subr.bf16.mxu0 0
      %1539 = vmatpush2.bf16.xpose.msra.mxu0 0
      %1540 = vmatprep.subr.bf16.mxu0 0
      %1541 = vmatpush2.bf16.xpose.msra.mxu0 0
      %1542 = vmatprep.subr.bf16.mxu0 0
      %1543 = vmatpush2.bf16.xpose.msra.mxu0 0
      %1544 = vmatprep.mubr.bf16.mxu0 0
      %1545 = vmatmul.mubr.bf16.gmra.mxu0 %v1507
      %v1546 = vpop.f32.mrf.mxu0
      %v1547 = vadd.f32 0.0, %v1546
      %v1548 = vpop.f32.mrf.mxu0
      %v1549 = vpop.f32.mrf.mxu0
      %v1550 = vadd.f32 0.0, %v1549
      %v1551 = vpop.f32.mrf.mxu0
      %1552 = vdwg.mxu0
      %v1553 = vmul.f32 %v1547, 0.35355338
      %v1554 = vmul.f32 %v1550, 0.35355338
      %v1555 = vadd.f32 %v1553, %v931
      %v1556 = vadd.f32 %v1554, %v932
      %v1557 = vsel %vm1199, %v1555, -inf
      %1558 = vmax.xlane.f32.xlu0 %v1557
      %v1559 = vpop.xlane.xlu0 %1558
      %v1560 = vsel %vm1203, %v1556, -inf
      %1561 = vmax.xlane.f32.xlu0 %v1560
      %v1562 = vpop.xlane.xlu0 %1561
      %v1563 = vsub.f32 %v1555, %v1559
      %v1564 = vsub.f32 %v1556, %v1562
      %v1565 = vmul.f32 %v1563, 1.442695
      %v1566 = vpow.pop %v1565
      %v1567 = vmul.f32 %v1564, 1.442695
      %v1568 = vpow.pop %v1567
      %v1569 = vsel %vm1199, %v1566, 0.0
      %1570 = vadd.xlane.f32.xlu0 %v1569
      %v1571 = vpop.xlane.xlu0 %1570
      %v1572 = vsel %vm1203, %v1568, 0.0
      %1573 = vadd.xlane.f32.xlu0 %v1572
      %v1574 = vpop.xlane.xlu0 %1573
      %v1575 = vrcp.pop %v1571
      %v1576 = vmul.f32 %v1566, %v1575
      %v1577 = vrcp.pop %v1574
      %v1578 = vmul.f32 %v1568, %v1577
      %v1579 = vpack.c.bf16 %v1578, %v1576
      %1580 = vrot.lane.b32.xlu0 %v1224, 112
      %v1581 = vpop.permute.xlu0 %1580
      %v1583 = vsel %vm1199, %v1579, 0
      %v1586 = vsel %vm1228, %v1581, 0
      %1588 = vmatprep.subr.bf16.mxu0 0
      %1589 = vmatpush1.bf16.msra.mxu0 0
      %1590 = vmatprep.subr.bf16.mxu0 0
      %1591 = vmatpush1.bf16.msra.mxu0 0
      %1592 = vmatprep.subr.bf16.mxu0 0
      %1593 = vmatpush1.bf16.msra.mxu0 0
      %1594 = vmatprep.subr.bf16.mxu0 0
      %1595 = vmatpush1.bf16.msra.mxu0 0
      %1596 = vmatprep.subr.bf16.mxu0 0
      %1597 = vmatpush1.bf16.msra.mxu0 0
      %1598 = vmatprep.subr.bf16.mxu0 0
      %1599 = vmatpush1.bf16.msra.mxu0 0
      %1600 = vmatprep.subr.bf16.mxu0 0
      %1601 = vmatpush1.bf16.msra.mxu0 0
      %1602 = vmatprep.subr.bf16.mxu0 0
      %1603 = vmatpush1.bf16.msra.mxu0 %v1586
      %1604 = vmatprep.subr.bf16.mxu0 0
      %1605 = vmatpush2.bf16.msra.mxu0 0
      %1606 = vmatprep.subr.bf16.mxu0 0
      %1607 = vmatpush2.bf16.msra.mxu0 0
      %1608 = vmatprep.subr.bf16.mxu0 0
      %1609 = vmatpush2.bf16.msra.mxu0 0
      %1610 = vmatprep.subr.bf16.mxu0 0
      %1611 = vmatpush2.bf16.msra.mxu0 0
      %1612 = vmatprep.subr.bf16.mxu0 0
      %1613 = vmatpush2.bf16.msra.mxu0 0
      %1614 = vmatprep.subr.bf16.mxu0 0
      %1615 = vmatpush2.bf16.msra.mxu0 0
      %1616 = vmatprep.subr.bf16.mxu0 0
      %1617 = vmatpush2.bf16.msra.mxu0 0
      %1618 = vmatprep.subr.bf16.mxu0 0
      %1619 = vmatpush2.bf16.msra.mxu0 0
      %1620 = vmatprep.mubr.bf16.mxu0 0
      %1621 = vmatmul.mubr.bf16.gmra.mxu0 %v1583
      %v1622 = vpop.f32.mrf.mxu0
      %v1623 = vadd.f32 0.0, %v1622
      %v1624 = vpop.f32.mrf.mxu0
      %v1625 = vpop.f32.mrf.mxu0
      %v1626 = vadd.f32 0.0, %v1625
      %v1627 = vpop.f32.mrf.mxu0
      %1628 = vdwg.mxu0
      %v1629 = vld [vmem:[%s19 + $0x10] sm:$0xff]
      %v1630 = vpack.c.bf16 %v1626, %v1623
      %v1631 = vpack.c.bf16 %v1629, %v1629
      %v1633 = vsel %vm1147, %v1630, 0
      %v1636 = vsel %vm1410, %v1631, 0
      %1638 = vmatprep.subr.bf16.mxu0 0
      %1639 = vmatpush1.bf16.msra.mxu0 0
      %1640 = vmatprep.subr.bf16.mxu0 0
      %1641 = vmatpush1.bf16.msra.mxu0 0
      %1642 = vmatprep.subr.bf16.mxu0 0
      %1643 = vmatpush1.bf16.msra.mxu0 0
      %1644 = vmatprep.subr.bf16.mxu0 0
      %1645 = vmatpush1.bf16.msra.mxu0 0
      %1646 = vmatprep.subr.bf16.mxu0 0
      %1647 = vmatpush1.bf16.msra.mxu0 0
      %1648 = vmatprep.subr.bf16.mxu0 0
      %1649 = vmatpush1.bf16.msra.mxu0 0
      %1650 = vmatprep.subr.bf16.mxu0 0
      %1651 = vmatpush1.bf16.msra.mxu0 0
      %1652 = vmatprep.subr.bf16.mxu0 0
      %1653 = vmatpush1.bf16.msra.mxu0 %v1636
      %1654 = vmatprep.subr.bf16.mxu0 0
      %1655 = vmatpush2.bf16.msra.mxu0 0
      %1656 = vmatprep.subr.bf16.mxu0 0
      %1657 = vmatpush2.bf16.msra.mxu0 0
      %1658 = vmatprep.subr.bf16.mxu0 0
      %1659 = vmatpush2.bf16.msra.mxu0 0
      %1660 = vmatprep.subr.bf16.mxu0 0
      %1661 = vmatpush2.bf16.msra.mxu0 0
      %1662 = vmatprep.subr.bf16.mxu0 0
      %1663 = vmatpush2.bf16.msra.mxu0 0
      %1664 = vmatprep.subr.bf16.mxu0 0
      %1665 = vmatpush2.bf16.msra.mxu0 0
      %1666 = vmatprep.subr.bf16.mxu0 0
      %1667 = vmatpush2.bf16.msra.mxu0 0
      %1668 = vmatprep.subr.bf16.mxu0 0
      %1669 = vmatpush2.bf16.msra.mxu0 0
      %1670 = vmatprep.mubr.bf16.mxu0 0
      %1671 = vmatmul.mubr.bf16.gmra.mxu0 %v1633
      %v1672 = vpop.f32.mrf.mxu0
      %v1673 = vadd.f32 0.0, %v1672
      %v1674 = vpop.f32.mrf.mxu0
      %v1675 = vpop.f32.mrf.mxu0
      %v1676 = vadd.f32 0.0, %v1675
      %v1677 = vpop.f32.mrf.mxu0
      %1678 = vdwg.mxu0
      %v1679 = vadd.f32 %v1496, %v1673
      %v1680 = vadd.f32 %v1499, %v1676
      %1681 = vrot.lane.b32.xlu0 %v1143, 104
      %v1682 = vpop.permute.xlu0 %1681
      %1683 = vrot.lane.b32.xlu0 %v1143, 40
      %v1684 = vpop.permute.xlu0 %1683
      %v1686 = vsel %vm1147, %v1682, 0
      %v1689 = vsel %vm1147, %v1684, 0
      %1691 = vmatprep.subr.bf16.mxu0 0
      %1692 = vmatpush1.bf16.xpose.msra.mxu0 0
      %1693 = vmatprep.subr.bf16.mxu0 0
      %1694 = vmatpush1.bf16.xpose.msra.mxu0 0
      %1695 = vmatprep.subr.bf16.mxu0 0
      %1696 = vmatpush1.bf16.xpose.msra.mxu0 0
      %1697 = vmatprep.subr.bf16.mxu0 0
      %1698 = vmatpush1.bf16.xpose.msra.mxu0 0
      %1699 = vmatprep.subr.bf16.mxu0 0
      %1700 = vmatpush1.bf16.xpose.msra.mxu0 0
      %1701 = vmatprep.subr.bf16.mxu0 0
      %1702 = vmatpush1.bf16.xpose.msra.mxu0 0
      %1703 = vmatprep.subr.bf16.mxu0 0
      %1704 = vmatpush1.bf16.xpose.msra.mxu0 0
      %1705 = vmatprep.subr.bf16.mxu0 0
      %1706 = vmatpush1.bf16.xpose.msra.mxu0 %v1689
      %1707 = vmatprep.subr.bf16.mxu0 0
      %1708 = vmatpush2.bf16.xpose.msra.mxu0 0
      %1709 = vmatprep.subr.bf16.mxu0 0
      %1710 = vmatpush2.bf16.xpose.msra.mxu0 0
      %1711 = vmatprep.subr.bf16.mxu0 0
      %1712 = vmatpush2.bf16.xpose.msra.mxu0 0
      %1713 = vmatprep.subr.bf16.mxu0 0
      %1714 = vmatpush2.bf16.xpose.msra.mxu0 0
      %1715 = vmatprep.subr.bf16.mxu0 0
      %1716 = vmatpush2.bf16.xpose.msra.mxu0 0
      %1717 = vmatprep.subr.bf16.mxu0 0
      %1718 = vmatpush2.bf16.xpose.msra.mxu0 0
      %1719 = vmatprep.subr.bf16.mxu0 0
      %1720 = vmatpush2.bf16.xpose.msra.mxu0 0
      %1721 = vmatprep.subr.bf16.mxu0 0
      %1722 = vmatpush2.bf16.xpose.msra.mxu0 0
      %1723 = vmatprep.mubr.bf16.mxu0 0
      %1724 = vmatmul.mubr.bf16.gmra.mxu0 %v1686
      %v1725 = vpop.f32.mrf.mxu0
      %v1726 = vadd.f32 0.0, %v1725
      %v1727 = vpop.f32.mrf.mxu0
      %v1728 = vpop.f32.mrf.mxu0
      %v1729 = vadd.f32 0.0, %v1728
      %v1730 = vpop.f32.mrf.mxu0
      %1731 = vdwg.mxu0
      %v1732 = vmul.f32 %v1726, 0.35355338
      %v1733 = vmul.f32 %v1729, 0.35355338
      %v1734 = vadd.f32 %v1732, %v931
      %v1735 = vadd.f32 %v1733, %v932
      %v1736 = vsel %vm1199, %v1734, -inf
      %1737 = vmax.xlane.f32.xlu0 %v1736
      %v1738 = vpop.xlane.xlu0 %1737
      %v1739 = vsel %vm1203, %v1735, -inf
      %1740 = vmax.xlane.f32.xlu0 %v1739
      %v1741 = vpop.xlane.xlu0 %1740
      %v1742 = vsub.f32 %v1734, %v1738
      %v1743 = vsub.f32 %v1735, %v1741
      %v1744 = vmul.f32 %v1742, 1.442695
      %v1745 = vpow.pop %v1744
      %v1746 = vmul.f32 %v1743, 1.442695
      %v1747 = vpow.pop %v1746
      %v1748 = vsel %vm1199, %v1745, 0.0
      %1749 = vadd.xlane.f32.xlu0 %v1748
      %v1750 = vpop.xlane.xlu0 %1749
      %v1751 = vsel %vm1203, %v1747, 0.0
      %1752 = vadd.xlane.f32.xlu0 %v1751
      %v1753 = vpop.xlane.xlu0 %1752
      %v1754 = vrcp.pop %v1750
      %v1755 = vmul.f32 %v1745, %v1754
      %v1756 = vrcp.pop %v1753
      %v1757 = vmul.f32 %v1747, %v1756
      %v1758 = vpack.c.bf16 %v1757, %v1755
      %1759 = vrot.lane.b32.xlu0 %v1224, 104
      %v1760 = vpop.permute.xlu0 %1759
      %v1762 = vsel %vm1199, %v1758, 0
      %v1765 = vsel %vm1228, %v1760, 0
      %1767 = vmatprep.subr.bf16.mxu0 0
      %1768 = vmatpush1.bf16.msra.mxu0 0
      %1769 = vmatprep.subr.bf16.mxu0 0
      %1770 = vmatpush1.bf16.msra.mxu0 0
      %1771 = vmatprep.subr.bf16.mxu0 0
      %1772 = vmatpush1.bf16.msra.mxu0 0
      %1773 = vmatprep.subr.bf16.mxu0 0
      %1774 = vmatpush1.bf16.msra.mxu0 0
      %1775 = vmatprep.subr.bf16.mxu0 0
      %1776 = vmatpush1.bf16.msra.mxu0 0
      %1777 = vmatprep.subr.bf16.mxu0 0
      %1778 = vmatpush1.bf16.msra.mxu0 0
      %1779 = vmatprep.subr.bf16.mxu0 0
      %1780 = vmatpush1.bf16.msra.mxu0 0
      %1781 = vmatprep.subr.bf16.mxu0 0
      %1782 = vmatpush1.bf16.msra.mxu0 %v1765
      %1783 = vmatprep.subr.bf16.mxu0 0
      %1784 = vmatpush2.bf16.msra.mxu0 0
      %1785 = vmatprep.subr.bf16.mxu0 0
      %1786 = vmatpush2.bf16.msra.mxu0 0
      %1787 = vmatprep.subr.bf16.mxu0 0
      %1788 = vmatpush2.bf16.msra.mxu0 0
      %1789 = vmatprep.subr.bf16.mxu0 0
      %1790 = vmatpush2.bf16.msra.mxu0 0
      %1791 = vmatprep.subr.bf16.mxu0 0
      %1792 = vmatpush2.bf16.msra.mxu0 0
      %1793 = vmatprep.subr.bf16.mxu0 0
      %1794 = vmatpush2.bf16.msra.mxu0 0
      %1795 = vmatprep.subr.bf16.mxu0 0
      %1796 = vmatpush2.bf16.msra.mxu0 0
      %1797 = vmatprep.subr.bf16.mxu0 0
      %1798 = vmatpush2.bf16.msra.mxu0 0
      %1799 = vmatprep.mubr.bf16.mxu0 0
      %1800 = vmatmul.mubr.bf16.gmra.mxu0 %v1762
      %v1801 = vpop.f32.mrf.mxu0
      %v1802 = vadd.f32 0.0, %v1801
      %v1803 = vpop.f32.mrf.mxu0
      %v1804 = vpop.f32.mrf.mxu0
      %v1805 = vadd.f32 0.0, %v1804
      %v1806 = vpop.f32.mrf.mxu0
      %1807 = vdwg.mxu0
      %v1808 = vld [vmem:[%s19 + $0x18] sm:$0xff]
      %v1809 = vpack.c.bf16 %v1805, %v1802
      %v1810 = vpack.c.bf16 %v1808, %v1808
      %v1812 = vsel %vm1147, %v1809, 0
      %v1815 = vsel %vm1410, %v1810, 0
      %1817 = vmatprep.subr.bf16.mxu0 0
      %1818 = vmatpush1.bf16.msra.mxu0 0
      %1819 = vmatprep.subr.bf16.mxu0 0
      %1820 = vmatpush1.bf16.msra.mxu0 0
      %1821 = vmatprep.subr.bf16.mxu0 0
      %1822 = vmatpush1.bf16.msra.mxu0 0
      %1823 = vmatprep.subr.bf16.mxu0 0
      %1824 = vmatpush1.bf16.msra.mxu0 0
      %1825 = vmatprep.subr.bf16.mxu0 0
      %1826 = vmatpush1.bf16.msra.mxu0 0
      %1827 = vmatprep.subr.bf16.mxu0 0
      %1828 = vmatpush1.bf16.msra.mxu0 0
      %1829 = vmatprep.subr.bf16.mxu0 0
      %1830 = vmatpush1.bf16.msra.mxu0 0
      %1831 = vmatprep.subr.bf16.mxu0 0
      %1832 = vmatpush1.bf16.msra.mxu0 %v1815
      %1833 = vmatprep.subr.bf16.mxu0 0
      %1834 = vmatpush2.bf16.msra.mxu0 0
      %1835 = vmatprep.subr.bf16.mxu0 0
      %1836 = vmatpush2.bf16.msra.mxu0 0
      %1837 = vmatprep.subr.bf16.mxu0 0
      %1838 = vmatpush2.bf16.msra.mxu0 0
      %1839 = vmatprep.subr.bf16.mxu0 0
      %1840 = vmatpush2.bf16.msra.mxu0 0
      %1841 = vmatprep.subr.bf16.mxu0 0
      %1842 = vmatpush2.bf16.msra.mxu0 0
      %1843 = vmatprep.subr.bf16.mxu0 0
      %1844 = vmatpush2.bf16.msra.mxu0 0
      %1845 = vmatprep.subr.bf16.mxu0 0
      %1846 = vmatpush2.bf16.msra.mxu0 0
      %1847 = vmatprep.subr.bf16.mxu0 0
      %1848 = vmatpush2.bf16.msra.mxu0 0
      %1849 = vmatprep.mubr.bf16.mxu0 0
      %1850 = vmatmul.mubr.bf16.gmra.mxu0 %v1812
      %v1851 = vpop.f32.mrf.mxu0
      %v1852 = vadd.f32 0.0, %v1851
      %v1853 = vpop.f32.mrf.mxu0
      %v1854 = vpop.f32.mrf.mxu0
      %v1855 = vadd.f32 0.0, %v1854
      %v1856 = vpop.f32.mrf.mxu0
      %1857 = vdwg.mxu0
      %v1858 = vadd.f32 %v1679, %v1852
      %v1859 = vadd.f32 %v1680, %v1855
      %1860 = vrot.lane.b32.xlu0 %v1143, 96
      %v1861 = vpop.permute.xlu0 %1860
      %1862 = vrot.lane.b32.xlu0 %v1143, 32
      %v1863 = vpop.permute.xlu0 %1862
      %v1865 = vsel %vm1147, %v1861, 0
      %v1868 = vsel %vm1147, %v1863, 0
      %1870 = vmatprep.subr.bf16.mxu0 0
      %1871 = vmatpush1.bf16.xpose.msra.mxu0 0
      %1872 = vmatprep.subr.bf16.mxu0 0
      %1873 = vmatpush1.bf16.xpose.msra.mxu0 0
      %1874 = vmatprep.subr.bf16.mxu0 0
      %1875 = vmatpush1.bf16.xpose.msra.mxu0 0
      %1876 = vmatprep.subr.bf16.mxu0 0
      %1877 = vmatpush1.bf16.xpose.msra.mxu0 0
      %1878 = vmatprep.subr.bf16.mxu0 0
      %1879 = vmatpush1.bf16.xpose.msra.mxu0 0
      %1880 = vmatprep.subr.bf16.mxu0 0
      %1881 = vmatpush1.bf16.xpose.msra.mxu0 0
      %1882 = vmatprep.subr.bf16.mxu0 0
      %1883 = vmatpush1.bf16.xpose.msra.mxu0 0
      %1884 = vmatprep.subr.bf16.mxu0 0
      %1885 = vmatpush1.bf16.xpose.msra.mxu0 %v1868
      %1886 = vmatprep.subr.bf16.mxu0 0
      %1887 = vmatpush2.bf16.xpose.msra.mxu0 0
      %1888 = vmatprep.subr.bf16.mxu0 0
      %1889 = vmatpush2.bf16.xpose.msra.mxu0 0
      %1890 = vmatprep.subr.bf16.mxu0 0
      %1891 = vmatpush2.bf16.xpose.msra.mxu0 0
      %1892 = vmatprep.subr.bf16.mxu0 0
      %1893 = vmatpush2.bf16.xpose.msra.mxu0 0
      %1894 = vmatprep.subr.bf16.mxu0 0
      %1895 = vmatpush2.bf16.xpose.msra.mxu0 0
      %1896 = vmatprep.subr.bf16.mxu0 0
      %1897 = vmatpush2.bf16.xpose.msra.mxu0 0
      %1898 = vmatprep.subr.bf16.mxu0 0
      %1899 = vmatpush2.bf16.xpose.msra.mxu0 0
      %1900 = vmatprep.subr.bf16.mxu0 0
      %1901 = vmatpush2.bf16.xpose.msra.mxu0 0
      %1902 = vmatprep.mubr.bf16.mxu0 0
      %1903 = vmatmul.mubr.bf16.gmra.mxu0 %v1865
      %v1904 = vpop.f32.mrf.mxu0
      %v1905 = vadd.f32 0.0, %v1904
      %v1906 = vpop.f32.mrf.mxu0
      %v1907 = vpop.f32.mrf.mxu0
      %v1908 = vadd.f32 0.0, %v1907
      %v1909 = vpop.f32.mrf.mxu0
      %1910 = vdwg.mxu0
      %v1911 = vmul.f32 %v1905, 0.35355338
      %v1912 = vmul.f32 %v1908, 0.35355338
      %v1913 = vadd.f32 %v1911, %v931
      %v1914 = vadd.f32 %v1912, %v932
      %v1915 = vsel %vm1199, %v1913, -inf
      %1916 = vmax.xlane.f32.xlu0 %v1915
      %v1917 = vpop.xlane.xlu0 %1916
      %v1918 = vsel %vm1203, %v1914, -inf
      %1919 = vmax.xlane.f32.xlu0 %v1918
      %v1920 = vpop.xlane.xlu0 %1919
      %v1921 = vsub.f32 %v1913, %v1917
      %v1922 = vsub.f32 %v1914, %v1920
      %v1923 = vmul.f32 %v1921, 1.442695
      %v1924 = vpow.pop %v1923
      %v1925 = vmul.f32 %v1922, 1.442695
      %v1926 = vpow.pop %v1925
      %v1927 = vsel %vm1199, %v1924, 0.0
      %1928 = vadd.xlane.f32.xlu0 %v1927
      %v1929 = vpop.xlane.xlu0 %1928
      %v1930 = vsel %vm1203, %v1926, 0.0
      %1931 = vadd.xlane.f32.xlu0 %v1930
      %v1932 = vpop.xlane.xlu0 %1931
      %v1933 = vrcp.pop %v1929
      %v1934 = vmul.f32 %v1924, %v1933
      %v1935 = vrcp.pop %v1932
      %v1936 = vmul.f32 %v1926, %v1935
      %v1937 = vpack.c.bf16 %v1936, %v1934
      %1938 = vrot.lane.b32.xlu0 %v1224, 96
      %v1939 = vpop.permute.xlu0 %1938
      %v1941 = vsel %vm1199, %v1937, 0
      %v1944 = vsel %vm1228, %v1939, 0
      %1946 = vmatprep.subr.bf16.mxu0 0
      %1947 = vmatpush1.bf16.msra.mxu0 0
      %1948 = vmatprep.subr.bf16.mxu0 0
      %1949 = vmatpush1.bf16.msra.mxu0 0
      %1950 = vmatprep.subr.bf16.mxu0 0
      %1951 = vmatpush1.bf16.msra.mxu0 0
      %1952 = vmatprep.subr.bf16.mxu0 0
      %1953 = vmatpush1.bf16.msra.mxu0 0
      %1954 = vmatprep.subr.bf16.mxu0 0
      %1955 = vmatpush1.bf16.msra.mxu0 0
      %1956 = vmatprep.subr.bf16.mxu0 0
      %1957 = vmatpush1.bf16.msra.mxu0 0
      %1958 = vmatprep.subr.bf16.mxu0 0
      %1959 = vmatpush1.bf16.msra.mxu0 0
      %1960 = vmatprep.subr.bf16.mxu0 0
      %1961 = vmatpush1.bf16.msra.mxu0 %v1944
      %1962 = vmatprep.subr.bf16.mxu0 0
      %1963 = vmatpush2.bf16.msra.mxu0 0
      %1964 = vmatprep.subr.bf16.mxu0 0
      %1965 = vmatpush2.bf16.msra.mxu0 0
      %1966 = vmatprep.subr.bf16.mxu0 0
      %1967 = vmatpush2.bf16.msra.mxu0 0
      %1968 = vmatprep.subr.bf16.mxu0 0
      %1969 = vmatpush2.bf16.msra.mxu0 0
      %1970 = vmatprep.subr.bf16.mxu0 0
      %1971 = vmatpush2.bf16.msra.mxu0 0
      %1972 = vmatprep.subr.bf16.mxu0 0
      %1973 = vmatpush2.bf16.msra.mxu0 0
      %1974 = vmatprep.subr.bf16.mxu0 0
      %1975 = vmatpush2.bf16.msra.mxu0 0
      %1976 = vmatprep.subr.bf16.mxu0 0
      %1977 = vmatpush2.bf16.msra.mxu0 0
      %1978 = vmatprep.mubr.bf16.mxu0 0
      %1979 = vmatmul.mubr.bf16.gmra.mxu0 %v1941
      %v1980 = vpop.f32.mrf.mxu0
      %v1981 = vadd.f32 0.0, %v1980
      %v1982 = vpop.f32.mrf.mxu0
      %v1983 = vpop.f32.mrf.mxu0
      %v1984 = vadd.f32 0.0, %v1983
      %v1985 = vpop.f32.mrf.mxu0
      %1986 = vdwg.mxu0
      %v1987 = vld [vmem:[%s19 + $0x20] sm:$0xff]
      %v1988 = vpack.c.bf16 %v1984, %v1981
      %v1989 = vpack.c.bf16 %v1987, %v1987
      %v1991 = vsel %vm1147, %v1988, 0
      %v1994 = vsel %vm1410, %v1989, 0
      %1996 = vmatprep.subr.bf16.mxu0 0
      %1997 = vmatpush1.bf16.msra.mxu0 0
      %1998 = vmatprep.subr.bf16.mxu0 0
      %1999 = vmatpush1.bf16.msra.mxu0 0
      %2000 = vmatprep.subr.bf16.mxu0 0
      %2001 = vmatpush1.bf16.msra.mxu0 0
      %2002 = vmatprep.subr.bf16.mxu0 0
      %2003 = vmatpush1.bf16.msra.mxu0 0
      %2004 = vmatprep.subr.bf16.mxu0 0
      %2005 = vmatpush1.bf16.msra.mxu0 0
      %2006 = vmatprep.subr.bf16.mxu0 0
      %2007 = vmatpush1.bf16.msra.mxu0 0
      %2008 = vmatprep.subr.bf16.mxu0 0
      %2009 = vmatpush1.bf16.msra.mxu0 0
      %2010 = vmatprep.subr.bf16.mxu0 0
      %2011 = vmatpush1.bf16.msra.mxu0 %v1994
      %2012 = vmatprep.subr.bf16.mxu0 0
      %2013 = vmatpush2.bf16.msra.mxu0 0
      %2014 = vmatprep.subr.bf16.mxu0 0
      %2015 = vmatpush2.bf16.msra.mxu0 0
      %2016 = vmatprep.subr.bf16.mxu0 0
      %2017 = vmatpush2.bf16.msra.mxu0 0
      %2018 = vmatprep.subr.bf16.mxu0 0
      %2019 = vmatpush2.bf16.msra.mxu0 0
      %2020 = vmatprep.subr.bf16.mxu0 0
      %2021 = vmatpush2.bf16.msra.mxu0 0
      %2022 = vmatprep.subr.bf16.mxu0 0
      %2023 = vmatpush2.bf16.msra.mxu0 0
      %2024 = vmatprep.subr.bf16.mxu0 0
      %2025 = vmatpush2.bf16.msra.mxu0 0
      %2026 = vmatprep.subr.bf16.mxu0 0
      %2027 = vmatpush2.bf16.msra.mxu0 0
      %2028 = vmatprep.mubr.bf16.mxu0 0
      %2029 = vmatmul.mubr.bf16.gmra.mxu0 %v1991
      %v2030 = vpop.f32.mrf.mxu0
      %v2031 = vadd.f32 0.0, %v2030
      %v2032 = vpop.f32.mrf.mxu0
      %v2033 = vpop.f32.mrf.mxu0
      %v2034 = vadd.f32 0.0, %v2033
      %v2035 = vpop.f32.mrf.mxu0
      %2036 = vdwg.mxu0
      %v2037 = vadd.f32 %v1858, %v2031
      %v2038 = vadd.f32 %v1859, %v2034
      %2039 = vrot.lane.b32.xlu0 %v1143, 88
      %v2040 = vpop.permute.xlu0 %2039
      %2041 = vrot.lane.b32.xlu0 %v1143, 24
      %v2042 = vpop.permute.xlu0 %2041
      %v2044 = vsel %vm1147, %v2040, 0
      %v2047 = vsel %vm1147, %v2042, 0
      %2049 = vmatprep.subr.bf16.mxu0 0
      %2050 = vmatpush1.bf16.xpose.msra.mxu0 0
      %2051 = vmatprep.subr.bf16.mxu0 0
      %2052 = vmatpush1.bf16.xpose.msra.mxu0 0
      %2053 = vmatprep.subr.bf16.mxu0 0
      %2054 = vmatpush1.bf16.xpose.msra.mxu0 0
      %2055 = vmatprep.subr.bf16.mxu0 0
      %2056 = vmatpush1.bf16.xpose.msra.mxu0 0
      %2057 = vmatprep.subr.bf16.mxu0 0
      %2058 = vmatpush1.bf16.xpose.msra.mxu0 0
      %2059 = vmatprep.subr.bf16.mxu0 0
      %2060 = vmatpush1.bf16.xpose.msra.mxu0 0
      %2061 = vmatprep.subr.bf16.mxu0 0
      %2062 = vmatpush1.bf16.xpose.msra.mxu0 0
      %2063 = vmatprep.subr.bf16.mxu0 0
      %2064 = vmatpush1.bf16.xpose.msra.mxu0 %v2047
      %2065 = vmatprep.subr.bf16.mxu0 0
      %2066 = vmatpush2.bf16.xpose.msra.mxu0 0
      %2067 = vmatprep.subr.bf16.mxu0 0
      %2068 = vmatpush2.bf16.xpose.msra.mxu0 0
      %2069 = vmatprep.subr.bf16.mxu0 0
      %2070 = vmatpush2.bf16.xpose.msra.mxu0 0
      %2071 = vmatprep.subr.bf16.mxu0 0
      %2072 = vmatpush2.bf16.xpose.msra.mxu0 0
      %2073 = vmatprep.subr.bf16.mxu0 0
      %2074 = vmatpush2.bf16.xpose.msra.mxu0 0
      %2075 = vmatprep.subr.bf16.mxu0 0
      %2076 = vmatpush2.bf16.xpose.msra.mxu0 0
      %2077 = vmatprep.subr.bf16.mxu0 0
      %2078 = vmatpush2.bf16.xpose.msra.mxu0 0
      %2079 = vmatprep.subr.bf16.mxu0 0
      %2080 = vmatpush2.bf16.xpose.msra.mxu0 0
      %2081 = vmatprep.mubr.bf16.mxu0 0
      %2082 = vmatmul.mubr.bf16.gmra.mxu0 %v2044
      %v2083 = vpop.f32.mrf.mxu0
      %v2084 = vadd.f32 0.0, %v2083
      %v2085 = vpop.f32.mrf.mxu0
      %v2086 = vpop.f32.mrf.mxu0
      %v2087 = vadd.f32 0.0, %v2086
      %v2088 = vpop.f32.mrf.mxu0
      %2089 = vdwg.mxu0
      %v2090 = vmul.f32 %v2084, 0.35355338
      %v2091 = vmul.f32 %v2087, 0.35355338
      %v2092 = vadd.f32 %v2090, %v931
      %v2093 = vadd.f32 %v2091, %v932
      %v2094 = vsel %vm1199, %v2092, -inf
      %2095 = vmax.xlane.f32.xlu0 %v2094
      %v2096 = vpop.xlane.xlu0 %2095
      %v2097 = vsel %vm1203, %v2093, -inf
      %2098 = vmax.xlane.f32.xlu0 %v2097
      %v2099 = vpop.xlane.xlu0 %2098
      %v2100 = vsub.f32 %v2092, %v2096
      %v2101 = vsub.f32 %v2093, %v2099
      %v2102 = vmul.f32 %v2100, 1.442695
      %v2103 = vpow.pop %v2102
      %v2104 = vmul.f32 %v2101, 1.442695
      %v2105 = vpow.pop %v2104
      %v2106 = vsel %vm1199, %v2103, 0.0
      %2107 = vadd.xlane.f32.xlu0 %v2106
      %v2108 = vpop.xlane.xlu0 %2107
      %v2109 = vsel %vm1203, %v2105, 0.0
      %2110 = vadd.xlane.f32.xlu0 %v2109
      %v2111 = vpop.xlane.xlu0 %2110
      %v2112 = vrcp.pop %v2108
      %v2113 = vmul.f32 %v2103, %v2112
      %v2114 = vrcp.pop %v2111
      %v2115 = vmul.f32 %v2105, %v2114
      %v2116 = vpack.c.bf16 %v2115, %v2113
      %2117 = vrot.lane.b32.xlu0 %v1224, 88
      %v2118 = vpop.permute.xlu0 %2117
      %v2120 = vsel %vm1199, %v2116, 0
      %v2123 = vsel %vm1228, %v2118, 0
      %2125 = vmatprep.subr.bf16.mxu0 0
      %2126 = vmatpush1.bf16.msra.mxu0 0
      %2127 = vmatprep.subr.bf16.mxu0 0
      %2128 = vmatpush1.bf16.msra.mxu0 0
      %2129 = vmatprep.subr.bf16.mxu0 0
      %2130 = vmatpush1.bf16.msra.mxu0 0
      %2131 = vmatprep.subr.bf16.mxu0 0
      %2132 = vmatpush1.bf16.msra.mxu0 0
      %2133 = vmatprep.subr.bf16.mxu0 0
      %2134 = vmatpush1.bf16.msra.mxu0 0
      %2135 = vmatprep.subr.bf16.mxu0 0
      %2136 = vmatpush1.bf16.msra.mxu0 0
      %2137 = vmatprep.subr.bf16.mxu0 0
      %2138 = vmatpush1.bf16.msra.mxu0 0
      %2139 = vmatprep.subr.bf16.mxu0 0
      %2140 = vmatpush1.bf16.msra.mxu0 %v2123
      %2141 = vmatprep.subr.bf16.mxu0 0
      %2142 = vmatpush2.bf16.msra.mxu0 0
      %2143 = vmatprep.subr.bf16.mxu0 0
      %2144 = vmatpush2.bf16.msra.mxu0 0
      %2145 = vmatprep.subr.bf16.mxu0 0
      %2146 = vmatpush2.bf16.msra.mxu0 0
      %2147 = vmatprep.subr.bf16.mxu0 0
      %2148 = vmatpush2.bf16.msra.mxu0 0
      %2149 = vmatprep.subr.bf16.mxu0 0
      %2150 = vmatpush2.bf16.msra.mxu0 0
      %2151 = vmatprep.subr.bf16.mxu0 0
      %2152 = vmatpush2.bf16.msra.mxu0 0
      %2153 = vmatprep.subr.bf16.mxu0 0
      %2154 = vmatpush2.bf16.msra.mxu0 0
      %2155 = vmatprep.subr.bf16.mxu0 0
      %2156 = vmatpush2.bf16.msra.mxu0 0
      %2157 = vmatprep.mubr.bf16.mxu0 0
      %2158 = vmatmul.mubr.bf16.gmra.mxu0 %v2120
      %v2159 = vpop.f32.mrf.mxu0
      %v2160 = vadd.f32 0.0, %v2159
      %v2161 = vpop.f32.mrf.mxu0
      %v2162 = vpop.f32.mrf.mxu0
      %v2163 = vadd.f32 0.0, %v2162
      %v2164 = vpop.f32.mrf.mxu0
      %2165 = vdwg.mxu0
      %v2166 = vld [vmem:[%s19 + $0x28] sm:$0xff]
      %v2167 = vpack.c.bf16 %v2163, %v2160
      %v2168 = vpack.c.bf16 %v2166, %v2166
      %v2170 = vsel %vm1147, %v2167, 0
      %v2173 = vsel %vm1410, %v2168, 0
      %2175 = vmatprep.subr.bf16.mxu0 0
      %2176 = vmatpush1.bf16.msra.mxu0 0
      %2177 = vmatprep.subr.bf16.mxu0 0
      %2178 = vmatpush1.bf16.msra.mxu0 0
      %2179 = vmatprep.subr.bf16.mxu0 0
      %2180 = vmatpush1.bf16.msra.mxu0 0
      %2181 = vmatprep.subr.bf16.mxu0 0
      %2182 = vmatpush1.bf16.msra.mxu0 0
      %2183 = vmatprep.subr.bf16.mxu0 0
      %2184 = vmatpush1.bf16.msra.mxu0 0
      %2185 = vmatprep.subr.bf16.mxu0 0
      %2186 = vmatpush1.bf16.msra.mxu0 0
      %2187 = vmatprep.subr.bf16.mxu0 0
      %2188 = vmatpush1.bf16.msra.mxu0 0
      %2189 = vmatprep.subr.bf16.mxu0 0
      %2190 = vmatpush1.bf16.msra.mxu0 %v2173
      %2191 = vmatprep.subr.bf16.mxu0 0
      %2192 = vmatpush2.bf16.msra.mxu0 0
      %2193 = vmatprep.subr.bf16.mxu0 0
      %2194 = vmatpush2.bf16.msra.mxu0 0
      %2195 = vmatprep.subr.bf16.mxu0 0
      %2196 = vmatpush2.bf16.msra.mxu0 0
      %2197 = vmatprep.subr.bf16.mxu0 0
      %2198 = vmatpush2.bf16.msra.mxu0 0
      %2199 = vmatprep.subr.bf16.mxu0 0
      %2200 = vmatpush2.bf16.msra.mxu0 0
      %2201 = vmatprep.subr.bf16.mxu0 0
      %2202 = vmatpush2.bf16.msra.mxu0 0
      %2203 = vmatprep.subr.bf16.mxu0 0
      %2204 = vmatpush2.bf16.msra.mxu0 0
      %2205 = vmatprep.subr.bf16.mxu0 0
      %2206 = vmatpush2.bf16.msra.mxu0 0
      %2207 = vmatprep.mubr.bf16.mxu0 0
      %2208 = vmatmul.mubr.bf16.gmra.mxu0 %v2170
      %v2209 = vpop.f32.mrf.mxu0
      %v2210 = vadd.f32 0.0, %v2209
      %v2211 = vpop.f32.mrf.mxu0
      %v2212 = vpop.f32.mrf.mxu0
      %v2213 = vadd.f32 0.0, %v2212
      %v2214 = vpop.f32.mrf.mxu0
      %2215 = vdwg.mxu0
      %v2216 = vadd.f32 %v2037, %v2210
      %v2217 = vadd.f32 %v2038, %v2213
      %2218 = vrot.lane.b32.xlu0 %v1143, 80
      %v2219 = vpop.permute.xlu0 %2218
      %2220 = vrot.lane.b32.xlu0 %v1143, 16
      %v2221 = vpop.permute.xlu0 %2220
      %v2223 = vsel %vm1147, %v2219, 0
      %v2226 = vsel %vm1147, %v2221, 0
      %2228 = vmatprep.subr.bf16.mxu0 0
      %2229 = vmatpush1.bf16.xpose.msra.mxu0 0
      %2230 = vmatprep.subr.bf16.mxu0 0
      %2231 = vmatpush1.bf16.xpose.msra.mxu0 0
      %2232 = vmatprep.subr.bf16.mxu0 0
      %2233 = vmatpush1.bf16.xpose.msra.mxu0 0
      %2234 = vmatprep.subr.bf16.mxu0 0
      %2235 = vmatpush1.bf16.xpose.msra.mxu0 0
      %2236 = vmatprep.subr.bf16.mxu0 0
      %2237 = vmatpush1.bf16.xpose.msra.mxu0 0
      %2238 = vmatprep.subr.bf16.mxu0 0
      %2239 = vmatpush1.bf16.xpose.msra.mxu0 0
      %2240 = vmatprep.subr.bf16.mxu0 0
      %2241 = vmatpush1.bf16.xpose.msra.mxu0 0
      %2242 = vmatprep.subr.bf16.mxu0 0
      %2243 = vmatpush1.bf16.xpose.msra.mxu0 %v2226
      %2244 = vmatprep.subr.bf16.mxu0 0
      %2245 = vmatpush2.bf16.xpose.msra.mxu0 0
      %2246 = vmatprep.subr.bf16.mxu0 0
      %2247 = vmatpush2.bf16.xpose.msra.mxu0 0
      %2248 = vmatprep.subr.bf16.mxu0 0
      %2249 = vmatpush2.bf16.xpose.msra.mxu0 0
      %2250 = vmatprep.subr.bf16.mxu0 0
      %2251 = vmatpush2.bf16.xpose.msra.mxu0 0
      %2252 = vmatprep.subr.bf16.mxu0 0
      %2253 = vmatpush2.bf16.xpose.msra.mxu0 0
      %2254 = vmatprep.subr.bf16.mxu0 0
      %2255 = vmatpush2.bf16.xpose.msra.mxu0 0
      %2256 = vmatprep.subr.bf16.mxu0 0
      %2257 = vmatpush2.bf16.xpose.msra.mxu0 0
      %2258 = vmatprep.subr.bf16.mxu0 0
      %2259 = vmatpush2.bf16.xpose.msra.mxu0 0
      %2260 = vmatprep.mubr.bf16.mxu0 0
      %2261 = vmatmul.mubr.bf16.gmra.mxu0 %v2223
      %v2262 = vpop.f32.mrf.mxu0
      %v2263 = vadd.f32 0.0, %v2262
      %v2264 = vpop.f32.mrf.mxu0
      %v2265 = vpop.f32.mrf.mxu0
      %v2266 = vadd.f32 0.0, %v2265
      %v2267 = vpop.f32.mrf.mxu0
      %2268 = vdwg.mxu0
      %v2269 = vmul.f32 %v2263, 0.35355338
      %v2270 = vmul.f32 %v2266, 0.35355338
      %v2271 = vadd.f32 %v2269, %v931
      %v2272 = vadd.f32 %v2270, %v932
      %v2273 = vsel %vm1199, %v2271, -inf
      %2274 = vmax.xlane.f32.xlu0 %v2273
      %v2275 = vpop.xlane.xlu0 %2274
      %v2276 = vsel %vm1203, %v2272, -inf
      %2277 = vmax.xlane.f32.xlu0 %v2276
      %v2278 = vpop.xlane.xlu0 %2277
      %v2279 = vsub.f32 %v2271, %v2275
      %v2280 = vsub.f32 %v2272, %v2278
      %v2281 = vmul.f32 %v2279, 1.442695
      %v2282 = vpow.pop %v2281
      %v2283 = vmul.f32 %v2280, 1.442695
      %v2284 = vpow.pop %v2283
      %v2285 = vsel %vm1199, %v2282, 0.0
      %2286 = vadd.xlane.f32.xlu0 %v2285
      %v2287 = vpop.xlane.xlu0 %2286
      %v2288 = vsel %vm1203, %v2284, 0.0
      %2289 = vadd.xlane.f32.xlu0 %v2288
      %v2290 = vpop.xlane.xlu0 %2289
      %v2291 = vrcp.pop %v2287
      %v2292 = vmul.f32 %v2282, %v2291
      %v2293 = vrcp.pop %v2290
      %v2294 = vmul.f32 %v2284, %v2293
      %v2295 = vpack.c.bf16 %v2294, %v2292
      %2296 = vrot.lane.b32.xlu0 %v1224, 80
      %v2297 = vpop.permute.xlu0 %2296
      %v2299 = vsel %vm1199, %v2295, 0
      %v2302 = vsel %vm1228, %v2297, 0
      %2304 = vmatprep.subr.bf16.mxu0 0
      %2305 = vmatpush1.bf16.msra.mxu0 0
      %2306 = vmatprep.subr.bf16.mxu0 0
      %2307 = vmatpush1.bf16.msra.mxu0 0
      %2308 = vmatprep.subr.bf16.mxu0 0
      %2309 = vmatpush1.bf16.msra.mxu0 0
      %2310 = vmatprep.subr.bf16.mxu0 0
      %2311 = vmatpush1.bf16.msra.mxu0 0
      %2312 = vmatprep.subr.bf16.mxu0 0
      %2313 = vmatpush1.bf16.msra.mxu0 0
      %2314 = vmatprep.subr.bf16.mxu0 0
      %2315 = vmatpush1.bf16.msra.mxu0 0
      %2316 = vmatprep.subr.bf16.mxu0 0
      %2317 = vmatpush1.bf16.msra.mxu0 0
      %2318 = vmatprep.subr.bf16.mxu0 0
      %2319 = vmatpush1.bf16.msra.mxu0 %v2302
      %2320 = vmatprep.subr.bf16.mxu0 0
      %2321 = vmatpush2.bf16.msra.mxu0 0
      %2322 = vmatprep.subr.bf16.mxu0 0
      %2323 = vmatpush2.bf16.msra.mxu0 0
      %2324 = vmatprep.subr.bf16.mxu0 0
      %2325 = vmatpush2.bf16.msra.mxu0 0
      %2326 = vmatprep.subr.bf16.mxu0 0
      %2327 = vmatpush2.bf16.msra.mxu0 0
      %2328 = vmatprep.subr.bf16.mxu0 0
      %2329 = vmatpush2.bf16.msra.mxu0 0
      %2330 = vmatprep.subr.bf16.mxu0 0
      %2331 = vmatpush2.bf16.msra.mxu0 0
      %2332 = vmatprep.subr.bf16.mxu0 0
      %2333 = vmatpush2.bf16.msra.mxu0 0
      %2334 = vmatprep.subr.bf16.mxu0 0
      %2335 = vmatpush2.bf16.msra.mxu0 0
      %2336 = vmatprep.mubr.bf16.mxu0 0
      %2337 = vmatmul.mubr.bf16.gmra.mxu0 %v2299
      %v2338 = vpop.f32.mrf.mxu0
      %v2339 = vadd.f32 0.0, %v2338
      %v2340 = vpop.f32.mrf.mxu0
      %v2341 = vpop.f32.mrf.mxu0
      %v2342 = vadd.f32 0.0, %v2341
      %v2343 = vpop.f32.mrf.mxu0
      %2344 = vdwg.mxu0
      %v2345 = vld [vmem:[%s19 + $0x30] sm:$0xff]
      %v2346 = vpack.c.bf16 %v2342, %v2339
      %v2347 = vpack.c.bf16 %v2345, %v2345
      %v2349 = vsel %vm1147, %v2346, 0
      %v2352 = vsel %vm1410, %v2347, 0
      %2354 = vmatprep.subr.bf16.mxu0 0
      %2355 = vmatpush1.bf16.msra.mxu0 0
      %2356 = vmatprep.subr.bf16.mxu0 0
      %2357 = vmatpush1.bf16.msra.mxu0 0
      %2358 = vmatprep.subr.bf16.mxu0 0
      %2359 = vmatpush1.bf16.msra.mxu0 0
      %2360 = vmatprep.subr.bf16.mxu0 0
      %2361 = vmatpush1.bf16.msra.mxu0 0
      %2362 = vmatprep.subr.bf16.mxu0 0
      %2363 = vmatpush1.bf16.msra.mxu0 0
      %2364 = vmatprep.subr.bf16.mxu0 0
      %2365 = vmatpush1.bf16.msra.mxu0 0
      %2366 = vmatprep.subr.bf16.mxu0 0
      %2367 = vmatpush1.bf16.msra.mxu0 0
      %2368 = vmatprep.subr.bf16.mxu0 0
      %2369 = vmatpush1.bf16.msra.mxu0 %v2352
      %2370 = vmatprep.subr.bf16.mxu0 0
      %2371 = vmatpush2.bf16.msra.mxu0 0
      %2372 = vmatprep.subr.bf16.mxu0 0
      %2373 = vmatpush2.bf16.msra.mxu0 0
      %2374 = vmatprep.subr.bf16.mxu0 0
      %2375 = vmatpush2.bf16.msra.mxu0 0
      %2376 = vmatprep.subr.bf16.mxu0 0
      %2377 = vmatpush2.bf16.msra.mxu0 0
      %2378 = vmatprep.subr.bf16.mxu0 0
      %2379 = vmatpush2.bf16.msra.mxu0 0
      %2380 = vmatprep.subr.bf16.mxu0 0
      %2381 = vmatpush2.bf16.msra.mxu0 0
      %2382 = vmatprep.subr.bf16.mxu0 0
      %2383 = vmatpush2.bf16.msra.mxu0 0
      %2384 = vmatprep.subr.bf16.mxu0 0
      %2385 = vmatpush2.bf16.msra.mxu0 0
      %2386 = vmatprep.mubr.bf16.mxu0 0
      %2387 = vmatmul.mubr.bf16.gmra.mxu0 %v2349
      %v2388 = vpop.f32.mrf.mxu0
      %v2389 = vadd.f32 0.0, %v2388
      %v2390 = vpop.f32.mrf.mxu0
      %v2391 = vpop.f32.mrf.mxu0
      %v2392 = vadd.f32 0.0, %v2391
      %v2393 = vpop.f32.mrf.mxu0
      %2394 = vdwg.mxu0
      %v2395 = vadd.f32 %v2216, %v2389
      %v2396 = vadd.f32 %v2217, %v2392
      %2397 = vrot.lane.b32.xlu0 %v1143, 72
      %v2398 = vpop.permute.xlu0 %2397
      %2399 = vrot.lane.b32.xlu0 %v1143, 8
      %v2400 = vpop.permute.xlu0 %2399
      %v2402 = vsel %vm1147, %v2398, 0
      %v2405 = vsel %vm1147, %v2400, 0
      %2407 = vmatprep.subr.bf16.mxu0 0
      %2408 = vmatpush1.bf16.xpose.msra.mxu0 0
      %2409 = vmatprep.subr.bf16.mxu0 0
      %2410 = vmatpush1.bf16.xpose.msra.mxu0 0
      %2411 = vmatprep.subr.bf16.mxu0 0
      %2412 = vmatpush1.bf16.xpose.msra.mxu0 0
      %2413 = vmatprep.subr.bf16.mxu0 0
      %2414 = vmatpush1.bf16.xpose.msra.mxu0 0
      %2415 = vmatprep.subr.bf16.mxu0 0
      %2416 = vmatpush1.bf16.xpose.msra.mxu0 0
      %2417 = vmatprep.subr.bf16.mxu0 0
      %2418 = vmatpush1.bf16.xpose.msra.mxu0 0
      %2419 = vmatprep.subr.bf16.mxu0 0
      %2420 = vmatpush1.bf16.xpose.msra.mxu0 0
      %2421 = vmatprep.subr.bf16.mxu0 0
      %2422 = vmatpush1.bf16.xpose.msra.mxu0 %v2405
      %2423 = vmatprep.subr.bf16.mxu0 0
      %2424 = vmatpush2.bf16.xpose.msra.mxu0 0
      %2425 = vmatprep.subr.bf16.mxu0 0
      %2426 = vmatpush2.bf16.xpose.msra.mxu0 0
      %2427 = vmatprep.subr.bf16.mxu0 0
      %2428 = vmatpush2.bf16.xpose.msra.mxu0 0
      %2429 = vmatprep.subr.bf16.mxu0 0
      %2430 = vmatpush2.bf16.xpose.msra.mxu0 0
      %2431 = vmatprep.subr.bf16.mxu0 0
      %2432 = vmatpush2.bf16.xpose.msra.mxu0 0
      %2433 = vmatprep.subr.bf16.mxu0 0
      %2434 = vmatpush2.bf16.xpose.msra.mxu0 0
      %2435 = vmatprep.subr.bf16.mxu0 0
      %2436 = vmatpush2.bf16.xpose.msra.mxu0 0
      %2437 = vmatprep.subr.bf16.mxu0 0
      %2438 = vmatpush2.bf16.xpose.msra.mxu0 0
      %2439 = vmatprep.mubr.bf16.mxu0 0
      %2440 = vmatmul.mubr.bf16.gmra.mxu0 %v2402
      %v2441 = vpop.f32.mrf.mxu0
      %v2442 = vadd.f32 0.0, %v2441
      %v2443 = vpop.f32.mrf.mxu0
      %v2444 = vpop.f32.mrf.mxu0
      %v2445 = vadd.f32 0.0, %v2444
      %v2446 = vpop.f32.mrf.mxu0
      %2447 = vdwg.mxu0
      %v2448 = vmul.f32 %v2442, 0.35355338
      %v2449 = vmul.f32 %v2445, 0.35355338
      %v2450 = vadd.f32 %v2448, %v931
      %v2451 = vadd.f32 %v2449, %v932
      %v2452 = vsel %vm1199, %v2450, -inf
      %2453 = vmax.xlane.f32.xlu0 %v2452
      %v2454 = vpop.xlane.xlu0 %2453
      %v2455 = vsel %vm1203, %v2451, -inf
      %2456 = vmax.xlane.f32.xlu0 %v2455
      %v2457 = vpop.xlane.xlu0 %2456
      %v2458 = vsub.f32 %v2450, %v2454
      %v2459 = vsub.f32 %v2451, %v2457
      %v2460 = vmul.f32 %v2458, 1.442695
      %v2461 = vpow.pop %v2460
      %v2462 = vmul.f32 %v2459, 1.442695
      %v2463 = vpow.pop %v2462
      %v2464 = vsel %vm1199, %v2461, 0.0
      %2465 = vadd.xlane.f32.xlu0 %v2464
      %v2466 = vpop.xlane.xlu0 %2465
      %v2467 = vsel %vm1203, %v2463, 0.0
      %2468 = vadd.xlane.f32.xlu0 %v2467
      %v2469 = vpop.xlane.xlu0 %2468
      %v2470 = vrcp.pop %v2466
      %v2471 = vmul.f32 %v2461, %v2470
      %v2472 = vrcp.pop %v2469
      %v2473 = vmul.f32 %v2463, %v2472
      %v2474 = vpack.c.bf16 %v2473, %v2471
      %2475 = vrot.lane.b32.xlu0 %v1224, 72
      %v2476 = vpop.permute.xlu0 %2475
      %v2478 = vsel %vm1199, %v2474, 0
      %v2481 = vsel %vm1228, %v2476, 0
      %2483 = vmatprep.subr.bf16.mxu0 0
      %2484 = vmatpush1.bf16.msra.mxu0 0
      %2485 = vmatprep.subr.bf16.mxu0 0
      %2486 = vmatpush1.bf16.msra.mxu0 0
      %2487 = vmatprep.subr.bf16.mxu0 0
      %2488 = vmatpush1.bf16.msra.mxu0 0
      %2489 = vmatprep.subr.bf16.mxu0 0
      %2490 = vmatpush1.bf16.msra.mxu0 0
      %2491 = vmatprep.subr.bf16.mxu0 0
      %2492 = vmatpush1.bf16.msra.mxu0 0
      %2493 = vmatprep.subr.bf16.mxu0 0
      %2494 = vmatpush1.bf16.msra.mxu0 0
      %2495 = vmatprep.subr.bf16.mxu0 0
      %2496 = vmatpush1.bf16.msra.mxu0 0
      %2497 = vmatprep.subr.bf16.mxu0 0
      %2498 = vmatpush1.bf16.msra.mxu0 %v2481
      %2499 = vmatprep.subr.bf16.mxu0 0
      %2500 = vmatpush2.bf16.msra.mxu0 0
      %2501 = vmatprep.subr.bf16.mxu0 0
      %2502 = vmatpush2.bf16.msra.mxu0 0
      %2503 = vmatprep.subr.bf16.mxu0 0
      %2504 = vmatpush2.bf16.msra.mxu0 0
      %2505 = vmatprep.subr.bf16.mxu0 0
      %2506 = vmatpush2.bf16.msra.mxu0 0
      %2507 = vmatprep.subr.bf16.mxu0 0
      %2508 = vmatpush2.bf16.msra.mxu0 0
      %2509 = vmatprep.subr.bf16.mxu0 0
      %2510 = vmatpush2.bf16.msra.mxu0 0
      %2511 = vmatprep.subr.bf16.mxu0 0
      %2512 = vmatpush2.bf16.msra.mxu0 0
      %2513 = vmatprep.subr.bf16.mxu0 0
      %2514 = vmatpush2.bf16.msra.mxu0 0
      %2515 = vmatprep.mubr.bf16.mxu0 0
      %2516 = vmatmul.mubr.bf16.gmra.mxu0 %v2478
      %v2517 = vpop.f32.mrf.mxu0
      %v2518 = vadd.f32 0.0, %v2517
      %v2519 = vpop.f32.mrf.mxu0
      %v2520 = vpop.f32.mrf.mxu0
      %v2521 = vadd.f32 0.0, %v2520
      %v2522 = vpop.f32.mrf.mxu0
      %2523 = vdwg.mxu0
      %v2524 = vld [vmem:[%s19 + $0x38] sm:$0xff]
      %v2525 = vpack.c.bf16 %v2521, %v2518
      %v2526 = vpack.c.bf16 %v2524, %v2524
      %v2528 = vsel %vm1147, %v2525, 0
      %v2531 = vsel %vm1410, %v2526, 0
      %2533 = vmatprep.subr.bf16.mxu0 0
      %2534 = vmatpush1.bf16.msra.mxu0 0
      %2535 = vmatprep.subr.bf16.mxu0 0
      %2536 = vmatpush1.bf16.msra.mxu0 0
      %2537 = vmatprep.subr.bf16.mxu0 0
      %2538 = vmatpush1.bf16.msra.mxu0 0
      %2539 = vmatprep.subr.bf16.mxu0 0
      %2540 = vmatpush1.bf16.msra.mxu0 0
      %2541 = vmatprep.subr.bf16.mxu0 0
      %2542 = vmatpush1.bf16.msra.mxu0 0
      %2543 = vmatprep.subr.bf16.mxu0 0
      %2544 = vmatpush1.bf16.msra.mxu0 0
      %2545 = vmatprep.subr.bf16.mxu0 0
      %2546 = vmatpush1.bf16.msra.mxu0 0
      %2547 = vmatprep.subr.bf16.mxu0 0
      %2548 = vmatpush1.bf16.msra.mxu0 %v2531
      %2549 = vmatprep.subr.bf16.mxu0 0
      %2550 = vmatpush2.bf16.msra.mxu0 0
      %2551 = vmatprep.subr.bf16.mxu0 0
      %2552 = vmatpush2.bf16.msra.mxu0 0
      %2553 = vmatprep.subr.bf16.mxu0 0
      %2554 = vmatpush2.bf16.msra.mxu0 0
      %2555 = vmatprep.subr.bf16.mxu0 0
      %2556 = vmatpush2.bf16.msra.mxu0 0
      %2557 = vmatprep.subr.bf16.mxu0 0
      %2558 = vmatpush2.bf16.msra.mxu0 0
      %2559 = vmatprep.subr.bf16.mxu0 0
      %2560 = vmatpush2.bf16.msra.mxu0 0
      %2561 = vmatprep.subr.bf16.mxu0 0
      %2562 = vmatpush2.bf16.msra.mxu0 0
      %2563 = vmatprep.subr.bf16.mxu0 0
      %2564 = vmatpush2.bf16.msra.mxu0 0
      %2565 = vmatprep.mubr.bf16.mxu0 0
      %2566 = vmatmul.mubr.bf16.gmra.mxu0 %v2528
      %v2567 = vpop.f32.mrf.mxu0
      %v2568 = vadd.f32 0.0, %v2567
      %v2569 = vpop.f32.mrf.mxu0
      %v2570 = vpop.f32.mrf.mxu0
      %v2571 = vadd.f32 0.0, %v2570
      %v2572 = vpop.f32.mrf.mxu0
      %2573 = vdwg.mxu0
      %v2574 = vadd.f32 %v2395, %v2568
      %v2575 = vadd.f32 %v2396, %v2571
      %v2576 = vld [vmem:[%s21] sm:$0x1]
      %v2578 = vlaneseq
      %v2579 = vshrl.u32 %v2578, 7
      %v2580 = vsub.s32 0, %v2579
      %v2581 = vrot.slane %v2576, %v2580
      %v2583 = vadd.f32 %v2574, %v2581
      %v2584 = vadd.f32 %v2575, %v2581
      %v2585 = vadd.f32 %v997, %v2583
      %v2586 = vadd.f32 %v998, %v2584
      %v2587 = vsel %vm999, %v2585, 0.0
      %2588 = vadd.xlane.f32.xlu0 %v2587
      %v2589 = vpop.xlane.xlu0 %2588
      %v2590 = vsel %vm1003, %v2586, 0.0
      %2591 = vadd.xlane.f32.xlu0 %v2590
      %v2592 = vpop.xlane.xlu0 %2591
      %v2593 = vmul.f32 %v2589, %v1007
      %v2594 = vmul.f32 %v2592, %v1007
      %v2595 = vsub.f32 %v2585, %v2593
      %v2596 = vsub.f32 %v2586, %v2594
      %v2597 = vmul.f32 %v2595, %v2595
      %v2598 = vmul.f32 %v2596, %v2596
      %v2599 = vsel %vm999, %v2597, 0.0
      %2600 = vadd.xlane.f32.xlu0 %v2599
      %v2601 = vpop.xlane.xlu0 %2600
      %v2602 = vsel %vm1003, %v2598, 0.0
      %2603 = vadd.xlane.f32.xlu0 %v2602
      %v2604 = vpop.xlane.xlu0 %2603
      %v2605 = vmul.f32 %v2601, 0.015873017
      %v2606 = vmul.f32 %v2604, 0.015873017
      %v2607 = vrsqrt.pop %v2605
      %v2608 = vmul.f32 %v2605, %v2607
      %vm2609 = vcmp.eq.f32.partialorder %v2605, inf
      %v2610 = vsel %vm2609, %v2605, %v2608
      %vm2611 = vcmp.eq.f32.partialorder %v2605, 0.0
      %v2612 = vand.u32 %v2605, 2147483648
      %v2613 = vsel %vm2611, %v2612, %v2610
      %v2614 = vrsqrt.pop %v2606
      %v2615 = vmul.f32 %v2606, %v2614
      %vm2616 = vcmp.eq.f32.partialorder %v2606, inf
      %v2617 = vsel %vm2616, %v2606, %v2615
      %vm2618 = vcmp.eq.f32.partialorder %v2606, 0.0
      %v2619 = vand.u32 %v2606, 2147483648
      %v2620 = vsel %vm2618, %v2619, %v2617
      %v2621 = vld [vmem:[%s23] sm:$0x1]
      %v2623 = vlaneseq
      %v2624 = vshrl.u32 %v2623, 7
      %v2625 = vsub.s32 0, %v2624
      %v2626 = vrot.slane %v2621, %v2625
      %v2628 = vmul.f32 %v2626, %v2595
      %v2629 = vmul.f32 %v2626, %v2596
      %v2630 = vadd.f32 %v2613, 1e-06
      %v2631 = vadd.f32 %v2620, 1e-06
      %v2632 = vrcp.pop %v2630
      %v2633 = vmul.f32 %v2628, %v2632
      %v2634 = vrcp.pop %v2631
      %v2635 = vmul.f32 %v2629, %v2634
      %v2636 = vld [vmem:[%s25] sm:$0x1]
      %v2638 = vlaneseq
      %v2639 = vshrl.u32 %v2638, 7
      %v2640 = vsub.s32 0, %v2639
      %v2641 = vrot.slane %v2636, %v2640
      %v2643 = vadd.f32 %v2633, %v2641
      %v2644 = vadd.f32 %v2635, %v2641
      %v2645 = vld [vmem:[%s27] sm:$0xff]
      %v2646 = vld [vmem:[%s27 + $0x8] sm:$0xff]
      %v2647 = vld [vmem:[%s27 + $0x10] sm:$0xff]
      %v2648 = vld [vmem:[%s27 + $0x18] sm:$0xff]
      %v2649 = vld [vmem:[%s27 + $0x20] sm:$0xff]
      %v2650 = vld [vmem:[%s27 + $0x28] sm:$0xff]
      %v2651 = vld [vmem:[%s27 + $0x30] sm:$0xff]
      %v2652 = vld [vmem:[%s27 + $0x38] sm:$0xff]
      %v2653 = vpack.c.bf16 %v2644, %v2643
      %v2654 = vpack.c.bf16 %v2646, %v2645
      %v2655 = vpack.c.bf16 %v2648, %v2647
      %v2656 = vpack.c.bf16 %v2650, %v2649
      %v2657 = vpack.c.bf16 %v2652, %v2651
      %v2658 = vld [vmem:[%s29] sm:$0x1]
      %v2660 = vlaneseq
      %v2661 = vshrl.u32 %v2660, 7
      %v2662 = vsub.s32 0, %v2661
      %v2663 = vrot.slane %v2658, %v2662
      %v2666 = vsel %vm999, %v2653, 0
      %2668 = vmatprep.subr.bf16.mxu0 0
      %2669 = vmatpush1.bf16.msra.mxu0 0
      %2670 = vmatprep.subr.bf16.mxu0 0
      %2671 = vmatpush1.bf16.msra.mxu0 0
      %2672 = vmatprep.subr.bf16.mxu0 0
      %2673 = vmatpush1.bf16.msra.mxu0 0
      %2674 = vmatprep.subr.bf16.mxu0 0
      %2675 = vmatpush1.bf16.msra.mxu0 0
      %2676 = vmatprep.subr.bf16.mxu0 0
      %2677 = vmatpush1.bf16.msra.mxu0 %v2657
      %2678 = vmatprep.subr.bf16.mxu0 0
      %2679 = vmatpush1.bf16.msra.mxu0 %v2656
      %2680 = vmatprep.subr.bf16.mxu0 0
      %2681 = vmatpush1.bf16.msra.mxu0 %v2655
      %2682 = vmatprep.subr.bf16.mxu0 0
      %2683 = vmatpush1.bf16.msra.mxu0 %v2654
      %2684 = vmatprep.subr.bf16.mxu0 0
      %2685 = vmatpush2.bf16.msra.mxu0 0
      %2686 = vmatprep.subr.bf16.mxu0 0
      %2687 = vmatpush2.bf16.msra.mxu0 0
      %2688 = vmatprep.subr.bf16.mxu0 0
      %2689 = vmatpush2.bf16.msra.mxu0 0
      %2690 = vmatprep.subr.bf16.mxu0 0
      %2691 = vmatpush2.bf16.msra.mxu0 0
      %2692 = vmatprep.subr.bf16.mxu0 0
      %2693 = vmatpush2.bf16.msra.mxu0 0
      %2694 = vmatprep.subr.bf16.mxu0 0
      %2695 = vmatpush2.bf16.msra.mxu0 0
      %2696 = vmatprep.subr.bf16.mxu0 0
      %2697 = vmatpush2.bf16.msra.mxu0 0
      %2698 = vmatprep.subr.bf16.mxu0 0
      %2699 = vmatpush2.bf16.msra.mxu0 0
      %2700 = vmatprep.mubr.bf16.mxu0 0
      %2701 = vmatmul.mubr.bf16.gmra.mxu0 %v2666
      %v2702 = vpop.f32.mrf.mxu0
      %v2703 = vadd.f32 %v2663, %v2702
      %v2704 = vpop.f32.mrf.mxu0
      %v2705 = vpop.f32.mrf.mxu0
      %v2706 = vadd.f32 %v2663, %v2705
      %v2707 = vpop.f32.mrf.mxu0
      %2708 = vdwg.mxu0
      %v2709 = vld [vmem:[%s31] sm:$0xff]
      %v2710 = vld [vmem:[%s31 + $0x8] sm:$0xff]
      %v2711 = vld [vmem:[%s31 + $0x10] sm:$0xff]
      %v2712 = vld [vmem:[%s31 + $0x18] sm:$0xff]
      %v2713 = vld [vmem:[%s31 + $0x20] sm:$0xff]
      %v2714 = vld [vmem:[%s31 + $0x28] sm:$0xff]
      %v2715 = vld [vmem:[%s31 + $0x30] sm:$0xff]
      %v2716 = vld [vmem:[%s31 + $0x38] sm:$0xff]
      %v2717 = vpack.c.bf16 %v923, %v923
      %v2718 = vpack.c.bf16 %v2710, %v2709
      %v2719 = vpack.c.bf16 %v2712, %v2711
      %v2720 = vpack.c.bf16 %v2714, %v2713
      %v2721 = vpack.c.bf16 %v2716, %v2715
      %v2722 = vld [vmem:[%s33] sm:$0x1]
      %v2724 = vlaneseq
      %v2725 = vshrl.u32 %v2724, 7
      %v2726 = vsub.s32 0, %v2725
      %v2727 = vrot.slane %v2722, %v2726
      %v2730 = vsel %vm999, %v2717, 0
      %2732 = vmatprep.subr.bf16.mxu0 0
      %2733 = vmatpush1.bf16.msra.mxu0 0
      %2734 = vmatprep.subr.bf16.mxu0 0
      %2735 = vmatpush1.bf16.msra.mxu0 0
      %2736 = vmatprep.subr.bf16.mxu0 0
      %2737 = vmatpush1.bf16.msra.mxu0 0
      %2738 = vmatprep.subr.bf16.mxu0 0
      %2739 = vmatpush1.bf16.msra.mxu0 0
      %2740 = vmatprep.subr.bf16.mxu0 0
      %2741 = vmatpush1.bf16.msra.mxu0 %v2721
      %2742 = vmatprep.subr.bf16.mxu0 0
      %2743 = vmatpush1.bf16.msra.mxu0 %v2720
      %2744 = vmatprep.subr.bf16.mxu0 0
      %2745 = vmatpush1.bf16.msra.mxu0 %v2719
      %2746 = vmatprep.subr.bf16.mxu0 0
      %2747 = vmatpush1.bf16.msra.mxu0 %v2718
      %2748 = vmatprep.subr.bf16.mxu0 0
      %2749 = vmatpush2.bf16.msra.mxu0 0
      %2750 = vmatprep.subr.bf16.mxu0 0
      %2751 = vmatpush2.bf16.msra.mxu0 0
      %2752 = vmatprep.subr.bf16.mxu0 0
      %2753 = vmatpush2.bf16.msra.mxu0 0
      %2754 = vmatprep.subr.bf16.mxu0 0
      %2755 = vmatpush2.bf16.msra.mxu0 0
      %2756 = vmatprep.subr.bf16.mxu0 0
      %2757 = vmatpush2.bf16.msra.mxu0 0
      %2758 = vmatprep.subr.bf16.mxu0 0
      %2759 = vmatpush2.bf16.msra.mxu0 0
      %2760 = vmatprep.subr.bf16.mxu0 0
      %2761 = vmatpush2.bf16.msra.mxu0 0
      %2762 = vmatprep.subr.bf16.mxu0 0
      %2763 = vmatpush2.bf16.msra.mxu0 0
      %2764 = vmatprep.mubr.bf16.mxu0 0
      %2765 = vmatmul.mubr.bf16.gmra.mxu0 %v2730
      %v2766 = vpop.f32.mrf.mxu0
      %v2767 = vadd.f32 %v2727, %v2766
      %v2768 = vpop.f32.mrf.mxu0
      %v2769 = vpop.f32.mrf.mxu0
      %v2770 = vpop.f32.mrf.mxu0
      %2771 = vdwg.mxu0
      %v2772 = vpack.c.bf16 %v2706, %v2703
      %v2773 = vpack.c.bf16 %v2767, %v2767
      %v2775 = vsel %vm1147, %v2772, 0
      %v2778 = vsel %vm1147, %v2773, 0
      %2780 = vmatprep.subr.bf16.mxu0 0
      %2781 = vmatpush1.bf16.xpose.msra.mxu0 0
      %2782 = vmatprep.subr.bf16.mxu0 0
      %2783 = vmatpush1.bf16.xpose.msra.mxu0 0
      %2784 = vmatprep.subr.bf16.mxu0 0
      %2785 = vmatpush1.bf16.xpose.msra.mxu0 0
      %2786 = vmatprep.subr.bf16.mxu0 0
      %2787 = vmatpush1.bf16.xpose.msra.mxu0 0
      %2788 = vmatprep.subr.bf16.mxu0 0
      %2789 = vmatpush1.bf16.xpose.msra.mxu0 0
      %2790 = vmatprep.subr.bf16.mxu0 0
      %2791 = vmatpush1.bf16.xpose.msra.mxu0 0
      %2792 = vmatprep.subr.bf16.mxu0 0
      %2793 = vmatpush1.bf16.xpose.msra.mxu0 0
      %2794 = vmatprep.subr.bf16.mxu0 0
      %2795 = vmatpush1.bf16.xpose.msra.mxu0 %v2778
      %2796 = vmatprep.subr.bf16.mxu0 0
      %2797 = vmatpush2.bf16.xpose.msra.mxu0 0
      %2798 = vmatprep.subr.bf16.mxu0 0
      %2799 = vmatpush2.bf16.xpose.msra.mxu0 0
      %2800 = vmatprep.subr.bf16.mxu0 0
      %2801 = vmatpush2.bf16.xpose.msra.mxu0 0
      %2802 = vmatprep.subr.bf16.mxu0 0
      %2803 = vmatpush2.bf16.xpose.msra.mxu0 0
      %2804 = vmatprep.subr.bf16.mxu0 0
      %2805 = vmatpush2.bf16.xpose.msra.mxu0 0
      %2806 = vmatprep.subr.bf16.mxu0 0
      %2807 = vmatpush2.bf16.xpose.msra.mxu0 0
      %2808 = vmatprep.subr.bf16.mxu0 0
      %2809 = vmatpush2.bf16.xpose.msra.mxu0 0
      %2810 = vmatprep.subr.bf16.mxu0 0
      %2811 = vmatpush2.bf16.xpose.msra.mxu0 0
      %2812 = vmatprep.mubr.bf16.mxu0 0
      %2813 = vmatmul.mubr.bf16.gmra.mxu0 %v2775
      %v2814 = vpop.f32.mrf.mxu0
      %v2815 = vadd.f32 0.0, %v2814
      %v2816 = vpop.f32.mrf.mxu0
      %v2817 = vpop.f32.mrf.mxu0
      %v2818 = vadd.f32 0.0, %v2817
      %v2819 = vpop.f32.mrf.mxu0
      %2820 = vdwg.mxu0
      %v2821 = vmul.f32 %v2815, 0.35355338
      %v2822 = vmul.f32 %v2818, 0.35355338
      %vm2823 = vcmask 56320
      %v2824 = vsel %vm2823, %v2821, -inf
      %2825 = vmax.xlane.f32.xlu0 %v2824
      %v2826 = vpop.xlane.xlu0 %2825
      %vm2827 = vcmask 52224
      %v2828 = vsel %vm2827, %v2822, -inf
      %2829 = vmax.xlane.f32.xlu0 %v2828
      %v2830 = vpop.xlane.xlu0 %2829
      %v2831 = vsub.f32 %v2821, %v2826
      %v2832 = vsub.f32 %v2822, %v2830
      %v2833 = vmul.f32 %v2831, 1.442695
      %v2834 = vpow.pop %v2833
      %v2835 = vmul.f32 %v2832, 1.442695
      %v2836 = vpow.pop %v2835
      %v2837 = vsel %vm2823, %v2834, 0.0
      %2838 = vadd.xlane.f32.xlu0 %v2837
      %v2839 = vpop.xlane.xlu0 %2838
      %v2840 = vsel %vm2827, %v2836, 0.0
      %2841 = vadd.xlane.f32.xlu0 %v2840
      %v2842 = vpop.xlane.xlu0 %2841
      %v2843 = vrcp.pop %v2839
      %v2844 = vmul.f32 %v2834, %v2843
      %v2845 = vrcp.pop %v2842
      %v2846 = vmul.f32 %v2836, %v2845
      %v2847 = vpack.c.bf16 %v2846, %v2844
      %2849 = vrot.lane.b32.xlu0 %v2773, 64
      %v2850 = vpop.permute.xlu0 %2849
      %v2852 = vsel %vm2823, %v2847, 0
      %vm2854 = vcmask 1042432
      %v2855 = vsel %vm2854, 4294967295, 65535
      %v2856 = vsel %vm1410, %v2855, 0
      %v2858 = vand.u32 %v2850, %v2856
      %2860 = vmatprep.subr.bf16.mxu0 0
      %2861 = vmatpush1.bf16.msra.mxu0 0
      %2862 = vmatprep.subr.bf16.mxu0 0
      %2863 = vmatpush1.bf16.msra.mxu0 0
      %2864 = vmatprep.subr.bf16.mxu0 0
      %2865 = vmatpush1.bf16.msra.mxu0 0
      %2866 = vmatprep.subr.bf16.mxu0 0
      %2867 = vmatpush1.bf16.msra.mxu0 0
      %2868 = vmatprep.subr.bf16.mxu0 0
      %2869 = vmatpush1.bf16.msra.mxu0 0
      %2870 = vmatprep.subr.bf16.mxu0 0
      %2871 = vmatpush1.bf16.msra.mxu0 0
      %2872 = vmatprep.subr.bf16.mxu0 0
      %2873 = vmatpush1.bf16.msra.mxu0 0
      %2874 = vmatprep.subr.bf16.mxu0 0
      %2875 = vmatpush1.bf16.msra.mxu0 %v2858
      %2876 = vmatprep.subr.bf16.mxu0 0
      %2877 = vmatpush2.bf16.msra.mxu0 0
      %2878 = vmatprep.subr.bf16.mxu0 0
      %2879 = vmatpush2.bf16.msra.mxu0 0
      %2880 = vmatprep.subr.bf16.mxu0 0
      %2881 = vmatpush2.bf16.msra.mxu0 0
      %2882 = vmatprep.subr.bf16.mxu0 0
      %2883 = vmatpush2.bf16.msra.mxu0 0
      %2884 = vmatprep.subr.bf16.mxu0 0
      %2885 = vmatpush2.bf16.msra.mxu0 0
      %2886 = vmatprep.subr.bf16.mxu0 0
      %2887 = vmatpush2.bf16.msra.mxu0 0
      %2888 = vmatprep.subr.bf16.mxu0 0
      %2889 = vmatpush2.bf16.msra.mxu0 0
      %2890 = vmatprep.subr.bf16.mxu0 0
      %2891 = vmatpush2.bf16.msra.mxu0 0
      %2892 = vmatprep.mubr.bf16.mxu0 0
      %2893 = vmatmul.mubr.bf16.gmra.mxu0 %v2852
      %v2894 = vpop.f32.mrf.mxu0
      %v2895 = vadd.f32 0.0, %v2894
      %v2896 = vpop.f32.mrf.mxu0
      %v2897 = vpop.f32.mrf.mxu0
      %v2898 = vadd.f32 0.0, %v2897
      %v2899 = vpop.f32.mrf.mxu0
      %2900 = vdwg.mxu0
      %v2901 = vld [vmem:[%s35] sm:$0xff]
      %v2902 = vpack.c.bf16 %v2898, %v2895
      %v2903 = vpack.c.bf16 %v2901, %v2901
      %2905 = vrot.lane.b32.xlu0 %v2772, 120
      %v2906 = vpop.permute.xlu0 %2905
      %2907 = vrot.lane.b32.xlu0 %v2773, 120
      %v2908 = vpop.permute.xlu0 %2907
      %v2910 = vsel %vm1147, %v2906, 0
      %v2913 = vsel %vm1147, %v2908, 0
      %2915 = vmatprep.subr.bf16.mxu0 0
      %2916 = vmatpush1.bf16.xpose.msra.mxu0 0
      %2917 = vmatprep.subr.bf16.mxu0 0
      %2918 = vmatpush1.bf16.xpose.msra.mxu0 0
      %2919 = vmatprep.subr.bf16.mxu0 0
      %2920 = vmatpush1.bf16.xpose.msra.mxu0 0
      %2921 = vmatprep.subr.bf16.mxu0 0
      %2922 = vmatpush1.bf16.xpose.msra.mxu0 0
      %2923 = vmatprep.subr.bf16.mxu0 0
      %2924 = vmatpush1.bf16.xpose.msra.mxu0 0
      %2925 = vmatprep.subr.bf16.mxu0 0
      %2926 = vmatpush1.bf16.xpose.msra.mxu0 0
      %2927 = vmatprep.subr.bf16.mxu0 0
      %2928 = vmatpush1.bf16.xpose.msra.mxu0 0
      %2929 = vmatprep.subr.bf16.mxu0 0
      %2930 = vmatpush1.bf16.xpose.msra.mxu0 %v2913
      %2931 = vmatprep.subr.bf16.mxu0 0
      %2932 = vmatpush2.bf16.xpose.msra.mxu0 0
      %2933 = vmatprep.subr.bf16.mxu0 0
      %2934 = vmatpush2.bf16.xpose.msra.mxu0 0
      %2935 = vmatprep.subr.bf16.mxu0 0
      %2936 = vmatpush2.bf16.xpose.msra.mxu0 0
      %2937 = vmatprep.subr.bf16.mxu0 0
      %2938 = vmatpush2.bf16.xpose.msra.mxu0 0
      %2939 = vmatprep.subr.bf16.mxu0 0
      %2940 = vmatpush2.bf16.xpose.msra.mxu0 0
      %2941 = vmatprep.subr.bf16.mxu0 0
      %2942 = vmatpush2.bf16.xpose.msra.mxu0 0
      %2943 = vmatprep.subr.bf16.mxu0 0
      %2944 = vmatpush2.bf16.xpose.msra.mxu0 0
      %2945 = vmatprep.subr.bf16.mxu0 0
      %2946 = vmatpush2.bf16.xpose.msra.mxu0 0
      %2947 = vmatprep.mubr.bf16.mxu0 0
      %2948 = vmatmul.mubr.bf16.gmra.mxu0 %v2910
      %v2949 = vpop.f32.mrf.mxu0
      %v2950 = vadd.f32 0.0, %v2949
      %v2951 = vpop.f32.mrf.mxu0
      %v2952 = vpop.f32.mrf.mxu0
      %v2953 = vadd.f32 0.0, %v2952
      %v2954 = vpop.f32.mrf.mxu0
      %2955 = vdwg.mxu0
      %v2956 = vmul.f32 %v2950, 0.35355338
      %v2957 = vmul.f32 %v2953, 0.35355338
      %v2958 = vsel %vm2823, %v2956, -inf
      %2959 = vmax.xlane.f32.xlu0 %v2958
      %v2960 = vpop.xlane.xlu0 %2959
      %v2961 = vsel %vm2827, %v2957, -inf
      %2962 = vmax.xlane.f32.xlu0 %v2961
      %v2963 = vpop.xlane.xlu0 %2962
      %v2964 = vsub.f32 %v2956, %v2960
      %v2965 = vsub.f32 %v2957, %v2963
      %v2966 = vmul.f32 %v2964, 1.442695
      %v2967 = vpow.pop %v2966
      %v2968 = vmul.f32 %v2965, 1.442695
      %v2969 = vpow.pop %v2968
      %v2970 = vsel %vm2823, %v2967, 0.0
      %2971 = vadd.xlane.f32.xlu0 %v2970
      %v2972 = vpop.xlane.xlu0 %2971
      %v2973 = vsel %vm2827, %v2969, 0.0
      %2974 = vadd.xlane.f32.xlu0 %v2973
      %v2975 = vpop.xlane.xlu0 %2974
      %v2976 = vrcp.pop %v2972
      %v2977 = vmul.f32 %v2967, %v2976
      %v2978 = vrcp.pop %v2975
      %v2979 = vmul.f32 %v2969, %v2978
      %v2980 = vpack.c.bf16 %v2979, %v2977
      %2981 = vrot.lane.b32.xlu0 %v2773, 56
      %v2982 = vpop.permute.xlu0 %2981
      %v2984 = vsel %vm2823, %v2980, 0
      %v2987 = vand.u32 %v2982, %v2856
      %2989 = vmatprep.subr.bf16.mxu0 0
      %2990 = vmatpush1.bf16.msra.mxu0 0
      %2991 = vmatprep.subr.bf16.mxu0 0
      %2992 = vmatpush1.bf16.msra.mxu0 0
      %2993 = vmatprep.subr.bf16.mxu0 0
      %2994 = vmatpush1.bf16.msra.mxu0 0
      %2995 = vmatprep.subr.bf16.mxu0 0
      %2996 = vmatpush1.bf16.msra.mxu0 0
      %2997 = vmatprep.subr.bf16.mxu0 0
      %2998 = vmatpush1.bf16.msra.mxu0 0
      %2999 = vmatprep.subr.bf16.mxu0 0
      %3000 = vmatpush1.bf16.msra.mxu0 0
      %3001 = vmatprep.subr.bf16.mxu0 0
      %3002 = vmatpush1.bf16.msra.mxu0 0
      %3003 = vmatprep.subr.bf16.mxu0 0
      %3004 = vmatpush1.bf16.msra.mxu0 %v2987
      %3005 = vmatprep.subr.bf16.mxu0 0
      %3006 = vmatpush2.bf16.msra.mxu0 0
      %3007 = vmatprep.subr.bf16.mxu0 0
      %3008 = vmatpush2.bf16.msra.mxu0 0
      %3009 = vmatprep.subr.bf16.mxu0 0
      %3010 = vmatpush2.bf16.msra.mxu0 0
      %3011 = vmatprep.subr.bf16.mxu0 0
      %3012 = vmatpush2.bf16.msra.mxu0 0
      %3013 = vmatprep.subr.bf16.mxu0 0
      %3014 = vmatpush2.bf16.msra.mxu0 0
      %3015 = vmatprep.subr.bf16.mxu0 0
      %3016 = vmatpush2.bf16.msra.mxu0 0
      %3017 = vmatprep.subr.bf16.mxu0 0
      %3018 = vmatpush2.bf16.msra.mxu0 0
      %3019 = vmatprep.subr.bf16.mxu0 0
      %3020 = vmatpush2.bf16.msra.mxu0 0
      %3021 = vmatprep.mubr.bf16.mxu0 0
      %3022 = vmatmul.mubr.bf16.gmra.mxu0 %v2984
      %v3023 = vpop.f32.mrf.mxu0
      %v3024 = vadd.f32 0.0, %v3023
      %v3025 = vpop.f32.mrf.mxu0
      %v3026 = vpop.f32.mrf.mxu0
      %v3027 = vadd.f32 0.0, %v3026
      %v3028 = vpop.f32.mrf.mxu0
      %3029 = vdwg.mxu0
      %v3030 = vld [vmem:[%s35 + $0x8] sm:$0xff]
      %v3031 = vpack.c.bf16 %v3027, %v3024
      %v3032 = vpack.c.bf16 %v3030, %v3030
      %v3034 = vsel %vm1147, %v3031, 0
      %v3037 = vsel %vm1410, %v3032, 0
      %3039 = vmatprep.subr.bf16.mxu0 0
      %3040 = vmatpush1.bf16.msra.mxu0 0
      %3041 = vmatprep.subr.bf16.mxu0 0
      %3042 = vmatpush1.bf16.msra.mxu0 0
      %3043 = vmatprep.subr.bf16.mxu0 0
      %3044 = vmatpush1.bf16.msra.mxu0 0
      %3045 = vmatprep.subr.bf16.mxu0 0
      %3046 = vmatpush1.bf16.msra.mxu0 0
      %3047 = vmatprep.subr.bf16.mxu0 0
      %3048 = vmatpush1.bf16.msra.mxu0 0
      %3049 = vmatprep.subr.bf16.mxu0 0
      %3050 = vmatpush1.bf16.msra.mxu0 0
      %3051 = vmatprep.subr.bf16.mxu0 0
      %3052 = vmatpush1.bf16.msra.mxu0 0
      %3053 = vmatprep.subr.bf16.mxu0 0
      %3054 = vmatpush1.bf16.msra.mxu0 %v3037
      %3055 = vmatprep.subr.bf16.mxu0 0
      %3056 = vmatpush2.bf16.msra.mxu0 0
      %3057 = vmatprep.subr.bf16.mxu0 0
      %3058 = vmatpush2.bf16.msra.mxu0 0
      %3059 = vmatprep.subr.bf16.mxu0 0
      %3060 = vmatpush2.bf16.msra.mxu0 0
      %3061 = vmatprep.subr.bf16.mxu0 0
      %3062 = vmatpush2.bf16.msra.mxu0 0
      %3063 = vmatprep.subr.bf16.mxu0 0
      %3064 = vmatpush2.bf16.msra.mxu0 0
      %3065 = vmatprep.subr.bf16.mxu0 0
      %3066 = vmatpush2.bf16.msra.mxu0 0
      %3067 = vmatprep.subr.bf16.mxu0 0
      %3068 = vmatpush2.bf16.msra.mxu0 0
      %3069 = vmatprep.subr.bf16.mxu0 0
      %3070 = vmatpush2.bf16.msra.mxu0 0
      %3071 = vmatprep.mubr.bf16.mxu0 0
      %3072 = vmatmul.mubr.bf16.gmra.mxu0 %v3034
      %v3073 = vpop.f32.mrf.mxu0
      %v3074 = vadd.f32 0.0, %v3073
      %v3075 = vpop.f32.mrf.mxu0
      %v3076 = vpop.f32.mrf.mxu0
      %v3077 = vadd.f32 0.0, %v3076
      %v3078 = vpop.f32.mrf.mxu0
      %3079 = vdwg.mxu0
      %v3081 = vsel %vm1147, %v2902, 0
      %v3084 = vsel %vm1410, %v2903, 0
      %3086 = vmatprep.subr.bf16.mxu0 0
      %3087 = vmatpush1.bf16.msra.mxu0 0
      %3088 = vmatprep.subr.bf16.mxu0 0
      %3089 = vmatpush1.bf16.msra.mxu0 0
      %3090 = vmatprep.subr.bf16.mxu0 0
      %3091 = vmatpush1.bf16.msra.mxu0 0
      %3092 = vmatprep.subr.bf16.mxu0 0
      %3093 = vmatpush1.bf16.msra.mxu0 0
      %3094 = vmatprep.subr.bf16.mxu0 0
      %3095 = vmatpush1.bf16.msra.mxu0 0
      %3096 = vmatprep.subr.bf16.mxu0 0
      %3097 = vmatpush1.bf16.msra.mxu0 0
      %3098 = vmatprep.subr.bf16.mxu0 0
      %3099 = vmatpush1.bf16.msra.mxu0 0
      %3100 = vmatprep.subr.bf16.mxu0 0
      %3101 = vmatpush1.bf16.msra.mxu0 %v3084
      %3102 = vmatprep.subr.bf16.mxu0 0
      %3103 = vmatpush2.bf16.msra.mxu0 0
      %3104 = vmatprep.subr.bf16.mxu0 0
      %3105 = vmatpush2.bf16.msra.mxu0 0
      %3106 = vmatprep.subr.bf16.mxu0 0
      %3107 = vmatpush2.bf16.msra.mxu0 0
      %3108 = vmatprep.subr.bf16.mxu0 0
      %3109 = vmatpush2.bf16.msra.mxu0 0
      %3110 = vmatprep.subr.bf16.mxu0 0
      %3111 = vmatpush2.bf16.msra.mxu0 0
      %3112 = vmatprep.subr.bf16.mxu0 0
      %3113 = vmatpush2.bf16.msra.mxu0 0
      %3114 = vmatprep.subr.bf16.mxu0 0
      %3115 = vmatpush2.bf16.msra.mxu0 0
      %3116 = vmatprep.subr.bf16.mxu0 0
      %3117 = vmatpush2.bf16.msra.mxu0 0
      %3118 = vmatprep.mubr.bf16.mxu0 0
      %3119 = vmatmul.mubr.bf16.gmra.mxu0 %v3081
      %v3120 = vpop.f32.mrf.mxu0
      %v3121 = vadd.f32 %v3074, %v3120
      %v3122 = vpop.f32.mrf.mxu0
      %v3123 = vpop.f32.mrf.mxu0
      %v3124 = vadd.f32 %v3077, %v3123
      %v3125 = vpop.f32.mrf.mxu0
      %3126 = vdwg.mxu0
      %3127 = vrot.lane.b32.xlu0 %v2772, 112
      %v3128 = vpop.permute.xlu0 %3127
      %3129 = vrot.lane.b32.xlu0 %v2773, 112
      %v3130 = vpop.permute.xlu0 %3129
      %v3132 = vsel %vm1147, %v3128, 0
      %v3135 = vsel %vm1147, %v3130, 0
      %3137 = vmatprep.subr.bf16.mxu0 0
      %3138 = vmatpush1.bf16.xpose.msra.mxu0 0
      %3139 = vmatprep.subr.bf16.mxu0 0
      %3140 = vmatpush1.bf16.xpose.msra.mxu0 0
      %3141 = vmatprep.subr.bf16.mxu0 0
      %3142 = vmatpush1.bf16.xpose.msra.mxu0 0
      %3143 = vmatprep.subr.bf16.mxu0 0
      %3144 = vmatpush1.bf16.xpose.msra.mxu0 0
      %3145 = vmatprep.subr.bf16.mxu0 0
      %3146 = vmatpush1.bf16.xpose.msra.mxu0 0
      %3147 = vmatprep.subr.bf16.mxu0 0
      %3148 = vmatpush1.bf16.xpose.msra.mxu0 0
      %3149 = vmatprep.subr.bf16.mxu0 0
      %3150 = vmatpush1.bf16.xpose.msra.mxu0 0
      %3151 = vmatprep.subr.bf16.mxu0 0
      %3152 = vmatpush1.bf16.xpose.msra.mxu0 %v3135
      %3153 = vmatprep.subr.bf16.mxu0 0
      %3154 = vmatpush2.bf16.xpose.msra.mxu0 0
      %3155 = vmatprep.subr.bf16.mxu0 0
      %3156 = vmatpush2.bf16.xpose.msra.mxu0 0
      %3157 = vmatprep.subr.bf16.mxu0 0
      %3158 = vmatpush2.bf16.xpose.msra.mxu0 0
      %3159 = vmatprep.subr.bf16.mxu0 0
      %3160 = vmatpush2.bf16.xpose.msra.mxu0 0
      %3161 = vmatprep.subr.bf16.mxu0 0
      %3162 = vmatpush2.bf16.xpose.msra.mxu0 0
      %3163 = vmatprep.subr.bf16.mxu0 0
      %3164 = vmatpush2.bf16.xpose.msra.mxu0 0
      %3165 = vmatprep.subr.bf16.mxu0 0
      %3166 = vmatpush2.bf16.xpose.msra.mxu0 0
      %3167 = vmatprep.subr.bf16.mxu0 0
      %3168 = vmatpush2.bf16.xpose.msra.mxu0 0
      %3169 = vmatprep.mubr.bf16.mxu0 0
      %3170 = vmatmul.mubr.bf16.gmra.mxu0 %v3132
      %v3171 = vpop.f32.mrf.mxu0
      %v3172 = vadd.f32 0.0, %v3171
      %v3173 = vpop.f32.mrf.mxu0
      %v3174 = vpop.f32.mrf.mxu0
      %v3175 = vadd.f32 0.0, %v3174
      %v3176 = vpop.f32.mrf.mxu0
      %3177 = vdwg.mxu0
      %v3178 = vmul.f32 %v3172, 0.35355338
      %v3179 = vmul.f32 %v3175, 0.35355338
      %v3180 = vsel %vm2823, %v3178, -inf
      %3181 = vmax.xlane.f32.xlu0 %v3180
      %v3182 = vpop.xlane.xlu0 %3181
      %v3183 = vsel %vm2827, %v3179, -inf
      %3184 = vmax.xlane.f32.xlu0 %v3183
      %v3185 = vpop.xlane.xlu0 %3184
      %v3186 = vsub.f32 %v3178, %v3182
      %v3187 = vsub.f32 %v3179, %v3185
      %v3188 = vmul.f32 %v3186, 1.442695
      %v3189 = vpow.pop %v3188
      %v3190 = vmul.f32 %v3187, 1.442695
      %v3191 = vpow.pop %v3190
      %v3192 = vsel %vm2823, %v3189, 0.0
      %3193 = vadd.xlane.f32.xlu0 %v3192
      %v3194 = vpop.xlane.xlu0 %3193
      %v3195 = vsel %vm2827, %v3191, 0.0
      %3196 = vadd.xlane.f32.xlu0 %v3195
      %v3197 = vpop.xlane.xlu0 %3196
      %v3198 = vrcp.pop %v3194
      %v3199 = vmul.f32 %v3189, %v3198
      %v3200 = vrcp.pop %v3197
      %v3201 = vmul.f32 %v3191, %v3200
      %v3202 = vpack.c.bf16 %v3201, %v3199
      %3203 = vrot.lane.b32.xlu0 %v2773, 48
      %v3204 = vpop.permute.xlu0 %3203
      %v3206 = vsel %vm2823, %v3202, 0
      %v3209 = vand.u32 %v3204, %v2856
      %3211 = vmatprep.subr.bf16.mxu0 0
      %3212 = vmatpush1.bf16.msra.mxu0 0
      %3213 = vmatprep.subr.bf16.mxu0 0
      %3214 = vmatpush1.bf16.msra.mxu0 0
      %3215 = vmatprep.subr.bf16.mxu0 0
      %3216 = vmatpush1.bf16.msra.mxu0 0
      %3217 = vmatprep.subr.bf16.mxu0 0
      %3218 = vmatpush1.bf16.msra.mxu0 0
      %3219 = vmatprep.subr.bf16.mxu0 0
      %3220 = vmatpush1.bf16.msra.mxu0 0
      %3221 = vmatprep.subr.bf16.mxu0 0
      %3222 = vmatpush1.bf16.msra.mxu0 0
      %3223 = vmatprep.subr.bf16.mxu0 0
      %3224 = vmatpush1.bf16.msra.mxu0 0
      %3225 = vmatprep.subr.bf16.mxu0 0
      %3226 = vmatpush1.bf16.msra.mxu0 %v3209
      %3227 = vmatprep.subr.bf16.mxu0 0
      %3228 = vmatpush2.bf16.msra.mxu0 0
      %3229 = vmatprep.subr.bf16.mxu0 0
      %3230 = vmatpush2.bf16.msra.mxu0 0
      %3231 = vmatprep.subr.bf16.mxu0 0
      %3232 = vmatpush2.bf16.msra.mxu0 0
      %3233 = vmatprep.subr.bf16.mxu0 0
      %3234 = vmatpush2.bf16.msra.mxu0 0
      %3235 = vmatprep.subr.bf16.mxu0 0
      %3236 = vmatpush2.bf16.msra.mxu0 0
      %3237 = vmatprep.subr.bf16.mxu0 0
      %3238 = vmatpush2.bf16.msra.mxu0 0
      %3239 = vmatprep.subr.bf16.mxu0 0
      %3240 = vmatpush2.bf16.msra.mxu0 0
      %3241 = vmatprep.subr.bf16.mxu0 0
      %3242 = vmatpush2.bf16.msra.mxu0 0
      %3243 = vmatprep.mubr.bf16.mxu0 0
      %3244 = vmatmul.mubr.bf16.gmra.mxu0 %v3206
      %v3245 = vpop.f32.mrf.mxu0
      %v3246 = vadd.f32 0.0, %v3245
      %v3247 = vpop.f32.mrf.mxu0
      %v3248 = vpop.f32.mrf.mxu0
      %v3249 = vadd.f32 0.0, %v3248
      %v3250 = vpop.f32.mrf.mxu0
      %3251 = vdwg.mxu0
      %v3252 = vld [vmem:[%s35 + $0x10] sm:$0xff]
      %v3253 = vpack.c.bf16 %v3249, %v3246
      %v3254 = vpack.c.bf16 %v3252, %v3252
      %v3256 = vsel %vm1147, %v3253, 0
      %v3259 = vsel %vm1410, %v3254, 0
      %3261 = vmatprep.subr.bf16.mxu0 0
      %3262 = vmatpush1.bf16.msra.mxu0 0
      %3263 = vmatprep.subr.bf16.mxu0 0
      %3264 = vmatpush1.bf16.msra.mxu0 0
      %3265 = vmatprep.subr.bf16.mxu0 0
      %3266 = vmatpush1.bf16.msra.mxu0 0
      %3267 = vmatprep.subr.bf16.mxu0 0
      %3268 = vmatpush1.bf16.msra.mxu0 0
      %3269 = vmatprep.subr.bf16.mxu0 0
      %3270 = vmatpush1.bf16.msra.mxu0 0
      %3271 = vmatprep.subr.bf16.mxu0 0
      %3272 = vmatpush1.bf16.msra.mxu0 0
      %3273 = vmatprep.subr.bf16.mxu0 0
      %3274 = vmatpush1.bf16.msra.mxu0 0
      %3275 = vmatprep.subr.bf16.mxu0 0
      %3276 = vmatpush1.bf16.msra.mxu0 %v3259
      %3277 = vmatprep.subr.bf16.mxu0 0
      %3278 = vmatpush2.bf16.msra.mxu0 0
      %3279 = vmatprep.subr.bf16.mxu0 0
      %3280 = vmatpush2.bf16.msra.mxu0 0
      %3281 = vmatprep.subr.bf16.mxu0 0
      %3282 = vmatpush2.bf16.msra.mxu0 0
      %3283 = vmatprep.subr.bf16.mxu0 0
      %3284 = vmatpush2.bf16.msra.mxu0 0
      %3285 = vmatprep.subr.bf16.mxu0 0
      %3286 = vmatpush2.bf16.msra.mxu0 0
      %3287 = vmatprep.subr.bf16.mxu0 0
      %3288 = vmatpush2.bf16.msra.mxu0 0
      %3289 = vmatprep.subr.bf16.mxu0 0
      %3290 = vmatpush2.bf16.msra.mxu0 0
      %3291 = vmatprep.subr.bf16.mxu0 0
      %3292 = vmatpush2.bf16.msra.mxu0 0
      %3293 = vmatprep.mubr.bf16.mxu0 0
      %3294 = vmatmul.mubr.bf16.gmra.mxu0 %v3256
      %v3295 = vpop.f32.mrf.mxu0
      %v3296 = vadd.f32 0.0, %v3295
      %v3297 = vpop.f32.mrf.mxu0
      %v3298 = vpop.f32.mrf.mxu0
      %v3299 = vadd.f32 0.0, %v3298
      %v3300 = vpop.f32.mrf.mxu0
      %3301 = vdwg.mxu0
      %v3302 = vadd.f32 %v3121, %v3296
      %v3303 = vadd.f32 %v3124, %v3299
      %3304 = vrot.lane.b32.xlu0 %v2772, 104
      %v3305 = vpop.permute.xlu0 %3304
      %3306 = vrot.lane.b32.xlu0 %v2773, 104
      %v3307 = vpop.permute.xlu0 %3306
      %v3309 = vsel %vm1147, %v3305, 0
      %v3312 = vsel %vm1147, %v3307, 0
      %3314 = vmatprep.subr.bf16.mxu0 0
      %3315 = vmatpush1.bf16.xpose.msra.mxu0 0
      %3316 = vmatprep.subr.bf16.mxu0 0
      %3317 = vmatpush1.bf16.xpose.msra.mxu0 0
      %3318 = vmatprep.subr.bf16.mxu0 0
      %3319 = vmatpush1.bf16.xpose.msra.mxu0 0
      %3320 = vmatprep.subr.bf16.mxu0 0
      %3321 = vmatpush1.bf16.xpose.msra.mxu0 0
      %3322 = vmatprep.subr.bf16.mxu0 0
      %3323 = vmatpush1.bf16.xpose.msra.mxu0 0
      %3324 = vmatprep.subr.bf16.mxu0 0
      %3325 = vmatpush1.bf16.xpose.msra.mxu0 0
      %3326 = vmatprep.subr.bf16.mxu0 0
      %3327 = vmatpush1.bf16.xpose.msra.mxu0 0
      %3328 = vmatprep.subr.bf16.mxu0 0
      %3329 = vmatpush1.bf16.xpose.msra.mxu0 %v3312
      %3330 = vmatprep.subr.bf16.mxu0 0
      %3331 = vmatpush2.bf16.xpose.msra.mxu0 0
      %3332 = vmatprep.subr.bf16.mxu0 0
      %3333 = vmatpush2.bf16.xpose.msra.mxu0 0
      %3334 = vmatprep.subr.bf16.mxu0 0
      %3335 = vmatpush2.bf16.xpose.msra.mxu0 0
      %3336 = vmatprep.subr.bf16.mxu0 0
      %3337 = vmatpush2.bf16.xpose.msra.mxu0 0
      %3338 = vmatprep.subr.bf16.mxu0 0
      %3339 = vmatpush2.bf16.xpose.msra.mxu0 0
      %3340 = vmatprep.subr.bf16.mxu0 0
      %3341 = vmatpush2.bf16.xpose.msra.mxu0 0
      %3342 = vmatprep.subr.bf16.mxu0 0
      %3343 = vmatpush2.bf16.xpose.msra.mxu0 0
      %3344 = vmatprep.subr.bf16.mxu0 0
      %3345 = vmatpush2.bf16.xpose.msra.mxu0 0
      %3346 = vmatprep.mubr.bf16.mxu0 0
      %3347 = vmatmul.mubr.bf16.gmra.mxu0 %v3309
      %v3348 = vpop.f32.mrf.mxu0
      %v3349 = vadd.f32 0.0, %v3348
      %v3350 = vpop.f32.mrf.mxu0
      %v3351 = vpop.f32.mrf.mxu0
      %v3352 = vadd.f32 0.0, %v3351
      %v3353 = vpop.f32.mrf.mxu0
      %3354 = vdwg.mxu0
      %v3355 = vmul.f32 %v3349, 0.35355338
      %v3356 = vmul.f32 %v3352, 0.35355338
      %v3357 = vsel %vm2823, %v3355, -inf
      %3358 = vmax.xlane.f32.xlu0 %v3357
      %v3359 = vpop.xlane.xlu0 %3358
      %v3360 = vsel %vm2827, %v3356, -inf
      %3361 = vmax.xlane.f32.xlu0 %v3360
      %v3362 = vpop.xlane.xlu0 %3361
      %v3363 = vsub.f32 %v3355, %v3359
      %v3364 = vsub.f32 %v3356, %v3362
      %v3365 = vmul.f32 %v3363, 1.442695
      %v3366 = vpow.pop %v3365
      %v3367 = vmul.f32 %v3364, 1.442695
      %v3368 = vpow.pop %v3367
      %v3369 = vsel %vm2823, %v3366, 0.0
      %3370 = vadd.xlane.f32.xlu0 %v3369
      %v3371 = vpop.xlane.xlu0 %3370
      %v3372 = vsel %vm2827, %v3368, 0.0
      %3373 = vadd.xlane.f32.xlu0 %v3372
      %v3374 = vpop.xlane.xlu0 %3373
      %v3375 = vrcp.pop %v3371
      %v3376 = vmul.f32 %v3366, %v3375
      %v3377 = vrcp.pop %v3374
      %v3378 = vmul.f32 %v3368, %v3377
      %v3379 = vpack.c.bf16 %v3378, %v3376
      %3380 = vrot.lane.b32.xlu0 %v2773, 40
      %v3381 = vpop.permute.xlu0 %3380
      %v3383 = vsel %vm2823, %v3379, 0
      %v3386 = vand.u32 %v3381, %v2856
      %3388 = vmatprep.subr.bf16.mxu0 0
      %3389 = vmatpush1.bf16.msra.mxu0 0
      %3390 = vmatprep.subr.bf16.mxu0 0
      %3391 = vmatpush1.bf16.msra.mxu0 0
      %3392 = vmatprep.subr.bf16.mxu0 0
      %3393 = vmatpush1.bf16.msra.mxu0 0
      %3394 = vmatprep.subr.bf16.mxu0 0
      %3395 = vmatpush1.bf16.msra.mxu0 0
      %3396 = vmatprep.subr.bf16.mxu0 0
      %3397 = vmatpush1.bf16.msra.mxu0 0
      %3398 = vmatprep.subr.bf16.mxu0 0
      %3399 = vmatpush1.bf16.msra.mxu0 0
      %3400 = vmatprep.subr.bf16.mxu0 0
      %3401 = vmatpush1.bf16.msra.mxu0 0
      %3402 = vmatprep.subr.bf16.mxu0 0
      %3403 = vmatpush1.bf16.msra.mxu0 %v3386
      %3404 = vmatprep.subr.bf16.mxu0 0
      %3405 = vmatpush2.bf16.msra.mxu0 0
      %3406 = vmatprep.subr.bf16.mxu0 0
      %3407 = vmatpush2.bf16.msra.mxu0 0
      %3408 = vmatprep.subr.bf16.mxu0 0
      %3409 = vmatpush2.bf16.msra.mxu0 0
      %3410 = vmatprep.subr.bf16.mxu0 0
      %3411 = vmatpush2.bf16.msra.mxu0 0
      %3412 = vmatprep.subr.bf16.mxu0 0
      %3413 = vmatpush2.bf16.msra.mxu0 0
      %3414 = vmatprep.subr.bf16.mxu0 0
      %3415 = vmatpush2.bf16.msra.mxu0 0
      %3416 = vmatprep.subr.bf16.mxu0 0
      %3417 = vmatpush2.bf16.msra.mxu0 0
      %3418 = vmatprep.subr.bf16.mxu0 0
      %3419 = vmatpush2.bf16.msra.mxu0 0
      %3420 = vmatprep.mubr.bf16.mxu0 0
      %3421 = vmatmul.mubr.bf16.gmra.mxu0 %v3383
      %v3422 = vpop.f32.mrf.mxu0
      %v3423 = vadd.f32 0.0, %v3422
      %v3424 = vpop.f32.mrf.mxu0
      %v3425 = vpop.f32.mrf.mxu0
      %v3426 = vadd.f32 0.0, %v3425
      %v3427 = vpop.f32.mrf.mxu0
      %3428 = vdwg.mxu0
      %v3429 = vld [vmem:[%s35 + $0x18] sm:$0xff]
      %v3430 = vpack.c.bf16 %v3426, %v3423
      %v3431 = vpack.c.bf16 %v3429, %v3429
      %v3433 = vsel %vm1147, %v3430, 0
      %v3436 = vsel %vm1410, %v3431, 0
      %3438 = vmatprep.subr.bf16.mxu0 0
      %3439 = vmatpush1.bf16.msra.mxu0 0
      %3440 = vmatprep.subr.bf16.mxu0 0
      %3441 = vmatpush1.bf16.msra.mxu0 0
      %3442 = vmatprep.subr.bf16.mxu0 0
      %3443 = vmatpush1.bf16.msra.mxu0 0
      %3444 = vmatprep.subr.bf16.mxu0 0
      %3445 = vmatpush1.bf16.msra.mxu0 0
      %3446 = vmatprep.subr.bf16.mxu0 0
      %3447 = vmatpush1.bf16.msra.mxu0 0
      %3448 = vmatprep.subr.bf16.mxu0 0
      %3449 = vmatpush1.bf16.msra.mxu0 0
      %3450 = vmatprep.subr.bf16.mxu0 0
      %3451 = vmatpush1.bf16.msra.mxu0 0
      %3452 = vmatprep.subr.bf16.mxu0 0
      %3453 = vmatpush1.bf16.msra.mxu0 %v3436
      %3454 = vmatprep.subr.bf16.mxu0 0
      %3455 = vmatpush2.bf16.msra.mxu0 0
      %3456 = vmatprep.subr.bf16.mxu0 0
      %3457 = vmatpush2.bf16.msra.mxu0 0
      %3458 = vmatprep.subr.bf16.mxu0 0
      %3459 = vmatpush2.bf16.msra.mxu0 0
      %3460 = vmatprep.subr.bf16.mxu0 0
      %3461 = vmatpush2.bf16.msra.mxu0 0
      %3462 = vmatprep.subr.bf16.mxu0 0
      %3463 = vmatpush2.bf16.msra.mxu0 0
      %3464 = vmatprep.subr.bf16.mxu0 0
      %3465 = vmatpush2.bf16.msra.mxu0 0
      %3466 = vmatprep.subr.bf16.mxu0 0
      %3467 = vmatpush2.bf16.msra.mxu0 0
      %3468 = vmatprep.subr.bf16.mxu0 0
      %3469 = vmatpush2.bf16.msra.mxu0 0
      %3470 = vmatprep.mubr.bf16.mxu0 0
      %3471 = vmatmul.mubr.bf16.gmra.mxu0 %v3433
      %v3472 = vpop.f32.mrf.mxu0
      %v3473 = vadd.f32 0.0, %v3472
      %v3474 = vpop.f32.mrf.mxu0
      %v3475 = vpop.f32.mrf.mxu0
      %v3476 = vadd.f32 0.0, %v3475
      %v3477 = vpop.f32.mrf.mxu0
      %3478 = vdwg.mxu0
      %v3479 = vadd.f32 %v3302, %v3473
      %v3480 = vadd.f32 %v3303, %v3476
      %3481 = vrot.lane.b32.xlu0 %v2772, 96
      %v3482 = vpop.permute.xlu0 %3481
      %3483 = vrot.lane.b32.xlu0 %v2773, 96
      %v3484 = vpop.permute.xlu0 %3483
      %v3486 = vsel %vm1147, %v3482, 0
      %v3489 = vsel %vm1147, %v3484, 0
      %3491 = vmatprep.subr.bf16.mxu0 0
      %3492 = vmatpush1.bf16.xpose.msra.mxu0 0
      %3493 = vmatprep.subr.bf16.mxu0 0
      %3494 = vmatpush1.bf16.xpose.msra.mxu0 0
      %3495 = vmatprep.subr.bf16.mxu0 0
      %3496 = vmatpush1.bf16.xpose.msra.mxu0 0
      %3497 = vmatprep.subr.bf16.mxu0 0
      %3498 = vmatpush1.bf16.xpose.msra.mxu0 0
      %3499 = vmatprep.subr.bf16.mxu0 0
      %3500 = vmatpush1.bf16.xpose.msra.mxu0 0
      %3501 = vmatprep.subr.bf16.mxu0 0
      %3502 = vmatpush1.bf16.xpose.msra.mxu0 0
      %3503 = vmatprep.subr.bf16.mxu0 0
      %3504 = vmatpush1.bf16.xpose.msra.mxu0 0
      %3505 = vmatprep.subr.bf16.mxu0 0
      %3506 = vmatpush1.bf16.xpose.msra.mxu0 %v3489
      %3507 = vmatprep.subr.bf16.mxu0 0
      %3508 = vmatpush2.bf16.xpose.msra.mxu0 0
      %3509 = vmatprep.subr.bf16.mxu0 0
      %3510 = vmatpush2.bf16.xpose.msra.mxu0 0
      %3511 = vmatprep.subr.bf16.mxu0 0
      %3512 = vmatpush2.bf16.xpose.msra.mxu0 0
      %3513 = vmatprep.subr.bf16.mxu0 0
      %3514 = vmatpush2.bf16.xpose.msra.mxu0 0
      %3515 = vmatprep.subr.bf16.mxu0 0
      %3516 = vmatpush2.bf16.xpose.msra.mxu0 0
      %3517 = vmatprep.subr.bf16.mxu0 0
      %3518 = vmatpush2.bf16.xpose.msra.mxu0 0
      %3519 = vmatprep.subr.bf16.mxu0 0
      %3520 = vmatpush2.bf16.xpose.msra.mxu0 0
      %3521 = vmatprep.subr.bf16.mxu0 0
      %3522 = vmatpush2.bf16.xpose.msra.mxu0 0
      %3523 = vmatprep.mubr.bf16.mxu0 0
      %3524 = vmatmul.mubr.bf16.gmra.mxu0 %v3486
      %v3525 = vpop.f32.mrf.mxu0
      %v3526 = vadd.f32 0.0, %v3525
      %v3527 = vpop.f32.mrf.mxu0
      %v3528 = vpop.f32.mrf.mxu0
      %v3529 = vadd.f32 0.0, %v3528
      %v3530 = vpop.f32.mrf.mxu0
      %3531 = vdwg.mxu0
      %v3532 = vmul.f32 %v3526, 0.35355338
      %v3533 = vmul.f32 %v3529, 0.35355338
      %v3534 = vsel %vm2823, %v3532, -inf
      %3535 = vmax.xlane.f32.xlu0 %v3534
      %v3536 = vpop.xlane.xlu0 %3535
      %v3537 = vsel %vm2827, %v3533, -inf
      %3538 = vmax.xlane.f32.xlu0 %v3537
      %v3539 = vpop.xlane.xlu0 %3538
      %v3540 = vsub.f32 %v3532, %v3536
      %v3541 = vsub.f32 %v3533, %v3539
      %v3542 = vmul.f32 %v3540, 1.442695
      %v3543 = vpow.pop %v3542
      %v3544 = vmul.f32 %v3541, 1.442695
      %v3545 = vpow.pop %v3544
      %v3546 = vsel %vm2823, %v3543, 0.0
      %3547 = vadd.xlane.f32.xlu0 %v3546
      %v3548 = vpop.xlane.xlu0 %3547
      %v3549 = vsel %vm2827, %v3545, 0.0
      %3550 = vadd.xlane.f32.xlu0 %v3549
      %v3551 = vpop.xlane.xlu0 %3550
      %v3552 = vrcp.pop %v3548
      %v3553 = vmul.f32 %v3543, %v3552
      %v3554 = vrcp.pop %v3551
      %v3555 = vmul.f32 %v3545, %v3554
      %v3556 = vpack.c.bf16 %v3555, %v3553
      %3557 = vrot.lane.b32.xlu0 %v2773, 32
      %v3558 = vpop.permute.xlu0 %3557
      %v3560 = vsel %vm2823, %v3556, 0
      %v3563 = vand.u32 %v3558, %v2856
      %3565 = vmatprep.subr.bf16.mxu0 0
      %3566 = vmatpush1.bf16.msra.mxu0 0
      %3567 = vmatprep.subr.bf16.mxu0 0
      %3568 = vmatpush1.bf16.msra.mxu0 0
      %3569 = vmatprep.subr.bf16.mxu0 0
      %3570 = vmatpush1.bf16.msra.mxu0 0
      %3571 = vmatprep.subr.bf16.mxu0 0
      %3572 = vmatpush1.bf16.msra.mxu0 0
      %3573 = vmatprep.subr.bf16.mxu0 0
      %3574 = vmatpush1.bf16.msra.mxu0 0
      %3575 = vmatprep.subr.bf16.mxu0 0
      %3576 = vmatpush1.bf16.msra.mxu0 0
      %3577 = vmatprep.subr.bf16.mxu0 0
      %3578 = vmatpush1.bf16.msra.mxu0 0
      %3579 = vmatprep.subr.bf16.mxu0 0
      %3580 = vmatpush1.bf16.msra.mxu0 %v3563
      %3581 = vmatprep.subr.bf16.mxu0 0
      %3582 = vmatpush2.bf16.msra.mxu0 0
      %3583 = vmatprep.subr.bf16.mxu0 0
      %3584 = vmatpush2.bf16.msra.mxu0 0
      %3585 = vmatprep.subr.bf16.mxu0 0
      %3586 = vmatpush2.bf16.msra.mxu0 0
      %3587 = vmatprep.subr.bf16.mxu0 0
      %3588 = vmatpush2.bf16.msra.mxu0 0
      %3589 = vmatprep.subr.bf16.mxu0 0
      %3590 = vmatpush2.bf16.msra.mxu0 0
      %3591 = vmatprep.subr.bf16.mxu0 0
      %3592 = vmatpush2.bf16.msra.mxu0 0
      %3593 = vmatprep.subr.bf16.mxu0 0
      %3594 = vmatpush2.bf16.msra.mxu0 0
      %3595 = vmatprep.subr.bf16.mxu0 0
      %3596 = vmatpush2.bf16.msra.mxu0 0
      %3597 = vmatprep.mubr.bf16.mxu0 0
      %3598 = vmatmul.mubr.bf16.gmra.mxu0 %v3560
      %v3599 = vpop.f32.mrf.mxu0
      %v3600 = vadd.f32 0.0, %v3599
      %v3601 = vpop.f32.mrf.mxu0
      %v3602 = vpop.f32.mrf.mxu0
      %v3603 = vadd.f32 0.0, %v3602
      %v3604 = vpop.f32.mrf.mxu0
      %3605 = vdwg.mxu0
      %v3606 = vld [vmem:[%s35 + $0x20] sm:$0xff]
      %v3607 = vpack.c.bf16 %v3603, %v3600
      %v3608 = vpack.c.bf16 %v3606, %v3606
      %v3610 = vsel %vm1147, %v3607, 0
      %v3613 = vsel %vm1410, %v3608, 0
      %3615 = vmatprep.subr.bf16.mxu0 0
      %3616 = vmatpush1.bf16.msra.mxu0 0
      %3617 = vmatprep.subr.bf16.mxu0 0
      %3618 = vmatpush1.bf16.msra.mxu0 0
      %3619 = vmatprep.subr.bf16.mxu0 0
      %3620 = vmatpush1.bf16.msra.mxu0 0
      %3621 = vmatprep.subr.bf16.mxu0 0
      %3622 = vmatpush1.bf16.msra.mxu0 0
      %3623 = vmatprep.subr.bf16.mxu0 0
      %3624 = vmatpush1.bf16.msra.mxu0 0
      %3625 = vmatprep.subr.bf16.mxu0 0
      %3626 = vmatpush1.bf16.msra.mxu0 0
      %3627 = vmatprep.subr.bf16.mxu0 0
      %3628 = vmatpush1.bf16.msra.mxu0 0
      %3629 = vmatprep.subr.bf16.mxu0 0
      %3630 = vmatpush1.bf16.msra.mxu0 %v3613
      %3631 = vmatprep.subr.bf16.mxu0 0
      %3632 = vmatpush2.bf16.msra.mxu0 0
      %3633 = vmatprep.subr.bf16.mxu0 0
      %3634 = vmatpush2.bf16.msra.mxu0 0
      %3635 = vmatprep.subr.bf16.mxu0 0
      %3636 = vmatpush2.bf16.msra.mxu0 0
      %3637 = vmatprep.subr.bf16.mxu0 0
      %3638 = vmatpush2.bf16.msra.mxu0 0
      %3639 = vmatprep.subr.bf16.mxu0 0
      %3640 = vmatpush2.bf16.msra.mxu0 0
      %3641 = vmatprep.subr.bf16.mxu0 0
      %3642 = vmatpush2.bf16.msra.mxu0 0
      %3643 = vmatprep.subr.bf16.mxu0 0
      %3644 = vmatpush2.bf16.msra.mxu0 0
      %3645 = vmatprep.subr.bf16.mxu0 0
      %3646 = vmatpush2.bf16.msra.mxu0 0
      %3647 = vmatprep.mubr.bf16.mxu0 0
      %3648 = vmatmul.mubr.bf16.gmra.mxu0 %v3610
      %v3649 = vpop.f32.mrf.mxu0
      %v3650 = vadd.f32 0.0, %v3649
      %v3651 = vpop.f32.mrf.mxu0
      %v3652 = vpop.f32.mrf.mxu0
      %v3653 = vadd.f32 0.0, %v3652
      %v3654 = vpop.f32.mrf.mxu0
      %3655 = vdwg.mxu0
      %v3656 = vadd.f32 %v3479, %v3650
      %v3657 = vadd.f32 %v3480, %v3653
      %3658 = vrot.lane.b32.xlu0 %v2772, 88
      %v3659 = vpop.permute.xlu0 %3658
      %3660 = vrot.lane.b32.xlu0 %v2773, 88
      %v3661 = vpop.permute.xlu0 %3660
      %v3663 = vsel %vm1147, %v3659, 0
      %v3666 = vsel %vm1147, %v3661, 0
      %3668 = vmatprep.subr.bf16.mxu0 0
      %3669 = vmatpush1.bf16.xpose.msra.mxu0 0
      %3670 = vmatprep.subr.bf16.mxu0 0
      %3671 = vmatpush1.bf16.xpose.msra.mxu0 0
      %3672 = vmatprep.subr.bf16.mxu0 0
      %3673 = vmatpush1.bf16.xpose.msra.mxu0 0
      %3674 = vmatprep.subr.bf16.mxu0 0
      %3675 = vmatpush1.bf16.xpose.msra.mxu0 0
      %3676 = vmatprep.subr.bf16.mxu0 0
      %3677 = vmatpush1.bf16.xpose.msra.mxu0 0
      %3678 = vmatprep.subr.bf16.mxu0 0
      %3679 = vmatpush1.bf16.xpose.msra.mxu0 0
      %3680 = vmatprep.subr.bf16.mxu0 0
      %3681 = vmatpush1.bf16.xpose.msra.mxu0 0
      %3682 = vmatprep.subr.bf16.mxu0 0
      %3683 = vmatpush1.bf16.xpose.msra.mxu0 %v3666
      %3684 = vmatprep.subr.bf16.mxu0 0
      %3685 = vmatpush2.bf16.xpose.msra.mxu0 0
      %3686 = vmatprep.subr.bf16.mxu0 0
      %3687 = vmatpush2.bf16.xpose.msra.mxu0 0
      %3688 = vmatprep.subr.bf16.mxu0 0
      %3689 = vmatpush2.bf16.xpose.msra.mxu0 0
      %3690 = vmatprep.subr.bf16.mxu0 0
      %3691 = vmatpush2.bf16.xpose.msra.mxu0 0
      %3692 = vmatprep.subr.bf16.mxu0 0
      %3693 = vmatpush2.bf16.xpose.msra.mxu0 0
      %3694 = vmatprep.subr.bf16.mxu0 0
      %3695 = vmatpush2.bf16.xpose.msra.mxu0 0
      %3696 = vmatprep.subr.bf16.mxu0 0
      %3697 = vmatpush2.bf16.xpose.msra.mxu0 0
      %3698 = vmatprep.subr.bf16.mxu0 0
      %3699 = vmatpush2.bf16.xpose.msra.mxu0 0
      %3700 = vmatprep.mubr.bf16.mxu0 0
      %3701 = vmatmul.mubr.bf16.gmra.mxu0 %v3663
      %v3702 = vpop.f32.mrf.mxu0
      %v3703 = vadd.f32 0.0, %v3702
      %v3704 = vpop.f32.mrf.mxu0
      %v3705 = vpop.f32.mrf.mxu0
      %v3706 = vadd.f32 0.0, %v3705
      %v3707 = vpop.f32.mrf.mxu0
      %3708 = vdwg.mxu0
      %v3709 = vmul.f32 %v3703, 0.35355338
      %v3710 = vmul.f32 %v3706, 0.35355338
      %v3711 = vsel %vm2823, %v3709, -inf
      %3712 = vmax.xlane.f32.xlu0 %v3711
      %v3713 = vpop.xlane.xlu0 %3712
      %v3714 = vsel %vm2827, %v3710, -inf
      %3715 = vmax.xlane.f32.xlu0 %v3714
      %v3716 = vpop.xlane.xlu0 %3715
      %v3717 = vsub.f32 %v3709, %v3713
      %v3718 = vsub.f32 %v3710, %v3716
      %v3719 = vmul.f32 %v3717, 1.442695
      %v3720 = vpow.pop %v3719
      %v3721 = vmul.f32 %v3718, 1.442695
      %v3722 = vpow.pop %v3721
      %v3723 = vsel %vm2823, %v3720, 0.0
      %3724 = vadd.xlane.f32.xlu0 %v3723
      %v3725 = vpop.xlane.xlu0 %3724
      %v3726 = vsel %vm2827, %v3722, 0.0
      %3727 = vadd.xlane.f32.xlu0 %v3726
      %v3728 = vpop.xlane.xlu0 %3727
      %v3729 = vrcp.pop %v3725
      %v3730 = vmul.f32 %v3720, %v3729
      %v3731 = vrcp.pop %v3728
      %v3732 = vmul.f32 %v3722, %v3731
      %v3733 = vpack.c.bf16 %v3732, %v3730
      %3734 = vrot.lane.b32.xlu0 %v2773, 24
      %v3735 = vpop.permute.xlu0 %3734
      %v3737 = vsel %vm2823, %v3733, 0
      %v3740 = vand.u32 %v3735, %v2856
      %3742 = vmatprep.subr.bf16.mxu0 0
      %3743 = vmatpush1.bf16.msra.mxu0 0
      %3744 = vmatprep.subr.bf16.mxu0 0
      %3745 = vmatpush1.bf16.msra.mxu0 0
      %3746 = vmatprep.subr.bf16.mxu0 0
      %3747 = vmatpush1.bf16.msra.mxu0 0
      %3748 = vmatprep.subr.bf16.mxu0 0
      %3749 = vmatpush1.bf16.msra.mxu0 0
      %3750 = vmatprep.subr.bf16.mxu0 0
      %3751 = vmatpush1.bf16.msra.mxu0 0
      %3752 = vmatprep.subr.bf16.mxu0 0
      %3753 = vmatpush1.bf16.msra.mxu0 0
      %3754 = vmatprep.subr.bf16.mxu0 0
      %3755 = vmatpush1.bf16.msra.mxu0 0
      %3756 = vmatprep.subr.bf16.mxu0 0
      %3757 = vmatpush1.bf16.msra.mxu0 %v3740
      %3758 = vmatprep.subr.bf16.mxu0 0
      %3759 = vmatpush2.bf16.msra.mxu0 0
      %3760 = vmatprep.subr.bf16.mxu0 0
      %3761 = vmatpush2.bf16.msra.mxu0 0
      %3762 = vmatprep.subr.bf16.mxu0 0
      %3763 = vmatpush2.bf16.msra.mxu0 0
      %3764 = vmatprep.subr.bf16.mxu0 0
      %3765 = vmatpush2.bf16.msra.mxu0 0
      %3766 = vmatprep.subr.bf16.mxu0 0
      %3767 = vmatpush2.bf16.msra.mxu0 0
      %3768 = vmatprep.subr.bf16.mxu0 0
      %3769 = vmatpush2.bf16.msra.mxu0 0
      %3770 = vmatprep.subr.bf16.mxu0 0
      %3771 = vmatpush2.bf16.msra.mxu0 0
      %3772 = vmatprep.subr.bf16.mxu0 0
      %3773 = vmatpush2.bf16.msra.mxu0 0
      %3774 = vmatprep.mubr.bf16.mxu0 0
      %3775 = vmatmul.mubr.bf16.gmra.mxu0 %v3737
      %v3776 = vpop.f32.mrf.mxu0
      %v3777 = vadd.f32 0.0, %v3776
      %v3778 = vpop.f32.mrf.mxu0
      %v3779 = vpop.f32.mrf.mxu0
      %v3780 = vadd.f32 0.0, %v3779
      %v3781 = vpop.f32.mrf.mxu0
      %3782 = vdwg.mxu0
      %v3783 = vld [vmem:[%s35 + $0x28] sm:$0xff]
      %v3784 = vpack.c.bf16 %v3780, %v3777
      %v3785 = vpack.c.bf16 %v3783, %v3783
      %v3787 = vsel %vm1147, %v3784, 0
      %v3790 = vsel %vm1410, %v3785, 0
      %3792 = vmatprep.subr.bf16.mxu0 0
      %3793 = vmatpush1.bf16.msra.mxu0 0
      %3794 = vmatprep.subr.bf16.mxu0 0
      %3795 = vmatpush1.bf16.msra.mxu0 0
      %3796 = vmatprep.subr.bf16.mxu0 0
      %3797 = vmatpush1.bf16.msra.mxu0 0
      %3798 = vmatprep.subr.bf16.mxu0 0
      %3799 = vmatpush1.bf16.msra.mxu0 0
      %3800 = vmatprep.subr.bf16.mxu0 0
      %3801 = vmatpush1.bf16.msra.mxu0 0
      %3802 = vmatprep.subr.bf16.mxu0 0
      %3803 = vmatpush1.bf16.msra.mxu0 0
      %3804 = vmatprep.subr.bf16.mxu0 0
      %3805 = vmatpush1.bf16.msra.mxu0 0
      %3806 = vmatprep.subr.bf16.mxu0 0
      %3807 = vmatpush1.bf16.msra.mxu0 %v3790
      %3808 = vmatprep.subr.bf16.mxu0 0
      %3809 = vmatpush2.bf16.msra.mxu0 0
      %3810 = vmatprep.subr.bf16.mxu0 0
      %3811 = vmatpush2.bf16.msra.mxu0 0
      %3812 = vmatprep.subr.bf16.mxu0 0
      %3813 = vmatpush2.bf16.msra.mxu0 0
      %3814 = vmatprep.subr.bf16.mxu0 0
      %3815 = vmatpush2.bf16.msra.mxu0 0
      %3816 = vmatprep.subr.bf16.mxu0 0
      %3817 = vmatpush2.bf16.msra.mxu0 0
      %3818 = vmatprep.subr.bf16.mxu0 0
      %3819 = vmatpush2.bf16.msra.mxu0 0
      %3820 = vmatprep.subr.bf16.mxu0 0
      %3821 = vmatpush2.bf16.msra.mxu0 0
      %3822 = vmatprep.subr.bf16.mxu0 0
      %3823 = vmatpush2.bf16.msra.mxu0 0
      %3824 = vmatprep.mubr.bf16.mxu0 0
      %3825 = vmatmul.mubr.bf16.gmra.mxu0 %v3787
      %v3826 = vpop.f32.mrf.mxu0
      %v3827 = vadd.f32 0.0, %v3826
      %v3828 = vpop.f32.mrf.mxu0
      %v3829 = vpop.f32.mrf.mxu0
      %v3830 = vadd.f32 0.0, %v3829
      %v3831 = vpop.f32.mrf.mxu0
      %3832 = vdwg.mxu0
      %v3833 = vadd.f32 %v3656, %v3827
      %v3834 = vadd.f32 %v3657, %v3830
      %3835 = vrot.lane.b32.xlu0 %v2772, 80
      %v3836 = vpop.permute.xlu0 %3835
      %3837 = vrot.lane.b32.xlu0 %v2773, 80
      %v3838 = vpop.permute.xlu0 %3837
      %v3840 = vsel %vm1147, %v3836, 0
      %v3843 = vsel %vm1147, %v3838, 0
      %3845 = vmatprep.subr.bf16.mxu0 0
      %3846 = vmatpush1.bf16.xpose.msra.mxu0 0
      %3847 = vmatprep.subr.bf16.mxu0 0
      %3848 = vmatpush1.bf16.xpose.msra.mxu0 0
      %3849 = vmatprep.subr.bf16.mxu0 0
      %3850 = vmatpush1.bf16.xpose.msra.mxu0 0
      %3851 = vmatprep.subr.bf16.mxu0 0
      %3852 = vmatpush1.bf16.xpose.msra.mxu0 0
      %3853 = vmatprep.subr.bf16.mxu0 0
      %3854 = vmatpush1.bf16.xpose.msra.mxu0 0
      %3855 = vmatprep.subr.bf16.mxu0 0
      %3856 = vmatpush1.bf16.xpose.msra.mxu0 0
      %3857 = vmatprep.subr.bf16.mxu0 0
      %3858 = vmatpush1.bf16.xpose.msra.mxu0 0
      %3859 = vmatprep.subr.bf16.mxu0 0
      %3860 = vmatpush1.bf16.xpose.msra.mxu0 %v3843
      %3861 = vmatprep.subr.bf16.mxu0 0
      %3862 = vmatpush2.bf16.xpose.msra.mxu0 0
      %3863 = vmatprep.subr.bf16.mxu0 0
      %3864 = vmatpush2.bf16.xpose.msra.mxu0 0
      %3865 = vmatprep.subr.bf16.mxu0 0
      %3866 = vmatpush2.bf16.xpose.msra.mxu0 0
      %3867 = vmatprep.subr.bf16.mxu0 0
      %3868 = vmatpush2.bf16.xpose.msra.mxu0 0
      %3869 = vmatprep.subr.bf16.mxu0 0
      %3870 = vmatpush2.bf16.xpose.msra.mxu0 0
      %3871 = vmatprep.subr.bf16.mxu0 0
      %3872 = vmatpush2.bf16.xpose.msra.mxu0 0
      %3873 = vmatprep.subr.bf16.mxu0 0
      %3874 = vmatpush2.bf16.xpose.msra.mxu0 0
      %3875 = vmatprep.subr.bf16.mxu0 0
      %3876 = vmatpush2.bf16.xpose.msra.mxu0 0
      %3877 = vmatprep.mubr.bf16.mxu0 0
      %3878 = vmatmul.mubr.bf16.gmra.mxu0 %v3840
      %v3879 = vpop.f32.mrf.mxu0
      %v3880 = vadd.f32 0.0, %v3879
      %v3881 = vpop.f32.mrf.mxu0
      %v3882 = vpop.f32.mrf.mxu0
      %v3883 = vadd.f32 0.0, %v3882
      %v3884 = vpop.f32.mrf.mxu0
      %3885 = vdwg.mxu0
      %v3886 = vmul.f32 %v3880, 0.35355338
      %v3887 = vmul.f32 %v3883, 0.35355338
      %v3888 = vsel %vm2823, %v3886, -inf
      %3889 = vmax.xlane.f32.xlu0 %v3888
      %v3890 = vpop.xlane.xlu0 %3889
      %v3891 = vsel %vm2827, %v3887, -inf
      %3892 = vmax.xlane.f32.xlu0 %v3891
      %v3893 = vpop.xlane.xlu0 %3892
      %v3894 = vsub.f32 %v3886, %v3890
      %v3895 = vsub.f32 %v3887, %v3893
      %v3896 = vmul.f32 %v3894, 1.442695
      %v3897 = vpow.pop %v3896
      %v3898 = vmul.f32 %v3895, 1.442695
      %v3899 = vpow.pop %v3898
      %v3900 = vsel %vm2823, %v3897, 0.0
      %3901 = vadd.xlane.f32.xlu0 %v3900
      %v3902 = vpop.xlane.xlu0 %3901
      %v3903 = vsel %vm2827, %v3899, 0.0
      %3904 = vadd.xlane.f32.xlu0 %v3903
      %v3905 = vpop.xlane.xlu0 %3904
      %v3906 = vrcp.pop %v3902
      %v3907 = vmul.f32 %v3897, %v3906
      %v3908 = vrcp.pop %v3905
      %v3909 = vmul.f32 %v3899, %v3908
      %v3910 = vpack.c.bf16 %v3909, %v3907
      %3911 = vrot.lane.b32.xlu0 %v2773, 16
      %v3912 = vpop.permute.xlu0 %3911
      %v3914 = vsel %vm2823, %v3910, 0
      %v3917 = vand.u32 %v3912, %v2856
      %3919 = vmatprep.subr.bf16.mxu0 0
      %3920 = vmatpush1.bf16.msra.mxu0 0
      %3921 = vmatprep.subr.bf16.mxu0 0
      %3922 = vmatpush1.bf16.msra.mxu0 0
      %3923 = vmatprep.subr.bf16.mxu0 0
      %3924 = vmatpush1.bf16.msra.mxu0 0
      %3925 = vmatprep.subr.bf16.mxu0 0
      %3926 = vmatpush1.bf16.msra.mxu0 0
      %3927 = vmatprep.subr.bf16.mxu0 0
      %3928 = vmatpush1.bf16.msra.mxu0 0
      %3929 = vmatprep.subr.bf16.mxu0 0
      %3930 = vmatpush1.bf16.msra.mxu0 0
      %3931 = vmatprep.subr.bf16.mxu0 0
      %3932 = vmatpush1.bf16.msra.mxu0 0
      %3933 = vmatprep.subr.bf16.mxu0 0
      %3934 = vmatpush1.bf16.msra.mxu0 %v3917
      %3935 = vmatprep.subr.bf16.mxu0 0
      %3936 = vmatpush2.bf16.msra.mxu0 0
      %3937 = vmatprep.subr.bf16.mxu0 0
      %3938 = vmatpush2.bf16.msra.mxu0 0
      %3939 = vmatprep.subr.bf16.mxu0 0
      %3940 = vmatpush2.bf16.msra.mxu0 0
      %3941 = vmatprep.subr.bf16.mxu0 0
      %3942 = vmatpush2.bf16.msra.mxu0 0
      %3943 = vmatprep.subr.bf16.mxu0 0
      %3944 = vmatpush2.bf16.msra.mxu0 0
      %3945 = vmatprep.subr.bf16.mxu0 0
      %3946 = vmatpush2.bf16.msra.mxu0 0
      %3947 = vmatprep.subr.bf16.mxu0 0
      %3948 = vmatpush2.bf16.msra.mxu0 0
      %3949 = vmatprep.subr.bf16.mxu0 0
      %3950 = vmatpush2.bf16.msra.mxu0 0
      %3951 = vmatprep.mubr.bf16.mxu0 0
      %3952 = vmatmul.mubr.bf16.gmra.mxu0 %v3914
      %v3953 = vpop.f32.mrf.mxu0
      %v3954 = vadd.f32 0.0, %v3953
      %v3955 = vpop.f32.mrf.mxu0
      %v3956 = vpop.f32.mrf.mxu0
      %v3957 = vadd.f32 0.0, %v3956
      %v3958 = vpop.f32.mrf.mxu0
      %3959 = vdwg.mxu0
      %v3960 = vld [vmem:[%s35 + $0x30] sm:$0xff]
      %v3961 = vpack.c.bf16 %v3957, %v3954
      %v3962 = vpack.c.bf16 %v3960, %v3960
      %v3964 = vsel %vm1147, %v3961, 0
      %v3967 = vsel %vm1410, %v3962, 0
      %3969 = vmatprep.subr.bf16.mxu0 0
      %3970 = vmatpush1.bf16.msra.mxu0 0
      %3971 = vmatprep.subr.bf16.mxu0 0
      %3972 = vmatpush1.bf16.msra.mxu0 0
      %3973 = vmatprep.subr.bf16.mxu0 0
      %3974 = vmatpush1.bf16.msra.mxu0 0
      %3975 = vmatprep.subr.bf16.mxu0 0
      %3976 = vmatpush1.bf16.msra.mxu0 0
      %3977 = vmatprep.subr.bf16.mxu0 0
      %3978 = vmatpush1.bf16.msra.mxu0 0
      %3979 = vmatprep.subr.bf16.mxu0 0
      %3980 = vmatpush1.bf16.msra.mxu0 0
      %3981 = vmatprep.subr.bf16.mxu0 0
      %3982 = vmatpush1.bf16.msra.mxu0 0
      %3983 = vmatprep.subr.bf16.mxu0 0
      %3984 = vmatpush1.bf16.msra.mxu0 %v3967
      %3985 = vmatprep.subr.bf16.mxu0 0
      %3986 = vmatpush2.bf16.msra.mxu0 0
      %3987 = vmatprep.subr.bf16.mxu0 0
      %3988 = vmatpush2.bf16.msra.mxu0 0
      %3989 = vmatprep.subr.bf16.mxu0 0
      %3990 = vmatpush2.bf16.msra.mxu0 0
      %3991 = vmatprep.subr.bf16.mxu0 0
      %3992 = vmatpush2.bf16.msra.mxu0 0
      %3993 = vmatprep.subr.bf16.mxu0 0
      %3994 = vmatpush2.bf16.msra.mxu0 0
      %3995 = vmatprep.subr.bf16.mxu0 0
      %3996 = vmatpush2.bf16.msra.mxu0 0
      %3997 = vmatprep.subr.bf16.mxu0 0
      %3998 = vmatpush2.bf16.msra.mxu0 0
      %3999 = vmatprep.subr.bf16.mxu0 0
      %4000 = vmatpush2.bf16.msra.mxu0 0
      %4001 = vmatprep.mubr.bf16.mxu0 0
      %4002 = vmatmul.mubr.bf16.gmra.mxu0 %v3964
      %v4003 = vpop.f32.mrf.mxu0
      %v4004 = vadd.f32 0.0, %v4003
      %v4005 = vpop.f32.mrf.mxu0
      %v4006 = vpop.f32.mrf.mxu0
      %v4007 = vadd.f32 0.0, %v4006
      %v4008 = vpop.f32.mrf.mxu0
      %4009 = vdwg.mxu0
      %v4010 = vadd.f32 %v3833, %v4004
      %v4011 = vadd.f32 %v3834, %v4007
      %4012 = vrot.lane.b32.xlu0 %v2772, 72
      %v4013 = vpop.permute.xlu0 %4012
      %4014 = vrot.lane.b32.xlu0 %v2773, 72
      %v4015 = vpop.permute.xlu0 %4014
      %v4017 = vsel %vm1147, %v4013, 0
      %v4020 = vsel %vm1147, %v4015, 0
      %4022 = vmatprep.subr.bf16.mxu0 0
      %4023 = vmatpush1.bf16.xpose.msra.mxu0 0
      %4024 = vmatprep.subr.bf16.mxu0 0
      %4025 = vmatpush1.bf16.xpose.msra.mxu0 0
      %4026 = vmatprep.subr.bf16.mxu0 0
      %4027 = vmatpush1.bf16.xpose.msra.mxu0 0
      %4028 = vmatprep.subr.bf16.mxu0 0
      %4029 = vmatpush1.bf16.xpose.msra.mxu0 0
      %4030 = vmatprep.subr.bf16.mxu0 0
      %4031 = vmatpush1.bf16.xpose.msra.mxu0 0
      %4032 = vmatprep.subr.bf16.mxu0 0
      %4033 = vmatpush1.bf16.xpose.msra.mxu0 0
      %4034 = vmatprep.subr.bf16.mxu0 0
      %4035 = vmatpush1.bf16.xpose.msra.mxu0 0
      %4036 = vmatprep.subr.bf16.mxu0 0
      %4037 = vmatpush1.bf16.xpose.msra.mxu0 %v4020
      %4038 = vmatprep.subr.bf16.mxu0 0
      %4039 = vmatpush2.bf16.xpose.msra.mxu0 0
      %4040 = vmatprep.subr.bf16.mxu0 0
      %4041 = vmatpush2.bf16.xpose.msra.mxu0 0
      %4042 = vmatprep.subr.bf16.mxu0 0
      %4043 = vmatpush2.bf16.xpose.msra.mxu0 0
      %4044 = vmatprep.subr.bf16.mxu0 0
      %4045 = vmatpush2.bf16.xpose.msra.mxu0 0
      %4046 = vmatprep.subr.bf16.mxu0 0
      %4047 = vmatpush2.bf16.xpose.msra.mxu0 0
      %4048 = vmatprep.subr.bf16.mxu0 0
      %4049 = vmatpush2.bf16.xpose.msra.mxu0 0
      %4050 = vmatprep.subr.bf16.mxu0 0
      %4051 = vmatpush2.bf16.xpose.msra.mxu0 0
      %4052 = vmatprep.subr.bf16.mxu0 0
      %4053 = vmatpush2.bf16.xpose.msra.mxu0 0
      %4054 = vmatprep.mubr.bf16.mxu0 0
      %4055 = vmatmul.mubr.bf16.gmra.mxu0 %v4017
      %v4056 = vpop.f32.mrf.mxu0
      %v4057 = vadd.f32 0.0, %v4056
      %v4058 = vpop.f32.mrf.mxu0
      %v4059 = vpop.f32.mrf.mxu0
      %v4060 = vadd.f32 0.0, %v4059
      %v4061 = vpop.f32.mrf.mxu0
      %4062 = vdwg.mxu0
      %v4063 = vmul.f32 %v4057, 0.35355338
      %v4064 = vmul.f32 %v4060, 0.35355338
      %v4065 = vsel %vm2823, %v4063, -inf
      %4066 = vmax.xlane.f32.xlu0 %v4065
      %v4067 = vpop.xlane.xlu0 %4066
      %v4068 = vsel %vm2827, %v4064, -inf
      %4069 = vmax.xlane.f32.xlu0 %v4068
      %v4070 = vpop.xlane.xlu0 %4069
      %v4071 = vsub.f32 %v4063, %v4067
      %v4072 = vsub.f32 %v4064, %v4070
      %v4073 = vmul.f32 %v4071, 1.442695
      %v4074 = vpow.pop %v4073
      %v4075 = vmul.f32 %v4072, 1.442695
      %v4076 = vpow.pop %v4075
      %v4077 = vsel %vm2823, %v4074, 0.0
      %4078 = vadd.xlane.f32.xlu0 %v4077
      %v4079 = vpop.xlane.xlu0 %4078
      %v4080 = vsel %vm2827, %v4076, 0.0
      %4081 = vadd.xlane.f32.xlu0 %v4080
      %v4082 = vpop.xlane.xlu0 %4081
      %v4083 = vrcp.pop %v4079
      %v4084 = vmul.f32 %v4074, %v4083
      %v4085 = vrcp.pop %v4082
      %v4086 = vmul.f32 %v4076, %v4085
      %v4087 = vpack.c.bf16 %v4086, %v4084
      %4088 = vrot.lane.b32.xlu0 %v2773, 8
      %v4089 = vpop.permute.xlu0 %4088
      %v4091 = vsel %vm2823, %v4087, 0
      %v4094 = vand.u32 %v4089, %v2856
      %4096 = vmatprep.subr.bf16.mxu0 0
      %4097 = vmatpush1.bf16.msra.mxu0 0
      %4098 = vmatprep.subr.bf16.mxu0 0
      %4099 = vmatpush1.bf16.msra.mxu0 0
      %4100 = vmatprep.subr.bf16.mxu0 0
      %4101 = vmatpush1.bf16.msra.mxu0 0
      %4102 = vmatprep.subr.bf16.mxu0 0
      %4103 = vmatpush1.bf16.msra.mxu0 0
      %4104 = vmatprep.subr.bf16.mxu0 0
      %4105 = vmatpush1.bf16.msra.mxu0 0
      %4106 = vmatprep.subr.bf16.mxu0 0
      %4107 = vmatpush1.bf16.msra.mxu0 0
      %4108 = vmatprep.subr.bf16.mxu0 0
      %4109 = vmatpush1.bf16.msra.mxu0 0
      %4110 = vmatprep.subr.bf16.mxu0 0
      %4111 = vmatpush1.bf16.msra.mxu0 %v4094
      %4112 = vmatprep.subr.bf16.mxu0 0
      %4113 = vmatpush2.bf16.msra.mxu0 0
      %4114 = vmatprep.subr.bf16.mxu0 0
      %4115 = vmatpush2.bf16.msra.mxu0 0
      %4116 = vmatprep.subr.bf16.mxu0 0
      %4117 = vmatpush2.bf16.msra.mxu0 0
      %4118 = vmatprep.subr.bf16.mxu0 0
      %4119 = vmatpush2.bf16.msra.mxu0 0
      %4120 = vmatprep.subr.bf16.mxu0 0
      %4121 = vmatpush2.bf16.msra.mxu0 0
      %4122 = vmatprep.subr.bf16.mxu0 0
      %4123 = vmatpush2.bf16.msra.mxu0 0
      %4124 = vmatprep.subr.bf16.mxu0 0
      %4125 = vmatpush2.bf16.msra.mxu0 0
      %4126 = vmatprep.subr.bf16.mxu0 0
      %4127 = vmatpush2.bf16.msra.mxu0 0
      %4128 = vmatprep.mubr.bf16.mxu0 0
      %4129 = vmatmul.mubr.bf16.gmra.mxu0 %v4091
      %v4130 = vpop.f32.mrf.mxu0
      %v4131 = vadd.f32 0.0, %v4130
      %v4132 = vpop.f32.mrf.mxu0
      %v4133 = vpop.f32.mrf.mxu0
      %v4134 = vadd.f32 0.0, %v4133
      %v4135 = vpop.f32.mrf.mxu0
      %4136 = vdwg.mxu0
      %v4137 = vld [vmem:[%s35 + $0x38] sm:$0xff]
      %v4138 = vpack.c.bf16 %v4134, %v4131
      %v4139 = vpack.c.bf16 %v4137, %v4137
      %v4141 = vsel %vm1147, %v4138, 0
      %v4144 = vsel %vm1410, %v4139, 0
      %4146 = vmatprep.subr.bf16.mxu0 0
      %4147 = vmatpush1.bf16.msra.mxu0 0
      %4148 = vmatprep.subr.bf16.mxu0 0
      %4149 = vmatpush1.bf16.msra.mxu0 0
      %4150 = vmatprep.subr.bf16.mxu0 0
      %4151 = vmatpush1.bf16.msra.mxu0 0
      %4152 = vmatprep.subr.bf16.mxu0 0
      %4153 = vmatpush1.bf16.msra.mxu0 0
      %4154 = vmatprep.subr.bf16.mxu0 0
      %4155 = vmatpush1.bf16.msra.mxu0 0
      %4156 = vmatprep.subr.bf16.mxu0 0
      %4157 = vmatpush1.bf16.msra.mxu0 0
      %4158 = vmatprep.subr.bf16.mxu0 0
      %4159 = vmatpush1.bf16.msra.mxu0 0
      %4160 = vmatprep.subr.bf16.mxu0 0
      %4161 = vmatpush1.bf16.msra.mxu0 %v4144
      %4162 = vmatprep.subr.bf16.mxu0 0
      %4163 = vmatpush2.bf16.msra.mxu0 0
      %4164 = vmatprep.subr.bf16.mxu0 0
      %4165 = vmatpush2.bf16.msra.mxu0 0
      %4166 = vmatprep.subr.bf16.mxu0 0
      %4167 = vmatpush2.bf16.msra.mxu0 0
      %4168 = vmatprep.subr.bf16.mxu0 0
      %4169 = vmatpush2.bf16.msra.mxu0 0
      %4170 = vmatprep.subr.bf16.mxu0 0
      %4171 = vmatpush2.bf16.msra.mxu0 0
      %4172 = vmatprep.subr.bf16.mxu0 0
      %4173 = vmatpush2.bf16.msra.mxu0 0
      %4174 = vmatprep.subr.bf16.mxu0 0
      %4175 = vmatpush2.bf16.msra.mxu0 0
      %4176 = vmatprep.subr.bf16.mxu0 0
      %4177 = vmatpush2.bf16.msra.mxu0 0
      %4178 = vmatprep.mubr.bf16.mxu0 0
      %4179 = vmatmul.mubr.bf16.gmra.mxu0 %v4141
      %v4180 = vpop.f32.mrf.mxu0
      %v4181 = vadd.f32 0.0, %v4180
      %v4182 = vpop.f32.mrf.mxu0
      %v4183 = vpop.f32.mrf.mxu0
      %v4184 = vadd.f32 0.0, %v4183
      %v4185 = vpop.f32.mrf.mxu0
      %4186 = vdwg.mxu0
      %v4187 = vadd.f32 %v4010, %v4181
      %v4188 = vadd.f32 %v4011, %v4184
      %v4189 = vld [vmem:[%s37] sm:$0x1]
      %v4191 = vlaneseq
      %v4192 = vshrl.u32 %v4191, 7
      %v4193 = vsub.s32 0, %v4192
      %v4194 = vrot.slane %v4189, %v4193
      %v4196 = vadd.f32 %v4187, %v4194
      %v4197 = vadd.f32 %v4188, %v4194
      %v4198 = vadd.f32 %v2585, %v4196
      %v4199 = vadd.f32 %v2586, %v4197
      %v4200 = vsel %vm999, %v4198, 0.0
      %4201 = vadd.xlane.f32.xlu0 %v4200
      %v4202 = vpop.xlane.xlu0 %4201
      %v4203 = vsel %vm1003, %v4199, 0.0
      %4204 = vadd.xlane.f32.xlu0 %v4203
      %v4205 = vpop.xlane.xlu0 %4204
      %v4206 = vmul.f32 %v4202, %v1007
      %v4207 = vmul.f32 %v4205, %v1007
      %v4208 = vsub.f32 %v4198, %v4206
      %v4209 = vsub.f32 %v4199, %v4207
      %v4210 = vmul.f32 %v4208, %v4208
      %v4211 = vmul.f32 %v4209, %v4209
      %v4212 = vsel %vm999, %v4210, 0.0
      %4213 = vadd.xlane.f32.xlu0 %v4212
      %v4214 = vpop.xlane.xlu0 %4213
      %v4215 = vsel %vm1003, %v4211, 0.0
      %4216 = vadd.xlane.f32.xlu0 %v4215
      %v4217 = vpop.xlane.xlu0 %4216
      %v4218 = vmul.f32 %v4214, 0.015873017
      %v4219 = vmul.f32 %v4217, 0.015873017
      %v4220 = vrsqrt.pop %v4218
      %v4221 = vmul.f32 %v4218, %v4220
      %vm4222 = vcmp.eq.f32.partialorder %v4218, inf
      %v4223 = vsel %vm4222, %v4218, %v4221
      %vm4224 = vcmp.eq.f32.partialorder %v4218, 0.0
      %v4225 = vand.u32 %v4218, 2147483648
      %v4226 = vsel %vm4224, %v4225, %v4223
      %v4227 = vrsqrt.pop %v4219
      %v4228 = vmul.f32 %v4219, %v4227
      %vm4229 = vcmp.eq.f32.partialorder %v4219, inf
      %v4230 = vsel %vm4229, %v4219, %v4228
      %vm4231 = vcmp.eq.f32.partialorder %v4219, 0.0
      %v4232 = vand.u32 %v4219, 2147483648
      %v4233 = vsel %vm4231, %v4232, %v4230
      %v4234 = vld [vmem:[%s39] sm:$0x1]
      %v4236 = vlaneseq
      %v4237 = vshrl.u32 %v4236, 7
      %v4238 = vsub.s32 0, %v4237
      %v4239 = vrot.slane %v4234, %v4238
      %v4241 = vmul.f32 %v4239, %v4208
      %v4242 = vmul.f32 %v4239, %v4209
      %v4243 = vadd.f32 %v4226, 1e-06
      %v4244 = vadd.f32 %v4233, 1e-06
      %v4245 = vrcp.pop %v4243
      %v4246 = vmul.f32 %v4241, %v4245
      %v4247 = vrcp.pop %v4244
      %v4248 = vmul.f32 %v4242, %v4247
      %v4249 = vld [vmem:[%s41] sm:$0x1]
      %v4251 = vlaneseq
      %v4252 = vshrl.u32 %v4251, 7
      %v4253 = vsub.s32 0, %v4252
      %v4254 = vrot.slane %v4249, %v4253
      %v4256 = vadd.f32 %v4246, %v4254
      %v4257 = vadd.f32 %v4248, %v4254
      %v4258 = vld [vmem:[%s43] sm:$0xff]
      %v4259 = vld [vmem:[%s43 + $0x8] sm:$0xff]
      %v4260 = vld [vmem:[%s43 + $0x10] sm:$0xff]
      %v4261 = vld [vmem:[%s43 + $0x18] sm:$0xff]
      %v4262 = vld [vmem:[%s43 + $0x20] sm:$0xff]
      %v4263 = vld [vmem:[%s43 + $0x28] sm:$0xff]
      %v4264 = vld [vmem:[%s43 + $0x30] sm:$0xff]
      %v4265 = vld [vmem:[%s43 + $0x38] sm:$0xff]
      %v4266 = vpack.c.bf16 %v4257, %v4256
      %v4267 = vpack.c.bf16 %v4259, %v4258
      %v4268 = vpack.c.bf16 %v4261, %v4260
      %v4269 = vpack.c.bf16 %v4263, %v4262
      %v4270 = vpack.c.bf16 %v4265, %v4264
      %v4271 = vld [vmem:[%s45] sm:$0x1]
      %v4273 = vlaneseq
      %v4274 = vshrl.u32 %v4273, 7
      %v4275 = vsub.s32 0, %v4274
      %v4276 = vrot.slane %v4271, %v4275
      %v4279 = vsel %vm999, %v4266, 0
      %4281 = vmatprep.subr.bf16.mxu0 0
      %4282 = vmatpush1.bf16.msra.mxu0 0
      %4283 = vmatprep.subr.bf16.mxu0 0
      %4284 = vmatpush1.bf16.msra.mxu0 0
      %4285 = vmatprep.subr.bf16.mxu0 0
      %4286 = vmatpush1.bf16.msra.mxu0 0
      %4287 = vmatprep.subr.bf16.mxu0 0
      %4288 = vmatpush1.bf16.msra.mxu0 0
      %4289 = vmatprep.subr.bf16.mxu0 0
      %4290 = vmatpush1.bf16.msra.mxu0 %v4270
      %4291 = vmatprep.subr.bf16.mxu0 0
      %4292 = vmatpush1.bf16.msra.mxu0 %v4269
      %4293 = vmatprep.subr.bf16.mxu0 0
      %4294 = vmatpush1.bf16.msra.mxu0 %v4268
      %4295 = vmatprep.subr.bf16.mxu0 0
      %4296 = vmatpush1.bf16.msra.mxu0 %v4267
      %4297 = vmatprep.subr.bf16.mxu0 0
      %4298 = vmatpush2.bf16.msra.mxu0 0
      %4299 = vmatprep.subr.bf16.mxu0 0
      %4300 = vmatpush2.bf16.msra.mxu0 0
      %4301 = vmatprep.subr.bf16.mxu0 0
      %4302 = vmatpush2.bf16.msra.mxu0 0
      %4303 = vmatprep.subr.bf16.mxu0 0
      %4304 = vmatpush2.bf16.msra.mxu0 0
      %4305 = vmatprep.subr.bf16.mxu0 0
      %4306 = vmatpush2.bf16.msra.mxu0 0
      %4307 = vmatprep.subr.bf16.mxu0 0
      %4308 = vmatpush2.bf16.msra.mxu0 0
      %4309 = vmatprep.subr.bf16.mxu0 0
      %4310 = vmatpush2.bf16.msra.mxu0 0
      %4311 = vmatprep.subr.bf16.mxu0 0
      %4312 = vmatpush2.bf16.msra.mxu0 0
      %4313 = vmatprep.mubr.bf16.mxu0 0
      %4314 = vmatmul.mubr.bf16.gmra.mxu0 %v4279
      %v4315 = vpop.f32.mrf.mxu0
      %v4316 = vadd.f32 %v4276, %v4315
      %v4317 = vpop.f32.mrf.mxu0
      %v4318 = vpop.f32.mrf.mxu0
      %v4319 = vadd.f32 %v4276, %v4318
      %v4320 = vpop.f32.mrf.mxu0
      %4321 = vdwg.mxu0
      %v4322 = vmax.f32 %v4316, 0.0
      %v4323 = vmax.f32 %v4319, 0.0
      %v4324 = vld [vmem:[%s47] sm:$0xff]
      %v4325 = vld [vmem:[%s47 + $0x8] sm:$0xff]
      %v4326 = vld [vmem:[%s47 + $0x10] sm:$0xff]
      %v4327 = vld [vmem:[%s47 + $0x18] sm:$0xff]
      %v4328 = vld [vmem:[%s47 + $0x20] sm:$0xff]
      %v4329 = vld [vmem:[%s47 + $0x28] sm:$0xff]
      %v4330 = vld [vmem:[%s47 + $0x30] sm:$0xff]
      %v4331 = vld [vmem:[%s47 + $0x38] sm:$0xff]
      %v4332 = vld [vmem:[%s47 + $0x40] sm:$0xff]
      %v4333 = vld [vmem:[%s47 + $0x48] sm:$0xff]
      %v4334 = vld [vmem:[%s47 + $0x50] sm:$0xff]
      %v4335 = vld [vmem:[%s47 + $0x58] sm:$0xff]
      %v4336 = vld [vmem:[%s47 + $0x60] sm:$0xff]
      %v4337 = vld [vmem:[%s47 + $0x68] sm:$0xff]
      %v4338 = vld [vmem:[%s47 + $0x70] sm:$0xff]
      %v4339 = vld [vmem:[%s47 + $0x78] sm:$0xff]
      %v4340 = vpack.c.bf16 %v4323, %v4322
      %v4341 = vpack.c.bf16 %v4325, %v4324
      %v4342 = vpack.c.bf16 %v4327, %v4326
      %v4343 = vpack.c.bf16 %v4329, %v4328
      %v4344 = vpack.c.bf16 %v4331, %v4330
      %v4345 = vpack.c.bf16 %v4333, %v4332
      %v4346 = vpack.c.bf16 %v4335, %v4334
      %v4347 = vpack.c.bf16 %v4337, %v4336
      %v4348 = vpack.c.bf16 %v4339, %v4338
      %v4349 = vld [vmem:[%s49] sm:$0x1]
      %v4351 = vlaneseq
      %v4352 = vshrl.u32 %v4351, 7
      %v4353 = vsub.s32 0, %v4352
      %v4354 = vrot.slane %v4349, %v4353
      %4356 = vmatprep.subr.bf16.mxu0 0
      %4357 = vmatpush1.bf16.msra.mxu0 %v4348
      %4358 = vmatprep.subr.bf16.mxu0 0
      %4359 = vmatpush1.bf16.msra.mxu0 %v4347
      %4360 = vmatprep.subr.bf16.mxu0 0
      %4361 = vmatpush1.bf16.msra.mxu0 %v4346
      %4362 = vmatprep.subr.bf16.mxu0 0
      %4363 = vmatpush1.bf16.msra.mxu0 %v4345
      %4364 = vmatprep.subr.bf16.mxu0 0
      %4365 = vmatpush1.bf16.msra.mxu0 %v4344
      %4366 = vmatprep.subr.bf16.mxu0 0
      %4367 = vmatpush1.bf16.msra.mxu0 %v4343
      %4368 = vmatprep.subr.bf16.mxu0 0
      %4369 = vmatpush1.bf16.msra.mxu0 %v4342
      %4370 = vmatprep.subr.bf16.mxu0 0
      %4371 = vmatpush1.bf16.msra.mxu0 %v4341
      %4372 = vmatprep.subr.bf16.mxu0 0
      %4373 = vmatpush2.bf16.msra.mxu0 0
      %4374 = vmatprep.subr.bf16.mxu0 0
      %4375 = vmatpush2.bf16.msra.mxu0 0
      %4376 = vmatprep.subr.bf16.mxu0 0
      %4377 = vmatpush2.bf16.msra.mxu0 0
      %4378 = vmatprep.subr.bf16.mxu0 0
      %4379 = vmatpush2.bf16.msra.mxu0 0
      %4380 = vmatprep.subr.bf16.mxu0 0
      %4381 = vmatpush2.bf16.msra.mxu0 0
      %4382 = vmatprep.subr.bf16.mxu0 0
      %4383 = vmatpush2.bf16.msra.mxu0 0
      %4384 = vmatprep.subr.bf16.mxu0 0
      %4385 = vmatpush2.bf16.msra.mxu0 0
      %4386 = vmatprep.subr.bf16.mxu0 0
      %4387 = vmatpush2.bf16.msra.mxu0 0
      %4388 = vmatprep.mubr.bf16.mxu0 0
      %4389 = vmatmul.mubr.bf16.gmra.mxu0 %v4340
      %v4390 = vpop.f32.mrf.mxu0
      %v4391 = vadd.f32 %v4354, %v4390
      %v4392 = vpop.f32.mrf.mxu0
      %v4393 = vpop.f32.mrf.mxu0
      %v4394 = vadd.f32 %v4354, %v4393
      %v4395 = vpop.f32.mrf.mxu0
      %4396 = vdwg.mxu0
      %v4397 = vadd.f32 %v4198, %v4391
      %v4398 = vadd.f32 %v4199, %v4394
      %v4399 = vsel %vm999, %v4397, 0.0
      %4400 = vadd.xlane.f32.xlu0 %v4399
      %v4401 = vpop.xlane.xlu0 %4400
      %v4402 = vsel %vm1003, %v4398, 0.0
      %4403 = vadd.xlane.f32.xlu0 %v4402
      %v4404 = vpop.xlane.xlu0 %4403
      %v4405 = vmul.f32 %v4401, %v1007
      %v4406 = vmul.f32 %v4404, %v1007
      %v4407 = vsub.f32 %v4397, %v4405
      %v4408 = vsub.f32 %v4398, %v4406
      %v4409 = vmul.f32 %v4407, %v4407
      %v4410 = vmul.f32 %v4408, %v4408
      %v4411 = vsel %vm999, %v4409, 0.0
      %4412 = vadd.xlane.f32.xlu0 %v4411
      %v4413 = vpop.xlane.xlu0 %4412
      %v4414 = vsel %vm1003, %v4410, 0.0
      %4415 = vadd.xlane.f32.xlu0 %v4414
      %v4416 = vpop.xlane.xlu0 %4415
      %v4417 = vmul.f32 %v4413, 0.015873017
      %v4418 = vmul.f32 %v4416, 0.015873017
      %v4419 = vrsqrt.pop %v4417
      %v4420 = vmul.f32 %v4417, %v4419
      %vm4421 = vcmp.eq.f32.partialorder %v4417, inf
      %v4422 = vsel %vm4421, %v4417, %v4420
      %vm4423 = vcmp.eq.f32.partialorder %v4417, 0.0
      %v4424 = vand.u32 %v4417, 2147483648
      %v4425 = vsel %vm4423, %v4424, %v4422
      %v4426 = vrsqrt.pop %v4418
      %v4427 = vmul.f32 %v4418, %v4426
      %vm4428 = vcmp.eq.f32.partialorder %v4418, inf
      %v4429 = vsel %vm4428, %v4418, %v4427
      %vm4430 = vcmp.eq.f32.partialorder %v4418, 0.0
      %v4431 = vand.u32 %v4418, 2147483648
      %v4432 = vsel %vm4430, %v4431, %v4429
      %v4433 = vld [vmem:[%s51] sm:$0x1]
      %v4435 = vlaneseq
      %v4436 = vshrl.u32 %v4435, 7
      %v4437 = vsub.s32 0, %v4436
      %v4438 = vrot.slane %v4433, %v4437
      %v4440 = vmul.f32 %v4438, %v4407
      %v4441 = vmul.f32 %v4438, %v4408
      %v4442 = vadd.f32 %v4425, 1e-06
      %v4443 = vadd.f32 %v4432, 1e-06
      %v4444 = vrcp.pop %v4442
      %v4445 = vmul.f32 %v4440, %v4444
      %v4446 = vrcp.pop %v4443
      %v4447 = vmul.f32 %v4441, %v4446
      %v4448 = vld [vmem:[%s53] sm:$0x1]
      %v4450 = vlaneseq
      %v4451 = vshrl.u32 %v4450, 7
      %v4452 = vsub.s32 0, %v4451
      %v4453 = vrot.slane %v4448, %v4452
      %v4455 = vadd.f32 %v4445, %v4453
      %v4456 = vadd.f32 %v4447, %v4453
      %v4457 = vld [vmem:[%s55] sm:$0xff]
      %v4458 = vld [vmem:[%s55 + $0x8] sm:$0xff]
      %v4459 = vld [vmem:[%s55 + $0x10] sm:$0xff]
      %v4460 = vld [vmem:[%s55 + $0x18] sm:$0xff]
      %v4461 = vld [vmem:[%s55 + $0x20] sm:$0xff]
      %v4462 = vld [vmem:[%s55 + $0x28] sm:$0xff]
      %v4463 = vld [vmem:[%s55 + $0x30] sm:$0xff]
      %v4464 = vld [vmem:[%s55 + $0x38] sm:$0xff]
      %v4465 = vpack.c.bf16 %v4456, %v4455
      %v4466 = vpack.c.bf16 %v4458, %v4457
      %v4467 = vpack.c.bf16 %v4460, %v4459
      %v4468 = vpack.c.bf16 %v4462, %v4461
      %v4469 = vpack.c.bf16 %v4464, %v4463
      %v4470 = vld [vmem:[%s57] sm:$0x1]
      %v4472 = vlaneseq
      %v4473 = vshrl.u32 %v4472, 7
      %v4474 = vsub.s32 0, %v4473
      %v4475 = vrot.slane %v4470, %v4474
      %v4478 = vsel %vm999, %v4465, 0
      %4480 = vmatprep.subr.bf16.mxu0 0
      %4481 = vmatpush1.bf16.msra.mxu0 0
      %4482 = vmatprep.subr.bf16.mxu0 0
      %4483 = vmatpush1.bf16.msra.mxu0 0
      %4484 = vmatprep.subr.bf16.mxu0 0
      %4485 = vmatpush1.bf16.msra.mxu0 0
      %4486 = vmatprep.subr.bf16.mxu0 0
      %4487 = vmatpush1.bf16.msra.mxu0 0
      %4488 = vmatprep.subr.bf16.mxu0 0
      %4489 = vmatpush1.bf16.msra.mxu0 %v4469
      %4490 = vmatprep.subr.bf16.mxu0 0
      %4491 = vmatpush1.bf16.msra.mxu0 %v4468
      %4492 = vmatprep.subr.bf16.mxu0 0
      %4493 = vmatpush1.bf16.msra.mxu0 %v4467
      %4494 = vmatprep.subr.bf16.mxu0 0
      %4495 = vmatpush1.bf16.msra.mxu0 %v4466
      %4496 = vmatprep.subr.bf16.mxu0 0
      %4497 = vmatpush2.bf16.msra.mxu0 0
      %4498 = vmatprep.subr.bf16.mxu0 0
      %4499 = vmatpush2.bf16.msra.mxu0 0
      %4500 = vmatprep.subr.bf16.mxu0 0
      %4501 = vmatpush2.bf16.msra.mxu0 0
      %4502 = vmatprep.subr.bf16.mxu0 0
      %4503 = vmatpush2.bf16.msra.mxu0 0
      %4504 = vmatprep.subr.bf16.mxu0 0
      %4505 = vmatpush2.bf16.msra.mxu0 0
      %4506 = vmatprep.subr.bf16.mxu0 0
      %4507 = vmatpush2.bf16.msra.mxu0 0
      %4508 = vmatprep.subr.bf16.mxu0 0
      %4509 = vmatpush2.bf16.msra.mxu0 0
      %4510 = vmatprep.subr.bf16.mxu0 0
      %4511 = vmatpush2.bf16.msra.mxu0 0
      %4512 = vmatprep.mubr.bf16.mxu0 0
      %4513 = vmatmul.mubr.bf16.gmra.mxu0 %v4478
      %v4514 = vpop.f32.mrf.mxu0
      %v4515 = vadd.f32 %v4475, %v4514
      %v4516 = vpop.f32.mrf.mxu0
      %v4517 = vpop.f32.mrf.mxu0
      %v4518 = vadd.f32 %v4475, %v4517
      %v4519 = vpop.f32.mrf.mxu0
      %4520 = vdwg.mxu0
      %4521 = vst.msk [vmem:[%s919] sm:$0xff] %vm943, %v4515
      %vm4522 = vcmask 19456
      %4523 = vst.msk [vmem:[%s919 + $0x8] sm:$0xf] %vm4522, %v4518
      %p4524 = scmp.lt.s32.totalorder %s70, 1
      %s4525 = scalar_select %p4524, %s70, 1
      %s4526 = smul.addr %s4525, 2
      %s4527 = smul.addr %s4526, 8
      %s4528 = scalar_lea.vmem %s59, %s4527
      // Predicated region
      $region137: #{trajectory_generator_forward.3} parent=135 // pred_check
        %p4529 = pneg %p707
      $region138: #{trajectory_generator_forward.3} parent=135 // pred_check_branch
        %4531 = sbr.rel (%p4529) target = $region140
      $region139: #{trajectory_generator_forward.3} parent=135 // pred_region
        _
      $region140: #{trajectory_generator_forward.3} parent=135 // pred_fallthru
        _
    $region136: #{trajectory_generator_forward.3} parent=5 // pred_fallthru
      _
    %p4532 = scmp.le.s32.totalorder 2, %s65
    // Predicated region
    $region141: #{trajectory_generator_forward.3} parent=5 // pred_check
      %p4533 = pneg %p4532
    $region142: #{trajectory_generator_forward.3} parent=5 // pred_check_branch
      %4535 = sbr.rel (%p4533) target = $region144
    $region143: #{trajectory_generator_forward.3} parent=5 // pred_region
      %s4536 = ssub.s32 %s65, 2
      // Predicated region
      $region145: #{trajectory_generator_forward.3} parent=143 // pred_check
        %p4537 = pneg %p713
      $region146: #{trajectory_generator_forward.3} parent=143 // pred_check_branch
        %4539 = sbr.rel (%p4537) target = $region148
      $region147: #{trajectory_generator_forward.3} parent=143 // pred_region
        %p4540 = scmp.lt.s32.totalorder %s71, 1
        %s4541 = scalar_select %p4540, %s71, 1
        %s4542 = smul.addr %s4541, 2
        %s4543 = smul.addr %s4542, 8
        %s4544 = scalar_lea.vmem %s59, %s4543
      $region148: #{trajectory_generator_forward.3} parent=143 // pred_fallthru
        _
    $region144: #{trajectory_generator_forward.3} parent=5 // pred_fallthru
      _
  $region6: #{trajectory_generator_forward.3} parent=0 // loop_footer
    %s69 = sadd.s32 1, %s65
  $region7: #{trajectory_generator_forward.3} parent=0 // loop_footer_branch
    %64 = sbr.rel target = $region3
  $region8: #{trajectory_generator_forward.3} parent=0 // loop_exit
    _

</llo_original>
